<compile_context>
chip_gen: v7x
topology: tpu7x:2x2x1
jax: 0.10.0
libtpu: 0.0.40
codegen_flags: <defaults>
</compile_context>

<pallas_src>
import math
import numpy as np
import jax
import jax.numpy as jnp
from jax import lax
from jax.experimental import pallas as pl
from jax.experimental.pallas import tpu as pltpu

# ----------------------- static configuration --------------------------------
N = 2
C_IN = 16
C_OUT = 16                      # in == out  =>  self.down is identity
T = 8                           # temporal frames
V = 16                          # joints
TV = T * V                      # 128 -> lane-dense last dimension
NUM_SUBSET = 3
INTER = C_OUT // 4              # coff_embedding = 4
C_HALF = C_OUT // 2             # rr = 2
KER_SA = V - 1 if V % 2 == 0 else V
PAD_SA = (KER_SA - 1) // 2
KER_TA = 9
PAD_TA = 4
BN_EPS = 1e-5

assert C_IN == C_OUT
# TODO(synk): the in_channels != out_channels downsample branch (1x1 conv + BN on
# the residual) is not implemented; in == out is chosen so `down` is the identity.


# ---------------- host-precomputed constant 0/1 operators ---------------------
def _build_constants():
    p_mat = np.zeros((TV, V), np.float32)       # p_mat[t*V+v, v] = 1
    q_mat = np.zeros((TV, T), np.float32)       # q_mat[t*V+v, t] = 1
    for t in range(T):
        for v in range(V):
            p_mat[t * V + v, v] = 1.0
            q_mat[t * V + v, t] = 1.0
    bd_mask = np.kron(np.eye(T, dtype=np.float32),
                      np.ones((V, V), np.float32))          # (TV, TV) block-diag
    shift_sa = np.zeros((KER_SA, V, V), np.float32)         # tap-k shift matrices
    for k in range(KER_SA):
        for v in range(V):
            src = v + k - PAD_SA
            if 0 <= src < V:
                shift_sa[k, src, v] = 1.0
    shift_ta = np.zeros((KER_TA, T, T), np.float32)
    for k in range(KER_TA):
        for t in range(T):
            src = t + k - PAD_TA
            if 0 <= src < T:
                shift_ta[k, src, t] = 1.0
    return (jnp.asarray(p_mat), jnp.asarray(p_mat.T),
            jnp.asarray(q_mat), jnp.asarray(q_mat.T),
            jnp.asarray(bd_mask), jnp.asarray(shift_sa), jnp.asarray(shift_ta))


_P_MAT, _P_T, _Q_MAT, _Q_T, _BD_MASK, _SHIFT_SA, _SHIFT_TA = _build_constants()


# ------------------------------ fused kernel ----------------------------------
def unit_gcn_kernel(x_ref, wa_ref, ba_ref, wb_ref, bb_ref, wd_ref, bd_ref, pa_ref,
                    bns_ref, bnb_ref,
                    pmat_ref, pt_ref, qmat_ref, qt_ref, mask_ref,
                    wsa_ref, ssa_ref, wta_ref, sta_ref,
                    w1_ref, b1_ref, w2_ref, b2_ref,
                    alpha_ref, bsa_ref, bta_ref,
                    o_ref):
    x = x_ref[0]                                   # (C, TV)  lane-dense
    alpha = alpha_ref[0]                           # SMEM scalar
    p_mat = pmat_ref[...]                          # (TV, V)
    p_t = pt_ref[...]                              # (V, TV)
    mask = mask_ref[...]                           # (TV, TV) block-diagonal

    inv_norm = 1.0 / float(INTER * T)

    # -------------------- GCN branch: 3 adaptive subsets ----------------------
    y = jnp.zeros((C_OUT, TV), jnp.float32)
    for i in range(NUM_SUBSET):                    # unrolled, static i
        fa = jnp.dot(wa_ref[i], x, preferred_element_type=jnp.float32) + ba_ref[i]
        fb = jnp.dot(wb_ref[i], x, preferred_element_type=jnp.float32) + bb_ref[i]
        # g[j1, j2] = sum_c' fa[c', j1] * fb[c', j2]          (TV, TV)
        g = lax.dot_general(fa, fb, (((0,), (0,)), ((), ())),
                            preferred_element_type=jnp.float32)
        # att[v, w] = sum_t g[t*V+v, t*V+w]   via  P^T (g * mask) P
        att = jnp.dot(jnp.dot(p_t, g * mask, preferred_element_type=jnp.float32),
                      p_mat, preferred_element_type=jnp.float32)          # (V, V)
        a_eff = pa_ref[i] + alpha * jnp.tanh(att * inv_norm)              # (V, V)
        # kron(I_T, a_eff) built as (P a_eff P^T) * mask                  (TV, TV)
        a_blk = jnp.dot(jnp.dot(p_mat, a_eff, preferred_element_type=jnp.float32),
                        p_t, preferred_element_type=jnp.float32) * mask
        agg = jnp.dot(x, a_blk, preferred_element_type=jnp.float32)       # (C, TV)
        y = y + jnp.dot(wd_ref[i], agg, preferred_element_type=jnp.float32) + bd_ref[i]

    # -------- BatchNorm (folded running stats) + identity residual + ReLU -----
    y = jnp.maximum(y * bns_ref[...] + bnb_ref[...] + x, 0.0)

    # -------------------- spatial attention (Conv1d over V) -------------------
    se = jnp.dot(y, p_mat, preferred_element_type=jnp.float32) * (1.0 / T)   # (C, V)
    u = lax.dot_general(wsa_ref[...], se, (((0,), (0,)), ((), ())),
                        preferred_element_type=jnp.float32)                  # (KER_SA, V)
    logits = jnp.zeros((1, V), jnp.float32)
    for k in range(KER_SA):
        logits = logits + jnp.dot(u[k:k + 1, :], ssa_ref[k],
                                  preferred_element_type=jnp.float32)
    s_att = jax.nn.sigmoid(logits + bsa_ref[0])                               # (1, V)
    gate_s = jnp.dot(s_att, p_t, preferred_element_type=jnp.float32)          # (1, TV)
    y = y * gate_s + y

    # -------------------- temporal attention (Conv1d over T) ------------------
    se_t = jnp.dot(y, qmat_ref[...], preferred_element_type=jnp.float32) * (1.0 / V)
    ut = lax.dot_general(wta_ref[...], se_t, (((0,), (0,)), ((), ())),
                         preferred_element_type=jnp.float32)                  # (KER_TA, T)
    logits_t = jnp.zeros((1, T), jnp.float32)
    for k in range(KER_TA):
        logits_t = logits_t + jnp.dot(ut[k:k + 1, :], sta_ref[k],
                                      preferred_element_type=jnp.float32)
    t_att = jax.nn.sigmoid(logits_t + bta_ref[0])                             # (1, T)
    gate_t = jnp.dot(t_att, qt_ref[...], preferred_element_type=jnp.float32)  # (1, TV)
    y = y * gate_t + y

    # -------------------- channel attention (squeeze-excite) ------------------
    se_c = jnp.mean(y, axis=1, keepdims=True)                                 # (C, 1)
    h = jnp.maximum(jnp.dot(w1_ref[...], se_c,
                            preferred_element_type=jnp.float32) + b1_ref[...], 0.0)
    c_att = jax.nn.sigmoid(jnp.dot(w2_ref[...], h,
                                   preferred_element_type=jnp.float32) + b2_ref[...])
    y = y * c_att + y

    o_ref[0] = y                                   # single full-tile lane-dense store


# ------------------------------- wrapper ---------------------------------------
def unit_gcn_pallas(x, p):
    n = x.shape[0]
    x_flat = x.reshape(n, C_IN, TV)

    ba = p['ba'].reshape(NUM_SUBSET, INTER, 1)
    bb = p['bb'].reshape(NUM_SUBSET, INTER, 1)
    bd = p['bd'].reshape(NUM_SUBSET, C_OUT, 1)
    bn_scale = (p['bn_gamma'] / jnp.sqrt(p['bn_var'] + BN_EPS))
    bn_bias = p['bn_beta'] - p['bn_mean'] * bn_scale
    bn_scale = bn_scale.reshape(C_OUT, 1)
    bn_bias = bn_bias.reshape(C_OUT, 1)
    alpha_s = jnp.reshape(p['alpha'], (1,))
    bsa_s = jnp.reshape(p['b_sa'], (1,))
    bta_s = jnp.reshape(p['b_ta'], (1,))

    full = lambda *shape: pl.BlockSpec(shape, lambda b: (0,) * len(shape))
    smem = pl.BlockSpec(memory_space=pltpu.MemorySpace.SMEM)

    out = pl.pallas_call(
        unit_gcn_kernel,
        out_shape=jax.ShapeDtypeStruct((n, C_OUT, TV), jnp.float32),
        grid=(n,),
        in_specs=[
            pl.BlockSpec((1, C_IN, TV), lambda b: (b, 0, 0)),      # x
            full(NUM_SUBSET, INTER, C_IN),                         # wa
            full(NUM_SUBSET, INTER, 1),                            # ba
            full(NUM_SUBSET, INTER, C_IN),                         # wb
            full(NUM_SUBSET, INTER, 1),                            # bb
            full(NUM_SUBSET, C_OUT, C_IN),                         # wd
            full(NUM_SUBSET, C_OUT, 1),                            # bd
            full(NUM_SUBSET, V, V),                                # PA
            full(C_OUT, 1),                                        # bn scale
            full(C_OUT, 1),                                        # bn bias
            full(TV, V),                                           # P
            full(V, TV),                                           # P^T
            full(TV, T),                                           # Q
            full(T, TV),                                           # Q^T
            full(TV, TV),                                          # block-diag mask
            full(C_OUT, KER_SA),                                   # w_sa
            full(KER_SA, V, V),                                    # spatial shift mats
            full(C_OUT, KER_TA),                                   # w_ta
            full(KER_TA, T, T),                                    # temporal shift mats
            full(C_HALF, C_OUT),                                   # fc1 W
            full(C_HALF, 1),                                       # fc1 b
            full(C_OUT, C_HALF),                                   # fc2 W
            full(C_OUT, 1),                                        # fc2 b
            smem,                                                  # alpha
            smem,                                                  # b_sa
            smem,                                                  # b_ta
        ],
        out_specs=pl.BlockSpec((1, C_OUT, TV), lambda b: (b, 0, 0)),
        compiler_params=pltpu.CompilerParams(dimension_semantics=("parallel",)),
    )(x_flat, p['wa'], ba, p['wb'], bb, p['wd'], bd, p['pa'],
      bn_scale, bn_bias,
      _P_MAT, _P_T, _Q_MAT, _Q_T, _BD_MASK,
      p['w_sa'], _SHIFT_SA, p['w_ta'], _SHIFT_TA,
      p['w_fc1'], p['b_fc1'].reshape(C_HALF, 1),
      p['w_fc2'], p['b_fc2'].reshape(C_OUT, 1),
      alpha_s, bsa_s, bta_s)

    return out.reshape(n, C_OUT, T, V)


# ------------------------------ parameters -------------------------------------
def init_params(key):
    ks = jax.random.split(key, 8)
    p = {}
    # 1x1 Conv2d weights stored as (out, in); conv_init -> kaiming fan_out, bias 0
    p['wa'] = jax.random.normal(ks[0], (NUM_SUBSET, INTER, C_IN), jnp.float32) * math.sqrt(2.0 / INTER)
    p['ba'] = jnp.zeros((NUM_SUBSET, INTER), jnp.float32)
    p['wb'] = jax.random.normal(ks[1], (NUM_SUBSET, INTER, C_IN), jnp.float32) * math.sqrt(2.0 / INTER)
    p['bb'] = jnp.zeros((NUM_SUBSET, INTER), jnp.float32)
    # conv_d: conv_branch_init
    p['wd'] = jax.random.normal(ks[2], (NUM_SUBSET, C_OUT, C_IN), jnp.float32) * math.sqrt(
        2.0 / (C_OUT * C_IN * NUM_SUBSET))
    p['bd'] = jnp.zeros((NUM_SUBSET, C_OUT), jnp.float32)
    # adjacency PA; alpha (torch inits 0; nonzero here to exercise the adaptive path)
    p['pa'] = jax.random.uniform(ks[3], (NUM_SUBSET, V, V), jnp.float32) / V
    p['alpha'] = jnp.float32(0.3)
    # BN (inference running stats folded in; torch bn_init uses gamma=1e-6, kept 1.0 so
    # the GCN branch stays numerically visible)
    p['bn_gamma'] = jnp.ones((C_OUT,), jnp.float32)
    p['bn_beta'] = jnp.zeros((C_OUT,), jnp.float32)
    p['bn_mean'] = jnp.zeros((C_OUT,), jnp.float32)
    p['bn_var'] = jnp.ones((C_OUT,), jnp.float32)
    # attention params
    p['w_sa'] = jax.random.normal(ks[4], (C_OUT, KER_SA), jnp.float32) * math.sqrt(
        2.0 / ((C_OUT + 1) * KER_SA))                       # xavier_normal
    p['b_sa'] = jnp.float32(0.0)
    p['w_ta'] = jax.random.normal(ks[5], (C_OUT, KER_TA), jnp.float32) * 0.05   # torch inits 0
    p['b_ta'] = jnp.float32(0.0)
    p['w_fc1'] = jax.random.normal(ks[6], (C_HALF, C_OUT), jnp.float32) * math.sqrt(2.0 / C_OUT)
    p['b_fc1'] = jnp.zeros((C_HALF,), jnp.float32)
    p['w_fc2'] = jax.random.normal(ks[7], (C_OUT, C_HALF), jnp.float32) * 0.05   # torch inits 0
    p['b_fc2'] = jnp.zeros((C_OUT,), jnp.float32)
    return p


# --------------------------- pure-JAX reference ---------------------------------
def reference_forward(x, p):
    n, c, t, v = x.shape
    y = jnp.zeros((n, C_OUT, t, v), jnp.float32)
    for i in range(NUM_SUBSET):
        fa = jnp.einsum('oc,nctv->notv', p['wa'][i], x) + p['ba'][i][None, :, None, None]
        fb = jnp.einsum('oc,nctv->notv', p['wb'][i], x) + p['bb'][i][None, :, None, None]
        a1 = jnp.transpose(fa, (0, 3, 1, 2)).reshape(n, v, INTER * t)
        a2 = fb.reshape(n, INTER * t, v)
        att = jnp.tanh(jnp.matmul(a1, a2) / (INTER * t))
        a_eff = p['pa'][i][None] + p['alpha'] * att
        agg = jnp.matmul(x.reshape(n, c * t, v), a_eff).reshape(n, c, t, v)
        z = jnp.einsum('oc,nctv->notv', p['wd'][i], agg) + p['bd'][i][None, :, None, None]
        y = y + z
    scale = p['bn_gamma'] / jnp.sqrt(p['bn_var'] + BN_EPS)
    bias = p['bn_beta'] - p['bn_mean'] * scale
    y = y * scale[None, :, None, None] + bias[None, :, None, None]
    y = jnp.maximum(y + x, 0.0)
    # spatial attention
    se = jnp.mean(y, axis=2)
    logit = lax.conv_general_dilated(se, p['w_sa'][None], (1,), [(PAD_SA, PAD_SA)],
                                     dimension_numbers=('NCH', 'OIH', 'NCH')) + p['b_sa']
    y = y * jax.nn.sigmoid(logit)[:, :, None, :] + y
    # temporal attention
    se = jnp.mean(y, axis=3)
    logit = lax.conv_general_dilated(se, p['w_ta'][None], (1,), [(PAD_TA, PAD_TA)],
                                     dimension_numbers=('NCH', 'OIH', 'NCH')) + p['b_ta']
    y = y * jax.nn.sigmoid(logit)[:, :, :, None] + y
    # channel attention
    se = jnp.mean(jnp.mean(y, axis=3), axis=2)
    h = jnp.maximum(se @ p['w_fc1'].T + p['b_fc1'], 0.0)
    s2 = jax.nn.sigmoid(h @ p['w_fc2'].T + p['b_fc2'])
    y = y * s2[:, :, None, None] + y
    return y


# ----------------------------------- main ----------------------------------------
if __name__ == "__main__":
    key = jax.random.PRNGKey(0)
    kx, kp = jax.random.split(key)
    x = jax.random.normal(kx, (N, C_IN, T, V), jnp.float32)
    params = init_params(kp)

    out = unit_gcn_pallas(x, params)
    out = jax.block_until_ready(out)

    ref = reference_forward(x, params)
    np.testing.assert_allclose(np.asarray(out), np.asarray(ref), rtol=5e-2, atol=5e-2)

    print("KERNEL_OK")
</pallas_src>

<mosaic_0001>
module attributes {stable_mosaic.version = 11 : i64} {
  func.func @unit_gcn_kernel(%arg0: i32, %arg1: memref<1x16x128xf32, #tpu.memory_space<vmem>>, %arg2: memref<3x4x16xf32, #tpu.memory_space<vmem>>, %arg3: memref<3x4x1xf32, #tpu.memory_space<vmem>>, %arg4: memref<3x4x16xf32, #tpu.memory_space<vmem>>, %arg5: memref<3x4x1xf32, #tpu.memory_space<vmem>>, %arg6: memref<3x16x16xf32, #tpu.memory_space<vmem>>, %arg7: memref<3x16x1xf32, #tpu.memory_space<vmem>>, %arg8: memref<3x16x16xf32, #tpu.memory_space<vmem>>, %arg9: memref<16x1xf32, #tpu.memory_space<vmem>>, %arg10: memref<16x1xf32, #tpu.memory_space<vmem>>, %arg11: memref<128x16xf32, #tpu.memory_space<vmem>>, %arg12: memref<16x128xf32, #tpu.memory_space<vmem>>, %arg13: memref<128x8xf32, #tpu.memory_space<vmem>>, %arg14: memref<8x128xf32, #tpu.memory_space<vmem>>, %arg15: memref<128x128xf32, #tpu.memory_space<vmem>>, %arg16: memref<16x15xf32, #tpu.memory_space<vmem>>, %arg17: memref<15x16x16xf32, #tpu.memory_space<vmem>>, %arg18: memref<16x9xf32, #tpu.memory_space<vmem>>, %arg19: memref<9x8x8xf32, #tpu.memory_space<vmem>>, %arg20: memref<8x16xf32, #tpu.memory_space<vmem>>, %arg21: memref<8x1xf32, #tpu.memory_space<vmem>>, %arg22: memref<16x8xf32, #tpu.memory_space<vmem>>, %arg23: memref<16x1xf32, #tpu.memory_space<vmem>>, %arg24: memref<1xf32, #tpu.memory_space<smem>>, %arg25: memref<1xf32, #tpu.memory_space<smem>>, %arg26: memref<1xf32, #tpu.memory_space<smem>>, %arg27: memref<1x16x128xf32, #tpu.memory_space<vmem>>) attributes {dimension_semantics = [#tpu.dimension_semantics<parallel>], iteration_bounds = array<i64: 2>, scalar_prefetch = 0 : i64, scratch_operands = 0 : i64, tpu.core_type = #tpu.core_type<tc>, window_params = [{transform_indices = @transform_0, window_bounds = array<i64: 1, 16, 128>}, {pipeline_mode = #tpu.pipeline_mode<synchronous>, transform_indices = @transform_1, window_bounds = array<i64: 3, 4, 16>}, {pipeline_mode = #tpu.pipeline_mode<synchronous>, transform_indices = @transform_2, window_bounds = array<i64: 3, 4, 1>}, {pipeline_mode = #tpu.pipeline_mode<synchronous>, transform_indices = @transform_3, window_bounds = array<i64: 3, 4, 16>}, {pipeline_mode = #tpu.pipeline_mode<synchronous>, transform_indices = @transform_4, window_bounds = array<i64: 3, 4, 1>}, {pipeline_mode = #tpu.pipeline_mode<synchronous>, transform_indices = @transform_5, window_bounds = array<i64: 3, 16, 16>}, {pipeline_mode = #tpu.pipeline_mode<synchronous>, transform_indices = @transform_6, window_bounds = array<i64: 3, 16, 1>}, {pipeline_mode = #tpu.pipeline_mode<synchronous>, transform_indices = @transform_7, window_bounds = array<i64: 3, 16, 16>}, {pipeline_mode = #tpu.pipeline_mode<synchronous>, transform_indices = @transform_8, window_bounds = array<i64: 16, 1>}, {pipeline_mode = #tpu.pipeline_mode<synchronous>, transform_indices = @transform_9, window_bounds = array<i64: 16, 1>}, {pipeline_mode = #tpu.pipeline_mode<synchronous>, transform_indices = @transform_10, window_bounds = array<i64: 128, 16>}, {pipeline_mode = #tpu.pipeline_mode<synchronous>, transform_indices = @transform_11, window_bounds = array<i64: 16, 128>}, {pipeline_mode = #tpu.pipeline_mode<synchronous>, transform_indices = @transform_12, window_bounds = array<i64: 128, 8>}, {pipeline_mode = #tpu.pipeline_mode<synchronous>, transform_indices = @transform_13, window_bounds = array<i64: 8, 128>}, {pipeline_mode = #tpu.pipeline_mode<synchronous>, transform_indices = @transform_14, window_bounds = array<i64: 128, 128>}, {pipeline_mode = #tpu.pipeline_mode<synchronous>, transform_indices = @transform_15, window_bounds = array<i64: 16, 15>}, {pipeline_mode = #tpu.pipeline_mode<synchronous>, transform_indices = @transform_16, window_bounds = array<i64: 15, 16, 16>}, {pipeline_mode = #tpu.pipeline_mode<synchronous>, transform_indices = @transform_17, window_bounds = array<i64: 16, 9>}, {pipeline_mode = #tpu.pipeline_mode<synchronous>, transform_indices = @transform_18, window_bounds = array<i64: 9, 8, 8>}, {pipeline_mode = #tpu.pipeline_mode<synchronous>, transform_indices = @transform_19, window_bounds = array<i64: 8, 16>}, {pipeline_mode = #tpu.pipeline_mode<synchronous>, transform_indices = @transform_20, window_bounds = array<i64: 8, 1>}, {pipeline_mode = #tpu.pipeline_mode<synchronous>, transform_indices = @transform_21, window_bounds = array<i64: 16, 8>}, {pipeline_mode = #tpu.pipeline_mode<synchronous>, transform_indices = @transform_22, window_bounds = array<i64: 16, 1>}, {transform_indices = @transform_23, window_bounds = array<i64: 1>}, {transform_indices = @transform_24, window_bounds = array<i64: 1>}, {transform_indices = @transform_25, window_bounds = array<i64: 1>}, {transform_indices = @transform_26, window_bounds = array<i64: 1, 16, 128>}]} {
    %c0 = arith.constant 0 : index
    %c0_0 = arith.constant 0 : index
    %c0_1 = arith.constant 0 : index
    %0 = vector.load %arg1[%c0, %c0_0, %c0_1] : memref<1x16x128xf32, #tpu.memory_space<vmem>>, vector<1x16x128xf32>
    %1 = vector.shape_cast %0 : vector<1x16x128xf32> to vector<16x128xf32>
    %c0_2 = arith.constant 0 : index
    %2 = memref.load %arg24[%c0_2] : memref<1xf32, #tpu.memory_space<smem>>
    %c0_3 = arith.constant 0 : index
    %c0_4 = arith.constant 0 : index
    %3 = vector.load %arg11[%c0_3, %c0_4] : memref<128x16xf32, #tpu.memory_space<vmem>>, vector<128x16xf32>
    %c0_5 = arith.constant 0 : index
    %c0_6 = arith.constant 0 : index
    %4 = vector.load %arg12[%c0_5, %c0_6] : memref<16x128xf32, #tpu.memory_space<vmem>>, vector<16x128xf32>
    %c0_7 = arith.constant 0 : index
    %c0_8 = arith.constant 0 : index
    %5 = vector.load %arg15[%c0_7, %c0_8] : memref<128x128xf32, #tpu.memory_space<vmem>>, vector<128x128xf32>
    %cst = arith.constant 0.000000e+00 : f32
    %6 = vector.broadcast %cst : f32 to vector<16x128xf32>
    %c0_9 = arith.constant 0 : index
    %c0_10 = arith.constant 0 : index
    %c0_11 = arith.constant 0 : index
    %7 = vector.load %arg2[%c0_9, %c0_10, %c0_11] : memref<3x4x16xf32, #tpu.memory_space<vmem>>, vector<1x4x16xf32>
    %8 = vector.shape_cast %7 : vector<1x4x16xf32> to vector<4x16xf32>
    %cst_12 = arith.constant dense<0.000000e+00> : vector<4x128xf32>
    %9 = tpu.matmul %8, %1, %cst_12 {dimension_numbers = #tpu.dot_dimension_numbers<[1], [0], [0], [1], [0, 0, 1, 1], [], []>} : vector<4x16xf32>, vector<16x128xf32>, vector<4x128xf32> -> vector<4x128xf32>
    %c0_13 = arith.constant 0 : index
    %c0_14 = arith.constant 0 : index
    %c0_15 = arith.constant 0 : index
    %10 = vector.load %arg3[%c0_13, %c0_14, %c0_15] : memref<3x4x1xf32, #tpu.memory_space<vmem>>, vector<1x4x1xf32>
    %11 = vector.shape_cast %10 : vector<1x4x1xf32> to vector<4x1xf32>
    %12 = vector.broadcast %11 : vector<4x1xf32> to vector<4x128xf32>
    %13 = arith.addf %9, %12 : vector<4x128xf32>
    %c0_16 = arith.constant 0 : index
    %c0_17 = arith.constant 0 : index
    %c0_18 = arith.constant 0 : index
    %14 = vector.load %arg4[%c0_16, %c0_17, %c0_18] : memref<3x4x16xf32, #tpu.memory_space<vmem>>, vector<1x4x16xf32>
    %15 = vector.shape_cast %14 : vector<1x4x16xf32> to vector<4x16xf32>
    %cst_19 = arith.constant dense<0.000000e+00> : vector<4x128xf32>
    %16 = tpu.matmul %15, %1, %cst_19 {dimension_numbers = #tpu.dot_dimension_numbers<[1], [0], [0], [1], [0, 0, 1, 1], [], []>} : vector<4x16xf32>, vector<16x128xf32>, vector<4x128xf32> -> vector<4x128xf32>
    %c0_20 = arith.constant 0 : index
    %c0_21 = arith.constant 0 : index
    %c0_22 = arith.constant 0 : index
    %17 = vector.load %arg5[%c0_20, %c0_21, %c0_22] : memref<3x4x1xf32, #tpu.memory_space<vmem>>, vector<1x4x1xf32>
    %18 = vector.shape_cast %17 : vector<1x4x1xf32> to vector<4x1xf32>
    %19 = vector.broadcast %18 : vector<4x1xf32> to vector<4x128xf32>
    %20 = arith.addf %16, %19 : vector<4x128xf32>
    %cst_23 = arith.constant dense<0.000000e+00> : vector<128x128xf32>
    %21 = tpu.matmul %13, %20, %cst_23 {dimension_numbers = #tpu.dot_dimension_numbers<[0], [0], [1], [1], [0, 1, 1, 1], [], []>} : vector<4x128xf32>, vector<4x128xf32>, vector<128x128xf32> -> vector<128x128xf32>
    %22 = arith.mulf %21, %5 : vector<128x128xf32>
    %cst_24 = arith.constant dense<0.000000e+00> : vector<16x128xf32>
    %23 = tpu.matmul %4, %22, %cst_24 {dimension_numbers = #tpu.dot_dimension_numbers<[1], [0], [0], [1], [0, 0, 1, 1], [], []>} : vector<16x128xf32>, vector<128x128xf32>, vector<16x128xf32> -> vector<16x128xf32>
    %cst_25 = arith.constant dense<0.000000e+00> : vector<16x16xf32>
    %24 = tpu.matmul %23, %3, %cst_25 {dimension_numbers = #tpu.dot_dimension_numbers<[1], [0], [0], [1], [0, 0, 1, 1], [], []>} : vector<16x128xf32>, vector<128x16xf32>, vector<16x16xf32> -> vector<16x16xf32>
    %c0_26 = arith.constant 0 : index
    %c0_27 = arith.constant 0 : index
    %c0_28 = arith.constant 0 : index
    %25 = vector.load %arg8[%c0_26, %c0_27, %c0_28] : memref<3x16x16xf32, #tpu.memory_space<vmem>>, vector<1x16x16xf32>
    %26 = vector.shape_cast %25 : vector<1x16x16xf32> to vector<16x16xf32>
    %cst_29 = arith.constant 3.125000e-02 : f32
    %27 = vector.broadcast %cst_29 : f32 to vector<16x16xf32>
    %28 = arith.mulf %24, %27 : vector<16x16xf32>
    %29 = math.tanh %28 : vector<16x16xf32>
    %30 = vector.broadcast %2 : f32 to vector<16x16xf32>
    %31 = arith.mulf %30, %29 : vector<16x16xf32>
    %32 = arith.addf %26, %31 : vector<16x16xf32>
    %cst_30 = arith.constant dense<0.000000e+00> : vector<128x16xf32>
    %33 = tpu.matmul %3, %32, %cst_30 {dimension_numbers = #tpu.dot_dimension_numbers<[1], [0], [0], [1], [0, 0, 1, 1], [], []>} : vector<128x16xf32>, vector<16x16xf32>, vector<128x16xf32> -> vector<128x16xf32>
    %cst_31 = arith.constant dense<0.000000e+00> : vector<128x128xf32>
    %34 = tpu.matmul %33, %4, %cst_31 {dimension_numbers = #tpu.dot_dimension_numbers<[1], [0], [0], [1], [0, 0, 1, 1], [], []>} : vector<128x16xf32>, vector<16x128xf32>, vector<128x128xf32> -> vector<128x128xf32>
    %35 = arith.mulf %34, %5 : vector<128x128xf32>
    %cst_32 = arith.constant dense<0.000000e+00> : vector<16x128xf32>
    %36 = tpu.matmul %1, %35, %cst_32 {dimension_numbers = #tpu.dot_dimension_numbers<[1], [0], [0], [1], [0, 0, 1, 1], [], []>} : vector<16x128xf32>, vector<128x128xf32>, vector<16x128xf32> -> vector<16x128xf32>
    %c0_33 = arith.constant 0 : index
    %c0_34 = arith.constant 0 : index
    %c0_35 = arith.constant 0 : index
    %37 = vector.load %arg6[%c0_33, %c0_34, %c0_35] : memref<3x16x16xf32, #tpu.memory_space<vmem>>, vector<1x16x16xf32>
    %38 = vector.shape_cast %37 : vector<1x16x16xf32> to vector<16x16xf32>
    %cst_36 = arith.constant dense<0.000000e+00> : vector<16x128xf32>
    %39 = tpu.matmul %38, %36, %cst_36 {dimension_numbers = #tpu.dot_dimension_numbers<[1], [0], [0], [1], [0, 0, 1, 1], [], []>} : vector<16x16xf32>, vector<16x128xf32>, vector<16x128xf32> -> vector<16x128xf32>
    %40 = arith.addf %6, %39 : vector<16x128xf32>
    %c0_37 = arith.constant 0 : index
    %c0_38 = arith.constant 0 : index
    %c0_39 = arith.constant 0 : index
    %41 = vector.load %arg7[%c0_37, %c0_38, %c0_39] : memref<3x16x1xf32, #tpu.memory_space<vmem>>, vector<1x16x1xf32>
    %42 = vector.shape_cast %41 : vector<1x16x1xf32> to vector<16x1xf32>
    %43 = vector.broadcast %42 : vector<16x1xf32> to vector<16x128xf32>
    %44 = arith.addf %40, %43 : vector<16x128xf32>
    %c1 = arith.constant 1 : index
    %c0_40 = arith.constant 0 : index
    %c0_41 = arith.constant 0 : index
    %45 = vector.load %arg2[%c1, %c0_40, %c0_41] : memref<3x4x16xf32, #tpu.memory_space<vmem>>, vector<1x4x16xf32>
    %46 = vector.shape_cast %45 : vector<1x4x16xf32> to vector<4x16xf32>
    %cst_42 = arith.constant dense<0.000000e+00> : vector<4x128xf32>
    %47 = tpu.matmul %46, %1, %cst_42 {dimension_numbers = #tpu.dot_dimension_numbers<[1], [0], [0], [1], [0, 0, 1, 1], [], []>} : vector<4x16xf32>, vector<16x128xf32>, vector<4x128xf32> -> vector<4x128xf32>
    %c1_43 = arith.constant 1 : index
    %c0_44 = arith.constant 0 : index
    %c0_45 = arith.constant 0 : index
    %48 = vector.load %arg3[%c1_43, %c0_44, %c0_45] : memref<3x4x1xf32, #tpu.memory_space<vmem>>, vector<1x4x1xf32>
    %49 = vector.shape_cast %48 : vector<1x4x1xf32> to vector<4x1xf32>
    %50 = vector.broadcast %49 : vector<4x1xf32> to vector<4x128xf32>
    %51 = arith.addf %47, %50 : vector<4x128xf32>
    %c1_46 = arith.constant 1 : index
    %c0_47 = arith.constant 0 : index
    %c0_48 = arith.constant 0 : index
    %52 = vector.load %arg4[%c1_46, %c0_47, %c0_48] : memref<3x4x16xf32, #tpu.memory_space<vmem>>, vector<1x4x16xf32>
    %53 = vector.shape_cast %52 : vector<1x4x16xf32> to vector<4x16xf32>
    %cst_49 = arith.constant dense<0.000000e+00> : vector<4x128xf32>
    %54 = tpu.matmul %53, %1, %cst_49 {dimension_numbers = #tpu.dot_dimension_numbers<[1], [0], [0], [1], [0, 0, 1, 1], [], []>} : vector<4x16xf32>, vector<16x128xf32>, vector<4x128xf32> -> vector<4x128xf32>
    %c1_50 = arith.constant 1 : index
    %c0_51 = arith.constant 0 : index
    %c0_52 = arith.constant 0 : index
    %55 = vector.load %arg5[%c1_50, %c0_51, %c0_52] : memref<3x4x1xf32, #tpu.memory_space<vmem>>, vector<1x4x1xf32>
    %56 = vector.shape_cast %55 : vector<1x4x1xf32> to vector<4x1xf32>
    %57 = vector.broadcast %56 : vector<4x1xf32> to vector<4x128xf32>
    %58 = arith.addf %54, %57 : vector<4x128xf32>
    %cst_53 = arith.constant dense<0.000000e+00> : vector<128x128xf32>
    %59 = tpu.matmul %51, %58, %cst_53 {dimension_numbers = #tpu.dot_dimension_numbers<[0], [0], [1], [1], [0, 1, 1, 1], [], []>} : vector<4x128xf32>, vector<4x128xf32>, vector<128x128xf32> -> vector<128x128xf32>
    %60 = arith.mulf %59, %5 : vector<128x128xf32>
    %cst_54 = arith.constant dense<0.000000e+00> : vector<16x128xf32>
    %61 = tpu.matmul %4, %60, %cst_54 {dimension_numbers = #tpu.dot_dimension_numbers<[1], [0], [0], [1], [0, 0, 1, 1], [], []>} : vector<16x128xf32>, vector<128x128xf32>, vector<16x128xf32> -> vector<16x128xf32>
    %cst_55 = arith.constant dense<0.000000e+00> : vector<16x16xf32>
    %62 = tpu.matmul %61, %3, %cst_55 {dimension_numbers = #tpu.dot_dimension_numbers<[1], [0], [0], [1], [0, 0, 1, 1], [], []>} : vector<16x128xf32>, vector<128x16xf32>, vector<16x16xf32> -> vector<16x16xf32>
    %c1_56 = arith.constant 1 : index
    %c0_57 = arith.constant 0 : index
    %c0_58 = arith.constant 0 : index
    %63 = vector.load %arg8[%c1_56, %c0_57, %c0_58] : memref<3x16x16xf32, #tpu.memory_space<vmem>>, vector<1x16x16xf32>
    %64 = vector.shape_cast %63 : vector<1x16x16xf32> to vector<16x16xf32>
    %cst_59 = arith.constant 3.125000e-02 : f32
    %65 = vector.broadcast %cst_59 : f32 to vector<16x16xf32>
    %66 = arith.mulf %62, %65 : vector<16x16xf32>
    %67 = math.tanh %66 : vector<16x16xf32>
    %68 = vector.broadcast %2 : f32 to vector<16x16xf32>
    %69 = arith.mulf %68, %67 : vector<16x16xf32>
    %70 = arith.addf %64, %69 : vector<16x16xf32>
    %cst_60 = arith.constant dense<0.000000e+00> : vector<128x16xf32>
    %71 = tpu.matmul %3, %70, %cst_60 {dimension_numbers = #tpu.dot_dimension_numbers<[1], [0], [0], [1], [0, 0, 1, 1], [], []>} : vector<128x16xf32>, vector<16x16xf32>, vector<128x16xf32> -> vector<128x16xf32>
    %cst_61 = arith.constant dense<0.000000e+00> : vector<128x128xf32>
    %72 = tpu.matmul %71, %4, %cst_61 {dimension_numbers = #tpu.dot_dimension_numbers<[1], [0], [0], [1], [0, 0, 1, 1], [], []>} : vector<128x16xf32>, vector<16x128xf32>, vector<128x128xf32> -> vector<128x128xf32>
    %73 = arith.mulf %72, %5 : vector<128x128xf32>
    %cst_62 = arith.constant dense<0.000000e+00> : vector<16x128xf32>
    %74 = tpu.matmul %1, %73, %cst_62 {dimension_numbers = #tpu.dot_dimension_numbers<[1], [0], [0], [1], [0, 0, 1, 1], [], []>} : vector<16x128xf32>, vector<128x128xf32>, vector<16x128xf32> -> vector<16x128xf32>
    %c1_63 = arith.constant 1 : index
    %c0_64 = arith.constant 0 : index
    %c0_65 = arith.constant 0 : index
    %75 = vector.load %arg6[%c1_63, %c0_64, %c0_65] : memref<3x16x16xf32, #tpu.memory_space<vmem>>, vector<1x16x16xf32>
    %76 = vector.shape_cast %75 : vector<1x16x16xf32> to vector<16x16xf32>
    %cst_66 = arith.constant dense<0.000000e+00> : vector<16x128xf32>
    %77 = tpu.matmul %76, %74, %cst_66 {dimension_numbers = #tpu.dot_dimension_numbers<[1], [0], [0], [1], [0, 0, 1, 1], [], []>} : vector<16x16xf32>, vector<16x128xf32>, vector<16x128xf32> -> vector<16x128xf32>
    %78 = arith.addf %44, %77 : vector<16x128xf32>
    %c1_67 = arith.constant 1 : index
    %c0_68 = arith.constant 0 : index
    %c0_69 = arith.constant 0 : index
    %79 = vector.load %arg7[%c1_67, %c0_68, %c0_69] : memref<3x16x1xf32, #tpu.memory_space<vmem>>, vector<1x16x1xf32>
    %80 = vector.shape_cast %79 : vector<1x16x1xf32> to vector<16x1xf32>
    %81 = vector.broadcast %80 : vector<16x1xf32> to vector<16x128xf32>
    %82 = arith.addf %78, %81 : vector<16x128xf32>
    %c2 = arith.constant 2 : index
    %c0_70 = arith.constant 0 : index
    %c0_71 = arith.constant 0 : index
    %83 = vector.load %arg2[%c2, %c0_70, %c0_71] : memref<3x4x16xf32, #tpu.memory_space<vmem>>, vector<1x4x16xf32>
    %84 = vector.shape_cast %83 : vector<1x4x16xf32> to vector<4x16xf32>
    %cst_72 = arith.constant dense<0.000000e+00> : vector<4x128xf32>
    %85 = tpu.matmul %84, %1, %cst_72 {dimension_numbers = #tpu.dot_dimension_numbers<[1], [0], [0], [1], [0, 0, 1, 1], [], []>} : vector<4x16xf32>, vector<16x128xf32>, vector<4x128xf32> -> vector<4x128xf32>
    %c2_73 = arith.constant 2 : index
    %c0_74 = arith.constant 0 : index
    %c0_75 = arith.constant 0 : index
    %86 = vector.load %arg3[%c2_73, %c0_74, %c0_75] : memref<3x4x1xf32, #tpu.memory_space<vmem>>, vector<1x4x1xf32>
    %87 = vector.shape_cast %86 : vector<1x4x1xf32> to vector<4x1xf32>
    %88 = vector.broadcast %87 : vector<4x1xf32> to vector<4x128xf32>
    %89 = arith.addf %85, %88 : vector<4x128xf32>
    %c2_76 = arith.constant 2 : index
    %c0_77 = arith.constant 0 : index
    %c0_78 = arith.constant 0 : index
    %90 = vector.load %arg4[%c2_76, %c0_77, %c0_78] : memref<3x4x16xf32, #tpu.memory_space<vmem>>, vector<1x4x16xf32>
    %91 = vector.shape_cast %90 : vector<1x4x16xf32> to vector<4x16xf32>
    %cst_79 = arith.constant dense<0.000000e+00> : vector<4x128xf32>
    %92 = tpu.matmul %91, %1, %cst_79 {dimension_numbers = #tpu.dot_dimension_numbers<[1], [0], [0], [1], [0, 0, 1, 1], [], []>} : vector<4x16xf32>, vector<16x128xf32>, vector<4x128xf32> -> vector<4x128xf32>
    %c2_80 = arith.constant 2 : index
    %c0_81 = arith.constant 0 : index
    %c0_82 = arith.constant 0 : index
    %93 = vector.load %arg5[%c2_80, %c0_81, %c0_82] : memref<3x4x1xf32, #tpu.memory_space<vmem>>, vector<1x4x1xf32>
    %94 = vector.shape_cast %93 : vector<1x4x1xf32> to vector<4x1xf32>
    %95 = vector.broadcast %94 : vector<4x1xf32> to vector<4x128xf32>
    %96 = arith.addf %92, %95 : vector<4x128xf32>
    %cst_83 = arith.constant dense<0.000000e+00> : vector<128x128xf32>
    %97 = tpu.matmul %89, %96, %cst_83 {dimension_numbers = #tpu.dot_dimension_numbers<[0], [0], [1], [1], [0, 1, 1, 1], [], []>} : vector<4x128xf32>, vector<4x128xf32>, vector<128x128xf32> -> vector<128x128xf32>
    %98 = arith.mulf %97, %5 : vector<128x128xf32>
    %cst_84 = arith.constant dense<0.000000e+00> : vector<16x128xf32>
    %99 = tpu.matmul %4, %98, %cst_84 {dimension_numbers = #tpu.dot_dimension_numbers<[1], [0], [0], [1], [0, 0, 1, 1], [], []>} : vector<16x128xf32>, vector<128x128xf32>, vector<16x128xf32> -> vector<16x128xf32>
    %cst_85 = arith.constant dense<0.000000e+00> : vector<16x16xf32>
    %100 = tpu.matmul %99, %3, %cst_85 {dimension_numbers = #tpu.dot_dimension_numbers<[1], [0], [0], [1], [0, 0, 1, 1], [], []>} : vector<16x128xf32>, vector<128x16xf32>, vector<16x16xf32> -> vector<16x16xf32>
    %c2_86 = arith.constant 2 : index
    %c0_87 = arith.constant 0 : index
    %c0_88 = arith.constant 0 : index
    %101 = vector.load %arg8[%c2_86, %c0_87, %c0_88] : memref<3x16x16xf32, #tpu.memory_space<vmem>>, vector<1x16x16xf32>
    %102 = vector.shape_cast %101 : vector<1x16x16xf32> to vector<16x16xf32>
    %cst_89 = arith.constant 3.125000e-02 : f32
    %103 = vector.broadcast %cst_89 : f32 to vector<16x16xf32>
    %104 = arith.mulf %100, %103 : vector<16x16xf32>
    %105 = math.tanh %104 : vector<16x16xf32>
    %106 = vector.broadcast %2 : f32 to vector<16x16xf32>
    %107 = arith.mulf %106, %105 : vector<16x16xf32>
    %108 = arith.addf %102, %107 : vector<16x16xf32>
    %cst_90 = arith.constant dense<0.000000e+00> : vector<128x16xf32>
    %109 = tpu.matmul %3, %108, %cst_90 {dimension_numbers = #tpu.dot_dimension_numbers<[1], [0], [0], [1], [0, 0, 1, 1], [], []>} : vector<128x16xf32>, vector<16x16xf32>, vector<128x16xf32> -> vector<128x16xf32>
    %cst_91 = arith.constant dense<0.000000e+00> : vector<128x128xf32>
    %110 = tpu.matmul %109, %4, %cst_91 {dimension_numbers = #tpu.dot_dimension_numbers<[1], [0], [0], [1], [0, 0, 1, 1], [], []>} : vector<128x16xf32>, vector<16x128xf32>, vector<128x128xf32> -> vector<128x128xf32>
    %111 = arith.mulf %110, %5 : vector<128x128xf32>
    %cst_92 = arith.constant dense<0.000000e+00> : vector<16x128xf32>
    %112 = tpu.matmul %1, %111, %cst_92 {dimension_numbers = #tpu.dot_dimension_numbers<[1], [0], [0], [1], [0, 0, 1, 1], [], []>} : vector<16x128xf32>, vector<128x128xf32>, vector<16x128xf32> -> vector<16x128xf32>
    %c2_93 = arith.constant 2 : index
    %c0_94 = arith.constant 0 : index
    %c0_95 = arith.constant 0 : index
    %113 = vector.load %arg6[%c2_93, %c0_94, %c0_95] : memref<3x16x16xf32, #tpu.memory_space<vmem>>, vector<1x16x16xf32>
    %114 = vector.shape_cast %113 : vector<1x16x16xf32> to vector<16x16xf32>
    %cst_96 = arith.constant dense<0.000000e+00> : vector<16x128xf32>
    %115 = tpu.matmul %114, %112, %cst_96 {dimension_numbers = #tpu.dot_dimension_numbers<[1], [0], [0], [1], [0, 0, 1, 1], [], []>} : vector<16x16xf32>, vector<16x128xf32>, vector<16x128xf32> -> vector<16x128xf32>
    %116 = arith.addf %82, %115 : vector<16x128xf32>
    %c2_97 = arith.constant 2 : index
    %c0_98 = arith.constant 0 : index
    %c0_99 = arith.constant 0 : index
    %117 = vector.load %arg7[%c2_97, %c0_98, %c0_99] : memref<3x16x1xf32, #tpu.memory_space<vmem>>, vector<1x16x1xf32>
    %118 = vector.shape_cast %117 : vector<1x16x1xf32> to vector<16x1xf32>
    %119 = vector.broadcast %118 : vector<16x1xf32> to vector<16x128xf32>
    %120 = arith.addf %116, %119 : vector<16x128xf32>
    %c0_100 = arith.constant 0 : index
    %c0_101 = arith.constant 0 : index
    %121 = vector.load %arg9[%c0_100, %c0_101] : memref<16x1xf32, #tpu.memory_space<vmem>>, vector<16x1xf32>
    %122 = vector.broadcast %121 : vector<16x1xf32> to vector<16x128xf32>
    %123 = arith.mulf %120, %122 : vector<16x128xf32>
    %c0_102 = arith.constant 0 : index
    %c0_103 = arith.constant 0 : index
    %124 = vector.load %arg10[%c0_102, %c0_103] : memref<16x1xf32, #tpu.memory_space<vmem>>, vector<16x1xf32>
    %125 = vector.broadcast %124 : vector<16x1xf32> to vector<16x128xf32>
    %126 = arith.addf %123, %125 : vector<16x128xf32>
    %127 = arith.addf %126, %1 : vector<16x128xf32>
    %cst_104 = arith.constant 0.000000e+00 : f32
    %128 = vector.broadcast %cst_104 : f32 to vector<16x128xf32>
    %129 = arith.maximumf %127, %128 : vector<16x128xf32>
    %cst_105 = arith.constant dense<0.000000e+00> : vector<16x16xf32>
    %130 = tpu.matmul %129, %3, %cst_105 {dimension_numbers = #tpu.dot_dimension_numbers<[1], [0], [0], [1], [0, 0, 1, 1], [], []>} : vector<16x128xf32>, vector<128x16xf32>, vector<16x16xf32> -> vector<16x16xf32>
    %cst_106 = arith.constant 1.250000e-01 : f32
    %131 = vector.broadcast %cst_106 : f32 to vector<16x16xf32>
    %132 = arith.mulf %130, %131 : vector<16x16xf32>
    %c0_107 = arith.constant 0 : index
    %c0_108 = arith.constant 0 : index
    %133 = vector.load %arg16[%c0_107, %c0_108] : memref<16x15xf32, #tpu.memory_space<vmem>>, vector<16x15xf32>
    %cst_109 = arith.constant dense<0.000000e+00> : vector<15x16xf32>
    %134 = tpu.matmul %133, %132, %cst_109 {dimension_numbers = #tpu.dot_dimension_numbers<[0], [0], [1], [1], [0, 1, 1, 1], [], []>} : vector<16x15xf32>, vector<16x16xf32>, vector<15x16xf32> -> vector<15x16xf32>
    %cst_110 = arith.constant 0.000000e+00 : f32
    %135 = vector.broadcast %cst_110 : f32 to vector<1x16xf32>
    %136 = vector.extract_strided_slice %134 {offsets = [0, 0], sizes = [1, 16], strides = [1, 1]} : vector<15x16xf32> to vector<1x16xf32>
    %c0_111 = arith.constant 0 : index
    %c0_112 = arith.constant 0 : index
    %c0_113 = arith.constant 0 : index
    %137 = vector.load %arg17[%c0_111, %c0_112, %c0_113] : memref<15x16x16xf32, #tpu.memory_space<vmem>>, vector<1x16x16xf32>
    %138 = vector.shape_cast %137 : vector<1x16x16xf32> to vector<16x16xf32>
    %cst_114 = arith.constant dense<0.000000e+00> : vector<1x16xf32>
    %139 = tpu.matmul %136, %138, %cst_114 {dimension_numbers = #tpu.dot_dimension_numbers<[1], [0], [0], [1], [0, 0, 1, 1], [], []>} : vector<1x16xf32>, vector<16x16xf32>, vector<1x16xf32> -> vector<1x16xf32>
    %140 = arith.addf %135, %139 : vector<1x16xf32>
    %141 = vector.extract_strided_slice %134 {offsets = [1, 0], sizes = [1, 16], strides = [1, 1]} : vector<15x16xf32> to vector<1x16xf32>
    %c1_115 = arith.constant 1 : index
    %c0_116 = arith.constant 0 : index
    %c0_117 = arith.constant 0 : index
    %142 = vector.load %arg17[%c1_115, %c0_116, %c0_117] : memref<15x16x16xf32, #tpu.memory_space<vmem>>, vector<1x16x16xf32>
    %143 = vector.shape_cast %142 : vector<1x16x16xf32> to vector<16x16xf32>
    %cst_118 = arith.constant dense<0.000000e+00> : vector<1x16xf32>
    %144 = tpu.matmul %141, %143, %cst_118 {dimension_numbers = #tpu.dot_dimension_numbers<[1], [0], [0], [1], [0, 0, 1, 1], [], []>} : vector<1x16xf32>, vector<16x16xf32>, vector<1x16xf32> -> vector<1x16xf32>
    %145 = arith.addf %140, %144 : vector<1x16xf32>
    %146 = vector.extract_strided_slice %134 {offsets = [2, 0], sizes = [1, 16], strides = [1, 1]} : vector<15x16xf32> to vector<1x16xf32>
    %c2_119 = arith.constant 2 : index
    %c0_120 = arith.constant 0 : index
    %c0_121 = arith.constant 0 : index
    %147 = vector.load %arg17[%c2_119, %c0_120, %c0_121] : memref<15x16x16xf32, #tpu.memory_space<vmem>>, vector<1x16x16xf32>
    %148 = vector.shape_cast %147 : vector<1x16x16xf32> to vector<16x16xf32>
    %cst_122 = arith.constant dense<0.000000e+00> : vector<1x16xf32>
    %149 = tpu.matmul %146, %148, %cst_122 {dimension_numbers = #tpu.dot_dimension_numbers<[1], [0], [0], [1], [0, 0, 1, 1], [], []>} : vector<1x16xf32>, vector<16x16xf32>, vector<1x16xf32> -> vector<1x16xf32>
    %150 = arith.addf %145, %149 : vector<1x16xf32>
    %151 = vector.extract_strided_slice %134 {offsets = [3, 0], sizes = [1, 16], strides = [1, 1]} : vector<15x16xf32> to vector<1x16xf32>
    %c3 = arith.constant 3 : index
    %c0_123 = arith.constant 0 : index
    %c0_124 = arith.constant 0 : index
    %152 = vector.load %arg17[%c3, %c0_123, %c0_124] : memref<15x16x16xf32, #tpu.memory_space<vmem>>, vector<1x16x16xf32>
    %153 = vector.shape_cast %152 : vector<1x16x16xf32> to vector<16x16xf32>
    %cst_125 = arith.constant dense<0.000000e+00> : vector<1x16xf32>
    %154 = tpu.matmul %151, %153, %cst_125 {dimension_numbers = #tpu.dot_dimension_numbers<[1], [0], [0], [1], [0, 0, 1, 1], [], []>} : vector<1x16xf32>, vector<16x16xf32>, vector<1x16xf32> -> vector<1x16xf32>
    %155 = arith.addf %150, %154 : vector<1x16xf32>
    %156 = vector.extract_strided_slice %134 {offsets = [4, 0], sizes = [1, 16], strides = [1, 1]} : vector<15x16xf32> to vector<1x16xf32>
    %c4 = arith.constant 4 : index
    %c0_126 = arith.constant 0 : index
    %c0_127 = arith.constant 0 : index
    %157 = vector.load %arg17[%c4, %c0_126, %c0_127] : memref<15x16x16xf32, #tpu.memory_space<vmem>>, vector<1x16x16xf32>
    %158 = vector.shape_cast %157 : vector<1x16x16xf32> to vector<16x16xf32>
    %cst_128 = arith.constant dense<0.000000e+00> : vector<1x16xf32>
    %159 = tpu.matmul %156, %158, %cst_128 {dimension_numbers = #tpu.dot_dimension_numbers<[1], [0], [0], [1], [0, 0, 1, 1], [], []>} : vector<1x16xf32>, vector<16x16xf32>, vector<1x16xf32> -> vector<1x16xf32>
    %160 = arith.addf %155, %159 : vector<1x16xf32>
    %161 = vector.extract_strided_slice %134 {offsets = [5, 0], sizes = [1, 16], strides = [1, 1]} : vector<15x16xf32> to vector<1x16xf32>
    %c5 = arith.constant 5 : index
    %c0_129 = arith.constant 0 : index
    %c0_130 = arith.constant 0 : index
    %162 = vector.load %arg17[%c5, %c0_129, %c0_130] : memref<15x16x16xf32, #tpu.memory_space<vmem>>, vector<1x16x16xf32>
    %163 = vector.shape_cast %162 : vector<1x16x16xf32> to vector<16x16xf32>
    %cst_131 = arith.constant dense<0.000000e+00> : vector<1x16xf32>
    %164 = tpu.matmul %161, %163, %cst_131 {dimension_numbers = #tpu.dot_dimension_numbers<[1], [0], [0], [1], [0, 0, 1, 1], [], []>} : vector<1x16xf32>, vector<16x16xf32>, vector<1x16xf32> -> vector<1x16xf32>
    %165 = arith.addf %160, %164 : vector<1x16xf32>
    %166 = vector.extract_strided_slice %134 {offsets = [6, 0], sizes = [1, 16], strides = [1, 1]} : vector<15x16xf32> to vector<1x16xf32>
    %c6 = arith.constant 6 : index
    %c0_132 = arith.constant 0 : index
    %c0_133 = arith.constant 0 : index
    %167 = vector.load %arg17[%c6, %c0_132, %c0_133] : memref<15x16x16xf32, #tpu.memory_space<vmem>>, vector<1x16x16xf32>
    %168 = vector.shape_cast %167 : vector<1x16x16xf32> to vector<16x16xf32>
    %cst_134 = arith.constant dense<0.000000e+00> : vector<1x16xf32>
    %169 = tpu.matmul %166, %168, %cst_134 {dimension_numbers = #tpu.dot_dimension_numbers<[1], [0], [0], [1], [0, 0, 1, 1], [], []>} : vector<1x16xf32>, vector<16x16xf32>, vector<1x16xf32> -> vector<1x16xf32>
    %170 = arith.addf %165, %169 : vector<1x16xf32>
    %171 = vector.extract_strided_slice %134 {offsets = [7, 0], sizes = [1, 16], strides = [1, 1]} : vector<15x16xf32> to vector<1x16xf32>
    %c7 = arith.constant 7 : index
    %c0_135 = arith.constant 0 : index
    %c0_136 = arith.constant 0 : index
    %172 = vector.load %arg17[%c7, %c0_135, %c0_136] : memref<15x16x16xf32, #tpu.memory_space<vmem>>, vector<1x16x16xf32>
    %173 = vector.shape_cast %172 : vector<1x16x16xf32> to vector<16x16xf32>
    %cst_137 = arith.constant dense<0.000000e+00> : vector<1x16xf32>
    %174 = tpu.matmul %171, %173, %cst_137 {dimension_numbers = #tpu.dot_dimension_numbers<[1], [0], [0], [1], [0, 0, 1, 1], [], []>} : vector<1x16xf32>, vector<16x16xf32>, vector<1x16xf32> -> vector<1x16xf32>
    %175 = arith.addf %170, %174 : vector<1x16xf32>
    %176 = vector.extract_strided_slice %134 {offsets = [8, 0], sizes = [1, 16], strides = [1, 1]} : vector<15x16xf32> to vector<1x16xf32>
    %c8 = arith.constant 8 : index
    %c0_138 = arith.constant 0 : index
    %c0_139 = arith.constant 0 : index
    %177 = vector.load %arg17[%c8, %c0_138, %c0_139] : memref<15x16x16xf32, #tpu.memory_space<vmem>>, vector<1x16x16xf32>
    %178 = vector.shape_cast %177 : vector<1x16x16xf32> to vector<16x16xf32>
    %cst_140 = arith.constant dense<0.000000e+00> : vector<1x16xf32>
    %179 = tpu.matmul %176, %178, %cst_140 {dimension_numbers = #tpu.dot_dimension_numbers<[1], [0], [0], [1], [0, 0, 1, 1], [], []>} : vector<1x16xf32>, vector<16x16xf32>, vector<1x16xf32> -> vector<1x16xf32>
    %180 = arith.addf %175, %179 : vector<1x16xf32>
    %181 = vector.extract_strided_slice %134 {offsets = [9, 0], sizes = [1, 16], strides = [1, 1]} : vector<15x16xf32> to vector<1x16xf32>
    %c9 = arith.constant 9 : index
    %c0_141 = arith.constant 0 : index
    %c0_142 = arith.constant 0 : index
    %182 = vector.load %arg17[%c9, %c0_141, %c0_142] : memref<15x16x16xf32, #tpu.memory_space<vmem>>, vector<1x16x16xf32>
    %183 = vector.shape_cast %182 : vector<1x16x16xf32> to vector<16x16xf32>
    %cst_143 = arith.constant dense<0.000000e+00> : vector<1x16xf32>
    %184 = tpu.matmul %181, %183, %cst_143 {dimension_numbers = #tpu.dot_dimension_numbers<[1], [0], [0], [1], [0, 0, 1, 1], [], []>} : vector<1x16xf32>, vector<16x16xf32>, vector<1x16xf32> -> vector<1x16xf32>
    %185 = arith.addf %180, %184 : vector<1x16xf32>
    %186 = vector.extract_strided_slice %134 {offsets = [10, 0], sizes = [1, 16], strides = [1, 1]} : vector<15x16xf32> to vector<1x16xf32>
    %c10 = arith.constant 10 : index
    %c0_144 = arith.constant 0 : index
    %c0_145 = arith.constant 0 : index
    %187 = vector.load %arg17[%c10, %c0_144, %c0_145] : memref<15x16x16xf32, #tpu.memory_space<vmem>>, vector<1x16x16xf32>
    %188 = vector.shape_cast %187 : vector<1x16x16xf32> to vector<16x16xf32>
    %cst_146 = arith.constant dense<0.000000e+00> : vector<1x16xf32>
    %189 = tpu.matmul %186, %188, %cst_146 {dimension_numbers = #tpu.dot_dimension_numbers<[1], [0], [0], [1], [0, 0, 1, 1], [], []>} : vector<1x16xf32>, vector<16x16xf32>, vector<1x16xf32> -> vector<1x16xf32>
    %190 = arith.addf %185, %189 : vector<1x16xf32>
    %191 = vector.extract_strided_slice %134 {offsets = [11, 0], sizes = [1, 16], strides = [1, 1]} : vector<15x16xf32> to vector<1x16xf32>
    %c11 = arith.constant 11 : index
    %c0_147 = arith.constant 0 : index
    %c0_148 = arith.constant 0 : index
    %192 = vector.load %arg17[%c11, %c0_147, %c0_148] : memref<15x16x16xf32, #tpu.memory_space<vmem>>, vector<1x16x16xf32>
    %193 = vector.shape_cast %192 : vector<1x16x16xf32> to vector<16x16xf32>
    %cst_149 = arith.constant dense<0.000000e+00> : vector<1x16xf32>
    %194 = tpu.matmul %191, %193, %cst_149 {dimension_numbers = #tpu.dot_dimension_numbers<[1], [0], [0], [1], [0, 0, 1, 1], [], []>} : vector<1x16xf32>, vector<16x16xf32>, vector<1x16xf32> -> vector<1x16xf32>
    %195 = arith.addf %190, %194 : vector<1x16xf32>
    %196 = vector.extract_strided_slice %134 {offsets = [12, 0], sizes = [1, 16], strides = [1, 1]} : vector<15x16xf32> to vector<1x16xf32>
    %c12 = arith.constant 12 : index
    %c0_150 = arith.constant 0 : index
    %c0_151 = arith.constant 0 : index
    %197 = vector.load %arg17[%c12, %c0_150, %c0_151] : memref<15x16x16xf32, #tpu.memory_space<vmem>>, vector<1x16x16xf32>
    %198 = vector.shape_cast %197 : vector<1x16x16xf32> to vector<16x16xf32>
    %cst_152 = arith.constant dense<0.000000e+00> : vector<1x16xf32>
    %199 = tpu.matmul %196, %198, %cst_152 {dimension_numbers = #tpu.dot_dimension_numbers<[1], [0], [0], [1], [0, 0, 1, 1], [], []>} : vector<1x16xf32>, vector<16x16xf32>, vector<1x16xf32> -> vector<1x16xf32>
    %200 = arith.addf %195, %199 : vector<1x16xf32>
    %201 = vector.extract_strided_slice %134 {offsets = [13, 0], sizes = [1, 16], strides = [1, 1]} : vector<15x16xf32> to vector<1x16xf32>
    %c13 = arith.constant 13 : index
    %c0_153 = arith.constant 0 : index
    %c0_154 = arith.constant 0 : index
    %202 = vector.load %arg17[%c13, %c0_153, %c0_154] : memref<15x16x16xf32, #tpu.memory_space<vmem>>, vector<1x16x16xf32>
    %203 = vector.shape_cast %202 : vector<1x16x16xf32> to vector<16x16xf32>
    %cst_155 = arith.constant dense<0.000000e+00> : vector<1x16xf32>
    %204 = tpu.matmul %201, %203, %cst_155 {dimension_numbers = #tpu.dot_dimension_numbers<[1], [0], [0], [1], [0, 0, 1, 1], [], []>} : vector<1x16xf32>, vector<16x16xf32>, vector<1x16xf32> -> vector<1x16xf32>
    %205 = arith.addf %200, %204 : vector<1x16xf32>
    %206 = vector.extract_strided_slice %134 {offsets = [14, 0], sizes = [1, 16], strides = [1, 1]} : vector<15x16xf32> to vector<1x16xf32>
    %c14 = arith.constant 14 : index
    %c0_156 = arith.constant 0 : index
    %c0_157 = arith.constant 0 : index
    %207 = vector.load %arg17[%c14, %c0_156, %c0_157] : memref<15x16x16xf32, #tpu.memory_space<vmem>>, vector<1x16x16xf32>
    %208 = vector.shape_cast %207 : vector<1x16x16xf32> to vector<16x16xf32>
    %cst_158 = arith.constant dense<0.000000e+00> : vector<1x16xf32>
    %209 = tpu.matmul %206, %208, %cst_158 {dimension_numbers = #tpu.dot_dimension_numbers<[1], [0], [0], [1], [0, 0, 1, 1], [], []>} : vector<1x16xf32>, vector<16x16xf32>, vector<1x16xf32> -> vector<1x16xf32>
    %210 = arith.addf %205, %209 : vector<1x16xf32>
    %c0_159 = arith.constant 0 : index
    %211 = memref.load %arg25[%c0_159] : memref<1xf32, #tpu.memory_space<smem>>
    %212 = vector.broadcast %211 : f32 to vector<1x16xf32>
    %213 = arith.addf %210, %212 : vector<1x16xf32>
    %214 = arith.negf %213 : vector<1x16xf32>
    %215 = math.exp %214 : vector<1x16xf32>
    %cst_160 = arith.constant 1.000000e+00 : f32
    %216 = vector.broadcast %cst_160 : f32 to vector<1x16xf32>
    %217 = arith.addf %216, %215 : vector<1x16xf32>
    %218 = arith.divf %216, %217 : vector<1x16xf32>
    %cst_161 = arith.constant dense<0.000000e+00> : vector<1x128xf32>
    %219 = tpu.matmul %218, %4, %cst_161 {dimension_numbers = #tpu.dot_dimension_numbers<[1], [0], [0], [1], [0, 0, 1, 1], [], []>} : vector<1x16xf32>, vector<16x128xf32>, vector<1x128xf32> -> vector<1x128xf32>
    %220 = vector.broadcast %219 : vector<1x128xf32> to vector<16x128xf32>
    %221 = arith.mulf %129, %220 : vector<16x128xf32>
    %222 = arith.addf %221, %129 : vector<16x128xf32>
    %c0_162 = arith.constant 0 : index
    %c0_163 = arith.constant 0 : index
    %223 = vector.load %arg13[%c0_162, %c0_163] : memref<128x8xf32, #tpu.memory_space<vmem>>, vector<128x8xf32>
    %cst_164 = arith.constant dense<0.000000e+00> : vector<16x8xf32>
    %224 = tpu.matmul %222, %223, %cst_164 {dimension_numbers = #tpu.dot_dimension_numbers<[1], [0], [0], [1], [0, 0, 1, 1], [], []>} : vector<16x128xf32>, vector<128x8xf32>, vector<16x8xf32> -> vector<16x8xf32>
    %cst_165 = arith.constant 6.250000e-02 : f32
    %225 = vector.broadcast %cst_165 : f32 to vector<16x8xf32>
    %226 = arith.mulf %224, %225 : vector<16x8xf32>
    %c0_166 = arith.constant 0 : index
    %c0_167 = arith.constant 0 : index
    %227 = vector.load %arg18[%c0_166, %c0_167] : memref<16x9xf32, #tpu.memory_space<vmem>>, vector<16x9xf32>
    %cst_168 = arith.constant dense<0.000000e+00> : vector<9x8xf32>
    %228 = tpu.matmul %227, %226, %cst_168 {dimension_numbers = #tpu.dot_dimension_numbers<[0], [0], [1], [1], [0, 1, 1, 1], [], []>} : vector<16x9xf32>, vector<16x8xf32>, vector<9x8xf32> -> vector<9x8xf32>
    %cst_169 = arith.constant 0.000000e+00 : f32
    %229 = vector.broadcast %cst_169 : f32 to vector<1x8xf32>
    %230 = vector.extract_strided_slice %228 {offsets = [0, 0], sizes = [1, 8], strides = [1, 1]} : vector<9x8xf32> to vector<1x8xf32>
    %c0_170 = arith.constant 0 : index
    %c0_171 = arith.constant 0 : index
    %c0_172 = arith.constant 0 : index
    %231 = vector.load %arg19[%c0_170, %c0_171, %c0_172] : memref<9x8x8xf32, #tpu.memory_space<vmem>>, vector<1x8x8xf32>
    %232 = vector.shape_cast %231 : vector<1x8x8xf32> to vector<8x8xf32>
    %cst_173 = arith.constant dense<0.000000e+00> : vector<1x8xf32>
    %233 = tpu.matmul %230, %232, %cst_173 {dimension_numbers = #tpu.dot_dimension_numbers<[1], [0], [0], [1], [0, 0, 1, 1], [], []>} : vector<1x8xf32>, vector<8x8xf32>, vector<1x8xf32> -> vector<1x8xf32>
    %234 = arith.addf %229, %233 : vector<1x8xf32>
    %235 = vector.extract_strided_slice %228 {offsets = [1, 0], sizes = [1, 8], strides = [1, 1]} : vector<9x8xf32> to vector<1x8xf32>
    %c1_174 = arith.constant 1 : index
    %c0_175 = arith.constant 0 : index
    %c0_176 = arith.constant 0 : index
    %236 = vector.load %arg19[%c1_174, %c0_175, %c0_176] : memref<9x8x8xf32, #tpu.memory_space<vmem>>, vector<1x8x8xf32>
    %237 = vector.shape_cast %236 : vector<1x8x8xf32> to vector<8x8xf32>
    %cst_177 = arith.constant dense<0.000000e+00> : vector<1x8xf32>
    %238 = tpu.matmul %235, %237, %cst_177 {dimension_numbers = #tpu.dot_dimension_numbers<[1], [0], [0], [1], [0, 0, 1, 1], [], []>} : vector<1x8xf32>, vector<8x8xf32>, vector<1x8xf32> -> vector<1x8xf32>
    %239 = arith.addf %234, %238 : vector<1x8xf32>
    %240 = vector.extract_strided_slice %228 {offsets = [2, 0], sizes = [1, 8], strides = [1, 1]} : vector<9x8xf32> to vector<1x8xf32>
    %c2_178 = arith.constant 2 : index
    %c0_179 = arith.constant 0 : index
    %c0_180 = arith.constant 0 : index
    %241 = vector.load %arg19[%c2_178, %c0_179, %c0_180] : memref<9x8x8xf32, #tpu.memory_space<vmem>>, vector<1x8x8xf32>
    %242 = vector.shape_cast %241 : vector<1x8x8xf32> to vector<8x8xf32>
    %cst_181 = arith.constant dense<0.000000e+00> : vector<1x8xf32>
    %243 = tpu.matmul %240, %242, %cst_181 {dimension_numbers = #tpu.dot_dimension_numbers<[1], [0], [0], [1], [0, 0, 1, 1], [], []>} : vector<1x8xf32>, vector<8x8xf32>, vector<1x8xf32> -> vector<1x8xf32>
    %244 = arith.addf %239, %243 : vector<1x8xf32>
    %245 = vector.extract_strided_slice %228 {offsets = [3, 0], sizes = [1, 8], strides = [1, 1]} : vector<9x8xf32> to vector<1x8xf32>
    %c3_182 = arith.constant 3 : index
    %c0_183 = arith.constant 0 : index
    %c0_184 = arith.constant 0 : index
    %246 = vector.load %arg19[%c3_182, %c0_183, %c0_184] : memref<9x8x8xf32, #tpu.memory_space<vmem>>, vector<1x8x8xf32>
    %247 = vector.shape_cast %246 : vector<1x8x8xf32> to vector<8x8xf32>
    %cst_185 = arith.constant dense<0.000000e+00> : vector<1x8xf32>
    %248 = tpu.matmul %245, %247, %cst_185 {dimension_numbers = #tpu.dot_dimension_numbers<[1], [0], [0], [1], [0, 0, 1, 1], [], []>} : vector<1x8xf32>, vector<8x8xf32>, vector<1x8xf32> -> vector<1x8xf32>
    %249 = arith.addf %244, %248 : vector<1x8xf32>
    %250 = vector.extract_strided_slice %228 {offsets = [4, 0], sizes = [1, 8], strides = [1, 1]} : vector<9x8xf32> to vector<1x8xf32>
    %c4_186 = arith.constant 4 : index
    %c0_187 = arith.constant 0 : index
    %c0_188 = arith.constant 0 : index
    %251 = vector.load %arg19[%c4_186, %c0_187, %c0_188] : memref<9x8x8xf32, #tpu.memory_space<vmem>>, vector<1x8x8xf32>
    %252 = vector.shape_cast %251 : vector<1x8x8xf32> to vector<8x8xf32>
    %cst_189 = arith.constant dense<0.000000e+00> : vector<1x8xf32>
    %253 = tpu.matmul %250, %252, %cst_189 {dimension_numbers = #tpu.dot_dimension_numbers<[1], [0], [0], [1], [0, 0, 1, 1], [], []>} : vector<1x8xf32>, vector<8x8xf32>, vector<1x8xf32> -> vector<1x8xf32>
    %254 = arith.addf %249, %253 : vector<1x8xf32>
    %255 = vector.extract_strided_slice %228 {offsets = [5, 0], sizes = [1, 8], strides = [1, 1]} : vector<9x8xf32> to vector<1x8xf32>
    %c5_190 = arith.constant 5 : index
    %c0_191 = arith.constant 0 : index
    %c0_192 = arith.constant 0 : index
    %256 = vector.load %arg19[%c5_190, %c0_191, %c0_192] : memref<9x8x8xf32, #tpu.memory_space<vmem>>, vector<1x8x8xf32>
    %257 = vector.shape_cast %256 : vector<1x8x8xf32> to vector<8x8xf32>
    %cst_193 = arith.constant dense<0.000000e+00> : vector<1x8xf32>
    %258 = tpu.matmul %255, %257, %cst_193 {dimension_numbers = #tpu.dot_dimension_numbers<[1], [0], [0], [1], [0, 0, 1, 1], [], []>} : vector<1x8xf32>, vector<8x8xf32>, vector<1x8xf32> -> vector<1x8xf32>
    %259 = arith.addf %254, %258 : vector<1x8xf32>
    %260 = vector.extract_strided_slice %228 {offsets = [6, 0], sizes = [1, 8], strides = [1, 1]} : vector<9x8xf32> to vector<1x8xf32>
    %c6_194 = arith.constant 6 : index
    %c0_195 = arith.constant 0 : index
    %c0_196 = arith.constant 0 : index
    %261 = vector.load %arg19[%c6_194, %c0_195, %c0_196] : memref<9x8x8xf32, #tpu.memory_space<vmem>>, vector<1x8x8xf32>
    %262 = vector.shape_cast %261 : vector<1x8x8xf32> to vector<8x8xf32>
    %cst_197 = arith.constant dense<0.000000e+00> : vector<1x8xf32>
    %263 = tpu.matmul %260, %262, %cst_197 {dimension_numbers = #tpu.dot_dimension_numbers<[1], [0], [0], [1], [0, 0, 1, 1], [], []>} : vector<1x8xf32>, vector<8x8xf32>, vector<1x8xf32> -> vector<1x8xf32>
    %264 = arith.addf %259, %263 : vector<1x8xf32>
    %265 = vector.extract_strided_slice %228 {offsets = [7, 0], sizes = [1, 8], strides = [1, 1]} : vector<9x8xf32> to vector<1x8xf32>
    %c7_198 = arith.constant 7 : index
    %c0_199 = arith.constant 0 : index
    %c0_200 = arith.constant 0 : index
    %266 = vector.load %arg19[%c7_198, %c0_199, %c0_200] : memref<9x8x8xf32, #tpu.memory_space<vmem>>, vector<1x8x8xf32>
    %267 = vector.shape_cast %266 : vector<1x8x8xf32> to vector<8x8xf32>
    %cst_201 = arith.constant dense<0.000000e+00> : vector<1x8xf32>
    %268 = tpu.matmul %265, %267, %cst_201 {dimension_numbers = #tpu.dot_dimension_numbers<[1], [0], [0], [1], [0, 0, 1, 1], [], []>} : vector<1x8xf32>, vector<8x8xf32>, vector<1x8xf32> -> vector<1x8xf32>
    %269 = arith.addf %264, %268 : vector<1x8xf32>
    %270 = vector.extract_strided_slice %228 {offsets = [8, 0], sizes = [1, 8], strides = [1, 1]} : vector<9x8xf32> to vector<1x8xf32>
    %c8_202 = arith.constant 8 : index
    %c0_203 = arith.constant 0 : index
    %c0_204 = arith.constant 0 : index
    %271 = vector.load %arg19[%c8_202, %c0_203, %c0_204] : memref<9x8x8xf32, #tpu.memory_space<vmem>>, vector<1x8x8xf32>
    %272 = vector.shape_cast %271 : vector<1x8x8xf32> to vector<8x8xf32>
    %cst_205 = arith.constant dense<0.000000e+00> : vector<1x8xf32>
    %273 = tpu.matmul %270, %272, %cst_205 {dimension_numbers = #tpu.dot_dimension_numbers<[1], [0], [0], [1], [0, 0, 1, 1], [], []>} : vector<1x8xf32>, vector<8x8xf32>, vector<1x8xf32> -> vector<1x8xf32>
    %274 = arith.addf %269, %273 : vector<1x8xf32>
    %c0_206 = arith.constant 0 : index
    %275 = memref.load %arg26[%c0_206] : memref<1xf32, #tpu.memory_space<smem>>
    %276 = vector.broadcast %275 : f32 to vector<1x8xf32>
    %277 = arith.addf %274, %276 : vector<1x8xf32>
    %278 = arith.negf %277 : vector<1x8xf32>
    %279 = math.exp %278 : vector<1x8xf32>
    %cst_207 = arith.constant 1.000000e+00 : f32
    %280 = vector.broadcast %cst_207 : f32 to vector<1x8xf32>
    %281 = arith.addf %280, %279 : vector<1x8xf32>
    %282 = arith.divf %280, %281 : vector<1x8xf32>
    %c0_208 = arith.constant 0 : index
    %c0_209 = arith.constant 0 : index
    %283 = vector.load %arg14[%c0_208, %c0_209] : memref<8x128xf32, #tpu.memory_space<vmem>>, vector<8x128xf32>
    %cst_210 = arith.constant dense<0.000000e+00> : vector<1x128xf32>
    %284 = tpu.matmul %282, %283, %cst_210 {dimension_numbers = #tpu.dot_dimension_numbers<[1], [0], [0], [1], [0, 0, 1, 1], [], []>} : vector<1x8xf32>, vector<8x128xf32>, vector<1x128xf32> -> vector<1x128xf32>
    %285 = vector.broadcast %284 : vector<1x128xf32> to vector<16x128xf32>
    %286 = arith.mulf %222, %285 : vector<16x128xf32>
    %287 = arith.addf %286, %222 : vector<16x128xf32>
    %cst_211 = arith.constant dense<0.000000e+00> : vector<16xf32>
    %288 = vector.multi_reduction <add>, %287, %cst_211 [1] : vector<16x128xf32> to vector<16xf32>
    %289 = vector.shape_cast %288 : vector<16xf32> to vector<16x1xf32>
    %cst_212 = arith.constant 1.280000e+02 : f32
    %290 = vector.broadcast %cst_212 : f32 to vector<16x1xf32>
    %291 = arith.divf %289, %290 : vector<16x1xf32>
    %c0_213 = arith.constant 0 : index
    %c0_214 = arith.constant 0 : index
    %292 = vector.load %arg20[%c0_213, %c0_214] : memref<8x16xf32, #tpu.memory_space<vmem>>, vector<8x16xf32>
    %cst_215 = arith.constant dense<0.000000e+00> : vector<8x1xf32>
    %293 = tpu.matmul %292, %291, %cst_215 {dimension_numbers = #tpu.dot_dimension_numbers<[1], [0], [0], [1], [0, 0, 1, 1], [], []>} : vector<8x16xf32>, vector<16x1xf32>, vector<8x1xf32> -> vector<8x1xf32>
    %c0_216 = arith.constant 0 : index
    %c0_217 = arith.constant 0 : index
    %294 = vector.load %arg21[%c0_216, %c0_217] : memref<8x1xf32, #tpu.memory_space<vmem>>, vector<8x1xf32>
    %295 = arith.addf %293, %294 : vector<8x1xf32>
    %cst_218 = arith.constant 0.000000e+00 : f32
    %296 = vector.broadcast %cst_218 : f32 to vector<8x1xf32>
    %297 = arith.maximumf %295, %296 : vector<8x1xf32>
    %c0_219 = arith.constant 0 : index
    %c0_220 = arith.constant 0 : index
    %298 = vector.load %arg22[%c0_219, %c0_220] : memref<16x8xf32, #tpu.memory_space<vmem>>, vector<16x8xf32>
    %cst_221 = arith.constant dense<0.000000e+00> : vector<16x1xf32>
    %299 = tpu.matmul %298, %297, %cst_221 {dimension_numbers = #tpu.dot_dimension_numbers<[1], [0], [0], [1], [0, 0, 1, 1], [], []>} : vector<16x8xf32>, vector<8x1xf32>, vector<16x1xf32> -> vector<16x1xf32>
    %c0_222 = arith.constant 0 : index
    %c0_223 = arith.constant 0 : index
    %300 = vector.load %arg23[%c0_222, %c0_223] : memref<16x1xf32, #tpu.memory_space<vmem>>, vector<16x1xf32>
    %301 = arith.addf %299, %300 : vector<16x1xf32>
    %302 = arith.negf %301 : vector<16x1xf32>
    %303 = math.exp %302 : vector<16x1xf32>
    %cst_224 = arith.constant 1.000000e+00 : f32
    %304 = vector.broadcast %cst_224 : f32 to vector<16x1xf32>
    %305 = arith.addf %304, %303 : vector<16x1xf32>
    %306 = arith.divf %304, %305 : vector<16x1xf32>
    %307 = vector.broadcast %306 : vector<16x1xf32> to vector<16x128xf32>
    %308 = arith.mulf %287, %307 : vector<16x128xf32>
    %309 = arith.addf %308, %287 : vector<16x128xf32>
    %c0_225 = arith.constant 0 : index
    %c0_226 = arith.constant 0 : index
    %c0_227 = arith.constant 0 : index
    %310 = vector.load %arg27[%c0_225, %c0_226, %c0_227] : memref<1x16x128xf32, #tpu.memory_space<vmem>>, vector<1x16x128xf32>
    %311 = vector.shape_cast %310 : vector<1x16x128xf32> to vector<16x128xf32>
    %312 = vector.shape_cast %309 : vector<16x128xf32> to vector<1x16x128xf32>
    tpu.vector_store %arg27[%c0_225, %c0_226, %c0_227], %312 {strides = array<i32>} : memref<1x16x128xf32, #tpu.memory_space<vmem>>, vector<1x16x128xf32>,
    return
  }
  func.func @transform_0(%arg0: i32) -> (i32, i32, i32) {
    %c0_i32 = arith.constant 0 : i32
    %c0_i32_0 = arith.constant 0 : i32
    %c0_i32_1 = arith.constant 0 : i32
    return %arg0, %c0_i32, %c0_i32_0 : i32, i32, i32
  }
  func.func @transform_1(%arg0: i32) -> (i32, i32, i32) {
    %c0_i32 = arith.constant 0 : i32
    %c0_i32_0 = arith.constant 0 : i32
    %c0_i32_1 = arith.constant 0 : i32
    %c0_i32_2 = arith.constant 0 : i32
    return %c0_i32, %c0_i32_0, %c0_i32_1 : i32, i32, i32
  }
  func.func @transform_2(%arg0: i32) -> (i32, i32, i32) {
    %c0_i32 = arith.constant 0 : i32
    %c0_i32_0 = arith.constant 0 : i32
    %c0_i32_1 = arith.constant 0 : i32
    %c0_i32_2 = arith.constant 0 : i32
    return %c0_i32, %c0_i32_0, %c0_i32_1 : i32, i32, i32
  }
  func.func @transform_3(%arg0: i32) -> (i32, i32, i32) {
    %c0_i32 = arith.constant 0 : i32
    %c0_i32_0 = arith.constant 0 : i32
    %c0_i32_1 = arith.constant 0 : i32
    %c0_i32_2 = arith.constant 0 : i32
    return %c0_i32, %c0_i32_0, %c0_i32_1 : i32, i32, i32
  }
  func.func @transform_4(%arg0: i32) -> (i32, i32, i32) {
    %c0_i32 = arith.constant 0 : i32
    %c0_i32_0 = arith.constant 0 : i32
    %c0_i32_1 = arith.constant 0 : i32
    %c0_i32_2 = arith.constant 0 : i32
    return %c0_i32, %c0_i32_0, %c0_i32_1 : i32, i32, i32
  }
  func.func @transform_5(%arg0: i32) -> (i32, i32, i32) {
    %c0_i32 = arith.constant 0 : i32
    %c0_i32_0 = arith.constant 0 : i32
    %c0_i32_1 = arith.constant 0 : i32
    %c0_i32_2 = arith.constant 0 : i32
    return %c0_i32, %c0_i32_0, %c0_i32_1 : i32, i32, i32
  }
  func.func @transform_6(%arg0: i32) -> (i32, i32, i32) {
    %c0_i32 = arith.constant 0 : i32
    %c0_i32_0 = arith.constant 0 : i32
    %c0_i32_1 = arith.constant 0 : i32
    %c0_i32_2 = arith.constant 0 : i32
    return %c0_i32, %c0_i32_0, %c0_i32_1 : i32, i32, i32
  }
  func.func @transform_7(%arg0: i32) -> (i32, i32, i32) {
    %c0_i32 = arith.constant 0 : i32
    %c0_i32_0 = arith.constant 0 : i32
    %c0_i32_1 = arith.constant 0 : i32
    %c0_i32_2 = arith.constant 0 : i32
    return %c0_i32, %c0_i32_0, %c0_i32_1 : i32, i32, i32
  }
  func.func @transform_8(%arg0: i32) -> (i32, i32) {
    %c0_i32 = arith.constant 0 : i32
    %c0_i32_0 = arith.constant 0 : i32
    %c0_i32_1 = arith.constant 0 : i32
    return %c0_i32, %c0_i32_0 : i32, i32
  }
  func.func @transform_9(%arg0: i32) -> (i32, i32) {
    %c0_i32 = arith.constant 0 : i32
    %c0_i32_0 = arith.constant 0 : i32
    %c0_i32_1 = arith.constant 0 : i32
    return %c0_i32, %c0_i32_0 : i32, i32
  }
  func.func @transform_10(%arg0: i32) -> (i32, i32) {
    %c0_i32 = arith.constant 0 : i32
    %c0_i32_0 = arith.constant 0 : i32
    %c0_i32_1 = arith.constant 0 : i32
    return %c0_i32, %c0_i32_0 : i32, i32
  }
  func.func @transform_11(%arg0: i32) -> (i32, i32) {
    %c0_i32 = arith.constant 0 : i32
    %c0_i32_0 = arith.constant 0 : i32
    %c0_i32_1 = arith.constant 0 : i32
    return %c0_i32, %c0_i32_0 : i32, i32
  }
  func.func @transform_12(%arg0: i32) -> (i32, i32) {
    %c0_i32 = arith.constant 0 : i32
    %c0_i32_0 = arith.constant 0 : i32
    %c0_i32_1 = arith.constant 0 : i32
    return %c0_i32, %c0_i32_0 : i32, i32
  }
  func.func @transform_13(%arg0: i32) -> (i32, i32) {
    %c0_i32 = arith.constant 0 : i32
    %c0_i32_0 = arith.constant 0 : i32
    %c0_i32_1 = arith.constant 0 : i32
    return %c0_i32, %c0_i32_0 : i32, i32
  }
  func.func @transform_14(%arg0: i32) -> (i32, i32) {
    %c0_i32 = arith.constant 0 : i32
    %c0_i32_0 = arith.constant 0 : i32
    %c0_i32_1 = arith.constant 0 : i32
    return %c0_i32, %c0_i32_0 : i32, i32
  }
  func.func @transform_15(%arg0: i32) -> (i32, i32) {
    %c0_i32 = arith.constant 0 : i32
    %c0_i32_0 = arith.constant 0 : i32
    %c0_i32_1 = arith.constant 0 : i32
    return %c0_i32, %c0_i32_0 : i32, i32
  }
  func.func @transform_16(%arg0: i32) -> (i32, i32, i32) {
    %c0_i32 = arith.constant 0 : i32
    %c0_i32_0 = arith.constant 0 : i32
    %c0_i32_1 = arith.constant 0 : i32
    %c0_i32_2 = arith.constant 0 : i32
    return %c0_i32, %c0_i32_0, %c0_i32_1 : i32, i32, i32
  }
  func.func @transform_17(%arg0: i32) -> (i32, i32) {
    %c0_i32 = arith.constant 0 : i32
    %c0_i32_0 = arith.constant 0 : i32
    %c0_i32_1 = arith.constant 0 : i32
    return %c0_i32, %c0_i32_0 : i32, i32
  }
  func.func @transform_18(%arg0: i32) -> (i32, i32, i32) {
    %c0_i32 = arith.constant 0 : i32
    %c0_i32_0 = arith.constant 0 : i32
    %c0_i32_1 = arith.constant 0 : i32
    %c0_i32_2 = arith.constant 0 : i32
    return %c0_i32, %c0_i32_0, %c0_i32_1 : i32, i32, i32
  }
  func.func @transform_19(%arg0: i32) -> (i32, i32) {
    %c0_i32 = arith.constant 0 : i32
    %c0_i32_0 = arith.constant 0 : i32
    %c0_i32_1 = arith.constant 0 : i32
    return %c0_i32, %c0_i32_0 : i32, i32
  }
  func.func @transform_20(%arg0: i32) -> (i32, i32) {
    %c0_i32 = arith.constant 0 : i32
    %c0_i32_0 = arith.constant 0 : i32
    %c0_i32_1 = arith.constant 0 : i32
    return %c0_i32, %c0_i32_0 : i32, i32
  }
  func.func @transform_21(%arg0: i32) -> (i32, i32) {
    %c0_i32 = arith.constant 0 : i32
    %c0_i32_0 = arith.constant 0 : i32
    %c0_i32_1 = arith.constant 0 : i32
    return %c0_i32, %c0_i32_0 : i32, i32
  }
  func.func @transform_22(%arg0: i32) -> (i32, i32) {
    %c0_i32 = arith.constant 0 : i32
    %c0_i32_0 = arith.constant 0 : i32
    %c0_i32_1 = arith.constant 0 : i32
    return %c0_i32, %c0_i32_0 : i32, i32
  }
  func.func @transform_23(%arg0: i32) -> i32 {
    %c0_i32 = arith.constant 0 : i32
    %c0_i32_0 = arith.constant 0 : i32
    return %c0_i32 : i32
  }
  func.func @transform_24(%arg0: i32) -> i32 {
    %c0_i32 = arith.constant 0 : i32
    %c0_i32_0 = arith.constant 0 : i32
    return %c0_i32 : i32
  }
  func.func @transform_25(%arg0: i32) -> i32 {
    %c0_i32 = arith.constant 0 : i32
    %c0_i32_0 = arith.constant 0 : i32
    return %c0_i32 : i32
  }
  func.func @transform_26(%arg0: i32) -> (i32, i32, i32) {
    %c0_i32 = arith.constant 0 : i32
    %c0_i32_0 = arith.constant 0 : i32
    %c0_i32_1 = arith.constant 0 : i32
    return %arg0, %c0_i32, %c0_i32_0 : i32, i32, i32
  }
}

</mosaic_0001>

<llo_original>
// kernel: tpu_custom_call.1
$region0: #{tpu_custom_call.1}
  #allocation0 [shape = 'u32[]', space=smem, size = 0x4, offset = 0x4, fixed_abs, tag = 'smem constant byte address 0x4 - core index']
  #allocation1 [shape = 'u32[144,128]{1,0:T(1,128)}', space=vmem, size = 0x12000, scoped, tag = 'internal scratch']
  #allocation2 [shape = 'f32[1]{0:T(128)S(6)}', space=smem, size = 0x200, scoped, tag = 'scoped memory for tpu_custom_call.1']
  #allocation3 [shape = 'f32[1]{0:T(128)S(6)}', space=smem, size = 0x200, scoped, tag = 'scoped memory for tpu_custom_call.1']
  #allocation4 [shape = 'f32[1]{0:T(128)S(6)}', space=smem, size = 0x200, scoped, tag = 'scoped memory for tpu_custom_call.1']
  %s0 = inlined_call_operand.vmem [shape: f32[2,16,128], index: 0, kind: input, shape index: {}]
  %s1 = inlined_call_operand.hbm [shape: f32[3,4,16], index: 1, kind: input, shape index: {}]
  %s2 = inlined_call_operand.vmem [shape: f32[3,4,1], index: 2, kind: input, shape index: {}]
  %s3 = inlined_call_operand.hbm [shape: f32[3,4,16], index: 3, kind: input, shape index: {}]
  %s4 = inlined_call_operand.vmem [shape: f32[3,4,1], index: 4, kind: input, shape index: {}]
  %s5 = inlined_call_operand.vmem [shape: f32[3,16,16], index: 5, kind: input, shape index: {}]
  %s6 = inlined_call_operand.vmem [shape: f32[3,16,1], index: 6, kind: input, shape index: {}]
  %s7 = inlined_call_operand.vmem [shape: f32[3,16,16], index: 7, kind: input, shape index: {}]
  %s8 = inlined_call_operand.vmem [shape: f32[16,1], index: 8, kind: input, shape index: {}]
  %s9 = inlined_call_operand.vmem [shape: f32[16,1], index: 9, kind: input, shape index: {}]
  %s10 = inlined_call_operand.vmem [shape: f32[128,16], index: 10, kind: input, shape index: {}]
  %s11 = inlined_call_operand.vmem [shape: f32[16,128], index: 11, kind: input, shape index: {}]
  %s12 = inlined_call_operand.vmem [shape: f32[128,8], index: 12, kind: input, shape index: {}]
  %s13 = inlined_call_operand.vmem [shape: f32[8,128], index: 13, kind: input, shape index: {}]
  %s14 = inlined_call_operand.vmem [shape: f32[128,128], index: 14, kind: input, shape index: {}]
  %s15 = inlined_call_operand.vmem [shape: f32[16,15], index: 15, kind: input, shape index: {}]
  %s16 = inlined_call_operand.vmem [shape: f32[15,16,16], index: 16, kind: input, shape index: {}]
  %s17 = inlined_call_operand.vmem [shape: f32[16,9], index: 17, kind: input, shape index: {}]
  %s18 = inlined_call_operand.vmem [shape: f32[9,8,8], index: 18, kind: input, shape index: {}]
  %s19 = inlined_call_operand.vmem [shape: f32[8,16], index: 19, kind: input, shape index: {}]
  %s20 = inlined_call_operand.vmem [shape: f32[8,1], index: 20, kind: input, shape index: {}]
  %s21 = inlined_call_operand.vmem [shape: f32[16,8], index: 21, kind: input, shape index: {}]
  %s22 = inlined_call_operand.vmem [shape: f32[16,1], index: 22, kind: input, shape index: {}]
  %s23 = inlined_call_operand.<no memory space> [shape: f32[1], index: 23, kind: input, shape index: {}]
  %s24 = inlined_call_operand.<no memory space> [shape: f32[1], index: 24, kind: input, shape index: {}]
  %s25 = inlined_call_operand.<no memory space> [shape: f32[1], index: 25, kind: input, shape index: {}]
  %s26 = inlined_call_operand.hbm [shape: f32[2,16,128], index: 26, kind: output, shape index: {}]
  %s27 = sld [smem:[#allocation0]]
  $region145: #{tpu_custom_call.1} parent=0
    _
  %s29 = ssub.s32 1, %s27
  %s30 = scalar_select 0, %s29, %s27
  %31 = sst [smem:[#allocation2]] %s23
  %32 = sst [smem:[#allocation3]] %s24
  %33 = sst [smem:[#allocation4]] %s25
  $region1: #{tpu_custom_call.1} parent=0
    #allocation5 [shape = 'u8[6144]{0}', space=vmem, size = 0x1800, scoped, tag = 'input window, operand 1, single buffered']
    #allocation6 [shape = 's32[2]{0}', space=sflag, size = 0x8, scoped, tag = 'scoped memory for tpu_custom_call.1']
    #allocation7 [shape = 's32[2]{0}', space=sflag, size = 0x8, scoped, tag = 'scoped memory for tpu_custom_call.1']
    #allocation8 [shape = 'u8[6144]{0}', space=vmem, size = 0x1800, scoped, tag = 'input window, operand 3, single buffered']
    #allocation9 [shape = 's32[1]{0}', space=sflag, size = 0x4, scoped, tag = 'scoped memory for tpu_custom_call.1']
    #allocation10 [shape = 'u8[16384]{0}', space=vmem, size = 0x4000, scoped, tag = 'output window, operand 0']
    %34 = vsyncpa [#allocation6], 0
    %35 = vsyncpa [#allocation9], 0
    %36 = vsyncpa [#allocation7], 0
    %s37 = scalar_lea.sflag [#allocation7], 1
    %38 = vsyncpa %s37, 0
    loop: start=0, step=1, limit=4
    $region2: #{tpu_custom_call.1} parent=1 // loop_pre_header
      _
    $region3: #{tpu_custom_call.1} parent=1 // loop_header
      %s40 = sphi 0, %s44
      %p41 = scmp.ge.s32.totalorder %s40, 4
      %s50 = sphi 0, %s52
      %s53 = sphi 0, %s50
      %s54 = sphi 0, %s53
      %s70 = sphi 0, %s54
      %s74 = sphi 0, %s74
      %s76 = sphi 0, %s74
      %s77 = sphi 0, %s76
      %s91 = sphi 0, %s77
      %s95 = sphi 0, %s95
      %s97 = sphi 0, %s95
      %s98 = sphi 0, %s97
      %s112 = sphi 0, %s98
      %s116 = sphi 0, %s116
      %s118 = sphi 0, %s116
      %s119 = sphi 0, %s118
      %s133 = sphi 0, %s119
      %s137 = sphi 0, %s137
      %s139 = sphi 0, %s137
      %s140 = sphi 0, %s139
      %s154 = sphi 0, %s140
      %s158 = sphi 0, %s158
      %s160 = sphi 0, %s158
      %s161 = sphi 0, %s160
      %s175 = sphi 0, %s161
      %s179 = sphi 0, %s179
      %s181 = sphi 0, %s179
      %s182 = sphi 0, %s181
      %s196 = sphi 0, %s182
      %s200 = sphi 0, %s200
      %s202 = sphi 0, %s200
      %s203 = sphi 0, %s202
      %s217 = sphi 0, %s203
      %s221 = sphi 0, %s221
      %s223 = sphi 0, %s221
      %s224 = sphi 0, %s223
      %s238 = sphi 0, %s224
      %s242 = sphi 0, %s242
      %s244 = sphi 0, %s242
      %s245 = sphi 0, %s244
      %s259 = sphi 0, %s245
      %s263 = sphi 0, %s263
      %s265 = sphi 0, %s263
      %s266 = sphi 0, %s265
      %s280 = sphi 0, %s266
      %s284 = sphi 0, %s284
      %s286 = sphi 0, %s284
      %s287 = sphi 0, %s286
      %s301 = sphi 0, %s287
      %s305 = sphi 0, %s305
      %s307 = sphi 0, %s305
      %s308 = sphi 0, %s307
      %s322 = sphi 0, %s308
      %s326 = sphi 0, %s326
      %s328 = sphi 0, %s326
      %s329 = sphi 0, %s328
      %s343 = sphi 0, %s329
      %s347 = sphi 0, %s347
      %s349 = sphi 0, %s347
      %s350 = sphi 0, %s349
      %s364 = sphi 0, %s350
      %s368 = sphi 0, %s368
      %s370 = sphi 0, %s368
      %s371 = sphi 0, %s370
      %s385 = sphi 0, %s371
      %s389 = sphi 0, %s389
      %s391 = sphi 0, %s389
      %s392 = sphi 0, %s391
      %s406 = sphi 0, %s392
      %s410 = sphi 0, %s410
      %s412 = sphi 0, %s410
      %s413 = sphi 0, %s412
      %s427 = sphi 0, %s413
      %s431 = sphi 0, %s431
      %s433 = sphi 0, %s431
      %s434 = sphi 0, %s433
      %s448 = sphi 0, %s434
      %s452 = sphi 0, %s452
      %s454 = sphi 0, %s452
      %s455 = sphi 0, %s454
      %s469 = sphi 0, %s455
      %s473 = sphi 0, %s473
      %s475 = sphi 0, %s473
      %s476 = sphi 0, %s475
      %s490 = sphi 0, %s476
      %s494 = sphi 0, %s494
      %s496 = sphi 0, %s494
      %s497 = sphi 0, %s496
      %s511 = sphi 0, %s497
      %s515 = sphi 0, %s515
      %s517 = sphi 0, %s515
      %s518 = sphi 0, %s517
      %s532 = sphi 0, %s518
      %s536 = sphi 0, %s536
      %s538 = sphi 0, %s536
      %s539 = sphi 0, %s538
      %s553 = sphi 0, %s539
      %s557 = sphi 0, %s557
      %s559 = sphi 0, %s557
      %s560 = sphi 0, %s559
      %s574 = sphi 0, %s560
      %s578 = sphi 0, %s578
      %s580 = sphi 0, %s578
      %s581 = sphi 0, %s580
      %s595 = sphi 0, %s581
      %s601 = sphi 0, %s603
      %s604 = sphi 0, %s601
      %s605 = sphi 0, %s604
      %s621 = sphi 0, %s605
    $region4: #{tpu_custom_call.1} parent=1 // loop_header_branch
      %43 = sbr.rel (%p41) target = $region8
    $region5: #{tpu_custom_call.1} parent=1 // loop_body
      %s45 = ssub.s32 %s40, 1
      %s46 = ssub.s32 %s40, 2
      %s47 = sadd.s32 %s40, 1
      %s48 = ssub.s32 %s40, %s47
      %p49 = scmp.eq.s32.totalorder %s48, 0
      %s51 = sadd.s32 %s50, 1
      %s52 = scalar_select %p49, %s50, %s51
      %p55 = pneg %p49
      %p56 = scmp.eq.s32.totalorder %s40, 1
      %p57 = por %p55, %p56
      %p58 = scmp.ne.s32.totalorder %s50, %s53
      %p59 = scmp.eq.s32.totalorder %s40, 0
      %p60 = por %p58, %p59
      %p61 = scmp.ne.s32.totalorder %s50, %s53
      %p62 = scmp.eq.s32.totalorder %s45, 1
      %p63 = por %p61, %p62
      %p64 = scmp.ne.s32.totalorder %s53, %s54
      %p65 = scmp.eq.s32.totalorder %s45, 0
      %p66 = por %p64, %p65
      %p67 = scmp.ne.s32.totalorder %s53, %s54
      %p68 = scmp.eq.s32.totalorder %s46, 1
      %p69 = por %p67, %p68
      %p71 = scmp.ne.s32.totalorder %s54, %s70
      %p72 = scmp.eq.s32.totalorder %s46, 0
      %p73 = por %p71, %p72
      %s75 = sadd.s32 %s74, 1
      %p78 = scmp.eq.s32.totalorder %s40, 1
      %p79 = scmp.ne.s32.totalorder %s74, %s76
      %p80 = scmp.eq.s32.totalorder %s40, 0
      %p81 = por %p79, %p80
      %p82 = scmp.ne.s32.totalorder %s74, %s76
      %p83 = scmp.eq.s32.totalorder %s45, 1
      %p84 = por %p82, %p83
      %p85 = scmp.ne.s32.totalorder %s76, %s77
      %p86 = scmp.eq.s32.totalorder %s45, 0
      %p87 = por %p85, %p86
      %p88 = scmp.ne.s32.totalorder %s76, %s77
      %p89 = scmp.eq.s32.totalorder %s46, 1
      %p90 = por %p88, %p89
      %p92 = scmp.ne.s32.totalorder %s77, %s91
      %p93 = scmp.eq.s32.totalorder %s46, 0
      %p94 = por %p92, %p93
      %s96 = sadd.s32 %s95, 1
      %p99 = scmp.eq.s32.totalorder %s40, 1
      %p100 = scmp.ne.s32.totalorder %s95, %s97
      %p101 = scmp.eq.s32.totalorder %s40, 0
      %p102 = por %p100, %p101
      %p103 = scmp.ne.s32.totalorder %s95, %s97
      %p104 = scmp.eq.s32.totalorder %s45, 1
      %p105 = por %p103, %p104
      %p106 = scmp.ne.s32.totalorder %s97, %s98
      %p107 = scmp.eq.s32.totalorder %s45, 0
      %p108 = por %p106, %p107
      %p109 = scmp.ne.s32.totalorder %s97, %s98
      %p110 = scmp.eq.s32.totalorder %s46, 1
      %p111 = por %p109, %p110
      %p113 = scmp.ne.s32.totalorder %s98, %s112
      %p114 = scmp.eq.s32.totalorder %s46, 0
      %p115 = por %p113, %p114
      %s117 = sadd.s32 %s116, 1
      %p120 = scmp.eq.s32.totalorder %s40, 1
      %p121 = scmp.ne.s32.totalorder %s116, %s118
      %p122 = scmp.eq.s32.totalorder %s40, 0
      %p123 = por %p121, %p122
      %p124 = scmp.ne.s32.totalorder %s116, %s118
      %p125 = scmp.eq.s32.totalorder %s45, 1
      %p126 = por %p124, %p125
      %p127 = scmp.ne.s32.totalorder %s118, %s119
      %p128 = scmp.eq.s32.totalorder %s45, 0
      %p129 = por %p127, %p128
      %p130 = scmp.ne.s32.totalorder %s118, %s119
      %p131 = scmp.eq.s32.totalorder %s46, 1
      %p132 = por %p130, %p131
      %p134 = scmp.ne.s32.totalorder %s119, %s133
      %p135 = scmp.eq.s32.totalorder %s46, 0
      %p136 = por %p134, %p135
      %s138 = sadd.s32 %s137, 1
      %p141 = scmp.eq.s32.totalorder %s40, 1
      %p142 = scmp.ne.s32.totalorder %s137, %s139
      %p143 = scmp.eq.s32.totalorder %s40, 0
      %p144 = por %p142, %p143
      %p145 = scmp.ne.s32.totalorder %s137, %s139
      %p146 = scmp.eq.s32.totalorder %s45, 1
      %p147 = por %p145, %p146
      %p148 = scmp.ne.s32.totalorder %s139, %s140
      %p149 = scmp.eq.s32.totalorder %s45, 0
      %p150 = por %p148, %p149
      %p151 = scmp.ne.s32.totalorder %s139, %s140
      %p152 = scmp.eq.s32.totalorder %s46, 1
      %p153 = por %p151, %p152
      %p155 = scmp.ne.s32.totalorder %s140, %s154
      %p156 = scmp.eq.s32.totalorder %s46, 0
      %p157 = por %p155, %p156
      %s159 = sadd.s32 %s158, 1
      %p162 = scmp.eq.s32.totalorder %s40, 1
      %p163 = scmp.ne.s32.totalorder %s158, %s160
      %p164 = scmp.eq.s32.totalorder %s40, 0
      %p165 = por %p163, %p164
      %p166 = scmp.ne.s32.totalorder %s158, %s160
      %p167 = scmp.eq.s32.totalorder %s45, 1
      %p168 = por %p166, %p167
      %p169 = scmp.ne.s32.totalorder %s160, %s161
      %p170 = scmp.eq.s32.totalorder %s45, 0
      %p171 = por %p169, %p170
      %p172 = scmp.ne.s32.totalorder %s160, %s161
      %p173 = scmp.eq.s32.totalorder %s46, 1
      %p174 = por %p172, %p173
      %p176 = scmp.ne.s32.totalorder %s161, %s175
      %p177 = scmp.eq.s32.totalorder %s46, 0
      %p178 = por %p176, %p177
      %s180 = sadd.s32 %s179, 1
      %p183 = scmp.eq.s32.totalorder %s40, 1
      %p184 = scmp.ne.s32.totalorder %s179, %s181
      %p185 = scmp.eq.s32.totalorder %s40, 0
      %p186 = por %p184, %p185
      %p187 = scmp.ne.s32.totalorder %s179, %s181
      %p188 = scmp.eq.s32.totalorder %s45, 1
      %p189 = por %p187, %p188
      %p190 = scmp.ne.s32.totalorder %s181, %s182
      %p191 = scmp.eq.s32.totalorder %s45, 0
      %p192 = por %p190, %p191
      %p193 = scmp.ne.s32.totalorder %s181, %s182
      %p194 = scmp.eq.s32.totalorder %s46, 1
      %p195 = por %p193, %p194
      %p197 = scmp.ne.s32.totalorder %s182, %s196
      %p198 = scmp.eq.s32.totalorder %s46, 0
      %p199 = por %p197, %p198
      %s201 = sadd.s32 %s200, 1
      %p204 = scmp.eq.s32.totalorder %s40, 1
      %p205 = scmp.ne.s32.totalorder %s200, %s202
      %p206 = scmp.eq.s32.totalorder %s40, 0
      %p207 = por %p205, %p206
      %p208 = scmp.ne.s32.totalorder %s200, %s202
      %p209 = scmp.eq.s32.totalorder %s45, 1
      %p210 = por %p208, %p209
      %p211 = scmp.ne.s32.totalorder %s202, %s203
      %p212 = scmp.eq.s32.totalorder %s45, 0
      %p213 = por %p211, %p212
      %p214 = scmp.ne.s32.totalorder %s202, %s203
      %p215 = scmp.eq.s32.totalorder %s46, 1
      %p216 = por %p214, %p215
      %p218 = scmp.ne.s32.totalorder %s203, %s217
      %p219 = scmp.eq.s32.totalorder %s46, 0
      %p220 = por %p218, %p219
      %s222 = sadd.s32 %s221, 1
      %p225 = scmp.eq.s32.totalorder %s40, 1
      %p226 = scmp.ne.s32.totalorder %s221, %s223
      %p227 = scmp.eq.s32.totalorder %s40, 0
      %p228 = por %p226, %p227
      %p229 = scmp.ne.s32.totalorder %s221, %s223
      %p230 = scmp.eq.s32.totalorder %s45, 1
      %p231 = por %p229, %p230
      %p232 = scmp.ne.s32.totalorder %s223, %s224
      %p233 = scmp.eq.s32.totalorder %s45, 0
      %p234 = por %p232, %p233
      %p235 = scmp.ne.s32.totalorder %s223, %s224
      %p236 = scmp.eq.s32.totalorder %s46, 1
      %p237 = por %p235, %p236
      %p239 = scmp.ne.s32.totalorder %s224, %s238
      %p240 = scmp.eq.s32.totalorder %s46, 0
      %p241 = por %p239, %p240
      %s243 = sadd.s32 %s242, 1
      %p246 = scmp.eq.s32.totalorder %s40, 1
      %p247 = scmp.ne.s32.totalorder %s242, %s244
      %p248 = scmp.eq.s32.totalorder %s40, 0
      %p249 = por %p247, %p248
      %p250 = scmp.ne.s32.totalorder %s242, %s244
      %p251 = scmp.eq.s32.totalorder %s45, 1
      %p252 = por %p250, %p251
      %p253 = scmp.ne.s32.totalorder %s244, %s245
      %p254 = scmp.eq.s32.totalorder %s45, 0
      %p255 = por %p253, %p254
      %p256 = scmp.ne.s32.totalorder %s244, %s245
      %p257 = scmp.eq.s32.totalorder %s46, 1
      %p258 = por %p256, %p257
      %p260 = scmp.ne.s32.totalorder %s245, %s259
      %p261 = scmp.eq.s32.totalorder %s46, 0
      %p262 = por %p260, %p261
      %s264 = sadd.s32 %s263, 1
      %p267 = scmp.eq.s32.totalorder %s40, 1
      %p268 = scmp.ne.s32.totalorder %s263, %s265
      %p269 = scmp.eq.s32.totalorder %s40, 0
      %p270 = por %p268, %p269
      %p271 = scmp.ne.s32.totalorder %s263, %s265
      %p272 = scmp.eq.s32.totalorder %s45, 1
      %p273 = por %p271, %p272
      %p274 = scmp.ne.s32.totalorder %s265, %s266
      %p275 = scmp.eq.s32.totalorder %s45, 0
      %p276 = por %p274, %p275
      %p277 = scmp.ne.s32.totalorder %s265, %s266
      %p278 = scmp.eq.s32.totalorder %s46, 1
      %p279 = por %p277, %p278
      %p281 = scmp.ne.s32.totalorder %s266, %s280
      %p282 = scmp.eq.s32.totalorder %s46, 0
      %p283 = por %p281, %p282
      %s285 = sadd.s32 %s284, 1
      %p288 = scmp.eq.s32.totalorder %s40, 1
      %p289 = scmp.ne.s32.totalorder %s284, %s286
      %p290 = scmp.eq.s32.totalorder %s40, 0
      %p291 = por %p289, %p290
      %p292 = scmp.ne.s32.totalorder %s284, %s286
      %p293 = scmp.eq.s32.totalorder %s45, 1
      %p294 = por %p292, %p293
      %p295 = scmp.ne.s32.totalorder %s286, %s287
      %p296 = scmp.eq.s32.totalorder %s45, 0
      %p297 = por %p295, %p296
      %p298 = scmp.ne.s32.totalorder %s286, %s287
      %p299 = scmp.eq.s32.totalorder %s46, 1
      %p300 = por %p298, %p299
      %p302 = scmp.ne.s32.totalorder %s287, %s301
      %p303 = scmp.eq.s32.totalorder %s46, 0
      %p304 = por %p302, %p303
      %s306 = sadd.s32 %s305, 1
      %p309 = scmp.eq.s32.totalorder %s40, 1
      %p310 = scmp.ne.s32.totalorder %s305, %s307
      %p311 = scmp.eq.s32.totalorder %s40, 0
      %p312 = por %p310, %p311
      %p313 = scmp.ne.s32.totalorder %s305, %s307
      %p314 = scmp.eq.s32.totalorder %s45, 1
      %p315 = por %p313, %p314
      %p316 = scmp.ne.s32.totalorder %s307, %s308
      %p317 = scmp.eq.s32.totalorder %s45, 0
      %p318 = por %p316, %p317
      %p319 = scmp.ne.s32.totalorder %s307, %s308
      %p320 = scmp.eq.s32.totalorder %s46, 1
      %p321 = por %p319, %p320
      %p323 = scmp.ne.s32.totalorder %s308, %s322
      %p324 = scmp.eq.s32.totalorder %s46, 0
      %p325 = por %p323, %p324
      %s327 = sadd.s32 %s326, 1
      %p330 = scmp.eq.s32.totalorder %s40, 1
      %p331 = scmp.ne.s32.totalorder %s326, %s328
      %p332 = scmp.eq.s32.totalorder %s40, 0
      %p333 = por %p331, %p332
      %p334 = scmp.ne.s32.totalorder %s326, %s328
      %p335 = scmp.eq.s32.totalorder %s45, 1
      %p336 = por %p334, %p335
      %p337 = scmp.ne.s32.totalorder %s328, %s329
      %p338 = scmp.eq.s32.totalorder %s45, 0
      %p339 = por %p337, %p338
      %p340 = scmp.ne.s32.totalorder %s328, %s329
      %p341 = scmp.eq.s32.totalorder %s46, 1
      %p342 = por %p340, %p341
      %p344 = scmp.ne.s32.totalorder %s329, %s343
      %p345 = scmp.eq.s32.totalorder %s46, 0
      %p346 = por %p344, %p345
      %s348 = sadd.s32 %s347, 1
      %p351 = scmp.eq.s32.totalorder %s40, 1
      %p352 = scmp.ne.s32.totalorder %s347, %s349
      %p353 = scmp.eq.s32.totalorder %s40, 0
      %p354 = por %p352, %p353
      %p355 = scmp.ne.s32.totalorder %s347, %s349
      %p356 = scmp.eq.s32.totalorder %s45, 1
      %p357 = por %p355, %p356
      %p358 = scmp.ne.s32.totalorder %s349, %s350
      %p359 = scmp.eq.s32.totalorder %s45, 0
      %p360 = por %p358, %p359
      %p361 = scmp.ne.s32.totalorder %s349, %s350
      %p362 = scmp.eq.s32.totalorder %s46, 1
      %p363 = por %p361, %p362
      %p365 = scmp.ne.s32.totalorder %s350, %s364
      %p366 = scmp.eq.s32.totalorder %s46, 0
      %p367 = por %p365, %p366
      %s369 = sadd.s32 %s368, 1
      %p372 = scmp.eq.s32.totalorder %s40, 1
      %p373 = scmp.ne.s32.totalorder %s368, %s370
      %p374 = scmp.eq.s32.totalorder %s40, 0
      %p375 = por %p373, %p374
      %p376 = scmp.ne.s32.totalorder %s368, %s370
      %p377 = scmp.eq.s32.totalorder %s45, 1
      %p378 = por %p376, %p377
      %p379 = scmp.ne.s32.totalorder %s370, %s371
      %p380 = scmp.eq.s32.totalorder %s45, 0
      %p381 = por %p379, %p380
      %p382 = scmp.ne.s32.totalorder %s370, %s371
      %p383 = scmp.eq.s32.totalorder %s46, 1
      %p384 = por %p382, %p383
      %p386 = scmp.ne.s32.totalorder %s371, %s385
      %p387 = scmp.eq.s32.totalorder %s46, 0
      %p388 = por %p386, %p387
      %s390 = sadd.s32 %s389, 1
      %p393 = scmp.eq.s32.totalorder %s40, 1
      %p394 = scmp.ne.s32.totalorder %s389, %s391
      %p395 = scmp.eq.s32.totalorder %s40, 0
      %p396 = por %p394, %p395
      %p397 = scmp.ne.s32.totalorder %s389, %s391
      %p398 = scmp.eq.s32.totalorder %s45, 1
      %p399 = por %p397, %p398
      %p400 = scmp.ne.s32.totalorder %s391, %s392
      %p401 = scmp.eq.s32.totalorder %s45, 0
      %p402 = por %p400, %p401
      %p403 = scmp.ne.s32.totalorder %s391, %s392
      %p404 = scmp.eq.s32.totalorder %s46, 1
      %p405 = por %p403, %p404
      %p407 = scmp.ne.s32.totalorder %s392, %s406
      %p408 = scmp.eq.s32.totalorder %s46, 0
      %p409 = por %p407, %p408
      %s411 = sadd.s32 %s410, 1
      %p414 = scmp.eq.s32.totalorder %s40, 1
      %p415 = scmp.ne.s32.totalorder %s410, %s412
      %p416 = scmp.eq.s32.totalorder %s40, 0
      %p417 = por %p415, %p416
      %p418 = scmp.ne.s32.totalorder %s410, %s412
      %p419 = scmp.eq.s32.totalorder %s45, 1
      %p420 = por %p418, %p419
      %p421 = scmp.ne.s32.totalorder %s412, %s413
      %p422 = scmp.eq.s32.totalorder %s45, 0
      %p423 = por %p421, %p422
      %p424 = scmp.ne.s32.totalorder %s412, %s413
      %p425 = scmp.eq.s32.totalorder %s46, 1
      %p426 = por %p424, %p425
      %p428 = scmp.ne.s32.totalorder %s413, %s427
      %p429 = scmp.eq.s32.totalorder %s46, 0
      %p430 = por %p428, %p429
      %s432 = sadd.s32 %s431, 1
      %p435 = scmp.eq.s32.totalorder %s40, 1
      %p436 = scmp.ne.s32.totalorder %s431, %s433
      %p437 = scmp.eq.s32.totalorder %s40, 0
      %p438 = por %p436, %p437
      %p439 = scmp.ne.s32.totalorder %s431, %s433
      %p440 = scmp.eq.s32.totalorder %s45, 1
      %p441 = por %p439, %p440
      %p442 = scmp.ne.s32.totalorder %s433, %s434
      %p443 = scmp.eq.s32.totalorder %s45, 0
      %p444 = por %p442, %p443
      %p445 = scmp.ne.s32.totalorder %s433, %s434
      %p446 = scmp.eq.s32.totalorder %s46, 1
      %p447 = por %p445, %p446
      %p449 = scmp.ne.s32.totalorder %s434, %s448
      %p450 = scmp.eq.s32.totalorder %s46, 0
      %p451 = por %p449, %p450
      %s453 = sadd.s32 %s452, 1
      %p456 = scmp.eq.s32.totalorder %s40, 1
      %p457 = scmp.ne.s32.totalorder %s452, %s454
      %p458 = scmp.eq.s32.totalorder %s40, 0
      %p459 = por %p457, %p458
      %p460 = scmp.ne.s32.totalorder %s452, %s454
      %p461 = scmp.eq.s32.totalorder %s45, 1
      %p462 = por %p460, %p461
      %p463 = scmp.ne.s32.totalorder %s454, %s455
      %p464 = scmp.eq.s32.totalorder %s45, 0
      %p465 = por %p463, %p464
      %p466 = scmp.ne.s32.totalorder %s454, %s455
      %p467 = scmp.eq.s32.totalorder %s46, 1
      %p468 = por %p466, %p467
      %p470 = scmp.ne.s32.totalorder %s455, %s469
      %p471 = scmp.eq.s32.totalorder %s46, 0
      %p472 = por %p470, %p471
      %s474 = sadd.s32 %s473, 1
      %p477 = scmp.eq.s32.totalorder %s40, 1
      %p478 = scmp.ne.s32.totalorder %s473, %s475
      %p479 = scmp.eq.s32.totalorder %s40, 0
      %p480 = por %p478, %p479
      %p481 = scmp.ne.s32.totalorder %s473, %s475
      %p482 = scmp.eq.s32.totalorder %s45, 1
      %p483 = por %p481, %p482
      %p484 = scmp.ne.s32.totalorder %s475, %s476
      %p485 = scmp.eq.s32.totalorder %s45, 0
      %p486 = por %p484, %p485
      %p487 = scmp.ne.s32.totalorder %s475, %s476
      %p488 = scmp.eq.s32.totalorder %s46, 1
      %p489 = por %p487, %p488
      %p491 = scmp.ne.s32.totalorder %s476, %s490
      %p492 = scmp.eq.s32.totalorder %s46, 0
      %p493 = por %p491, %p492
      %s495 = sadd.s32 %s494, 1
      %p498 = scmp.eq.s32.totalorder %s40, 1
      %p499 = scmp.ne.s32.totalorder %s494, %s496
      %p500 = scmp.eq.s32.totalorder %s40, 0
      %p501 = por %p499, %p500
      %p502 = scmp.ne.s32.totalorder %s494, %s496
      %p503 = scmp.eq.s32.totalorder %s45, 1
      %p504 = por %p502, %p503
      %p505 = scmp.ne.s32.totalorder %s496, %s497
      %p506 = scmp.eq.s32.totalorder %s45, 0
      %p507 = por %p505, %p506
      %p508 = scmp.ne.s32.totalorder %s496, %s497
      %p509 = scmp.eq.s32.totalorder %s46, 1
      %p510 = por %p508, %p509
      %p512 = scmp.ne.s32.totalorder %s497, %s511
      %p513 = scmp.eq.s32.totalorder %s46, 0
      %p514 = por %p512, %p513
      %s516 = sadd.s32 %s515, 1
      %p519 = scmp.eq.s32.totalorder %s40, 1
      %p520 = scmp.ne.s32.totalorder %s515, %s517
      %p521 = scmp.eq.s32.totalorder %s40, 0
      %p522 = por %p520, %p521
      %p523 = scmp.ne.s32.totalorder %s515, %s517
      %p524 = scmp.eq.s32.totalorder %s45, 1
      %p525 = por %p523, %p524
      %p526 = scmp.ne.s32.totalorder %s517, %s518
      %p527 = scmp.eq.s32.totalorder %s45, 0
      %p528 = por %p526, %p527
      %p529 = scmp.ne.s32.totalorder %s517, %s518
      %p530 = scmp.eq.s32.totalorder %s46, 1
      %p531 = por %p529, %p530
      %p533 = scmp.ne.s32.totalorder %s518, %s532
      %p534 = scmp.eq.s32.totalorder %s46, 0
      %p535 = por %p533, %p534
      %s537 = sadd.s32 %s536, 1
      %p540 = scmp.eq.s32.totalorder %s40, 1
      %p541 = scmp.ne.s32.totalorder %s536, %s538
      %p542 = scmp.eq.s32.totalorder %s40, 0
      %p543 = por %p541, %p542
      %p544 = scmp.ne.s32.totalorder %s536, %s538
      %p545 = scmp.eq.s32.totalorder %s45, 1
      %p546 = por %p544, %p545
      %p547 = scmp.ne.s32.totalorder %s538, %s539
      %p548 = scmp.eq.s32.totalorder %s45, 0
      %p549 = por %p547, %p548
      %p550 = scmp.ne.s32.totalorder %s538, %s539
      %p551 = scmp.eq.s32.totalorder %s46, 1
      %p552 = por %p550, %p551
      %p554 = scmp.ne.s32.totalorder %s539, %s553
      %p555 = scmp.eq.s32.totalorder %s46, 0
      %p556 = por %p554, %p555
      %s558 = sadd.s32 %s557, 1
      %p561 = scmp.eq.s32.totalorder %s40, 1
      %p562 = scmp.ne.s32.totalorder %s557, %s559
      %p563 = scmp.eq.s32.totalorder %s40, 0
      %p564 = por %p562, %p563
      %p565 = scmp.ne.s32.totalorder %s557, %s559
      %p566 = scmp.eq.s32.totalorder %s45, 1
      %p567 = por %p565, %p566
      %p568 = scmp.ne.s32.totalorder %s559, %s560
      %p569 = scmp.eq.s32.totalorder %s45, 0
      %p570 = por %p568, %p569
      %p571 = scmp.ne.s32.totalorder %s559, %s560
      %p572 = scmp.eq.s32.totalorder %s46, 1
      %p573 = por %p571, %p572
      %p575 = scmp.ne.s32.totalorder %s560, %s574
      %p576 = scmp.eq.s32.totalorder %s46, 0
      %p577 = por %p575, %p576
      %s579 = sadd.s32 %s578, 1
      %p582 = scmp.eq.s32.totalorder %s40, 1
      %p583 = scmp.ne.s32.totalorder %s578, %s580
      %p584 = scmp.eq.s32.totalorder %s40, 0
      %p585 = por %p583, %p584
      %p586 = scmp.ne.s32.totalorder %s578, %s580
      %p587 = scmp.eq.s32.totalorder %s45, 1
      %p588 = por %p586, %p587
      %p589 = scmp.ne.s32.totalorder %s580, %s581
      %p590 = scmp.eq.s32.totalorder %s45, 0
      %p591 = por %p589, %p590
      %p592 = scmp.ne.s32.totalorder %s580, %s581
      %p593 = scmp.eq.s32.totalorder %s46, 1
      %p594 = por %p592, %p593
      %p596 = scmp.ne.s32.totalorder %s581, %s595
      %p597 = scmp.eq.s32.totalorder %s46, 0
      %p598 = por %p596, %p597
      %s599 = ssub.s32 %s40, %s47
      %p600 = scmp.eq.s32.totalorder %s599, 0
      %s602 = sadd.s32 %s601, 1
      %s603 = scalar_select %p600, %s601, %s602
      %p606 = pneg %p600
      %p607 = scmp.eq.s32.totalorder %s40, 1
      %p608 = por %p606, %p607
      %p609 = scmp.ne.s32.totalorder %s601, %s604
      %p610 = scmp.eq.s32.totalorder %s40, 0
      %p611 = por %p609, %p610
      %p612 = scmp.ne.s32.totalorder %s601, %s604
      %p613 = scmp.eq.s32.totalorder %s45, 1
      %p614 = por %p612, %p613
      %p615 = scmp.ne.s32.totalorder %s604, %s605
      %p616 = scmp.eq.s32.totalorder %s45, 0
      %p617 = por %p615, %p616
      %p618 = scmp.ne.s32.totalorder %s604, %s605
      %p619 = scmp.eq.s32.totalorder %s46, 1
      %p620 = por %p618, %p619
      %p622 = scmp.ne.s32.totalorder %s605, %s621
      %p623 = scmp.eq.s32.totalorder %s46, 0
      %p624 = por %p622, %p623
      %p625 = scmp.le.s32.totalorder 1, %s40
      %p626 = scmp.lt.s32.totalorder %s40, 3
      %p627 = pnand %p625, %p626
      %p628 = pneg %p627
      // Predicated region
      $region9: #{tpu_custom_call.1} parent=5 // pred_check
        _
      $region10: #{tpu_custom_call.1} parent=5 // pred_check_branch
        %630 = sbr.rel (%p627) target = $region12
      $region11: #{tpu_custom_call.1} parent=5 // pred_region
        %s631 = ssub.s32 %s40, 1
        // Predicated region
        $region13: #{tpu_custom_call.1} parent=11 // pred_check
          %p632 = pneg %p87
        $region14: #{tpu_custom_call.1} parent=11 // pred_check_branch
          %634 = sbr.rel (%p632) target = $region16
        $region15: #{tpu_custom_call.1} parent=11 // pred_region
          %s636 = ssub.s32 192, 192
          %637 = vsyncadd [#allocation6], %s636
          %s638 = sshll.u32 [#allocation5], 4
          %s639 = int_to_ptr.vmem [resolvable:$true] %s638
          %644 = dma.hbm_to_vmem [thread:$0]  %s1, 192, %s639, [#allocation6], 64, 64, 4
        $region16: #{tpu_custom_call.1} parent=11 // pred_fallthru
          _
        // Predicated region
        $region17: #{tpu_custom_call.1} parent=11 // pred_check
          %p645 = pneg %p108
        $region18: #{tpu_custom_call.1} parent=11 // pred_check_branch
          %647 = sbr.rel (%p645) target = $region20
        $region19: #{tpu_custom_call.1} parent=11 // pred_region
          _
        $region20: #{tpu_custom_call.1} parent=11 // pred_fallthru
          _
        // Predicated region
        $region21: #{tpu_custom_call.1} parent=11 // pred_check
          %p648 = pneg %p129
        $region22: #{tpu_custom_call.1} parent=11 // pred_check_branch
          %650 = sbr.rel (%p648) target = $region24
        $region23: #{tpu_custom_call.1} parent=11 // pred_region
          %s652 = ssub.s32 192, 192
          %653 = vsyncadd [#allocation9], %s652
          %s654 = sshll.u32 [#allocation8], 4
          %s655 = int_to_ptr.vmem [resolvable:$true] %s654
          %660 = dma.hbm_to_vmem [thread:$0]  %s3, 192, %s655, [#allocation9], 64, 64, 4
        $region24: #{tpu_custom_call.1} parent=11 // pred_fallthru
          _
        // Predicated region
        $region25: #{tpu_custom_call.1} parent=11 // pred_check
          %p661 = pneg %p150
        $region26: #{tpu_custom_call.1} parent=11 // pred_check_branch
          %663 = sbr.rel (%p661) target = $region28
        $region27: #{tpu_custom_call.1} parent=11 // pred_region
          _
        $region28: #{tpu_custom_call.1} parent=11 // pred_fallthru
          _
        // Predicated region
        $region29: #{tpu_custom_call.1} parent=11 // pred_check
          %p664 = pneg %p171
        $region30: #{tpu_custom_call.1} parent=11 // pred_check_branch
          %666 = sbr.rel (%p664) target = $region32
        $region31: #{tpu_custom_call.1} parent=11 // pred_region
          _
        $region32: #{tpu_custom_call.1} parent=11 // pred_fallthru
          _
        // Predicated region
        $region33: #{tpu_custom_call.1} parent=11 // pred_check
          %p667 = pneg %p192
        $region34: #{tpu_custom_call.1} parent=11 // pred_check_branch
          %669 = sbr.rel (%p667) target = $region36
        $region35: #{tpu_custom_call.1} parent=11 // pred_region
          _
        $region36: #{tpu_custom_call.1} parent=11 // pred_fallthru
          _
        // Predicated region
        $region37: #{tpu_custom_call.1} parent=11 // pred_check
          %p670 = pneg %p213
        $region38: #{tpu_custom_call.1} parent=11 // pred_check_branch
          %672 = sbr.rel (%p670) target = $region40
        $region39: #{tpu_custom_call.1} parent=11 // pred_region
          _
        $region40: #{tpu_custom_call.1} parent=11 // pred_fallthru
          _
        // Predicated region
        $region41: #{tpu_custom_call.1} parent=11 // pred_check
          %p673 = pneg %p234
        $region42: #{tpu_custom_call.1} parent=11 // pred_check_branch
          %675 = sbr.rel (%p673) target = $region44
        $region43: #{tpu_custom_call.1} parent=11 // pred_region
          _
        $region44: #{tpu_custom_call.1} parent=11 // pred_fallthru
          _
        // Predicated region
        $region45: #{tpu_custom_call.1} parent=11 // pred_check
          %p676 = pneg %p255
        $region46: #{tpu_custom_call.1} parent=11 // pred_check_branch
          %678 = sbr.rel (%p676) target = $region48
        $region47: #{tpu_custom_call.1} parent=11 // pred_region
          _
        $region48: #{tpu_custom_call.1} parent=11 // pred_fallthru
          _
        // Predicated region
        $region49: #{tpu_custom_call.1} parent=11 // pred_check
          %p679 = pneg %p276
        $region50: #{tpu_custom_call.1} parent=11 // pred_check_branch
          %681 = sbr.rel (%p679) target = $region52
        $region51: #{tpu_custom_call.1} parent=11 // pred_region
          _
        $region52: #{tpu_custom_call.1} parent=11 // pred_fallthru
          _
        // Predicated region
        $region53: #{tpu_custom_call.1} parent=11 // pred_check
          %p682 = pneg %p297
        $region54: #{tpu_custom_call.1} parent=11 // pred_check_branch
          %684 = sbr.rel (%p682) target = $region56
        $region55: #{tpu_custom_call.1} parent=11 // pred_region
          _
        $region56: #{tpu_custom_call.1} parent=11 // pred_fallthru
          _
        // Predicated region
        $region57: #{tpu_custom_call.1} parent=11 // pred_check
          %p685 = pneg %p318
        $region58: #{tpu_custom_call.1} parent=11 // pred_check_branch
          %687 = sbr.rel (%p685) target = $region60
        $region59: #{tpu_custom_call.1} parent=11 // pred_region
          _
        $region60: #{tpu_custom_call.1} parent=11 // pred_fallthru
          _
        // Predicated region
        $region61: #{tpu_custom_call.1} parent=11 // pred_check
          %p688 = pneg %p339
        $region62: #{tpu_custom_call.1} parent=11 // pred_check_branch
          %690 = sbr.rel (%p688) target = $region64
        $region63: #{tpu_custom_call.1} parent=11 // pred_region
          _
        $region64: #{tpu_custom_call.1} parent=11 // pred_fallthru
          _
        // Predicated region
        $region65: #{tpu_custom_call.1} parent=11 // pred_check
          %p691 = pneg %p360
        $region66: #{tpu_custom_call.1} parent=11 // pred_check_branch
          %693 = sbr.rel (%p691) target = $region68
        $region67: #{tpu_custom_call.1} parent=11 // pred_region
          _
        $region68: #{tpu_custom_call.1} parent=11 // pred_fallthru
          _
        // Predicated region
        $region69: #{tpu_custom_call.1} parent=11 // pred_check
          %p694 = pneg %p381
        $region70: #{tpu_custom_call.1} parent=11 // pred_check_branch
          %696 = sbr.rel (%p694) target = $region72
        $region71: #{tpu_custom_call.1} parent=11 // pred_region
          _
        $region72: #{tpu_custom_call.1} parent=11 // pred_fallthru
          _
        // Predicated region
        $region73: #{tpu_custom_call.1} parent=11 // pred_check
          %p697 = pneg %p402
        $region74: #{tpu_custom_call.1} parent=11 // pred_check_branch
          %699 = sbr.rel (%p697) target = $region76
        $region75: #{tpu_custom_call.1} parent=11 // pred_region
          _
        $region76: #{tpu_custom_call.1} parent=11 // pred_fallthru
          _
        // Predicated region
        $region77: #{tpu_custom_call.1} parent=11 // pred_check
          %p700 = pneg %p423
        $region78: #{tpu_custom_call.1} parent=11 // pred_check_branch
          %702 = sbr.rel (%p700) target = $region80
        $region79: #{tpu_custom_call.1} parent=11 // pred_region
          _
        $region80: #{tpu_custom_call.1} parent=11 // pred_fallthru
          _
        // Predicated region
        $region81: #{tpu_custom_call.1} parent=11 // pred_check
          %p703 = pneg %p444
        $region82: #{tpu_custom_call.1} parent=11 // pred_check_branch
          %705 = sbr.rel (%p703) target = $region84
        $region83: #{tpu_custom_call.1} parent=11 // pred_region
          _
        $region84: #{tpu_custom_call.1} parent=11 // pred_fallthru
          _
        // Predicated region
        $region85: #{tpu_custom_call.1} parent=11 // pred_check
          %p706 = pneg %p465
        $region86: #{tpu_custom_call.1} parent=11 // pred_check_branch
          %708 = sbr.rel (%p706) target = $region88
        $region87: #{tpu_custom_call.1} parent=11 // pred_region
          _
        $region88: #{tpu_custom_call.1} parent=11 // pred_fallthru
          _
        // Predicated region
        $region89: #{tpu_custom_call.1} parent=11 // pred_check
          %p709 = pneg %p486
        $region90: #{tpu_custom_call.1} parent=11 // pred_check_branch
          %711 = sbr.rel (%p709) target = $region92
        $region91: #{tpu_custom_call.1} parent=11 // pred_region
          _
        $region92: #{tpu_custom_call.1} parent=11 // pred_fallthru
          _
        // Predicated region
        $region93: #{tpu_custom_call.1} parent=11 // pred_check
          %p712 = pneg %p507
        $region94: #{tpu_custom_call.1} parent=11 // pred_check_branch
          %714 = sbr.rel (%p712) target = $region96
        $region95: #{tpu_custom_call.1} parent=11 // pred_region
          _
        $region96: #{tpu_custom_call.1} parent=11 // pred_fallthru
          _
        // Predicated region
        $region97: #{tpu_custom_call.1} parent=11 // pred_check
          %p715 = pneg %p528
        $region98: #{tpu_custom_call.1} parent=11 // pred_check_branch
          %717 = sbr.rel (%p715) target = $region100
        $region99: #{tpu_custom_call.1} parent=11 // pred_region
          _
        $region100: #{tpu_custom_call.1} parent=11 // pred_fallthru
          _
        // Predicated region
        $region101: #{tpu_custom_call.1} parent=11 // pred_check
          %p718 = pneg %p549
        $region102: #{tpu_custom_call.1} parent=11 // pred_check_branch
          %720 = sbr.rel (%p718) target = $region104
        $region103: #{tpu_custom_call.1} parent=11 // pred_region
          _
        $region104: #{tpu_custom_call.1} parent=11 // pred_fallthru
          _
        // Predicated region
        $region105: #{tpu_custom_call.1} parent=11 // pred_check
          %p721 = pneg %p570
        $region106: #{tpu_custom_call.1} parent=11 // pred_check_branch
          %723 = sbr.rel (%p721) target = $region108
        $region107: #{tpu_custom_call.1} parent=11 // pred_region
          _
        $region108: #{tpu_custom_call.1} parent=11 // pred_fallthru
          _
        // Predicated region
        $region109: #{tpu_custom_call.1} parent=11 // pred_check
          %p724 = pneg %p591
        $region110: #{tpu_custom_call.1} parent=11 // pred_check_branch
          %726 = sbr.rel (%p724) target = $region112
        $region111: #{tpu_custom_call.1} parent=11 // pred_region
          _
        $region112: #{tpu_custom_call.1} parent=11 // pred_fallthru
          _
      $region12: #{tpu_custom_call.1} parent=5 // pred_fallthru
        _
      %p727 = scmp.lt.s32.totalorder %s40, 2
      // Predicated region
      $region113: #{tpu_custom_call.1} parent=5 // pred_check
        %p728 = pneg %p727
      $region114: #{tpu_custom_call.1} parent=5 // pred_check_branch
        %730 = sbr.rel (%p728) target = $region116
      $region115: #{tpu_custom_call.1} parent=5 // pred_region
        // Predicated region
        $region117: #{tpu_custom_call.1} parent=115 // pred_check
          %p731 = pneg %p60
        $region118: #{tpu_custom_call.1} parent=115 // pred_check_branch
          %733 = sbr.rel (%p731) target = $region120
        $region119: #{tpu_custom_call.1} parent=115 // pred_region
          %p734 = scmp.lt.s32.totalorder %s40, 1
          %s735 = scalar_select %p734, %s40, 1
          %s736 = smul.addr %s735, 2
          %s737 = smul.addr %s736, 8
          %s738 = scalar_lea.vmem %s0, %s737
        $region120: #{tpu_custom_call.1} parent=115 // pred_fallthru
          _
      $region116: #{tpu_custom_call.1} parent=5 // pred_fallthru
        _
      %p739 = scmp.le.s32.totalorder 1, %s40
      %p740 = scmp.lt.s32.totalorder %s40, 3
      %p741 = pnand %p739, %p740
      %p742 = pneg %p741
      // Predicated region
      $region121: #{tpu_custom_call.1} parent=5 // pred_check
        _
      $region122: #{tpu_custom_call.1} parent=5 // pred_check_branch
        %744 = sbr.rel (%p741) target = $region124
      $region123: #{tpu_custom_call.1} parent=5 // pred_region
        %s745 = ssub.s32 %s40, 1
        // Predicated region
        $region125: #{tpu_custom_call.1} parent=123 // pred_check
          %p746 = pneg %p87
        $region126: #{tpu_custom_call.1} parent=123 // pred_check_branch
          %748 = sbr.rel (%p746) target = $region128
        $region127: #{tpu_custom_call.1} parent=123 // pred_region
          %749 = dma.done [#allocation6], 192
        $region128: #{tpu_custom_call.1} parent=123 // pred_fallthru
          _
        // Predicated region
        $region129: #{tpu_custom_call.1} parent=123 // pred_check
          %p750 = pneg %p129
        $region130: #{tpu_custom_call.1} parent=123 // pred_check_branch
          %752 = sbr.rel (%p750) target = $region132
        $region131: #{tpu_custom_call.1} parent=123 // pred_region
          %753 = dma.done [#allocation9], 192
        $region132: #{tpu_custom_call.1} parent=123 // pred_fallthru
          _
        %p754 = scmp.lt.s32.totalorder %s45, 1
        %s755 = scalar_select %p754, %s45, 1
        %s756 = smul.addr %s755, 2
        %s757 = smul.addr %s756, 8
        %s758 = scalar_lea.vmem %s0, %s757
        %p759 = pneg %p66
        %p760 = pneg %p63
        %p761 = pneg %p87
        %p762 = pneg %p84
        %p763 = pneg %p108
        %p764 = pneg %p105
        %p765 = pneg %p129
        %p766 = pneg %p126
        %p767 = pneg %p150
        %p768 = pneg %p147
        %p769 = pneg %p171
        %p770 = pneg %p168
        %p771 = pneg %p192
        %p772 = pneg %p189
        %p773 = pneg %p213
        %p774 = pneg %p210
        %p775 = pneg %p234
        %p776 = pneg %p231
        %p777 = pneg %p255
        %p778 = pneg %p252
        %p779 = pneg %p276
        %p780 = pneg %p273
        %p781 = pneg %p297
        %p782 = pneg %p294
        %p783 = pneg %p318
        %p784 = pneg %p315
        %p785 = pneg %p339
        %p786 = pneg %p336
        %p787 = pneg %p360
        %p788 = pneg %p357
        %p789 = pneg %p381
        %p790 = pneg %p378
        %p791 = pneg %p402
        %p792 = pneg %p399
        %p793 = pneg %p423
        %p794 = pneg %p420
        %p795 = pneg %p444
        %p796 = pneg %p441
        %p797 = pneg %p465
        %p798 = pneg %p462
        %p799 = pneg %p486
        %p800 = pneg %p483
        %p801 = pneg %p507
        %p802 = pneg %p504
        %p803 = pneg %p528
        %p804 = pneg %p525
        %p805 = pneg %p549
        %p806 = pneg %p546
        %p807 = pneg %p570
        %p808 = pneg %p567
        %p809 = pneg %p591
        %p810 = pneg %p588
        %p811 = pneg %p617
        %p812 = pneg %p614
        %s813 = sand.u32 %s604, 1
        %s814 = scalar_lea.sflag [#allocation7], %s813
        %s815 = sand.u32 %s604, 1
        %s816 = smul.addr %s815, 16
        %s817 = scalar_lea.vmem [#allocation10], %s816
        %p818 = scmp.lt.s32.totalorder %s45, 1
        %s819 = scalar_select %p818, %s45, 1
        %s820 = smul.addr %s819, 2
        %s821 = smul.addr %s820, 8
        %s822 = scalar_lea.vmem %s0, %s821
        %v823 = vld [vmem:[%s822] sm:$0xff]
        %v824 = vld [vmem:[%s822 + $0x8] sm:$0xff]
        %s825 = sld [smem:[#allocation2]]
        %v826 = vld [vmem:[%s10] sm:$0xff]
        %v827 = vld [vmem:[%s10 + $0x8] sm:$0xff]
        %v828 = vld [vmem:[%s10 + $0x10] sm:$0xff]
        %v829 = vld [vmem:[%s10 + $0x18] sm:$0xff]
        %v830 = vld [vmem:[%s10 + $0x20] sm:$0xff]
        %v831 = vld [vmem:[%s10 + $0x28] sm:$0xff]
        %v832 = vld [vmem:[%s10 + $0x30] sm:$0xff]
        %v833 = vld [vmem:[%s10 + $0x38] sm:$0xff]
        %v834 = vld [vmem:[%s10 + $0x40] sm:$0xff]
        %v835 = vld [vmem:[%s10 + $0x48] sm:$0xff]
        %v836 = vld [vmem:[%s10 + $0x50] sm:$0xff]
        %v837 = vld [vmem:[%s10 + $0x58] sm:$0xff]
        %v838 = vld [vmem:[%s10 + $0x60] sm:$0xff]
        %v839 = vld [vmem:[%s10 + $0x68] sm:$0xff]
        %v840 = vld [vmem:[%s10 + $0x70] sm:$0xff]
        %v841 = vld [vmem:[%s10 + $0x78] sm:$0xff]
        %v842 = vld [vmem:[%s11] sm:$0xff]
        %v843 = vld [vmem:[%s11 + $0x8] sm:$0xff]
        %v844 = vld [vmem:[%s14] sm:$0xff]
        %v845 = vld [vmem:[%s14 + $0x8] sm:$0xff]
        %v846 = vld [vmem:[%s14 + $0x10] sm:$0xff]
        %v847 = vld [vmem:[%s14 + $0x18] sm:$0xff]
        %v848 = vld [vmem:[%s14 + $0x20] sm:$0xff]
        %v849 = vld [vmem:[%s14 + $0x28] sm:$0xff]
        %v850 = vld [vmem:[%s14 + $0x30] sm:$0xff]
        %v851 = vld [vmem:[%s14 + $0x38] sm:$0xff]
        %v852 = vld [vmem:[%s14 + $0x40] sm:$0xff]
        %v853 = vld [vmem:[%s14 + $0x48] sm:$0xff]
        %v854 = vld [vmem:[%s14 + $0x50] sm:$0xff]
        %v855 = vld [vmem:[%s14 + $0x58] sm:$0xff]
        %v856 = vld [vmem:[%s14 + $0x60] sm:$0xff]
        %v857 = vld [vmem:[%s14 + $0x68] sm:$0xff]
        %v858 = vld [vmem:[%s14 + $0x70] sm:$0xff]
        %v859 = vld [vmem:[%s14 + $0x78] sm:$0xff]
        %v860 = vld [vmem:[#allocation5] sm:$0xf]
        %v861 = vld [vmem:[%s2] sm:$0xf]
        %863 = vset.pattern.permute.xlu0 0
        %864 = vperm.xlu0 %863, %v861
        %v865 = vpop.permute.xlu0 %864
        %vm867 = vcmask 130048
        %v869 = vsel %vm867, %v860, 0
        %871 = vmatprep.subr.mxu0 0.0
        %872 = vmatpush1.msra.mxu0 %v823
        %873 = vmatprep.subr.mxu0 0.0
        %874 = vmatpush1.msra.mxu0 %v824
        %875 = vmatprep.subr.mxu0 0.0
        %876 = vmatpush1.msra.mxu0 0.0
        %877 = vmatprep.subr.mxu0 0.0
        %878 = vmatpush1.msra.mxu0 0.0
        %879 = vmatprep.subr.mxu0 0.0
        %880 = vmatpush1.msra.mxu0 0.0
        %881 = vmatprep.subr.mxu0 0.0
        %882 = vmatpush1.msra.mxu0 0.0
        %883 = vmatprep.subr.mxu0 0.0
        %884 = vmatpush1.msra.mxu0 0.0
        %885 = vmatprep.subr.mxu0 0.0
        %886 = vmatpush1.msra.mxu0 0.0
        %887 = vmatprep.subr.mxu0 0.0
        %888 = vmatpush1.msra.mxu0 0.0
        %889 = vmatprep.subr.mxu0 0.0
        %890 = vmatpush1.msra.mxu0 0.0
        %891 = vmatprep.subr.mxu0 0.0
        %892 = vmatpush1.msra.mxu0 0.0
        %893 = vmatprep.subr.mxu0 0.0
        %894 = vmatpush1.msra.mxu0 0.0
        %895 = vmatprep.subr.mxu0 0.0
        %896 = vmatpush1.msra.mxu0 0.0
        %897 = vmatprep.subr.mxu0 0.0
        %898 = vmatpush1.msra.mxu0 0.0
        %899 = vmatprep.subr.mxu0 0.0
        %900 = vmatpush1.msra.mxu0 0.0
        %901 = vmatprep.subr.mxu0 0.0
        %902 = vmatpush1.msra.mxu0 0.0
        %903 = vmatprep.subr.mxu0 0.0
        %904 = vmatpush1.msra.mxu0 0.0
        %905 = vmatprep.subr.mxu0 0.0
        %906 = vmatpush1.msra.mxu0 0.0
        %907 = vmatprep.subr.mxu0 0.0
        %908 = vmatpush1.msra.mxu0 0.0
        %909 = vmatprep.subr.mxu0 0.0
        %910 = vmatpush1.msra.mxu0 0.0
        %911 = vmatprep.subr.mxu0 0.0
        %912 = vmatpush1.msra.mxu0 0.0
        %913 = vmatprep.subr.mxu0 0.0
        %914 = vmatpush1.msra.mxu0 0.0
        %915 = vmatprep.subr.mxu0 0.0
        %916 = vmatpush1.msra.mxu0 0.0
        %917 = vmatprep.subr.mxu0 0.0
        %918 = vmatpush1.msra.mxu0 0.0
        %919 = vmatprep.subr.mxu0 0.0
        %920 = vmatpush1.msra.mxu0 0.0
        %921 = vmatprep.subr.mxu0 0.0
        %922 = vmatpush1.msra.mxu0 0.0
        %923 = vmatprep.subr.mxu0 0.0
        %924 = vmatpush1.msra.mxu0 0.0
        %925 = vmatprep.subr.mxu0 0.0
        %926 = vmatpush1.msra.mxu0 0.0
        %927 = vmatprep.subr.mxu0 0.0
        %928 = vmatpush1.msra.mxu0 0.0
        %929 = vmatprep.subr.mxu0 0.0
        %930 = vmatpush1.msra.mxu0 0.0
        %931 = vmatprep.subr.mxu0 0.0
        %932 = vmatpush1.msra.mxu0 0.0
        %933 = vmatprep.subr.mxu0 0.0
        %934 = vmatpush1.msra.mxu0 0.0
        %935 = vmatprep.mubr.f32.mxu0 0.0
        %936 = vmatmul.mubr.f32.gmra.mrb[0].mxu0 %v869
        %v937 = vpop.f32.mrb[0].mxu0
        %v938 = vadd.f32 %v865, %v937
        %v939 = vpop.f32.mrb[0].mxu0
        %940 = vdwg.mxu0
        %v941 = vld [vmem:[#allocation8] sm:$0xf]
        %v942 = vld [vmem:[%s4] sm:$0xf]
        %944 = vset.pattern.permute.xlu0 0
        %945 = vperm.xlu0 %944, %v942
        %v946 = vpop.permute.xlu0 %945
        %v949 = vsel %vm867, %v941, 0
        %951 = vmatprep.subr.mxu0 0.0
        %952 = vmatpush1.msra.mxu0 %v823
        %953 = vmatprep.subr.mxu0 0.0
        %954 = vmatpush1.msra.mxu0 %v824
        %955 = vmatprep.subr.mxu0 0.0
        %956 = vmatpush1.msra.mxu0 0.0
        %957 = vmatprep.subr.mxu0 0.0
        %958 = vmatpush1.msra.mxu0 0.0
        %959 = vmatprep.subr.mxu0 0.0
        %960 = vmatpush1.msra.mxu0 0.0
        %961 = vmatprep.subr.mxu0 0.0
        %962 = vmatpush1.msra.mxu0 0.0
        %963 = vmatprep.subr.mxu0 0.0
        %964 = vmatpush1.msra.mxu0 0.0
        %965 = vmatprep.subr.mxu0 0.0
        %966 = vmatpush1.msra.mxu0 0.0
        %967 = vmatprep.subr.mxu0 0.0
        %968 = vmatpush1.msra.mxu0 0.0
        %969 = vmatprep.subr.mxu0 0.0
        %970 = vmatpush1.msra.mxu0 0.0
        %971 = vmatprep.subr.mxu0 0.0
        %972 = vmatpush1.msra.mxu0 0.0
        %973 = vmatprep.subr.mxu0 0.0
        %974 = vmatpush1.msra.mxu0 0.0
        %975 = vmatprep.subr.mxu0 0.0
        %976 = vmatpush1.msra.mxu0 0.0
        %977 = vmatprep.subr.mxu0 0.0
        %978 = vmatpush1.msra.mxu0 0.0
        %979 = vmatprep.subr.mxu0 0.0
        %980 = vmatpush1.msra.mxu0 0.0
        %981 = vmatprep.subr.mxu0 0.0
        %982 = vmatpush1.msra.mxu0 0.0
        %983 = vmatprep.subr.mxu0 0.0
        %984 = vmatpush1.msra.mxu0 0.0
        %985 = vmatprep.subr.mxu0 0.0
        %986 = vmatpush1.msra.mxu0 0.0
        %987 = vmatprep.subr.mxu0 0.0
        %988 = vmatpush1.msra.mxu0 0.0
        %989 = vmatprep.subr.mxu0 0.0
        %990 = vmatpush1.msra.mxu0 0.0
        %991 = vmatprep.subr.mxu0 0.0
        %992 = vmatpush1.msra.mxu0 0.0
        %993 = vmatprep.subr.mxu0 0.0
        %994 = vmatpush1.msra.mxu0 0.0
        %995 = vmatprep.subr.mxu0 0.0
        %996 = vmatpush1.msra.mxu0 0.0
        %997 = vmatprep.subr.mxu0 0.0
        %998 = vmatpush1.msra.mxu0 0.0
        %999 = vmatprep.subr.mxu0 0.0
        %1000 = vmatpush1.msra.mxu0 0.0
        %1001 = vmatprep.subr.mxu0 0.0
        %1002 = vmatpush1.msra.mxu0 0.0
        %1003 = vmatprep.subr.mxu0 0.0
        %1004 = vmatpush1.msra.mxu0 0.0
        %1005 = vmatprep.subr.mxu0 0.0
        %1006 = vmatpush1.msra.mxu0 0.0
        %1007 = vmatprep.subr.mxu0 0.0
        %1008 = vmatpush1.msra.mxu0 0.0
        %1009 = vmatprep.subr.mxu0 0.0
        %1010 = vmatpush1.msra.mxu0 0.0
        %1011 = vmatprep.subr.mxu0 0.0
        %1012 = vmatpush1.msra.mxu0 0.0
        %1013 = vmatprep.subr.mxu0 0.0
        %1014 = vmatpush1.msra.mxu0 0.0
        %1015 = vmatprep.mubr.f32.mxu0 0.0
        %1016 = vmatmul.mubr.f32.gmra.mrb[0].mxu0 %v949
        %v1017 = vpop.f32.mrb[0].mxu0
        %v1018 = vadd.f32 %v946, %v1017
        %v1019 = vpop.f32.mrb[0].mxu0
        %1020 = vdwg.mxu0
        %1021 = vxpose.xlu0.b32.start [1/16] %v938, 128
        %1022 = vxpose.xlu0.b32.cont [2/16] 0.0, 128
        %1023 = vxpose.xlu0.b32.cont [3/16] 0.0, 128
        %1024 = vxpose.xlu0.b32.cont [4/16] 0.0, 128
        %1025 = vxpose.xlu0.b32.cont [5/16] 0.0, 128
        %1026 = vxpose.xlu0.b32.cont [6/16] 0.0, 128
        %1027 = vxpose.xlu0.b32.cont [7/16] 0.0, 128
        %1028 = vxpose.xlu0.b32.cont [8/16] 0.0, 128
        %1029 = vxpose.xlu0.b32.cont [9/16] 0.0, 128
        %1030 = vxpose.xlu0.b32.cont [10/16] 0.0, 128
        %1031 = vxpose.xlu0.b32.cont [11/16] 0.0, 128
        %1032 = vxpose.xlu0.b32.cont [12/16] 0.0, 128
        %1033 = vxpose.xlu0.b32.cont [13/16] 0.0, 128
        %1034 = vxpose.xlu0.b32.cont [14/16] 0.0, 128
        %1035 = vxpose.xlu0.b32.cont [15/16] 0.0, 128
        %1036 = vxpose.xlu0.b32.end [16/16] 0.0, 128
        %v1037 = vpop.trf.xlu0
        %v1038 = vpop.trf.xlu0
        %v1039 = vpop.trf.xlu0
        %v1040 = vpop.trf.xlu0
        %v1041 = vpop.trf.xlu0
        %v1042 = vpop.trf.xlu0
        %v1043 = vpop.trf.xlu0
        %v1044 = vpop.trf.xlu0
        %v1045 = vpop.trf.xlu0
        %v1046 = vpop.trf.xlu0
        %v1047 = vpop.trf.xlu0
        %v1048 = vpop.trf.xlu0
        %v1049 = vpop.trf.xlu0
        %v1050 = vpop.trf.xlu0
        %v1051 = vpop.trf.xlu0
        %v1052 = vpop.trf.xlu0
        %vm1053 = vcmask 31744
        %v1055 = vsel %vm1053, %v1037, 0
        %v1058 = vsel %vm1053, %v1038, 0
        %v1061 = vsel %vm1053, %v1039, 0
        %v1064 = vsel %vm1053, %v1040, 0
        %v1067 = vsel %vm1053, %v1041, 0
        %v1070 = vsel %vm1053, %v1042, 0
        %v1073 = vsel %vm1053, %v1043, 0
        %v1076 = vsel %vm1053, %v1044, 0
        %v1079 = vsel %vm1053, %v1045, 0
        %v1082 = vsel %vm1053, %v1046, 0
        %v1085 = vsel %vm1053, %v1047, 0
        %v1088 = vsel %vm1053, %v1048, 0
        %v1091 = vsel %vm1053, %v1049, 0
        %v1094 = vsel %vm1053, %v1050, 0
        %v1097 = vsel %vm1053, %v1051, 0
        %v1100 = vsel %vm1053, %v1052, 0
        %vm1102 = vcmask 1043456
        %v1104 = vsel %vm1102, %v1018, 0
        %1106 = vmatprep.subr.mxu0 0.0
        %1107 = vmatpush1.msra.mxu0 %v1104
        %1108 = vmatprep.subr.mxu0 0.0
        %1109 = vmatpush1.msra.mxu0 0.0
        %1110 = vmatprep.subr.mxu0 0.0
        %1111 = vmatpush1.msra.mxu0 0.0
        %1112 = vmatprep.subr.mxu0 0.0
        %1113 = vmatpush1.msra.mxu0 0.0
        %1114 = vmatprep.subr.mxu0 0.0
        %1115 = vmatpush1.msra.mxu0 0.0
        %1116 = vmatprep.subr.mxu0 0.0
        %1117 = vmatpush1.msra.mxu0 0.0
        %1118 = vmatprep.subr.mxu0 0.0
        %1119 = vmatpush1.msra.mxu0 0.0
        %1120 = vmatprep.subr.mxu0 0.0
        %1121 = vmatpush1.msra.mxu0 0.0
        %1122 = vmatprep.subr.mxu0 0.0
        %1123 = vmatpush1.msra.mxu0 0.0
        %1124 = vmatprep.subr.mxu0 0.0
        %1125 = vmatpush1.msra.mxu0 0.0
        %1126 = vmatprep.subr.mxu0 0.0
        %1127 = vmatpush1.msra.mxu0 0.0
        %1128 = vmatprep.subr.mxu0 0.0
        %1129 = vmatpush1.msra.mxu0 0.0
        %1130 = vmatprep.subr.mxu0 0.0
        %1131 = vmatpush1.msra.mxu0 0.0
        %1132 = vmatprep.subr.mxu0 0.0
        %1133 = vmatpush1.msra.mxu0 0.0
        %1134 = vmatprep.subr.mxu0 0.0
        %1135 = vmatpush1.msra.mxu0 0.0
        %1136 = vmatprep.subr.mxu0 0.0
        %1137 = vmatpush1.msra.mxu0 0.0
        %1138 = vmatprep.subr.mxu0 0.0
        %1139 = vmatpush1.msra.mxu0 0.0
        %1140 = vmatprep.subr.mxu0 0.0
        %1141 = vmatpush1.msra.mxu0 0.0
        %1142 = vmatprep.subr.mxu0 0.0
        %1143 = vmatpush1.msra.mxu0 0.0
        %1144 = vmatprep.subr.mxu0 0.0
        %1145 = vmatpush1.msra.mxu0 0.0
        %1146 = vmatprep.subr.mxu0 0.0
        %1147 = vmatpush1.msra.mxu0 0.0
        %1148 = vmatprep.subr.mxu0 0.0
        %1149 = vmatpush1.msra.mxu0 0.0
        %1150 = vmatprep.subr.mxu0 0.0
        %1151 = vmatpush1.msra.mxu0 0.0
        %1152 = vmatprep.subr.mxu0 0.0
        %1153 = vmatpush1.msra.mxu0 0.0
        %1154 = vmatprep.subr.mxu0 0.0
        %1155 = vmatpush1.msra.mxu0 0.0
        %1156 = vmatprep.subr.mxu0 0.0
        %1157 = vmatpush1.msra.mxu0 0.0
        %1158 = vmatprep.subr.mxu0 0.0
        %1159 = vmatpush1.msra.mxu0 0.0
        %1160 = vmatprep.subr.mxu0 0.0
        %1161 = vmatpush1.msra.mxu0 0.0
        %1162 = vmatprep.subr.mxu0 0.0
        %1163 = vmatpush1.msra.mxu0 0.0
        %1164 = vmatprep.subr.mxu0 0.0
        %1165 = vmatpush1.msra.mxu0 0.0
        %1166 = vmatprep.subr.mxu0 0.0
        %1167 = vmatpush1.msra.mxu0 0.0
        %1168 = vmatprep.subr.mxu0 0.0
        %1169 = vmatpush1.msra.mxu0 0.0
        %1170 = vmatprep.mubr.f32.mxu0 0.0
        %1171 = vmatmul.mubr.f32.gmra.mrb[0].mxu0 %v1055
        %v1172 = vpop.f32.mrb[0].mxu0
        %v1173 = vadd.f32 0.0, %v1172
        %v1174 = vpop.f32.mrb[0].mxu0
        %1175 = vmatprep.mubr.f32.mxu0 0.0
        %1176 = vmatmul.mubr.f32.gmra.mrb[0].mxu0 %v1058
        %v1177 = vpop.f32.mrb[0].mxu0
        %v1178 = vadd.f32 0.0, %v1177
        %v1179 = vpop.f32.mrb[0].mxu0
        %1180 = vmatprep.mubr.f32.mxu0 0.0
        %1181 = vmatmul.mubr.f32.gmra.mrb[0].mxu0 %v1061
        %v1182 = vpop.f32.mrb[0].mxu0
        %v1183 = vadd.f32 0.0, %v1182
        %v1184 = vpop.f32.mrb[0].mxu0
        %1185 = vmatprep.mubr.f32.mxu0 0.0
        %1186 = vmatmul.mubr.f32.gmra.mrb[0].mxu0 %v1064
        %v1187 = vpop.f32.mrb[0].mxu0
        %v1188 = vadd.f32 0.0, %v1187
        %v1189 = vpop.f32.mrb[0].mxu0
        %1190 = vmatprep.mubr.f32.mxu0 0.0
        %1191 = vmatmul.mubr.f32.gmra.mrb[0].mxu0 %v1067
        %v1192 = vpop.f32.mrb[0].mxu0
        %v1193 = vadd.f32 0.0, %v1192
        %v1194 = vpop.f32.mrb[0].mxu0
        %1195 = vmatprep.mubr.f32.mxu0 0.0
        %1196 = vmatmul.mubr.f32.gmra.mrb[0].mxu0 %v1070
        %v1197 = vpop.f32.mrb[0].mxu0
        %v1198 = vadd.f32 0.0, %v1197
        %v1199 = vpop.f32.mrb[0].mxu0
        %1200 = vmatprep.mubr.f32.mxu0 0.0
        %1201 = vmatmul.mubr.f32.gmra.mrb[0].mxu0 %v1073
        %v1202 = vpop.f32.mrb[0].mxu0
        %v1203 = vadd.f32 0.0, %v1202
        %v1204 = vpop.f32.mrb[0].mxu0
        %1205 = vmatprep.mubr.f32.mxu0 0.0
        %1206 = vmatmul.mubr.f32.gmra.mrb[0].mxu0 %v1076
        %v1207 = vpop.f32.mrb[0].mxu0
        %v1208 = vadd.f32 0.0, %v1207
        %v1209 = vpop.f32.mrb[0].mxu0
        %1210 = vmatprep.mubr.f32.mxu0 0.0
        %1211 = vmatmul.mubr.f32.gmra.mrb[0].mxu0 %v1079
        %v1212 = vpop.f32.mrb[0].mxu0
        %v1213 = vadd.f32 0.0, %v1212
        %v1214 = vpop.f32.mrb[0].mxu0
        %1215 = vmatprep.mubr.f32.mxu0 0.0
        %1216 = vmatmul.mubr.f32.gmra.mrb[0].mxu0 %v1082
        %v1217 = vpop.f32.mrb[0].mxu0
        %v1218 = vadd.f32 0.0, %v1217
        %v1219 = vpop.f32.mrb[0].mxu0
        %1220 = vmatprep.mubr.f32.mxu0 0.0
        %1221 = vmatmul.mubr.f32.gmra.mrb[0].mxu0 %v1085
        %v1222 = vpop.f32.mrb[0].mxu0
        %v1223 = vadd.f32 0.0, %v1222
        %v1224 = vpop.f32.mrb[0].mxu0
        %1225 = vmatprep.mubr.f32.mxu0 0.0
        %1226 = vmatmul.mubr.f32.gmra.mrb[0].mxu0 %v1088
        %v1227 = vpop.f32.mrb[0].mxu0
        %v1228 = vadd.f32 0.0, %v1227
        %v1229 = vpop.f32.mrb[0].mxu0
        %1230 = vmatprep.mubr.f32.mxu0 0.0
        %1231 = vmatmul.mubr.f32.gmra.mrb[0].mxu0 %v1091
        %v1232 = vpop.f32.mrb[0].mxu0
        %v1233 = vadd.f32 0.0, %v1232
        %v1234 = vpop.f32.mrb[0].mxu0
        %1235 = vmatprep.mubr.f32.mxu0 0.0
        %1236 = vmatmul.mubr.f32.gmra.mrb[0].mxu0 %v1094
        %v1237 = vpop.f32.mrb[0].mxu0
        %v1238 = vadd.f32 0.0, %v1237
        %v1239 = vpop.f32.mrb[0].mxu0
        %1240 = vmatprep.mubr.f32.mxu0 0.0
        %1241 = vmatmul.mubr.f32.gmra.mrb[0].mxu0 %v1097
        %v1242 = vpop.f32.mrb[0].mxu0
        %v1243 = vadd.f32 0.0, %v1242
        %v1244 = vpop.f32.mrb[0].mxu0
        %1245 = vmatprep.mubr.f32.mxu0 0.0
        %1246 = vmatmul.mubr.f32.gmra.mrb[0].mxu0 %v1100
        %v1247 = vpop.f32.mrb[0].mxu0
        %v1248 = vadd.f32 0.0, %v1247
        %v1249 = vpop.f32.mrb[0].mxu0
        %1250 = vdwg.mxu0
        %v1251 = vmul.f32 %v1173, %v844
        %v1252 = vmul.f32 %v1178, %v845
        %v1253 = vmul.f32 %v1183, %v846
        %v1254 = vmul.f32 %v1188, %v847
        %v1255 = vmul.f32 %v1193, %v848
        %v1256 = vmul.f32 %v1198, %v849
        %v1257 = vmul.f32 %v1203, %v850
        %v1258 = vmul.f32 %v1208, %v851
        %v1259 = vmul.f32 %v1213, %v852
        %v1260 = vmul.f32 %v1218, %v853
        %v1261 = vmul.f32 %v1223, %v854
        %v1262 = vmul.f32 %v1228, %v855
        %v1263 = vmul.f32 %v1233, %v856
        %v1264 = vmul.f32 %v1238, %v857
        %v1265 = vmul.f32 %v1243, %v858
        %v1266 = vmul.f32 %v1248, %v859
        %1267 = vmatprep.subr.mxu0 0.0
        %1268 = vmatpush1.msra.mxu0 %v1251
        %1269 = vmatprep.subr.mxu0 0.0
        %1270 = vmatpush1.msra.mxu0 %v1252
        %1271 = vmatprep.subr.mxu0 0.0
        %1272 = vmatpush1.msra.mxu0 %v1253
        %1273 = vmatprep.subr.mxu0 0.0
        %1274 = vmatpush1.msra.mxu0 %v1254
        %1275 = vmatprep.subr.mxu0 0.0
        %1276 = vmatpush1.msra.mxu0 %v1255
        %1277 = vmatprep.subr.mxu0 0.0
        %1278 = vmatpush1.msra.mxu0 %v1256
        %1279 = vmatprep.subr.mxu0 0.0
        %1280 = vmatpush1.msra.mxu0 %v1257
        %1281 = vmatprep.subr.mxu0 0.0
        %1282 = vmatpush1.msra.mxu0 %v1258
        %1283 = vmatprep.subr.mxu0 0.0
        %1284 = vmatpush1.msra.mxu0 %v1259
        %1285 = vmatprep.subr.mxu0 0.0
        %1286 = vmatpush1.msra.mxu0 %v1260
        %1287 = vmatprep.subr.mxu0 0.0
        %1288 = vmatpush1.msra.mxu0 %v1261
        %1289 = vmatprep.subr.mxu0 0.0
        %1290 = vmatpush1.msra.mxu0 %v1262
        %1291 = vmatprep.subr.mxu0 0.0
        %1292 = vmatpush1.msra.mxu0 %v1263
        %1293 = vmatprep.subr.mxu0 0.0
        %1294 = vmatpush1.msra.mxu0 %v1264
        %1295 = vmatprep.subr.mxu0 0.0
        %1296 = vmatpush1.msra.mxu0 %v1265
        %1297 = vmatprep.subr.mxu0 0.0
        %1298 = vmatpush1.msra.mxu0 %v1266
        %1299 = vmatprep.subr.mxu0 0.0
        %1300 = vmatpush1.msra.mxu0 0.0
        %1301 = vmatprep.subr.mxu0 0.0
        %1302 = vmatpush1.msra.mxu0 0.0
        %1303 = vmatprep.subr.mxu0 0.0
        %1304 = vmatpush1.msra.mxu0 0.0
        %1305 = vmatprep.subr.mxu0 0.0
        %1306 = vmatpush1.msra.mxu0 0.0
        %1307 = vmatprep.subr.mxu0 0.0
        %1308 = vmatpush1.msra.mxu0 0.0
        %1309 = vmatprep.subr.mxu0 0.0
        %1310 = vmatpush1.msra.mxu0 0.0
        %1311 = vmatprep.subr.mxu0 0.0
        %1312 = vmatpush1.msra.mxu0 0.0
        %1313 = vmatprep.subr.mxu0 0.0
        %1314 = vmatpush1.msra.mxu0 0.0
        %1315 = vmatprep.subr.mxu0 0.0
        %1316 = vmatpush1.msra.mxu0 0.0
        %1317 = vmatprep.subr.mxu0 0.0
        %1318 = vmatpush1.msra.mxu0 0.0
        %1319 = vmatprep.subr.mxu0 0.0
        %1320 = vmatpush1.msra.mxu0 0.0
        %1321 = vmatprep.subr.mxu0 0.0
        %1322 = vmatpush1.msra.mxu0 0.0
        %1323 = vmatprep.subr.mxu0 0.0
        %1324 = vmatpush1.msra.mxu0 0.0
        %1325 = vmatprep.subr.mxu0 0.0
        %1326 = vmatpush1.msra.mxu0 0.0
        %1327 = vmatprep.subr.mxu0 0.0
        %1328 = vmatpush1.msra.mxu0 0.0
        %1329 = vmatprep.subr.mxu0 0.0
        %1330 = vmatpush1.msra.mxu0 0.0
        %1331 = vmatprep.mubr.f32.mxu0 0.0
        %1332 = vmatmul.mubr.f32.gmra.mrb[0].mxu0 %v842
        %v1333 = vpop.f32.mrb[0].mxu0
        %v1334 = vadd.f32 0.0, %v1333
        %v1335 = vpop.f32.mrb[0].mxu0
        %1336 = vmatprep.mubr.f32.mxu0 0.0
        %1337 = vmatmul.mubr.f32.gmra.mrb[0].mxu0 %v843
        %v1338 = vpop.f32.mrb[0].mxu0
        %v1339 = vadd.f32 0.0, %v1338
        %v1340 = vpop.f32.mrb[0].mxu0
        %1341 = vdwg.mxu0
        %1342 = vmatprep.subr.mxu0 0.0
        %1343 = vmatpush1.msra.mxu0 %v826
        %1344 = vmatprep.subr.mxu0 0.0
        %1345 = vmatpush1.msra.mxu0 %v827
        %1346 = vmatprep.subr.mxu0 0.0
        %1347 = vmatpush1.msra.mxu0 %v828
        %1348 = vmatprep.subr.mxu0 0.0
        %1349 = vmatpush1.msra.mxu0 %v829
        %1350 = vmatprep.subr.mxu0 0.0
        %1351 = vmatpush1.msra.mxu0 %v830
        %1352 = vmatprep.subr.mxu0 0.0
        %1353 = vmatpush1.msra.mxu0 %v831
        %1354 = vmatprep.subr.mxu0 0.0
        %1355 = vmatpush1.msra.mxu0 %v832
        %1356 = vmatprep.subr.mxu0 0.0
        %1357 = vmatpush1.msra.mxu0 %v833
        %1358 = vmatprep.subr.mxu0 0.0
        %1359 = vmatpush1.msra.mxu0 %v834
        %1360 = vmatprep.subr.mxu0 0.0
        %1361 = vmatpush1.msra.mxu0 %v835
        %1362 = vmatprep.subr.mxu0 0.0
        %1363 = vmatpush1.msra.mxu0 %v836
        %1364 = vmatprep.subr.mxu0 0.0
        %1365 = vmatpush1.msra.mxu0 %v837
        %1366 = vmatprep.subr.mxu0 0.0
        %1367 = vmatpush1.msra.mxu0 %v838
        %1368 = vmatprep.subr.mxu0 0.0
        %1369 = vmatpush1.msra.mxu0 %v839
        %1370 = vmatprep.subr.mxu0 0.0
        %1371 = vmatpush1.msra.mxu0 %v840
        %1372 = vmatprep.subr.mxu0 0.0
        %1373 = vmatpush1.msra.mxu0 %v841
        %1374 = vmatprep.subr.mxu0 0.0
        %1375 = vmatpush1.msra.mxu0 0.0
        %1376 = vmatprep.subr.mxu0 0.0
        %1377 = vmatpush1.msra.mxu0 0.0
        %1378 = vmatprep.subr.mxu0 0.0
        %1379 = vmatpush1.msra.mxu0 0.0
        %1380 = vmatprep.subr.mxu0 0.0
        %1381 = vmatpush1.msra.mxu0 0.0
        %1382 = vmatprep.subr.mxu0 0.0
        %1383 = vmatpush1.msra.mxu0 0.0
        %1384 = vmatprep.subr.mxu0 0.0
        %1385 = vmatpush1.msra.mxu0 0.0
        %1386 = vmatprep.subr.mxu0 0.0
        %1387 = vmatpush1.msra.mxu0 0.0
        %1388 = vmatprep.subr.mxu0 0.0
        %1389 = vmatpush1.msra.mxu0 0.0
        %1390 = vmatprep.subr.mxu0 0.0
        %1391 = vmatpush1.msra.mxu0 0.0
        %1392 = vmatprep.subr.mxu0 0.0
        %1393 = vmatpush1.msra.mxu0 0.0
        %1394 = vmatprep.subr.mxu0 0.0
        %1395 = vmatpush1.msra.mxu0 0.0
        %1396 = vmatprep.subr.mxu0 0.0
        %1397 = vmatpush1.msra.mxu0 0.0
        %1398 = vmatprep.subr.mxu0 0.0
        %1399 = vmatpush1.msra.mxu0 0.0
        %1400 = vmatprep.subr.mxu0 0.0
        %1401 = vmatpush1.msra.mxu0 0.0
        %1402 = vmatprep.subr.mxu0 0.0
        %1403 = vmatpush1.msra.mxu0 0.0
        %1404 = vmatprep.subr.mxu0 0.0
        %1405 = vmatpush1.msra.mxu0 0.0
        %1406 = vmatprep.mubr.f32.mxu0 0.0
        %1407 = vmatmul.mubr.f32.gmra.mrb[0].mxu0 %v1334
        %v1408 = vpop.f32.mrb[0].mxu0
        %v1409 = vadd.f32 0.0, %v1408
        %v1410 = vpop.f32.mrb[0].mxu0
        %1411 = vmatprep.mubr.f32.mxu0 0.0
        %1412 = vmatmul.mubr.f32.gmra.mrb[0].mxu0 %v1339
        %v1413 = vpop.f32.mrb[0].mxu0
        %v1414 = vadd.f32 0.0, %v1413
        %v1415 = vpop.f32.mrb[0].mxu0
        %1416 = vdwg.mxu0
        %v1417 = vld [vmem:[%s7] sm:$0xff]
        %v1418 = vld [vmem:[%s7 + $0x8] sm:$0xff]
        %v1419 = vmul.f32 %v1409, 0.03125
        %v1420 = vmul.f32 %v1414, 0.03125
        %v1421 = vtanh.pop %v1419
        %v1422 = vtanh.pop %v1420
        %v1423 = vstv %s825
        %v1424 = vmul.f32 %v1423, %v1421
        %v1425 = vmul.f32 %v1423, %v1422
        %v1426 = vadd.f32 %v1417, %v1424
        %v1427 = vadd.f32 %v1418, %v1425
        %v1429 = vsel %vm867, %v826, 0
        %v1432 = vsel %vm867, %v827, 0
        %v1435 = vsel %vm867, %v828, 0
        %v1438 = vsel %vm867, %v829, 0
        %v1441 = vsel %vm867, %v830, 0
        %v1444 = vsel %vm867, %v831, 0
        %v1447 = vsel %vm867, %v832, 0
        %v1450 = vsel %vm867, %v833, 0
        %v1453 = vsel %vm867, %v834, 0
        %v1456 = vsel %vm867, %v835, 0
        %v1459 = vsel %vm867, %v836, 0
        %v1462 = vsel %vm867, %v837, 0
        %v1465 = vsel %vm867, %v838, 0
        %v1468 = vsel %vm867, %v839, 0
        %v1471 = vsel %vm867, %v840, 0
        %v1474 = vsel %vm867, %v841, 0
        %1476 = vmatprep.subr.mxu0 0.0
        %1477 = vmatpush1.msra.mxu0 %v1426
        %1478 = vmatprep.subr.mxu0 0.0
        %1479 = vmatpush1.msra.mxu0 %v1427
        %1480 = vmatprep.subr.mxu0 0.0
        %1481 = vmatpush1.msra.mxu0 0.0
        %1482 = vmatprep.subr.mxu0 0.0
        %1483 = vmatpush1.msra.mxu0 0.0
        %1484 = vmatprep.subr.mxu0 0.0
        %1485 = vmatpush1.msra.mxu0 0.0
        %1486 = vmatprep.subr.mxu0 0.0
        %1487 = vmatpush1.msra.mxu0 0.0
        %1488 = vmatprep.subr.mxu0 0.0
        %1489 = vmatpush1.msra.mxu0 0.0
        %1490 = vmatprep.subr.mxu0 0.0
        %1491 = vmatpush1.msra.mxu0 0.0
        %1492 = vmatprep.subr.mxu0 0.0
        %1493 = vmatpush1.msra.mxu0 0.0
        %1494 = vmatprep.subr.mxu0 0.0
        %1495 = vmatpush1.msra.mxu0 0.0
        %1496 = vmatprep.subr.mxu0 0.0
        %1497 = vmatpush1.msra.mxu0 0.0
        %1498 = vmatprep.subr.mxu0 0.0
        %1499 = vmatpush1.msra.mxu0 0.0
        %1500 = vmatprep.subr.mxu0 0.0
        %1501 = vmatpush1.msra.mxu0 0.0
        %1502 = vmatprep.subr.mxu0 0.0
        %1503 = vmatpush1.msra.mxu0 0.0
        %1504 = vmatprep.subr.mxu0 0.0
        %1505 = vmatpush1.msra.mxu0 0.0
        %1506 = vmatprep.subr.mxu0 0.0
        %1507 = vmatpush1.msra.mxu0 0.0
        %1508 = vmatprep.subr.mxu0 0.0
        %1509 = vmatpush1.msra.mxu0 0.0
        %1510 = vmatprep.subr.mxu0 0.0
        %1511 = vmatpush1.msra.mxu0 0.0
        %1512 = vmatprep.subr.mxu0 0.0
        %1513 = vmatpush1.msra.mxu0 0.0
        %1514 = vmatprep.subr.mxu0 0.0
        %1515 = vmatpush1.msra.mxu0 0.0
        %1516 = vmatprep.subr.mxu0 0.0
        %1517 = vmatpush1.msra.mxu0 0.0
        %1518 = vmatprep.subr.mxu0 0.0
        %1519 = vmatpush1.msra.mxu0 0.0
        %1520 = vmatprep.subr.mxu0 0.0
        %1521 = vmatpush1.msra.mxu0 0.0
        %1522 = vmatprep.subr.mxu0 0.0
        %1523 = vmatpush1.msra.mxu0 0.0
        %1524 = vmatprep.subr.mxu0 0.0
        %1525 = vmatpush1.msra.mxu0 0.0
        %1526 = vmatprep.subr.mxu0 0.0
        %1527 = vmatpush1.msra.mxu0 0.0
        %1528 = vmatprep.subr.mxu0 0.0
        %1529 = vmatpush1.msra.mxu0 0.0
        %1530 = vmatprep.subr.mxu0 0.0
        %1531 = vmatpush1.msra.mxu0 0.0
        %1532 = vmatprep.subr.mxu0 0.0
        %1533 = vmatpush1.msra.mxu0 0.0
        %1534 = vmatprep.subr.mxu0 0.0
        %1535 = vmatpush1.msra.mxu0 0.0
        %1536 = vmatprep.subr.mxu0 0.0
        %1537 = vmatpush1.msra.mxu0 0.0
        %1538 = vmatprep.subr.mxu0 0.0
        %1539 = vmatpush1.msra.mxu0 0.0
        %1540 = vmatprep.mubr.f32.mxu0 0.0
        %1541 = vmatmul.mubr.f32.gmra.mrb[0].mxu0 %v1429
        %v1542 = vpop.f32.mrb[0].mxu0
        %v1543 = vadd.f32 0.0, %v1542
        %v1544 = vpop.f32.mrb[0].mxu0
        %1545 = vmatprep.mubr.f32.mxu0 0.0
        %1546 = vmatmul.mubr.f32.gmra.mrb[0].mxu0 %v1432
        %v1547 = vpop.f32.mrb[0].mxu0
        %v1548 = vadd.f32 0.0, %v1547
        %v1549 = vpop.f32.mrb[0].mxu0
        %1550 = vmatprep.mubr.f32.mxu0 0.0
        %1551 = vmatmul.mubr.f32.gmra.mrb[0].mxu0 %v1435
        %v1552 = vpop.f32.mrb[0].mxu0
        %v1553 = vadd.f32 0.0, %v1552
        %v1554 = vpop.f32.mrb[0].mxu0
        %1555 = vmatprep.mubr.f32.mxu0 0.0
        %1556 = vmatmul.mubr.f32.gmra.mrb[0].mxu0 %v1438
        %v1557 = vpop.f32.mrb[0].mxu0
        %v1558 = vadd.f32 0.0, %v1557
        %v1559 = vpop.f32.mrb[0].mxu0
        %1560 = vmatprep.mubr.f32.mxu0 0.0
        %1561 = vmatmul.mubr.f32.gmra.mrb[0].mxu0 %v1441
        %v1562 = vpop.f32.mrb[0].mxu0
        %v1563 = vadd.f32 0.0, %v1562
        %v1564 = vpop.f32.mrb[0].mxu0
        %1565 = vmatprep.mubr.f32.mxu0 0.0
        %1566 = vmatmul.mubr.f32.gmra.mrb[0].mxu0 %v1444
        %v1567 = vpop.f32.mrb[0].mxu0
        %v1568 = vadd.f32 0.0, %v1567
        %v1569 = vpop.f32.mrb[0].mxu0
        %1570 = vmatprep.mubr.f32.mxu0 0.0
        %1571 = vmatmul.mubr.f32.gmra.mrb[0].mxu0 %v1447
        %v1572 = vpop.f32.mrb[0].mxu0
        %v1573 = vadd.f32 0.0, %v1572
        %v1574 = vpop.f32.mrb[0].mxu0
        %1575 = vmatprep.mubr.f32.mxu0 0.0
        %1576 = vmatmul.mubr.f32.gmra.mrb[0].mxu0 %v1450
        %v1577 = vpop.f32.mrb[0].mxu0
        %v1578 = vadd.f32 0.0, %v1577
        %v1579 = vpop.f32.mrb[0].mxu0
        %1580 = vmatprep.mubr.f32.mxu0 0.0
        %1581 = vmatmul.mubr.f32.gmra.mrb[0].mxu0 %v1453
        %v1582 = vpop.f32.mrb[0].mxu0
        %v1583 = vadd.f32 0.0, %v1582
        %v1584 = vpop.f32.mrb[0].mxu0
        %1585 = vmatprep.mubr.f32.mxu0 0.0
        %1586 = vmatmul.mubr.f32.gmra.mrb[0].mxu0 %v1456
        %v1587 = vpop.f32.mrb[0].mxu0
        %v1588 = vadd.f32 0.0, %v1587
        %v1589 = vpop.f32.mrb[0].mxu0
        %1590 = vmatprep.mubr.f32.mxu0 0.0
        %1591 = vmatmul.mubr.f32.gmra.mrb[0].mxu0 %v1459
        %v1592 = vpop.f32.mrb[0].mxu0
        %v1593 = vadd.f32 0.0, %v1592
        %v1594 = vpop.f32.mrb[0].mxu0
        %1595 = vmatprep.mubr.f32.mxu0 0.0
        %1596 = vmatmul.mubr.f32.gmra.mrb[0].mxu0 %v1462
        %v1597 = vpop.f32.mrb[0].mxu0
        %v1598 = vadd.f32 0.0, %v1597
        %v1599 = vpop.f32.mrb[0].mxu0
        %1600 = vmatprep.mubr.f32.mxu0 0.0
        %1601 = vmatmul.mubr.f32.gmra.mrb[0].mxu0 %v1465
        %v1602 = vpop.f32.mrb[0].mxu0
        %v1603 = vadd.f32 0.0, %v1602
        %v1604 = vpop.f32.mrb[0].mxu0
        %1605 = vmatprep.mubr.f32.mxu0 0.0
        %1606 = vmatmul.mubr.f32.gmra.mrb[0].mxu0 %v1468
        %v1607 = vpop.f32.mrb[0].mxu0
        %v1608 = vadd.f32 0.0, %v1607
        %v1609 = vpop.f32.mrb[0].mxu0
        %1610 = vmatprep.mubr.f32.mxu0 0.0
        %1611 = vmatmul.mubr.f32.gmra.mrb[0].mxu0 %v1471
        %v1612 = vpop.f32.mrb[0].mxu0
        %v1613 = vadd.f32 0.0, %v1612
        %v1614 = vpop.f32.mrb[0].mxu0
        %1615 = vmatprep.mubr.f32.mxu0 0.0
        %1616 = vmatmul.mubr.f32.gmra.mrb[0].mxu0 %v1474
        %v1617 = vpop.f32.mrb[0].mxu0
        %v1618 = vadd.f32 0.0, %v1617
        %v1619 = vpop.f32.mrb[0].mxu0
        %1620 = vdwg.mxu0
        %v1622 = vsel %vm867, %v1543, 0
        %v1625 = vsel %vm867, %v1548, 0
        %v1628 = vsel %vm867, %v1553, 0
        %v1631 = vsel %vm867, %v1558, 0
        %v1634 = vsel %vm867, %v1563, 0
        %v1637 = vsel %vm867, %v1568, 0
        %v1640 = vsel %vm867, %v1573, 0
        %v1643 = vsel %vm867, %v1578, 0
        %v1646 = vsel %vm867, %v1583, 0
        %v1649 = vsel %vm867, %v1588, 0
        %v1652 = vsel %vm867, %v1593, 0
        %v1655 = vsel %vm867, %v1598, 0
        %v1658 = vsel %vm867, %v1603, 0
        %v1661 = vsel %vm867, %v1608, 0
        %v1664 = vsel %vm867, %v1613, 0
        %v1667 = vsel %vm867, %v1618, 0
        %1669 = vmatprep.subr.mxu0 0.0
        %1670 = vmatpush1.msra.mxu0 %v842
        %1671 = vmatprep.subr.mxu0 0.0
        %1672 = vmatpush1.msra.mxu0 %v843
        %1673 = vmatprep.subr.mxu0 0.0
        %1674 = vmatpush1.msra.mxu0 0.0
        %1675 = vmatprep.subr.mxu0 0.0
        %1676 = vmatpush1.msra.mxu0 0.0
        %1677 = vmatprep.subr.mxu0 0.0
        %1678 = vmatpush1.msra.mxu0 0.0
        %1679 = vmatprep.subr.mxu0 0.0
        %1680 = vmatpush1.msra.mxu0 0.0
        %1681 = vmatprep.subr.mxu0 0.0
        %1682 = vmatpush1.msra.mxu0 0.0
        %1683 = vmatprep.subr.mxu0 0.0
        %1684 = vmatpush1.msra.mxu0 0.0
        %1685 = vmatprep.subr.mxu0 0.0
        %1686 = vmatpush1.msra.mxu0 0.0
        %1687 = vmatprep.subr.mxu0 0.0
        %1688 = vmatpush1.msra.mxu0 0.0
        %1689 = vmatprep.subr.mxu0 0.0
        %1690 = vmatpush1.msra.mxu0 0.0
        %1691 = vmatprep.subr.mxu0 0.0
        %1692 = vmatpush1.msra.mxu0 0.0
        %1693 = vmatprep.subr.mxu0 0.0
        %1694 = vmatpush1.msra.mxu0 0.0
        %1695 = vmatprep.subr.mxu0 0.0
        %1696 = vmatpush1.msra.mxu0 0.0
        %1697 = vmatprep.subr.mxu0 0.0
        %1698 = vmatpush1.msra.mxu0 0.0
        %1699 = vmatprep.subr.mxu0 0.0
        %1700 = vmatpush1.msra.mxu0 0.0
        %1701 = vmatprep.subr.mxu0 0.0
        %1702 = vmatpush1.msra.mxu0 0.0
        %1703 = vmatprep.subr.mxu0 0.0
        %1704 = vmatpush1.msra.mxu0 0.0
        %1705 = vmatprep.subr.mxu0 0.0
        %1706 = vmatpush1.msra.mxu0 0.0
        %1707 = vmatprep.subr.mxu0 0.0
        %1708 = vmatpush1.msra.mxu0 0.0
        %1709 = vmatprep.subr.mxu0 0.0
        %1710 = vmatpush1.msra.mxu0 0.0
        %1711 = vmatprep.subr.mxu0 0.0
        %1712 = vmatpush1.msra.mxu0 0.0
        %1713 = vmatprep.subr.mxu0 0.0
        %1714 = vmatpush1.msra.mxu0 0.0
        %1715 = vmatprep.subr.mxu0 0.0
        %1716 = vmatpush1.msra.mxu0 0.0
        %1717 = vmatprep.subr.mxu0 0.0
        %1718 = vmatpush1.msra.mxu0 0.0
        %1719 = vmatprep.subr.mxu0 0.0
        %1720 = vmatpush1.msra.mxu0 0.0
        %1721 = vmatprep.subr.mxu0 0.0
        %1722 = vmatpush1.msra.mxu0 0.0
        %1723 = vmatprep.subr.mxu0 0.0
        %1724 = vmatpush1.msra.mxu0 0.0
        %1725 = vmatprep.subr.mxu0 0.0
        %1726 = vmatpush1.msra.mxu0 0.0
        %1727 = vmatprep.subr.mxu0 0.0
        %1728 = vmatpush1.msra.mxu0 0.0
        %1729 = vmatprep.subr.mxu0 0.0
        %1730 = vmatpush1.msra.mxu0 0.0
        %1731 = vmatprep.subr.mxu0 0.0
        %1732 = vmatpush1.msra.mxu0 0.0
        %1733 = vmatprep.mubr.f32.mxu0 0.0
        %1734 = vmatmul.mubr.f32.gmra.mrb[0].mxu0 %v1622
        %v1735 = vpop.f32.mrb[0].mxu0
        %v1736 = vadd.f32 0.0, %v1735
        %v1737 = vpop.f32.mrb[0].mxu0
        %1738 = vmatprep.mubr.f32.mxu0 0.0
        %1739 = vmatmul.mubr.f32.gmra.mrb[0].mxu0 %v1625
        %v1740 = vpop.f32.mrb[0].mxu0
        %v1741 = vadd.f32 0.0, %v1740
        %v1742 = vpop.f32.mrb[0].mxu0
        %1743 = vmatprep.mubr.f32.mxu0 0.0
        %1744 = vmatmul.mubr.f32.gmra.mrb[0].mxu0 %v1628
        %v1745 = vpop.f32.mrb[0].mxu0
        %v1746 = vadd.f32 0.0, %v1745
        %v1747 = vpop.f32.mrb[0].mxu0
        %1748 = vmatprep.mubr.f32.mxu0 0.0
        %1749 = vmatmul.mubr.f32.gmra.mrb[0].mxu0 %v1631
        %v1750 = vpop.f32.mrb[0].mxu0
        %v1751 = vadd.f32 0.0, %v1750
        %v1752 = vpop.f32.mrb[0].mxu0
        %1753 = vmatprep.mubr.f32.mxu0 0.0
        %1754 = vmatmul.mubr.f32.gmra.mrb[0].mxu0 %v1634
        %v1755 = vpop.f32.mrb[0].mxu0
        %v1756 = vadd.f32 0.0, %v1755
        %v1757 = vpop.f32.mrb[0].mxu0
        %1758 = vmatprep.mubr.f32.mxu0 0.0
        %1759 = vmatmul.mubr.f32.gmra.mrb[0].mxu0 %v1637
        %v1760 = vpop.f32.mrb[0].mxu0
        %v1761 = vadd.f32 0.0, %v1760
        %v1762 = vpop.f32.mrb[0].mxu0
        %1763 = vmatprep.mubr.f32.mxu0 0.0
        %1764 = vmatmul.mubr.f32.gmra.mrb[0].mxu0 %v1640
        %v1765 = vpop.f32.mrb[0].mxu0
        %v1766 = vadd.f32 0.0, %v1765
        %v1767 = vpop.f32.mrb[0].mxu0
        %1768 = vmatprep.mubr.f32.mxu0 0.0
        %1769 = vmatmul.mubr.f32.gmra.mrb[0].mxu0 %v1643
        %v1770 = vpop.f32.mrb[0].mxu0
        %v1771 = vadd.f32 0.0, %v1770
        %v1772 = vpop.f32.mrb[0].mxu0
        %1773 = vmatprep.mubr.f32.mxu0 0.0
        %1774 = vmatmul.mubr.f32.gmra.mrb[0].mxu0 %v1646
        %v1775 = vpop.f32.mrb[0].mxu0
        %v1776 = vadd.f32 0.0, %v1775
        %v1777 = vpop.f32.mrb[0].mxu0
        %1778 = vmatprep.mubr.f32.mxu0 0.0
        %1779 = vmatmul.mubr.f32.gmra.mrb[0].mxu0 %v1649
        %v1780 = vpop.f32.mrb[0].mxu0
        %v1781 = vadd.f32 0.0, %v1780
        %v1782 = vpop.f32.mrb[0].mxu0
        %1783 = vmatprep.mubr.f32.mxu0 0.0
        %1784 = vmatmul.mubr.f32.gmra.mrb[0].mxu0 %v1652
        %v1785 = vpop.f32.mrb[0].mxu0
        %v1786 = vadd.f32 0.0, %v1785
        %v1787 = vpop.f32.mrb[0].mxu0
        %1788 = vmatprep.mubr.f32.mxu0 0.0
        %1789 = vmatmul.mubr.f32.gmra.mrb[0].mxu0 %v1655
        %v1790 = vpop.f32.mrb[0].mxu0
        %v1791 = vadd.f32 0.0, %v1790
        %v1792 = vpop.f32.mrb[0].mxu0
        %1793 = vmatprep.mubr.f32.mxu0 0.0
        %1794 = vmatmul.mubr.f32.gmra.mrb[0].mxu0 %v1658
        %v1795 = vpop.f32.mrb[0].mxu0
        %v1796 = vadd.f32 0.0, %v1795
        %v1797 = vpop.f32.mrb[0].mxu0
        %1798 = vmatprep.mubr.f32.mxu0 0.0
        %1799 = vmatmul.mubr.f32.gmra.mrb[0].mxu0 %v1661
        %v1800 = vpop.f32.mrb[0].mxu0
        %v1801 = vadd.f32 0.0, %v1800
        %v1802 = vpop.f32.mrb[0].mxu0
        %1803 = vmatprep.mubr.f32.mxu0 0.0
        %1804 = vmatmul.mubr.f32.gmra.mrb[0].mxu0 %v1664
        %v1805 = vpop.f32.mrb[0].mxu0
        %v1806 = vadd.f32 0.0, %v1805
        %v1807 = vpop.f32.mrb[0].mxu0
        %1808 = vmatprep.mubr.f32.mxu0 0.0
        %1809 = vmatmul.mubr.f32.gmra.mrb[0].mxu0 %v1667
        %v1810 = vpop.f32.mrb[0].mxu0
        %v1811 = vadd.f32 0.0, %v1810
        %v1812 = vpop.f32.mrb[0].mxu0
        %1813 = vdwg.mxu0
        %v1814 = vmul.f32 %v1736, %v844
        %v1815 = vmul.f32 %v1741, %v845
        %v1816 = vmul.f32 %v1746, %v846
        %v1817 = vmul.f32 %v1751, %v847
        %v1818 = vmul.f32 %v1756, %v848
        %v1819 = vmul.f32 %v1761, %v849
        %v1820 = vmul.f32 %v1766, %v850
        %v1821 = vmul.f32 %v1771, %v851
        %v1822 = vmul.f32 %v1776, %v852
        %v1823 = vmul.f32 %v1781, %v853
        %v1824 = vmul.f32 %v1786, %v854
        %v1825 = vmul.f32 %v1791, %v855
        %v1826 = vmul.f32 %v1796, %v856
        %v1827 = vmul.f32 %v1801, %v857
        %v1828 = vmul.f32 %v1806, %v858
        %v1829 = vmul.f32 %v1811, %v859
        %1830 = vmatprep.subr.mxu0 0.0
        %1831 = vmatpush1.msra.mxu0 %v1814
        %1832 = vmatprep.subr.mxu0 0.0
        %1833 = vmatpush1.msra.mxu0 %v1815
        %1834 = vmatprep.subr.mxu0 0.0
        %1835 = vmatpush1.msra.mxu0 %v1816
        %1836 = vmatprep.subr.mxu0 0.0
        %1837 = vmatpush1.msra.mxu0 %v1817
        %1838 = vmatprep.subr.mxu0 0.0
        %1839 = vmatpush1.msra.mxu0 %v1818
        %1840 = vmatprep.subr.mxu0 0.0
        %1841 = vmatpush1.msra.mxu0 %v1819
        %1842 = vmatprep.subr.mxu0 0.0
        %1843 = vmatpush1.msra.mxu0 %v1820
        %1844 = vmatprep.subr.mxu0 0.0
        %1845 = vmatpush1.msra.mxu0 %v1821
        %1846 = vmatprep.subr.mxu0 0.0
        %1847 = vmatpush1.msra.mxu0 %v1822
        %1848 = vmatprep.subr.mxu0 0.0
        %1849 = vmatpush1.msra.mxu0 %v1823
        %1850 = vmatprep.subr.mxu0 0.0
        %1851 = vmatpush1.msra.mxu0 %v1824
        %1852 = vmatprep.subr.mxu0 0.0
        %1853 = vmatpush1.msra.mxu0 %v1825
        %1854 = vmatprep.subr.mxu0 0.0
        %1855 = vmatpush1.msra.mxu0 %v1826
        %1856 = vmatprep.subr.mxu0 0.0
        %1857 = vmatpush1.msra.mxu0 %v1827
        %1858 = vmatprep.subr.mxu0 0.0
        %1859 = vmatpush1.msra.mxu0 %v1828
        %1860 = vmatprep.subr.mxu0 0.0
        %1861 = vmatpush1.msra.mxu0 %v1829
        %1862 = vmatprep.subr.mxu0 0.0
        %1863 = vmatpush1.msra.mxu0 0.0
        %1864 = vmatprep.subr.mxu0 0.0
        %1865 = vmatpush1.msra.mxu0 0.0
        %1866 = vmatprep.subr.mxu0 0.0
        %1867 = vmatpush1.msra.mxu0 0.0
        %1868 = vmatprep.subr.mxu0 0.0
        %1869 = vmatpush1.msra.mxu0 0.0
        %1870 = vmatprep.subr.mxu0 0.0
        %1871 = vmatpush1.msra.mxu0 0.0
        %1872 = vmatprep.subr.mxu0 0.0
        %1873 = vmatpush1.msra.mxu0 0.0
        %1874 = vmatprep.subr.mxu0 0.0
        %1875 = vmatpush1.msra.mxu0 0.0
        %1876 = vmatprep.subr.mxu0 0.0
        %1877 = vmatpush1.msra.mxu0 0.0
        %1878 = vmatprep.subr.mxu0 0.0
        %1879 = vmatpush1.msra.mxu0 0.0
        %1880 = vmatprep.subr.mxu0 0.0
        %1881 = vmatpush1.msra.mxu0 0.0
        %1882 = vmatprep.subr.mxu0 0.0
        %1883 = vmatpush1.msra.mxu0 0.0
        %1884 = vmatprep.subr.mxu0 0.0
        %1885 = vmatpush1.msra.mxu0 0.0
        %1886 = vmatprep.subr.mxu0 0.0
        %1887 = vmatpush1.msra.mxu0 0.0
        %1888 = vmatprep.subr.mxu0 0.0
        %1889 = vmatpush1.msra.mxu0 0.0
        %1890 = vmatprep.subr.mxu0 0.0
        %1891 = vmatpush1.msra.mxu0 0.0
        %1892 = vmatprep.subr.mxu0 0.0
        %1893 = vmatpush1.msra.mxu0 0.0
        %1894 = vmatprep.mubr.f32.mxu0 0.0
        %1895 = vmatmul.mubr.f32.gmra.mrb[0].mxu0 %v823
        %v1896 = vpop.f32.mrb[0].mxu0
        %v1897 = vadd.f32 0.0, %v1896
        %v1898 = vpop.f32.mrb[0].mxu0
        %1899 = vmatprep.mubr.f32.mxu0 0.0
        %1900 = vmatmul.mubr.f32.gmra.mrb[0].mxu0 %v824
        %v1901 = vpop.f32.mrb[0].mxu0
        %v1902 = vadd.f32 0.0, %v1901
        %v1903 = vpop.f32.mrb[0].mxu0
        %1904 = vdwg.mxu0
        %v1905 = vld [vmem:[%s5] sm:$0xff]
        %v1906 = vld [vmem:[%s5 + $0x8] sm:$0xff]
        %v1907 = vld [vmem:[%s6] sm:$0xff]
        %v1908 = vld [vmem:[%s6 + $0x8] sm:$0xff]
        %1910 = vset.pattern.permute.xlu0 0
        %1911 = vperm.xlu0 %1910, %v1907
        %v1912 = vpop.permute.xlu0 %1911
        %1915 = vset.pattern.permute.xlu0 0
        %1916 = vperm.xlu0 %1915, %v1908
        %v1917 = vpop.permute.xlu0 %1916
        %v1920 = vsel %vm867, %v1905, 0
        %v1923 = vsel %vm867, %v1906, 0
        %1925 = vmatprep.subr.mxu0 0.0
        %1926 = vmatpush1.msra.mxu0 %v1897
        %1927 = vmatprep.subr.mxu0 0.0
        %1928 = vmatpush1.msra.mxu0 %v1902
        %1929 = vmatprep.subr.mxu0 0.0
        %1930 = vmatpush1.msra.mxu0 0.0
        %1931 = vmatprep.subr.mxu0 0.0
        %1932 = vmatpush1.msra.mxu0 0.0
        %1933 = vmatprep.subr.mxu0 0.0
        %1934 = vmatpush1.msra.mxu0 0.0
        %1935 = vmatprep.subr.mxu0 0.0
        %1936 = vmatpush1.msra.mxu0 0.0
        %1937 = vmatprep.subr.mxu0 0.0
        %1938 = vmatpush1.msra.mxu0 0.0
        %1939 = vmatprep.subr.mxu0 0.0
        %1940 = vmatpush1.msra.mxu0 0.0
        %1941 = vmatprep.subr.mxu0 0.0
        %1942 = vmatpush1.msra.mxu0 0.0
        %1943 = vmatprep.subr.mxu0 0.0
        %1944 = vmatpush1.msra.mxu0 0.0
        %1945 = vmatprep.subr.mxu0 0.0
        %1946 = vmatpush1.msra.mxu0 0.0
        %1947 = vmatprep.subr.mxu0 0.0
        %1948 = vmatpush1.msra.mxu0 0.0
        %1949 = vmatprep.subr.mxu0 0.0
        %1950 = vmatpush1.msra.mxu0 0.0
        %1951 = vmatprep.subr.mxu0 0.0
        %1952 = vmatpush1.msra.mxu0 0.0
        %1953 = vmatprep.subr.mxu0 0.0
        %1954 = vmatpush1.msra.mxu0 0.0
        %1955 = vmatprep.subr.mxu0 0.0
        %1956 = vmatpush1.msra.mxu0 0.0
        %1957 = vmatprep.subr.mxu0 0.0
        %1958 = vmatpush1.msra.mxu0 0.0
        %1959 = vmatprep.subr.mxu0 0.0
        %1960 = vmatpush1.msra.mxu0 0.0
        %1961 = vmatprep.subr.mxu0 0.0
        %1962 = vmatpush1.msra.mxu0 0.0
        %1963 = vmatprep.subr.mxu0 0.0
        %1964 = vmatpush1.msra.mxu0 0.0
        %1965 = vmatprep.subr.mxu0 0.0
        %1966 = vmatpush1.msra.mxu0 0.0
        %1967 = vmatprep.subr.mxu0 0.0
        %1968 = vmatpush1.msra.mxu0 0.0
        %1969 = vmatprep.subr.mxu0 0.0
        %1970 = vmatpush1.msra.mxu0 0.0
        %1971 = vmatprep.subr.mxu0 0.0
        %1972 = vmatpush1.msra.mxu0 0.0
        %1973 = vmatprep.subr.mxu0 0.0
        %1974 = vmatpush1.msra.mxu0 0.0
        %1975 = vmatprep.subr.mxu0 0.0
        %1976 = vmatpush1.msra.mxu0 0.0
        %1977 = vmatprep.subr.mxu0 0.0
        %1978 = vmatpush1.msra.mxu0 0.0
        %1979 = vmatprep.subr.mxu0 0.0
        %1980 = vmatpush1.msra.mxu0 0.0
        %1981 = vmatprep.subr.mxu0 0.0
        %1982 = vmatpush1.msra.mxu0 0.0
        %1983 = vmatprep.subr.mxu0 0.0
        %1984 = vmatpush1.msra.mxu0 0.0
        %1985 = vmatprep.subr.mxu0 0.0
        %1986 = vmatpush1.msra.mxu0 0.0
        %1987 = vmatprep.subr.mxu0 0.0
        %1988 = vmatpush1.msra.mxu0 0.0
        %1989 = vmatprep.mubr.f32.mxu0 0.0
        %1990 = vmatmul.mubr.f32.gmra.mrb[0].mxu0 %v1920
        %v1991 = vpop.f32.mrb[0].mxu0
        %v1992 = vadd.f32 %v1912, %v1991
        %v1993 = vpop.f32.mrb[0].mxu0
        %1994 = vmatprep.mubr.f32.mxu0 0.0
        %1995 = vmatmul.mubr.f32.gmra.mrb[0].mxu0 %v1923
        %v1996 = vpop.f32.mrb[0].mxu0
        %v1997 = vadd.f32 %v1917, %v1996
        %v1998 = vpop.f32.mrb[0].mxu0
        %1999 = vdwg.mxu0
        %s2000 = scalar_lea.vmem [#allocation5], 4
        %v2001 = vld [vmem:[%s2000] sm:$0xf]
        %s2002 = scalar_lea.vmem %s2, 4
        %v2003 = vld [vmem:[%s2002] sm:$0xf]
        %2005 = vset.pattern.permute.xlu0 0
        %2006 = vperm.xlu0 %2005, %v2003
        %v2007 = vpop.permute.xlu0 %2006
        %v2010 = vsel %vm867, %v2001, 0
        %2012 = vmatprep.subr.mxu0 0.0
        %2013 = vmatpush1.msra.mxu0 %v823
        %2014 = vmatprep.subr.mxu0 0.0
        %2015 = vmatpush1.msra.mxu0 %v824
        %2016 = vmatprep.subr.mxu0 0.0
        %2017 = vmatpush1.msra.mxu0 0.0
        %2018 = vmatprep.subr.mxu0 0.0
        %2019 = vmatpush1.msra.mxu0 0.0
        %2020 = vmatprep.subr.mxu0 0.0
        %2021 = vmatpush1.msra.mxu0 0.0
        %2022 = vmatprep.subr.mxu0 0.0
        %2023 = vmatpush1.msra.mxu0 0.0
        %2024 = vmatprep.subr.mxu0 0.0
        %2025 = vmatpush1.msra.mxu0 0.0
        %2026 = vmatprep.subr.mxu0 0.0
        %2027 = vmatpush1.msra.mxu0 0.0
        %2028 = vmatprep.subr.mxu0 0.0
        %2029 = vmatpush1.msra.mxu0 0.0
        %2030 = vmatprep.subr.mxu0 0.0
        %2031 = vmatpush1.msra.mxu0 0.0
        %2032 = vmatprep.subr.mxu0 0.0
        %2033 = vmatpush1.msra.mxu0 0.0
        %2034 = vmatprep.subr.mxu0 0.0
        %2035 = vmatpush1.msra.mxu0 0.0
        %2036 = vmatprep.subr.mxu0 0.0
        %2037 = vmatpush1.msra.mxu0 0.0
        %2038 = vmatprep.subr.mxu0 0.0
        %2039 = vmatpush1.msra.mxu0 0.0
        %2040 = vmatprep.subr.mxu0 0.0
        %2041 = vmatpush1.msra.mxu0 0.0
        %2042 = vmatprep.subr.mxu0 0.0
        %2043 = vmatpush1.msra.mxu0 0.0
        %2044 = vmatprep.subr.mxu0 0.0
        %2045 = vmatpush1.msra.mxu0 0.0
        %2046 = vmatprep.subr.mxu0 0.0
        %2047 = vmatpush1.msra.mxu0 0.0
        %2048 = vmatprep.subr.mxu0 0.0
        %2049 = vmatpush1.msra.mxu0 0.0
        %2050 = vmatprep.subr.mxu0 0.0
        %2051 = vmatpush1.msra.mxu0 0.0
        %2052 = vmatprep.subr.mxu0 0.0
        %2053 = vmatpush1.msra.mxu0 0.0
        %2054 = vmatprep.subr.mxu0 0.0
        %2055 = vmatpush1.msra.mxu0 0.0
        %2056 = vmatprep.subr.mxu0 0.0
        %2057 = vmatpush1.msra.mxu0 0.0
        %2058 = vmatprep.subr.mxu0 0.0
        %2059 = vmatpush1.msra.mxu0 0.0
        %2060 = vmatprep.subr.mxu0 0.0
        %2061 = vmatpush1.msra.mxu0 0.0
        %2062 = vmatprep.subr.mxu0 0.0
        %2063 = vmatpush1.msra.mxu0 0.0
        %2064 = vmatprep.subr.mxu0 0.0
        %2065 = vmatpush1.msra.mxu0 0.0
        %2066 = vmatprep.subr.mxu0 0.0
        %2067 = vmatpush1.msra.mxu0 0.0
        %2068 = vmatprep.subr.mxu0 0.0
        %2069 = vmatpush1.msra.mxu0 0.0
        %2070 = vmatprep.subr.mxu0 0.0
        %2071 = vmatpush1.msra.mxu0 0.0
        %2072 = vmatprep.subr.mxu0 0.0
        %2073 = vmatpush1.msra.mxu0 0.0
        %2074 = vmatprep.subr.mxu0 0.0
        %2075 = vmatpush1.msra.mxu0 0.0
        %2076 = vmatprep.mubr.f32.mxu0 0.0
        %2077 = vmatmul.mubr.f32.gmra.mrb[0].mxu0 %v2010
        %v2078 = vpop.f32.mrb[0].mxu0
        %v2079 = vadd.f32 %v2007, %v2078
        %v2080 = vpop.f32.mrb[0].mxu0
        %2081 = vdwg.mxu0
        %s2082 = scalar_lea.vmem [#allocation8], 4
        %v2083 = vld [vmem:[%s2082] sm:$0xf]
        %s2084 = scalar_lea.vmem %s4, 4
        %v2085 = vld [vmem:[%s2084] sm:$0xf]
        %2087 = vset.pattern.permute.xlu0 0
        %2088 = vperm.xlu0 %2087, %v2085
        %v2089 = vpop.permute.xlu0 %2088
        %v2092 = vsel %vm867, %v2083, 0
        %2094 = vmatprep.subr.mxu0 0.0
        %2095 = vmatpush1.msra.mxu0 %v823
        %2096 = vmatprep.subr.mxu0 0.0
        %2097 = vmatpush1.msra.mxu0 %v824
        %2098 = vmatprep.subr.mxu0 0.0
        %2099 = vmatpush1.msra.mxu0 0.0
        %2100 = vmatprep.subr.mxu0 0.0
        %2101 = vmatpush1.msra.mxu0 0.0
        %2102 = vmatprep.subr.mxu0 0.0
        %2103 = vmatpush1.msra.mxu0 0.0
        %2104 = vmatprep.subr.mxu0 0.0
        %2105 = vmatpush1.msra.mxu0 0.0
        %2106 = vmatprep.subr.mxu0 0.0
        %2107 = vmatpush1.msra.mxu0 0.0
        %2108 = vmatprep.subr.mxu0 0.0
        %2109 = vmatpush1.msra.mxu0 0.0
        %2110 = vmatprep.subr.mxu0 0.0
        %2111 = vmatpush1.msra.mxu0 0.0
        %2112 = vmatprep.subr.mxu0 0.0
        %2113 = vmatpush1.msra.mxu0 0.0
        %2114 = vmatprep.subr.mxu0 0.0
        %2115 = vmatpush1.msra.mxu0 0.0
        %2116 = vmatprep.subr.mxu0 0.0
        %2117 = vmatpush1.msra.mxu0 0.0
        %2118 = vmatprep.subr.mxu0 0.0
        %2119 = vmatpush1.msra.mxu0 0.0
        %2120 = vmatprep.subr.mxu0 0.0
        %2121 = vmatpush1.msra.mxu0 0.0
        %2122 = vmatprep.subr.mxu0 0.0
        %2123 = vmatpush1.msra.mxu0 0.0
        %2124 = vmatprep.subr.mxu0 0.0
        %2125 = vmatpush1.msra.mxu0 0.0
        %2126 = vmatprep.subr.mxu0 0.0
        %2127 = vmatpush1.msra.mxu0 0.0
        %2128 = vmatprep.subr.mxu0 0.0
        %2129 = vmatpush1.msra.mxu0 0.0
        %2130 = vmatprep.subr.mxu0 0.0
        %2131 = vmatpush1.msra.mxu0 0.0
        %2132 = vmatprep.subr.mxu0 0.0
        %2133 = vmatpush1.msra.mxu0 0.0
        %2134 = vmatprep.subr.mxu0 0.0
        %2135 = vmatpush1.msra.mxu0 0.0
        %2136 = vmatprep.subr.mxu0 0.0
        %2137 = vmatpush1.msra.mxu0 0.0
        %2138 = vmatprep.subr.mxu0 0.0
        %2139 = vmatpush1.msra.mxu0 0.0
        %2140 = vmatprep.subr.mxu0 0.0
        %2141 = vmatpush1.msra.mxu0 0.0
        %2142 = vmatprep.subr.mxu0 0.0
        %2143 = vmatpush1.msra.mxu0 0.0
        %2144 = vmatprep.subr.mxu0 0.0
        %2145 = vmatpush1.msra.mxu0 0.0
        %2146 = vmatprep.subr.mxu0 0.0
        %2147 = vmatpush1.msra.mxu0 0.0
        %2148 = vmatprep.subr.mxu0 0.0
        %2149 = vmatpush1.msra.mxu0 0.0
        %2150 = vmatprep.subr.mxu0 0.0
        %2151 = vmatpush1.msra.mxu0 0.0
        %2152 = vmatprep.subr.mxu0 0.0
        %2153 = vmatpush1.msra.mxu0 0.0
        %2154 = vmatprep.subr.mxu0 0.0
        %2155 = vmatpush1.msra.mxu0 0.0
        %2156 = vmatprep.subr.mxu0 0.0
        %2157 = vmatpush1.msra.mxu0 0.0
        %2158 = vmatprep.mubr.f32.mxu0 0.0
        %2159 = vmatmul.mubr.f32.gmra.mrb[0].mxu0 %v2092
        %v2160 = vpop.f32.mrb[0].mxu0
        %v2161 = vadd.f32 %v2089, %v2160
        %v2162 = vpop.f32.mrb[0].mxu0
        %2163 = vdwg.mxu0
        %2164 = vxpose.xlu0.b32.start [1/16] %v2079, 128
        %2165 = vxpose.xlu0.b32.cont [2/16] 0.0, 128
        %2166 = vxpose.xlu0.b32.cont [3/16] 0.0, 128
        %2167 = vxpose.xlu0.b32.cont [4/16] 0.0, 128
        %2168 = vxpose.xlu0.b32.cont [5/16] 0.0, 128
        %2169 = vxpose.xlu0.b32.cont [6/16] 0.0, 128
        %2170 = vxpose.xlu0.b32.cont [7/16] 0.0, 128
        %2171 = vxpose.xlu0.b32.cont [8/16] 0.0, 128
        %2172 = vxpose.xlu0.b32.cont [9/16] 0.0, 128
        %2173 = vxpose.xlu0.b32.cont [10/16] 0.0, 128
        %2174 = vxpose.xlu0.b32.cont [11/16] 0.0, 128
        %2175 = vxpose.xlu0.b32.cont [12/16] 0.0, 128
        %2176 = vxpose.xlu0.b32.cont [13/16] 0.0, 128
        %2177 = vxpose.xlu0.b32.cont [14/16] 0.0, 128
        %2178 = vxpose.xlu0.b32.cont [15/16] 0.0, 128
        %2179 = vxpose.xlu0.b32.end [16/16] 0.0, 128
        %v2180 = vpop.trf.xlu0
        %v2181 = vpop.trf.xlu0
        %v2182 = vpop.trf.xlu0
        %v2183 = vpop.trf.xlu0
        %v2184 = vpop.trf.xlu0
        %v2185 = vpop.trf.xlu0
        %v2186 = vpop.trf.xlu0
        %v2187 = vpop.trf.xlu0
        %v2188 = vpop.trf.xlu0
        %v2189 = vpop.trf.xlu0
        %v2190 = vpop.trf.xlu0
        %v2191 = vpop.trf.xlu0
        %v2192 = vpop.trf.xlu0
        %v2193 = vpop.trf.xlu0
        %v2194 = vpop.trf.xlu0
        %v2195 = vpop.trf.xlu0
        %v2197 = vsel %vm1053, %v2180, 0
        %v2200 = vsel %vm1053, %v2181, 0
        %v2203 = vsel %vm1053, %v2182, 0
        %v2206 = vsel %vm1053, %v2183, 0
        %v2209 = vsel %vm1053, %v2184, 0
        %v2212 = vsel %vm1053, %v2185, 0
        %v2215 = vsel %vm1053, %v2186, 0
        %v2218 = vsel %vm1053, %v2187, 0
        %v2221 = vsel %vm1053, %v2188, 0
        %v2224 = vsel %vm1053, %v2189, 0
        %v2227 = vsel %vm1053, %v2190, 0
        %v2230 = vsel %vm1053, %v2191, 0
        %v2233 = vsel %vm1053, %v2192, 0
        %v2236 = vsel %vm1053, %v2193, 0
        %v2239 = vsel %vm1053, %v2194, 0
        %v2242 = vsel %vm1053, %v2195, 0
        %v2245 = vsel %vm1102, %v2161, 0
        %2247 = vmatprep.subr.mxu0 0.0
        %2248 = vmatpush1.msra.mxu0 %v2245
        %2249 = vmatprep.subr.mxu0 0.0
        %2250 = vmatpush1.msra.mxu0 0.0
        %2251 = vmatprep.subr.mxu0 0.0
        %2252 = vmatpush1.msra.mxu0 0.0
        %2253 = vmatprep.subr.mxu0 0.0
        %2254 = vmatpush1.msra.mxu0 0.0
        %2255 = vmatprep.subr.mxu0 0.0
        %2256 = vmatpush1.msra.mxu0 0.0
        %2257 = vmatprep.subr.mxu0 0.0
        %2258 = vmatpush1.msra.mxu0 0.0
        %2259 = vmatprep.subr.mxu0 0.0
        %2260 = vmatpush1.msra.mxu0 0.0
        %2261 = vmatprep.subr.mxu0 0.0
        %2262 = vmatpush1.msra.mxu0 0.0
        %2263 = vmatprep.subr.mxu0 0.0
        %2264 = vmatpush1.msra.mxu0 0.0
        %2265 = vmatprep.subr.mxu0 0.0
        %2266 = vmatpush1.msra.mxu0 0.0
        %2267 = vmatprep.subr.mxu0 0.0
        %2268 = vmatpush1.msra.mxu0 0.0
        %2269 = vmatprep.subr.mxu0 0.0
        %2270 = vmatpush1.msra.mxu0 0.0
        %2271 = vmatprep.subr.mxu0 0.0
        %2272 = vmatpush1.msra.mxu0 0.0
        %2273 = vmatprep.subr.mxu0 0.0
        %2274 = vmatpush1.msra.mxu0 0.0
        %2275 = vmatprep.subr.mxu0 0.0
        %2276 = vmatpush1.msra.mxu0 0.0
        %2277 = vmatprep.subr.mxu0 0.0
        %2278 = vmatpush1.msra.mxu0 0.0
        %2279 = vmatprep.subr.mxu0 0.0
        %2280 = vmatpush1.msra.mxu0 0.0
        %2281 = vmatprep.subr.mxu0 0.0
        %2282 = vmatpush1.msra.mxu0 0.0
        %2283 = vmatprep.subr.mxu0 0.0
        %2284 = vmatpush1.msra.mxu0 0.0
        %2285 = vmatprep.subr.mxu0 0.0
        %2286 = vmatpush1.msra.mxu0 0.0
        %2287 = vmatprep.subr.mxu0 0.0
        %2288 = vmatpush1.msra.mxu0 0.0
        %2289 = vmatprep.subr.mxu0 0.0
        %2290 = vmatpush1.msra.mxu0 0.0
        %2291 = vmatprep.subr.mxu0 0.0
        %2292 = vmatpush1.msra.mxu0 0.0
        %2293 = vmatprep.subr.mxu0 0.0
        %2294 = vmatpush1.msra.mxu0 0.0
        %2295 = vmatprep.subr.mxu0 0.0
        %2296 = vmatpush1.msra.mxu0 0.0
        %2297 = vmatprep.subr.mxu0 0.0
        %2298 = vmatpush1.msra.mxu0 0.0
        %2299 = vmatprep.subr.mxu0 0.0
        %2300 = vmatpush1.msra.mxu0 0.0
        %2301 = vmatprep.subr.mxu0 0.0
        %2302 = vmatpush1.msra.mxu0 0.0
        %2303 = vmatprep.subr.mxu0 0.0
        %2304 = vmatpush1.msra.mxu0 0.0
        %2305 = vmatprep.subr.mxu0 0.0
        %2306 = vmatpush1.msra.mxu0 0.0
        %2307 = vmatprep.subr.mxu0 0.0
        %2308 = vmatpush1.msra.mxu0 0.0
        %2309 = vmatprep.subr.mxu0 0.0
        %2310 = vmatpush1.msra.mxu0 0.0
        %2311 = vmatprep.mubr.f32.mxu0 0.0
        %2312 = vmatmul.mubr.f32.gmra.mrb[0].mxu0 %v2197
        %v2313 = vpop.f32.mrb[0].mxu0
        %v2314 = vadd.f32 0.0, %v2313
        %v2315 = vpop.f32.mrb[0].mxu0
        %2316 = vmatprep.mubr.f32.mxu0 0.0
        %2317 = vmatmul.mubr.f32.gmra.mrb[0].mxu0 %v2200
        %v2318 = vpop.f32.mrb[0].mxu0
        %v2319 = vadd.f32 0.0, %v2318
        %v2320 = vpop.f32.mrb[0].mxu0
        %2321 = vmatprep.mubr.f32.mxu0 0.0
        %2322 = vmatmul.mubr.f32.gmra.mrb[0].mxu0 %v2203
        %v2323 = vpop.f32.mrb[0].mxu0
        %v2324 = vadd.f32 0.0, %v2323
        %v2325 = vpop.f32.mrb[0].mxu0
        %2326 = vmatprep.mubr.f32.mxu0 0.0
        %2327 = vmatmul.mubr.f32.gmra.mrb[0].mxu0 %v2206
        %v2328 = vpop.f32.mrb[0].mxu0
        %v2329 = vadd.f32 0.0, %v2328
        %v2330 = vpop.f32.mrb[0].mxu0
        %2331 = vmatprep.mubr.f32.mxu0 0.0
        %2332 = vmatmul.mubr.f32.gmra.mrb[0].mxu0 %v2209
        %v2333 = vpop.f32.mrb[0].mxu0
        %v2334 = vadd.f32 0.0, %v2333
        %v2335 = vpop.f32.mrb[0].mxu0
        %2336 = vmatprep.mubr.f32.mxu0 0.0
        %2337 = vmatmul.mubr.f32.gmra.mrb[0].mxu0 %v2212
        %v2338 = vpop.f32.mrb[0].mxu0
        %v2339 = vadd.f32 0.0, %v2338
        %v2340 = vpop.f32.mrb[0].mxu0
        %2341 = vmatprep.mubr.f32.mxu0 0.0
        %2342 = vmatmul.mubr.f32.gmra.mrb[0].mxu0 %v2215
        %v2343 = vpop.f32.mrb[0].mxu0
        %v2344 = vadd.f32 0.0, %v2343
        %v2345 = vpop.f32.mrb[0].mxu0
        %2346 = vmatprep.mubr.f32.mxu0 0.0
        %2347 = vmatmul.mubr.f32.gmra.mrb[0].mxu0 %v2218
        %v2348 = vpop.f32.mrb[0].mxu0
        %v2349 = vadd.f32 0.0, %v2348
        %v2350 = vpop.f32.mrb[0].mxu0
        %2351 = vmatprep.mubr.f32.mxu0 0.0
        %2352 = vmatmul.mubr.f32.gmra.mrb[0].mxu0 %v2221
        %v2353 = vpop.f32.mrb[0].mxu0
        %v2354 = vadd.f32 0.0, %v2353
        %v2355 = vpop.f32.mrb[0].mxu0
        %2356 = vmatprep.mubr.f32.mxu0 0.0
        %2357 = vmatmul.mubr.f32.gmra.mrb[0].mxu0 %v2224
        %v2358 = vpop.f32.mrb[0].mxu0
        %v2359 = vadd.f32 0.0, %v2358
        %v2360 = vpop.f32.mrb[0].mxu0
        %2361 = vmatprep.mubr.f32.mxu0 0.0
        %2362 = vmatmul.mubr.f32.gmra.mrb[0].mxu0 %v2227
        %v2363 = vpop.f32.mrb[0].mxu0
        %v2364 = vadd.f32 0.0, %v2363
        %v2365 = vpop.f32.mrb[0].mxu0
        %2366 = vmatprep.mubr.f32.mxu0 0.0
        %2367 = vmatmul.mubr.f32.gmra.mrb[0].mxu0 %v2230
        %v2368 = vpop.f32.mrb[0].mxu0
        %v2369 = vadd.f32 0.0, %v2368
        %v2370 = vpop.f32.mrb[0].mxu0
        %2371 = vmatprep.mubr.f32.mxu0 0.0
        %2372 = vmatmul.mubr.f32.gmra.mrb[0].mxu0 %v2233
        %v2373 = vpop.f32.mrb[0].mxu0
        %v2374 = vadd.f32 0.0, %v2373
        %v2375 = vpop.f32.mrb[0].mxu0
        %2376 = vmatprep.mubr.f32.mxu0 0.0
        %2377 = vmatmul.mubr.f32.gmra.mrb[0].mxu0 %v2236
        %v2378 = vpop.f32.mrb[0].mxu0
        %v2379 = vadd.f32 0.0, %v2378
        %v2380 = vpop.f32.mrb[0].mxu0
        %2381 = vmatprep.mubr.f32.mxu0 0.0
        %2382 = vmatmul.mubr.f32.gmra.mrb[0].mxu0 %v2239
        %v2383 = vpop.f32.mrb[0].mxu0
        %v2384 = vadd.f32 0.0, %v2383
        %v2385 = vpop.f32.mrb[0].mxu0
        %2386 = vmatprep.mubr.f32.mxu0 0.0
        %2387 = vmatmul.mubr.f32.gmra.mrb[0].mxu0 %v2242
        %v2388 = vpop.f32.mrb[0].mxu0
        %v2389 = vadd.f32 0.0, %v2388
        %v2390 = vpop.f32.mrb[0].mxu0
        %2391 = vdwg.mxu0
        %v2392 = vmul.f32 %v2314, %v844
        %v2393 = vmul.f32 %v2319, %v845
        %v2394 = vmul.f32 %v2324, %v846
        %v2395 = vmul.f32 %v2329, %v847
        %v2396 = vmul.f32 %v2334, %v848
        %v2397 = vmul.f32 %v2339, %v849
        %v2398 = vmul.f32 %v2344, %v850
        %v2399 = vmul.f32 %v2349, %v851
        %v2400 = vmul.f32 %v2354, %v852
        %v2401 = vmul.f32 %v2359, %v853
        %v2402 = vmul.f32 %v2364, %v854
        %v2403 = vmul.f32 %v2369, %v855
        %v2404 = vmul.f32 %v2374, %v856
        %v2405 = vmul.f32 %v2379, %v857
        %v2406 = vmul.f32 %v2384, %v858
        %v2407 = vmul.f32 %v2389, %v859
        %2408 = vmatprep.subr.mxu0 0.0
        %2409 = vmatpush1.msra.mxu0 %v2392
        %2410 = vmatprep.subr.mxu0 0.0
        %2411 = vmatpush1.msra.mxu0 %v2393
        %2412 = vmatprep.subr.mxu0 0.0
        %2413 = vmatpush1.msra.mxu0 %v2394
        %2414 = vmatprep.subr.mxu0 0.0
        %2415 = vmatpush1.msra.mxu0 %v2395
        %2416 = vmatprep.subr.mxu0 0.0
        %2417 = vmatpush1.msra.mxu0 %v2396
        %2418 = vmatprep.subr.mxu0 0.0
        %2419 = vmatpush1.msra.mxu0 %v2397
        %2420 = vmatprep.subr.mxu0 0.0
        %2421 = vmatpush1.msra.mxu0 %v2398
        %2422 = vmatprep.subr.mxu0 0.0
        %2423 = vmatpush1.msra.mxu0 %v2399
        %2424 = vmatprep.subr.mxu0 0.0
        %2425 = vmatpush1.msra.mxu0 %v2400
        %2426 = vmatprep.subr.mxu0 0.0
        %2427 = vmatpush1.msra.mxu0 %v2401
        %2428 = vmatprep.subr.mxu0 0.0
        %2429 = vmatpush1.msra.mxu0 %v2402
        %2430 = vmatprep.subr.mxu0 0.0
        %2431 = vmatpush1.msra.mxu0 %v2403
        %2432 = vmatprep.subr.mxu0 0.0
        %2433 = vmatpush1.msra.mxu0 %v2404
        %2434 = vmatprep.subr.mxu0 0.0
        %2435 = vmatpush1.msra.mxu0 %v2405
        %2436 = vmatprep.subr.mxu0 0.0
        %2437 = vmatpush1.msra.mxu0 %v2406
        %2438 = vmatprep.subr.mxu0 0.0
        %2439 = vmatpush1.msra.mxu0 %v2407
        %2440 = vmatprep.subr.mxu0 0.0
        %2441 = vmatpush1.msra.mxu0 0.0
        %2442 = vmatprep.subr.mxu0 0.0
        %2443 = vmatpush1.msra.mxu0 0.0
        %2444 = vmatprep.subr.mxu0 0.0
        %2445 = vmatpush1.msra.mxu0 0.0
        %2446 = vmatprep.subr.mxu0 0.0
        %2447 = vmatpush1.msra.mxu0 0.0
        %2448 = vmatprep.subr.mxu0 0.0
        %2449 = vmatpush1.msra.mxu0 0.0
        %2450 = vmatprep.subr.mxu0 0.0
        %2451 = vmatpush1.msra.mxu0 0.0
        %2452 = vmatprep.subr.mxu0 0.0
        %2453 = vmatpush1.msra.mxu0 0.0
        %2454 = vmatprep.subr.mxu0 0.0
        %2455 = vmatpush1.msra.mxu0 0.0
        %2456 = vmatprep.subr.mxu0 0.0
        %2457 = vmatpush1.msra.mxu0 0.0
        %2458 = vmatprep.subr.mxu0 0.0
        %2459 = vmatpush1.msra.mxu0 0.0
        %2460 = vmatprep.subr.mxu0 0.0
        %2461 = vmatpush1.msra.mxu0 0.0
        %2462 = vmatprep.subr.mxu0 0.0
        %2463 = vmatpush1.msra.mxu0 0.0
        %2464 = vmatprep.subr.mxu0 0.0
        %2465 = vmatpush1.msra.mxu0 0.0
        %2466 = vmatprep.subr.mxu0 0.0
        %2467 = vmatpush1.msra.mxu0 0.0
        %2468 = vmatprep.subr.mxu0 0.0
        %2469 = vmatpush1.msra.mxu0 0.0
        %2470 = vmatprep.subr.mxu0 0.0
        %2471 = vmatpush1.msra.mxu0 0.0
        %2472 = vmatprep.mubr.f32.mxu0 0.0
        %2473 = vmatmul.mubr.f32.gmra.mrb[0].mxu0 %v842
        %v2474 = vpop.f32.mrb[0].mxu0
        %v2475 = vadd.f32 0.0, %v2474
        %v2476 = vpop.f32.mrb[0].mxu0
        %2477 = vmatprep.mubr.f32.mxu0 0.0
        %2478 = vmatmul.mubr.f32.gmra.mrb[0].mxu0 %v843
        %v2479 = vpop.f32.mrb[0].mxu0
        %v2480 = vadd.f32 0.0, %v2479
        %v2481 = vpop.f32.mrb[0].mxu0
        %2482 = vdwg.mxu0
        %2483 = vmatprep.subr.mxu0 0.0
        %2484 = vmatpush1.msra.mxu0 %v826
        %2485 = vmatprep.subr.mxu0 0.0
        %2486 = vmatpush1.msra.mxu0 %v827
        %2487 = vmatprep.subr.mxu0 0.0
        %2488 = vmatpush1.msra.mxu0 %v828
        %2489 = vmatprep.subr.mxu0 0.0
        %2490 = vmatpush1.msra.mxu0 %v829
        %2491 = vmatprep.subr.mxu0 0.0
        %2492 = vmatpush1.msra.mxu0 %v830
        %2493 = vmatprep.subr.mxu0 0.0
        %2494 = vmatpush1.msra.mxu0 %v831
        %2495 = vmatprep.subr.mxu0 0.0
        %2496 = vmatpush1.msra.mxu0 %v832
        %2497 = vmatprep.subr.mxu0 0.0
        %2498 = vmatpush1.msra.mxu0 %v833
        %2499 = vmatprep.subr.mxu0 0.0
        %2500 = vmatpush1.msra.mxu0 %v834
        %2501 = vmatprep.subr.mxu0 0.0
        %2502 = vmatpush1.msra.mxu0 %v835
        %2503 = vmatprep.subr.mxu0 0.0
        %2504 = vmatpush1.msra.mxu0 %v836
        %2505 = vmatprep.subr.mxu0 0.0
        %2506 = vmatpush1.msra.mxu0 %v837
        %2507 = vmatprep.subr.mxu0 0.0
        %2508 = vmatpush1.msra.mxu0 %v838
        %2509 = vmatprep.subr.mxu0 0.0
        %2510 = vmatpush1.msra.mxu0 %v839
        %2511 = vmatprep.subr.mxu0 0.0
        %2512 = vmatpush1.msra.mxu0 %v840
        %2513 = vmatprep.subr.mxu0 0.0
        %2514 = vmatpush1.msra.mxu0 %v841
        %2515 = vmatprep.subr.mxu0 0.0
        %2516 = vmatpush1.msra.mxu0 0.0
        %2517 = vmatprep.subr.mxu0 0.0
        %2518 = vmatpush1.msra.mxu0 0.0
        %2519 = vmatprep.subr.mxu0 0.0
        %2520 = vmatpush1.msra.mxu0 0.0
        %2521 = vmatprep.subr.mxu0 0.0
        %2522 = vmatpush1.msra.mxu0 0.0
        %2523 = vmatprep.subr.mxu0 0.0
        %2524 = vmatpush1.msra.mxu0 0.0
        %2525 = vmatprep.subr.mxu0 0.0
        %2526 = vmatpush1.msra.mxu0 0.0
        %2527 = vmatprep.subr.mxu0 0.0
        %2528 = vmatpush1.msra.mxu0 0.0
        %2529 = vmatprep.subr.mxu0 0.0
        %2530 = vmatpush1.msra.mxu0 0.0
        %2531 = vmatprep.subr.mxu0 0.0
        %2532 = vmatpush1.msra.mxu0 0.0
        %2533 = vmatprep.subr.mxu0 0.0
        %2534 = vmatpush1.msra.mxu0 0.0
        %2535 = vmatprep.subr.mxu0 0.0
        %2536 = vmatpush1.msra.mxu0 0.0
        %2537 = vmatprep.subr.mxu0 0.0
        %2538 = vmatpush1.msra.mxu0 0.0
        %2539 = vmatprep.subr.mxu0 0.0
        %2540 = vmatpush1.msra.mxu0 0.0
        %2541 = vmatprep.subr.mxu0 0.0
        %2542 = vmatpush1.msra.mxu0 0.0
        %2543 = vmatprep.subr.mxu0 0.0
        %2544 = vmatpush1.msra.mxu0 0.0
        %2545 = vmatprep.subr.mxu0 0.0
        %2546 = vmatpush1.msra.mxu0 0.0
        %2547 = vmatprep.mubr.f32.mxu0 0.0
        %2548 = vmatmul.mubr.f32.gmra.mrb[0].mxu0 %v2475
        %v2549 = vpop.f32.mrb[0].mxu0
        %v2550 = vadd.f32 0.0, %v2549
        %v2551 = vpop.f32.mrb[0].mxu0
        %2552 = vmatprep.mubr.f32.mxu0 0.0
        %2553 = vmatmul.mubr.f32.gmra.mrb[0].mxu0 %v2480
        %v2554 = vpop.f32.mrb[0].mxu0
        %v2555 = vadd.f32 0.0, %v2554
        %v2556 = vpop.f32.mrb[0].mxu0
        %2557 = vdwg.mxu0
        %s2558 = scalar_lea.vmem %s7, 16
        %v2559 = vld [vmem:[%s2558] sm:$0xff]
        %v2560 = vld [vmem:[%s2558 + $0x8] sm:$0xff]
        %v2561 = vmul.f32 %v2550, 0.03125
        %v2562 = vmul.f32 %v2555, 0.03125
        %v2563 = vtanh.pop %v2561
        %v2564 = vtanh.pop %v2562
        %v2565 = vmul.f32 %v1423, %v2563
        %v2566 = vmul.f32 %v1423, %v2564
        %v2567 = vadd.f32 %v2559, %v2565
        %v2568 = vadd.f32 %v2560, %v2566
        %2569 = vmatprep.subr.mxu0 0.0
        %2570 = vmatpush1.msra.mxu0 %v2567
        %2571 = vmatprep.subr.mxu0 0.0
        %2572 = vmatpush1.msra.mxu0 %v2568
        %2573 = vmatprep.subr.mxu0 0.0
        %2574 = vmatpush1.msra.mxu0 0.0
        %2575 = vmatprep.subr.mxu0 0.0
        %2576 = vmatpush1.msra.mxu0 0.0
        %2577 = vmatprep.subr.mxu0 0.0
        %2578 = vmatpush1.msra.mxu0 0.0
        %2579 = vmatprep.subr.mxu0 0.0
        %2580 = vmatpush1.msra.mxu0 0.0
        %2581 = vmatprep.subr.mxu0 0.0
        %2582 = vmatpush1.msra.mxu0 0.0
        %2583 = vmatprep.subr.mxu0 0.0
        %2584 = vmatpush1.msra.mxu0 0.0
        %2585 = vmatprep.subr.mxu0 0.0
        %2586 = vmatpush1.msra.mxu0 0.0
        %2587 = vmatprep.subr.mxu0 0.0
        %2588 = vmatpush1.msra.mxu0 0.0
        %2589 = vmatprep.subr.mxu0 0.0
        %2590 = vmatpush1.msra.mxu0 0.0
        %2591 = vmatprep.subr.mxu0 0.0
        %2592 = vmatpush1.msra.mxu0 0.0
        %2593 = vmatprep.subr.mxu0 0.0
        %2594 = vmatpush1.msra.mxu0 0.0
        %2595 = vmatprep.subr.mxu0 0.0
        %2596 = vmatpush1.msra.mxu0 0.0
        %2597 = vmatprep.subr.mxu0 0.0
        %2598 = vmatpush1.msra.mxu0 0.0
        %2599 = vmatprep.subr.mxu0 0.0
        %2600 = vmatpush1.msra.mxu0 0.0
        %2601 = vmatprep.subr.mxu0 0.0
        %2602 = vmatpush1.msra.mxu0 0.0
        %2603 = vmatprep.subr.mxu0 0.0
        %2604 = vmatpush1.msra.mxu0 0.0
        %2605 = vmatprep.subr.mxu0 0.0
        %2606 = vmatpush1.msra.mxu0 0.0
        %2607 = vmatprep.subr.mxu0 0.0
        %2608 = vmatpush1.msra.mxu0 0.0
        %2609 = vmatprep.subr.mxu0 0.0
        %2610 = vmatpush1.msra.mxu0 0.0
        %2611 = vmatprep.subr.mxu0 0.0
        %2612 = vmatpush1.msra.mxu0 0.0
        %2613 = vmatprep.subr.mxu0 0.0
        %2614 = vmatpush1.msra.mxu0 0.0
        %2615 = vmatprep.subr.mxu0 0.0
        %2616 = vmatpush1.msra.mxu0 0.0
        %2617 = vmatprep.subr.mxu0 0.0
        %2618 = vmatpush1.msra.mxu0 0.0
        %2619 = vmatprep.subr.mxu0 0.0
        %2620 = vmatpush1.msra.mxu0 0.0
        %2621 = vmatprep.subr.mxu0 0.0
        %2622 = vmatpush1.msra.mxu0 0.0
        %2623 = vmatprep.subr.mxu0 0.0
        %2624 = vmatpush1.msra.mxu0 0.0
        %2625 = vmatprep.subr.mxu0 0.0
        %2626 = vmatpush1.msra.mxu0 0.0
        %2627 = vmatprep.subr.mxu0 0.0
        %2628 = vmatpush1.msra.mxu0 0.0
        %2629 = vmatprep.subr.mxu0 0.0
        %2630 = vmatpush1.msra.mxu0 0.0
        %2631 = vmatprep.subr.mxu0 0.0
        %2632 = vmatpush1.msra.mxu0 0.0
        %2633 = vmatprep.mubr.f32.mxu0 0.0
        %2634 = vmatmul.mubr.f32.gmra.mrb[0].mxu0 %v1429
        %v2635 = vpop.f32.mrb[0].mxu0
        %v2636 = vadd.f32 0.0, %v2635
        %v2637 = vpop.f32.mrb[0].mxu0
        %2638 = vmatprep.mubr.f32.mxu0 0.0
        %2639 = vmatmul.mubr.f32.gmra.mrb[0].mxu0 %v1432
        %v2640 = vpop.f32.mrb[0].mxu0
        %v2641 = vadd.f32 0.0, %v2640
        %v2642 = vpop.f32.mrb[0].mxu0
        %2643 = vmatprep.mubr.f32.mxu0 0.0
        %2644 = vmatmul.mubr.f32.gmra.mrb[0].mxu0 %v1435
        %v2645 = vpop.f32.mrb[0].mxu0
        %v2646 = vadd.f32 0.0, %v2645
        %v2647 = vpop.f32.mrb[0].mxu0
        %2648 = vmatprep.mubr.f32.mxu0 0.0
        %2649 = vmatmul.mubr.f32.gmra.mrb[0].mxu0 %v1438
        %v2650 = vpop.f32.mrb[0].mxu0
        %v2651 = vadd.f32 0.0, %v2650
        %v2652 = vpop.f32.mrb[0].mxu0
        %2653 = vmatprep.mubr.f32.mxu0 0.0
        %2654 = vmatmul.mubr.f32.gmra.mrb[0].mxu0 %v1441
        %v2655 = vpop.f32.mrb[0].mxu0
        %v2656 = vadd.f32 0.0, %v2655
        %v2657 = vpop.f32.mrb[0].mxu0
        %2658 = vmatprep.mubr.f32.mxu0 0.0
        %2659 = vmatmul.mubr.f32.gmra.mrb[0].mxu0 %v1444
        %v2660 = vpop.f32.mrb[0].mxu0
        %v2661 = vadd.f32 0.0, %v2660
        %v2662 = vpop.f32.mrb[0].mxu0
        %2663 = vmatprep.mubr.f32.mxu0 0.0
        %2664 = vmatmul.mubr.f32.gmra.mrb[0].mxu0 %v1447
        %v2665 = vpop.f32.mrb[0].mxu0
        %v2666 = vadd.f32 0.0, %v2665
        %v2667 = vpop.f32.mrb[0].mxu0
        %2668 = vmatprep.mubr.f32.mxu0 0.0
        %2669 = vmatmul.mubr.f32.gmra.mrb[0].mxu0 %v1450
        %v2670 = vpop.f32.mrb[0].mxu0
        %v2671 = vadd.f32 0.0, %v2670
        %v2672 = vpop.f32.mrb[0].mxu0
        %2673 = vmatprep.mubr.f32.mxu0 0.0
        %2674 = vmatmul.mubr.f32.gmra.mrb[0].mxu0 %v1453
        %v2675 = vpop.f32.mrb[0].mxu0
        %v2676 = vadd.f32 0.0, %v2675
        %v2677 = vpop.f32.mrb[0].mxu0
        %2678 = vmatprep.mubr.f32.mxu0 0.0
        %2679 = vmatmul.mubr.f32.gmra.mrb[0].mxu0 %v1456
        %v2680 = vpop.f32.mrb[0].mxu0
        %v2681 = vadd.f32 0.0, %v2680
        %v2682 = vpop.f32.mrb[0].mxu0
        %2683 = vmatprep.mubr.f32.mxu0 0.0
        %2684 = vmatmul.mubr.f32.gmra.mrb[0].mxu0 %v1459
        %v2685 = vpop.f32.mrb[0].mxu0
        %v2686 = vadd.f32 0.0, %v2685
        %v2687 = vpop.f32.mrb[0].mxu0
        %2688 = vmatprep.mubr.f32.mxu0 0.0
        %2689 = vmatmul.mubr.f32.gmra.mrb[0].mxu0 %v1462
        %v2690 = vpop.f32.mrb[0].mxu0
        %v2691 = vadd.f32 0.0, %v2690
        %v2692 = vpop.f32.mrb[0].mxu0
        %2693 = vmatprep.mubr.f32.mxu0 0.0
        %2694 = vmatmul.mubr.f32.gmra.mrb[0].mxu0 %v1465
        %v2695 = vpop.f32.mrb[0].mxu0
        %v2696 = vadd.f32 0.0, %v2695
        %v2697 = vpop.f32.mrb[0].mxu0
        %2698 = vmatprep.mubr.f32.mxu0 0.0
        %2699 = vmatmul.mubr.f32.gmra.mrb[0].mxu0 %v1468
        %v2700 = vpop.f32.mrb[0].mxu0
        %v2701 = vadd.f32 0.0, %v2700
        %v2702 = vpop.f32.mrb[0].mxu0
        %2703 = vmatprep.mubr.f32.mxu0 0.0
        %2704 = vmatmul.mubr.f32.gmra.mrb[0].mxu0 %v1471
        %v2705 = vpop.f32.mrb[0].mxu0
        %v2706 = vadd.f32 0.0, %v2705
        %v2707 = vpop.f32.mrb[0].mxu0
        %2708 = vmatprep.mubr.f32.mxu0 0.0
        %2709 = vmatmul.mubr.f32.gmra.mrb[0].mxu0 %v1474
        %v2710 = vpop.f32.mrb[0].mxu0
        %v2711 = vadd.f32 0.0, %v2710
        %v2712 = vpop.f32.mrb[0].mxu0
        %2713 = vdwg.mxu0
        %v2715 = vsel %vm867, %v2636, 0
        %v2718 = vsel %vm867, %v2641, 0
        %v2721 = vsel %vm867, %v2646, 0
        %v2724 = vsel %vm867, %v2651, 0
        %v2727 = vsel %vm867, %v2656, 0
        %v2730 = vsel %vm867, %v2661, 0
        %v2733 = vsel %vm867, %v2666, 0
        %v2736 = vsel %vm867, %v2671, 0
        %v2739 = vsel %vm867, %v2676, 0
        %v2742 = vsel %vm867, %v2681, 0
        %v2745 = vsel %vm867, %v2686, 0
        %v2748 = vsel %vm867, %v2691, 0
        %v2751 = vsel %vm867, %v2696, 0
        %v2754 = vsel %vm867, %v2701, 0
        %v2757 = vsel %vm867, %v2706, 0
        %v2760 = vsel %vm867, %v2711, 0
        %2762 = vmatprep.subr.mxu0 0.0
        %2763 = vmatpush1.msra.mxu0 %v842
        %2764 = vmatprep.subr.mxu0 0.0
        %2765 = vmatpush1.msra.mxu0 %v843
        %2766 = vmatprep.subr.mxu0 0.0
        %2767 = vmatpush1.msra.mxu0 0.0
        %2768 = vmatprep.subr.mxu0 0.0
        %2769 = vmatpush1.msra.mxu0 0.0
        %2770 = vmatprep.subr.mxu0 0.0
        %2771 = vmatpush1.msra.mxu0 0.0
        %2772 = vmatprep.subr.mxu0 0.0
        %2773 = vmatpush1.msra.mxu0 0.0
        %2774 = vmatprep.subr.mxu0 0.0
        %2775 = vmatpush1.msra.mxu0 0.0
        %2776 = vmatprep.subr.mxu0 0.0
        %2777 = vmatpush1.msra.mxu0 0.0
        %2778 = vmatprep.subr.mxu0 0.0
        %2779 = vmatpush1.msra.mxu0 0.0
        %2780 = vmatprep.subr.mxu0 0.0
        %2781 = vmatpush1.msra.mxu0 0.0
        %2782 = vmatprep.subr.mxu0 0.0
        %2783 = vmatpush1.msra.mxu0 0.0
        %2784 = vmatprep.subr.mxu0 0.0
        %2785 = vmatpush1.msra.mxu0 0.0
        %2786 = vmatprep.subr.mxu0 0.0
        %2787 = vmatpush1.msra.mxu0 0.0
        %2788 = vmatprep.subr.mxu0 0.0
        %2789 = vmatpush1.msra.mxu0 0.0
        %2790 = vmatprep.subr.mxu0 0.0
        %2791 = vmatpush1.msra.mxu0 0.0
        %2792 = vmatprep.subr.mxu0 0.0
        %2793 = vmatpush1.msra.mxu0 0.0
        %2794 = vmatprep.subr.mxu0 0.0
        %2795 = vmatpush1.msra.mxu0 0.0
        %2796 = vmatprep.subr.mxu0 0.0
        %2797 = vmatpush1.msra.mxu0 0.0
        %2798 = vmatprep.subr.mxu0 0.0
        %2799 = vmatpush1.msra.mxu0 0.0
        %2800 = vmatprep.subr.mxu0 0.0
        %2801 = vmatpush1.msra.mxu0 0.0
        %2802 = vmatprep.subr.mxu0 0.0
        %2803 = vmatpush1.msra.mxu0 0.0
        %2804 = vmatprep.subr.mxu0 0.0
        %2805 = vmatpush1.msra.mxu0 0.0
        %2806 = vmatprep.subr.mxu0 0.0
        %2807 = vmatpush1.msra.mxu0 0.0
        %2808 = vmatprep.subr.mxu0 0.0
        %2809 = vmatpush1.msra.mxu0 0.0
        %2810 = vmatprep.subr.mxu0 0.0
        %2811 = vmatpush1.msra.mxu0 0.0
        %2812 = vmatprep.subr.mxu0 0.0
        %2813 = vmatpush1.msra.mxu0 0.0
        %2814 = vmatprep.subr.mxu0 0.0
        %2815 = vmatpush1.msra.mxu0 0.0
        %2816 = vmatprep.subr.mxu0 0.0
        %2817 = vmatpush1.msra.mxu0 0.0
        %2818 = vmatprep.subr.mxu0 0.0
        %2819 = vmatpush1.msra.mxu0 0.0
        %2820 = vmatprep.subr.mxu0 0.0
        %2821 = vmatpush1.msra.mxu0 0.0
        %2822 = vmatprep.subr.mxu0 0.0
        %2823 = vmatpush1.msra.mxu0 0.0
        %2824 = vmatprep.subr.mxu0 0.0
        %2825 = vmatpush1.msra.mxu0 0.0
        %2826 = vmatprep.mubr.f32.mxu0 0.0
        %2827 = vmatmul.mubr.f32.gmra.mrb[0].mxu0 %v2715
        %v2828 = vpop.f32.mrb[0].mxu0
        %v2829 = vadd.f32 0.0, %v2828
        %v2830 = vpop.f32.mrb[0].mxu0
        %2831 = vmatprep.mubr.f32.mxu0 0.0
        %2832 = vmatmul.mubr.f32.gmra.mrb[0].mxu0 %v2718
        %v2833 = vpop.f32.mrb[0].mxu0
        %v2834 = vadd.f32 0.0, %v2833
        %v2835 = vpop.f32.mrb[0].mxu0
        %2836 = vmatprep.mubr.f32.mxu0 0.0
        %2837 = vmatmul.mubr.f32.gmra.mrb[0].mxu0 %v2721
        %v2838 = vpop.f32.mrb[0].mxu0
        %v2839 = vadd.f32 0.0, %v2838
        %v2840 = vpop.f32.mrb[0].mxu0
        %2841 = vmatprep.mubr.f32.mxu0 0.0
        %2842 = vmatmul.mubr.f32.gmra.mrb[0].mxu0 %v2724
        %v2843 = vpop.f32.mrb[0].mxu0
        %v2844 = vadd.f32 0.0, %v2843
        %v2845 = vpop.f32.mrb[0].mxu0
        %2846 = vmatprep.mubr.f32.mxu0 0.0
        %2847 = vmatmul.mubr.f32.gmra.mrb[0].mxu0 %v2727
        %v2848 = vpop.f32.mrb[0].mxu0
        %v2849 = vadd.f32 0.0, %v2848
        %v2850 = vpop.f32.mrb[0].mxu0
        %2851 = vmatprep.mubr.f32.mxu0 0.0
        %2852 = vmatmul.mubr.f32.gmra.mrb[0].mxu0 %v2730
        %v2853 = vpop.f32.mrb[0].mxu0
        %v2854 = vadd.f32 0.0, %v2853
        %v2855 = vpop.f32.mrb[0].mxu0
        %2856 = vmatprep.mubr.f32.mxu0 0.0
        %2857 = vmatmul.mubr.f32.gmra.mrb[0].mxu0 %v2733
        %v2858 = vpop.f32.mrb[0].mxu0
        %v2859 = vadd.f32 0.0, %v2858
        %v2860 = vpop.f32.mrb[0].mxu0
        %2861 = vmatprep.mubr.f32.mxu0 0.0
        %2862 = vmatmul.mubr.f32.gmra.mrb[0].mxu0 %v2736
        %v2863 = vpop.f32.mrb[0].mxu0
        %v2864 = vadd.f32 0.0, %v2863
        %v2865 = vpop.f32.mrb[0].mxu0
        %2866 = vmatprep.mubr.f32.mxu0 0.0
        %2867 = vmatmul.mubr.f32.gmra.mrb[0].mxu0 %v2739
        %v2868 = vpop.f32.mrb[0].mxu0
        %v2869 = vadd.f32 0.0, %v2868
        %v2870 = vpop.f32.mrb[0].mxu0
        %2871 = vmatprep.mubr.f32.mxu0 0.0
        %2872 = vmatmul.mubr.f32.gmra.mrb[0].mxu0 %v2742
        %v2873 = vpop.f32.mrb[0].mxu0
        %v2874 = vadd.f32 0.0, %v2873
        %v2875 = vpop.f32.mrb[0].mxu0
        %2876 = vmatprep.mubr.f32.mxu0 0.0
        %2877 = vmatmul.mubr.f32.gmra.mrb[0].mxu0 %v2745
        %v2878 = vpop.f32.mrb[0].mxu0
        %v2879 = vadd.f32 0.0, %v2878
        %v2880 = vpop.f32.mrb[0].mxu0
        %2881 = vmatprep.mubr.f32.mxu0 0.0
        %2882 = vmatmul.mubr.f32.gmra.mrb[0].mxu0 %v2748
        %v2883 = vpop.f32.mrb[0].mxu0
        %v2884 = vadd.f32 0.0, %v2883
        %v2885 = vpop.f32.mrb[0].mxu0
        %2886 = vmatprep.mubr.f32.mxu0 0.0
        %2887 = vmatmul.mubr.f32.gmra.mrb[0].mxu0 %v2751
        %v2888 = vpop.f32.mrb[0].mxu0
        %v2889 = vadd.f32 0.0, %v2888
        %v2890 = vpop.f32.mrb[0].mxu0
        %2891 = vmatprep.mubr.f32.mxu0 0.0
        %2892 = vmatmul.mubr.f32.gmra.mrb[0].mxu0 %v2754
        %v2893 = vpop.f32.mrb[0].mxu0
        %v2894 = vadd.f32 0.0, %v2893
        %v2895 = vpop.f32.mrb[0].mxu0
        %2896 = vmatprep.mubr.f32.mxu0 0.0
        %2897 = vmatmul.mubr.f32.gmra.mrb[0].mxu0 %v2757
        %v2898 = vpop.f32.mrb[0].mxu0
        %v2899 = vadd.f32 0.0, %v2898
        %v2900 = vpop.f32.mrb[0].mxu0
        %2901 = vmatprep.mubr.f32.mxu0 0.0
        %2902 = vmatmul.mubr.f32.gmra.mrb[0].mxu0 %v2760
        %v2903 = vpop.f32.mrb[0].mxu0
        %v2904 = vadd.f32 0.0, %v2903
        %v2905 = vpop.f32.mrb[0].mxu0
        %2906 = vdwg.mxu0
        %v2907 = vmul.f32 %v2829, %v844
        %v2908 = vmul.f32 %v2834, %v845
        %v2909 = vmul.f32 %v2839, %v846
        %v2910 = vmul.f32 %v2844, %v847
        %v2911 = vmul.f32 %v2849, %v848
        %v2912 = vmul.f32 %v2854, %v849
        %v2913 = vmul.f32 %v2859, %v850
        %v2914 = vmul.f32 %v2864, %v851
        %v2915 = vmul.f32 %v2869, %v852
        %v2916 = vmul.f32 %v2874, %v853
        %v2917 = vmul.f32 %v2879, %v854
        %v2918 = vmul.f32 %v2884, %v855
        %v2919 = vmul.f32 %v2889, %v856
        %v2920 = vmul.f32 %v2894, %v857
        %v2921 = vmul.f32 %v2899, %v858
        %v2922 = vmul.f32 %v2904, %v859
        %2923 = vmatprep.subr.mxu0 0.0
        %2924 = vmatpush1.msra.mxu0 %v2907
        %2925 = vmatprep.subr.mxu0 0.0
        %2926 = vmatpush1.msra.mxu0 %v2908
        %2927 = vmatprep.subr.mxu0 0.0
        %2928 = vmatpush1.msra.mxu0 %v2909
        %2929 = vmatprep.subr.mxu0 0.0
        %2930 = vmatpush1.msra.mxu0 %v2910
        %2931 = vmatprep.subr.mxu0 0.0
        %2932 = vmatpush1.msra.mxu0 %v2911
        %2933 = vmatprep.subr.mxu0 0.0
        %2934 = vmatpush1.msra.mxu0 %v2912
        %2935 = vmatprep.subr.mxu0 0.0
        %2936 = vmatpush1.msra.mxu0 %v2913
        %2937 = vmatprep.subr.mxu0 0.0
        %2938 = vmatpush1.msra.mxu0 %v2914
        %2939 = vmatprep.subr.mxu0 0.0
        %2940 = vmatpush1.msra.mxu0 %v2915
        %2941 = vmatprep.subr.mxu0 0.0
        %2942 = vmatpush1.msra.mxu0 %v2916
        %2943 = vmatprep.subr.mxu0 0.0
        %2944 = vmatpush1.msra.mxu0 %v2917
        %2945 = vmatprep.subr.mxu0 0.0
        %2946 = vmatpush1.msra.mxu0 %v2918
        %2947 = vmatprep.subr.mxu0 0.0
        %2948 = vmatpush1.msra.mxu0 %v2919
        %2949 = vmatprep.subr.mxu0 0.0
        %2950 = vmatpush1.msra.mxu0 %v2920
        %2951 = vmatprep.subr.mxu0 0.0
        %2952 = vmatpush1.msra.mxu0 %v2921
        %2953 = vmatprep.subr.mxu0 0.0
        %2954 = vmatpush1.msra.mxu0 %v2922
        %2955 = vmatprep.subr.mxu0 0.0
        %2956 = vmatpush1.msra.mxu0 0.0
        %2957 = vmatprep.subr.mxu0 0.0
        %2958 = vmatpush1.msra.mxu0 0.0
        %2959 = vmatprep.subr.mxu0 0.0
        %2960 = vmatpush1.msra.mxu0 0.0
        %2961 = vmatprep.subr.mxu0 0.0
        %2962 = vmatpush1.msra.mxu0 0.0
        %2963 = vmatprep.subr.mxu0 0.0
        %2964 = vmatpush1.msra.mxu0 0.0
        %2965 = vmatprep.subr.mxu0 0.0
        %2966 = vmatpush1.msra.mxu0 0.0
        %2967 = vmatprep.subr.mxu0 0.0
        %2968 = vmatpush1.msra.mxu0 0.0
        %2969 = vmatprep.subr.mxu0 0.0
        %2970 = vmatpush1.msra.mxu0 0.0
        %2971 = vmatprep.subr.mxu0 0.0
        %2972 = vmatpush1.msra.mxu0 0.0
        %2973 = vmatprep.subr.mxu0 0.0
        %2974 = vmatpush1.msra.mxu0 0.0
        %2975 = vmatprep.subr.mxu0 0.0
        %2976 = vmatpush1.msra.mxu0 0.0
        %2977 = vmatprep.subr.mxu0 0.0
        %2978 = vmatpush1.msra.mxu0 0.0
        %2979 = vmatprep.subr.mxu0 0.0
        %2980 = vmatpush1.msra.mxu0 0.0
        %2981 = vmatprep.subr.mxu0 0.0
        %2982 = vmatpush1.msra.mxu0 0.0
        %2983 = vmatprep.subr.mxu0 0.0
        %2984 = vmatpush1.msra.mxu0 0.0
        %2985 = vmatprep.subr.mxu0 0.0
        %2986 = vmatpush1.msra.mxu0 0.0
        %2987 = vmatprep.mubr.f32.mxu0 0.0
        %2988 = vmatmul.mubr.f32.gmra.mrb[0].mxu0 %v823
        %v2989 = vpop.f32.mrb[0].mxu0
        %v2990 = vadd.f32 0.0, %v2989
        %v2991 = vpop.f32.mrb[0].mxu0
        %2992 = vmatprep.mubr.f32.mxu0 0.0
        %2993 = vmatmul.mubr.f32.gmra.mrb[0].mxu0 %v824
        %v2994 = vpop.f32.mrb[0].mxu0
        %v2995 = vadd.f32 0.0, %v2994
        %v2996 = vpop.f32.mrb[0].mxu0
        %2997 = vdwg.mxu0
        %s2998 = scalar_lea.vmem %s5, 16
        %v2999 = vld [vmem:[%s2998] sm:$0xff]
        %v3000 = vld [vmem:[%s2998 + $0x8] sm:$0xff]
        %v3002 = vsel %vm867, %v2999, 0
        %v3005 = vsel %vm867, %v3000, 0
        %3007 = vmatprep.subr.mxu0 0.0
        %3008 = vmatpush1.msra.mxu0 %v2990
        %3009 = vmatprep.subr.mxu0 0.0
        %3010 = vmatpush1.msra.mxu0 %v2995
        %3011 = vmatprep.subr.mxu0 0.0
        %3012 = vmatpush1.msra.mxu0 0.0
        %3013 = vmatprep.subr.mxu0 0.0
        %3014 = vmatpush1.msra.mxu0 0.0
        %3015 = vmatprep.subr.mxu0 0.0
        %3016 = vmatpush1.msra.mxu0 0.0
        %3017 = vmatprep.subr.mxu0 0.0
        %3018 = vmatpush1.msra.mxu0 0.0
        %3019 = vmatprep.subr.mxu0 0.0
        %3020 = vmatpush1.msra.mxu0 0.0
        %3021 = vmatprep.subr.mxu0 0.0
        %3022 = vmatpush1.msra.mxu0 0.0
        %3023 = vmatprep.subr.mxu0 0.0
        %3024 = vmatpush1.msra.mxu0 0.0
        %3025 = vmatprep.subr.mxu0 0.0
        %3026 = vmatpush1.msra.mxu0 0.0
        %3027 = vmatprep.subr.mxu0 0.0
        %3028 = vmatpush1.msra.mxu0 0.0
        %3029 = vmatprep.subr.mxu0 0.0
        %3030 = vmatpush1.msra.mxu0 0.0
        %3031 = vmatprep.subr.mxu0 0.0
        %3032 = vmatpush1.msra.mxu0 0.0
        %3033 = vmatprep.subr.mxu0 0.0
        %3034 = vmatpush1.msra.mxu0 0.0
        %3035 = vmatprep.subr.mxu0 0.0
        %3036 = vmatpush1.msra.mxu0 0.0
        %3037 = vmatprep.subr.mxu0 0.0
        %3038 = vmatpush1.msra.mxu0 0.0
        %3039 = vmatprep.subr.mxu0 0.0
        %3040 = vmatpush1.msra.mxu0 0.0
        %3041 = vmatprep.subr.mxu0 0.0
        %3042 = vmatpush1.msra.mxu0 0.0
        %3043 = vmatprep.subr.mxu0 0.0
        %3044 = vmatpush1.msra.mxu0 0.0
        %3045 = vmatprep.subr.mxu0 0.0
        %3046 = vmatpush1.msra.mxu0 0.0
        %3047 = vmatprep.subr.mxu0 0.0
        %3048 = vmatpush1.msra.mxu0 0.0
        %3049 = vmatprep.subr.mxu0 0.0
        %3050 = vmatpush1.msra.mxu0 0.0
        %3051 = vmatprep.subr.mxu0 0.0
        %3052 = vmatpush1.msra.mxu0 0.0
        %3053 = vmatprep.subr.mxu0 0.0
        %3054 = vmatpush1.msra.mxu0 0.0
        %3055 = vmatprep.subr.mxu0 0.0
        %3056 = vmatpush1.msra.mxu0 0.0
        %3057 = vmatprep.subr.mxu0 0.0
        %3058 = vmatpush1.msra.mxu0 0.0
        %3059 = vmatprep.subr.mxu0 0.0
        %3060 = vmatpush1.msra.mxu0 0.0
        %3061 = vmatprep.subr.mxu0 0.0
        %3062 = vmatpush1.msra.mxu0 0.0
        %3063 = vmatprep.subr.mxu0 0.0
        %3064 = vmatpush1.msra.mxu0 0.0
        %3065 = vmatprep.subr.mxu0 0.0
        %3066 = vmatpush1.msra.mxu0 0.0
        %3067 = vmatprep.subr.mxu0 0.0
        %3068 = vmatpush1.msra.mxu0 0.0
        %3069 = vmatprep.subr.mxu0 0.0
        %3070 = vmatpush1.msra.mxu0 0.0
        %3071 = vmatprep.mubr.f32.mxu0 0.0
        %3072 = vmatmul.mubr.f32.gmra.mrb[0].mxu0 %v3002
        %v3073 = vpop.f32.mrb[0].mxu0
        %v3074 = vadd.f32 0.0, %v3073
        %v3075 = vpop.f32.mrb[0].mxu0
        %3076 = vmatprep.mubr.f32.mxu0 0.0
        %3077 = vmatmul.mubr.f32.gmra.mrb[0].mxu0 %v3005
        %v3078 = vpop.f32.mrb[0].mxu0
        %v3079 = vadd.f32 0.0, %v3078
        %v3080 = vpop.f32.mrb[0].mxu0
        %3081 = vdwg.mxu0
        %v3082 = vadd.f32 %v1992, %v3074
        %v3083 = vadd.f32 %v1997, %v3079
        %s3084 = scalar_lea.vmem %s6, 16
        %v3085 = vld [vmem:[%s3084] sm:$0xff]
        %v3086 = vld [vmem:[%s3084 + $0x8] sm:$0xff]
        %3088 = vset.pattern.permute.xlu0 0
        %3089 = vperm.xlu0 %3088, %v3085
        %v3090 = vpop.permute.xlu0 %3089
        %3093 = vset.pattern.permute.xlu0 0
        %3094 = vperm.xlu0 %3093, %v3086
        %v3095 = vpop.permute.xlu0 %3094
        %v3097 = vadd.f32 %v3082, %v3090
        %v3098 = vadd.f32 %v3083, %v3095
        %s3099 = scalar_lea.vmem [#allocation5], 8
        %v3100 = vld [vmem:[%s3099] sm:$0xf]
        %s3101 = scalar_lea.vmem %s2, 8
        %v3102 = vld [vmem:[%s3101] sm:$0xf]
        %3104 = vset.pattern.permute.xlu0 0
        %3105 = vperm.xlu0 %3104, %v3102
        %v3106 = vpop.permute.xlu0 %3105
        %v3109 = vsel %vm867, %v3100, 0
        %3111 = vmatprep.subr.mxu0 0.0
        %3112 = vmatpush1.msra.mxu0 %v823
        %3113 = vmatprep.subr.mxu0 0.0
        %3114 = vmatpush1.msra.mxu0 %v824
        %3115 = vmatprep.subr.mxu0 0.0
        %3116 = vmatpush1.msra.mxu0 0.0
        %3117 = vmatprep.subr.mxu0 0.0
        %3118 = vmatpush1.msra.mxu0 0.0
        %3119 = vmatprep.subr.mxu0 0.0
        %3120 = vmatpush1.msra.mxu0 0.0
        %3121 = vmatprep.subr.mxu0 0.0
        %3122 = vmatpush1.msra.mxu0 0.0
        %3123 = vmatprep.subr.mxu0 0.0
        %3124 = vmatpush1.msra.mxu0 0.0
        %3125 = vmatprep.subr.mxu0 0.0
        %3126 = vmatpush1.msra.mxu0 0.0
        %3127 = vmatprep.subr.mxu0 0.0
        %3128 = vmatpush1.msra.mxu0 0.0
        %3129 = vmatprep.subr.mxu0 0.0
        %3130 = vmatpush1.msra.mxu0 0.0
        %3131 = vmatprep.subr.mxu0 0.0
        %3132 = vmatpush1.msra.mxu0 0.0
        %3133 = vmatprep.subr.mxu0 0.0
        %3134 = vmatpush1.msra.mxu0 0.0
        %3135 = vmatprep.subr.mxu0 0.0
        %3136 = vmatpush1.msra.mxu0 0.0
        %3137 = vmatprep.subr.mxu0 0.0
        %3138 = vmatpush1.msra.mxu0 0.0
        %3139 = vmatprep.subr.mxu0 0.0
        %3140 = vmatpush1.msra.mxu0 0.0
        %3141 = vmatprep.subr.mxu0 0.0
        %3142 = vmatpush1.msra.mxu0 0.0
        %3143 = vmatprep.subr.mxu0 0.0
        %3144 = vmatpush1.msra.mxu0 0.0
        %3145 = vmatprep.subr.mxu0 0.0
        %3146 = vmatpush1.msra.mxu0 0.0
        %3147 = vmatprep.subr.mxu0 0.0
        %3148 = vmatpush1.msra.mxu0 0.0
        %3149 = vmatprep.subr.mxu0 0.0
        %3150 = vmatpush1.msra.mxu0 0.0
        %3151 = vmatprep.subr.mxu0 0.0
        %3152 = vmatpush1.msra.mxu0 0.0
        %3153 = vmatprep.subr.mxu0 0.0
        %3154 = vmatpush1.msra.mxu0 0.0
        %3155 = vmatprep.subr.mxu0 0.0
        %3156 = vmatpush1.msra.mxu0 0.0
        %3157 = vmatprep.subr.mxu0 0.0
        %3158 = vmatpush1.msra.mxu0 0.0
        %3159 = vmatprep.subr.mxu0 0.0
        %3160 = vmatpush1.msra.mxu0 0.0
        %3161 = vmatprep.subr.mxu0 0.0
        %3162 = vmatpush1.msra.mxu0 0.0
        %3163 = vmatprep.subr.mxu0 0.0
        %3164 = vmatpush1.msra.mxu0 0.0
        %3165 = vmatprep.subr.mxu0 0.0
        %3166 = vmatpush1.msra.mxu0 0.0
        %3167 = vmatprep.subr.mxu0 0.0
        %3168 = vmatpush1.msra.mxu0 0.0
        %3169 = vmatprep.subr.mxu0 0.0
        %3170 = vmatpush1.msra.mxu0 0.0
        %3171 = vmatprep.subr.mxu0 0.0
        %3172 = vmatpush1.msra.mxu0 0.0
        %3173 = vmatprep.subr.mxu0 0.0
        %3174 = vmatpush1.msra.mxu0 0.0
        %3175 = vmatprep.mubr.f32.mxu0 0.0
        %3176 = vmatmul.mubr.f32.gmra.mrb[0].mxu0 %v3109
        %v3177 = vpop.f32.mrb[0].mxu0
        %v3178 = vadd.f32 %v3106, %v3177
        %v3179 = vpop.f32.mrb[0].mxu0
        %3180 = vdwg.mxu0
        %s3181 = scalar_lea.vmem [#allocation8], 8
        %v3182 = vld [vmem:[%s3181] sm:$0xf]
        %s3183 = scalar_lea.vmem %s4, 8
        %v3184 = vld [vmem:[%s3183] sm:$0xf]
        %3186 = vset.pattern.permute.xlu0 0
        %3187 = vperm.xlu0 %3186, %v3184
        %v3188 = vpop.permute.xlu0 %3187
        %v3191 = vsel %vm867, %v3182, 0
        %3193 = vmatprep.subr.mxu0 0.0
        %3194 = vmatpush1.msra.mxu0 %v823
        %3195 = vmatprep.subr.mxu0 0.0
        %3196 = vmatpush1.msra.mxu0 %v824
        %3197 = vmatprep.subr.mxu0 0.0
        %3198 = vmatpush1.msra.mxu0 0.0
        %3199 = vmatprep.subr.mxu0 0.0
        %3200 = vmatpush1.msra.mxu0 0.0
        %3201 = vmatprep.subr.mxu0 0.0
        %3202 = vmatpush1.msra.mxu0 0.0
        %3203 = vmatprep.subr.mxu0 0.0
        %3204 = vmatpush1.msra.mxu0 0.0
        %3205 = vmatprep.subr.mxu0 0.0
        %3206 = vmatpush1.msra.mxu0 0.0
        %3207 = vmatprep.subr.mxu0 0.0
        %3208 = vmatpush1.msra.mxu0 0.0
        %3209 = vmatprep.subr.mxu0 0.0
        %3210 = vmatpush1.msra.mxu0 0.0
        %3211 = vmatprep.subr.mxu0 0.0
        %3212 = vmatpush1.msra.mxu0 0.0
        %3213 = vmatprep.subr.mxu0 0.0
        %3214 = vmatpush1.msra.mxu0 0.0
        %3215 = vmatprep.subr.mxu0 0.0
        %3216 = vmatpush1.msra.mxu0 0.0
        %3217 = vmatprep.subr.mxu0 0.0
        %3218 = vmatpush1.msra.mxu0 0.0
        %3219 = vmatprep.subr.mxu0 0.0
        %3220 = vmatpush1.msra.mxu0 0.0
        %3221 = vmatprep.subr.mxu0 0.0
        %3222 = vmatpush1.msra.mxu0 0.0
        %3223 = vmatprep.subr.mxu0 0.0
        %3224 = vmatpush1.msra.mxu0 0.0
        %3225 = vmatprep.subr.mxu0 0.0
        %3226 = vmatpush1.msra.mxu0 0.0
        %3227 = vmatprep.subr.mxu0 0.0
        %3228 = vmatpush1.msra.mxu0 0.0
        %3229 = vmatprep.subr.mxu0 0.0
        %3230 = vmatpush1.msra.mxu0 0.0
        %3231 = vmatprep.subr.mxu0 0.0
        %3232 = vmatpush1.msra.mxu0 0.0
        %3233 = vmatprep.subr.mxu0 0.0
        %3234 = vmatpush1.msra.mxu0 0.0
        %3235 = vmatprep.subr.mxu0 0.0
        %3236 = vmatpush1.msra.mxu0 0.0
        %3237 = vmatprep.subr.mxu0 0.0
        %3238 = vmatpush1.msra.mxu0 0.0
        %3239 = vmatprep.subr.mxu0 0.0
        %3240 = vmatpush1.msra.mxu0 0.0
        %3241 = vmatprep.subr.mxu0 0.0
        %3242 = vmatpush1.msra.mxu0 0.0
        %3243 = vmatprep.subr.mxu0 0.0
        %3244 = vmatpush1.msra.mxu0 0.0
        %3245 = vmatprep.subr.mxu0 0.0
        %3246 = vmatpush1.msra.mxu0 0.0
        %3247 = vmatprep.subr.mxu0 0.0
        %3248 = vmatpush1.msra.mxu0 0.0
        %3249 = vmatprep.subr.mxu0 0.0
        %3250 = vmatpush1.msra.mxu0 0.0
        %3251 = vmatprep.subr.mxu0 0.0
        %3252 = vmatpush1.msra.mxu0 0.0
        %3253 = vmatprep.subr.mxu0 0.0
        %3254 = vmatpush1.msra.mxu0 0.0
        %3255 = vmatprep.subr.mxu0 0.0
        %3256 = vmatpush1.msra.mxu0 0.0
        %3257 = vmatprep.mubr.f32.mxu0 0.0
        %3258 = vmatmul.mubr.f32.gmra.mrb[0].mxu0 %v3191
        %v3259 = vpop.f32.mrb[0].mxu0
        %v3260 = vadd.f32 %v3188, %v3259
        %v3261 = vpop.f32.mrb[0].mxu0
        %3262 = vdwg.mxu0
        %3263 = vxpose.xlu0.b32.start [1/16] %v3178, 128
        %3264 = vxpose.xlu0.b32.cont [2/16] 0.0, 128
        %3265 = vxpose.xlu0.b32.cont [3/16] 0.0, 128
        %3266 = vxpose.xlu0.b32.cont [4/16] 0.0, 128
        %3267 = vxpose.xlu0.b32.cont [5/16] 0.0, 128
        %3268 = vxpose.xlu0.b32.cont [6/16] 0.0, 128
        %3269 = vxpose.xlu0.b32.cont [7/16] 0.0, 128
        %3270 = vxpose.xlu0.b32.cont [8/16] 0.0, 128
        %3271 = vxpose.xlu0.b32.cont [9/16] 0.0, 128
        %3272 = vxpose.xlu0.b32.cont [10/16] 0.0, 128
        %3273 = vxpose.xlu0.b32.cont [11/16] 0.0, 128
        %3274 = vxpose.xlu0.b32.cont [12/16] 0.0, 128
        %3275 = vxpose.xlu0.b32.cont [13/16] 0.0, 128
        %3276 = vxpose.xlu0.b32.cont [14/16] 0.0, 128
        %3277 = vxpose.xlu0.b32.cont [15/16] 0.0, 128
        %3278 = vxpose.xlu0.b32.end [16/16] 0.0, 128
        %v3279 = vpop.trf.xlu0
        %v3280 = vpop.trf.xlu0
        %v3281 = vpop.trf.xlu0
        %v3282 = vpop.trf.xlu0
        %v3283 = vpop.trf.xlu0
        %v3284 = vpop.trf.xlu0
        %v3285 = vpop.trf.xlu0
        %v3286 = vpop.trf.xlu0
        %v3287 = vpop.trf.xlu0
        %v3288 = vpop.trf.xlu0
        %v3289 = vpop.trf.xlu0
        %v3290 = vpop.trf.xlu0
        %v3291 = vpop.trf.xlu0
        %v3292 = vpop.trf.xlu0
        %v3293 = vpop.trf.xlu0
        %v3294 = vpop.trf.xlu0
        %v3296 = vsel %vm1053, %v3279, 0
        %v3299 = vsel %vm1053, %v3280, 0
        %v3302 = vsel %vm1053, %v3281, 0
        %v3305 = vsel %vm1053, %v3282, 0
        %v3308 = vsel %vm1053, %v3283, 0
        %v3311 = vsel %vm1053, %v3284, 0
        %v3314 = vsel %vm1053, %v3285, 0
        %v3317 = vsel %vm1053, %v3286, 0
        %v3320 = vsel %vm1053, %v3287, 0
        %v3323 = vsel %vm1053, %v3288, 0
        %v3326 = vsel %vm1053, %v3289, 0
        %v3329 = vsel %vm1053, %v3290, 0
        %v3332 = vsel %vm1053, %v3291, 0
        %v3335 = vsel %vm1053, %v3292, 0
        %v3338 = vsel %vm1053, %v3293, 0
        %v3341 = vsel %vm1053, %v3294, 0
        %v3344 = vsel %vm1102, %v3260, 0
        %3346 = vmatprep.subr.mxu0 0.0
        %3347 = vmatpush1.msra.mxu0 %v3344
        %3348 = vmatprep.subr.mxu0 0.0
        %3349 = vmatpush1.msra.mxu0 0.0
        %3350 = vmatprep.subr.mxu0 0.0
        %3351 = vmatpush1.msra.mxu0 0.0
        %3352 = vmatprep.subr.mxu0 0.0
        %3353 = vmatpush1.msra.mxu0 0.0
        %3354 = vmatprep.subr.mxu0 0.0
        %3355 = vmatpush1.msra.mxu0 0.0
        %3356 = vmatprep.subr.mxu0 0.0
        %3357 = vmatpush1.msra.mxu0 0.0
        %3358 = vmatprep.subr.mxu0 0.0
        %3359 = vmatpush1.msra.mxu0 0.0
        %3360 = vmatprep.subr.mxu0 0.0
        %3361 = vmatpush1.msra.mxu0 0.0
        %3362 = vmatprep.subr.mxu0 0.0
        %3363 = vmatpush1.msra.mxu0 0.0
        %3364 = vmatprep.subr.mxu0 0.0
        %3365 = vmatpush1.msra.mxu0 0.0
        %3366 = vmatprep.subr.mxu0 0.0
        %3367 = vmatpush1.msra.mxu0 0.0
        %3368 = vmatprep.subr.mxu0 0.0
        %3369 = vmatpush1.msra.mxu0 0.0
        %3370 = vmatprep.subr.mxu0 0.0
        %3371 = vmatpush1.msra.mxu0 0.0
        %3372 = vmatprep.subr.mxu0 0.0
        %3373 = vmatpush1.msra.mxu0 0.0
        %3374 = vmatprep.subr.mxu0 0.0
        %3375 = vmatpush1.msra.mxu0 0.0
        %3376 = vmatprep.subr.mxu0 0.0
        %3377 = vmatpush1.msra.mxu0 0.0
        %3378 = vmatprep.subr.mxu0 0.0
        %3379 = vmatpush1.msra.mxu0 0.0
        %3380 = vmatprep.subr.mxu0 0.0
        %3381 = vmatpush1.msra.mxu0 0.0
        %3382 = vmatprep.subr.mxu0 0.0
        %3383 = vmatpush1.msra.mxu0 0.0
        %3384 = vmatprep.subr.mxu0 0.0
        %3385 = vmatpush1.msra.mxu0 0.0
        %3386 = vmatprep.subr.mxu0 0.0
        %3387 = vmatpush1.msra.mxu0 0.0
        %3388 = vmatprep.subr.mxu0 0.0
        %3389 = vmatpush1.msra.mxu0 0.0
        %3390 = vmatprep.subr.mxu0 0.0
        %3391 = vmatpush1.msra.mxu0 0.0
        %3392 = vmatprep.subr.mxu0 0.0
        %3393 = vmatpush1.msra.mxu0 0.0
        %3394 = vmatprep.subr.mxu0 0.0
        %3395 = vmatpush1.msra.mxu0 0.0
        %3396 = vmatprep.subr.mxu0 0.0
        %3397 = vmatpush1.msra.mxu0 0.0
        %3398 = vmatprep.subr.mxu0 0.0
        %3399 = vmatpush1.msra.mxu0 0.0
        %3400 = vmatprep.subr.mxu0 0.0
        %3401 = vmatpush1.msra.mxu0 0.0
        %3402 = vmatprep.subr.mxu0 0.0
        %3403 = vmatpush1.msra.mxu0 0.0
        %3404 = vmatprep.subr.mxu0 0.0
        %3405 = vmatpush1.msra.mxu0 0.0
        %3406 = vmatprep.subr.mxu0 0.0
        %3407 = vmatpush1.msra.mxu0 0.0
        %3408 = vmatprep.subr.mxu0 0.0
        %3409 = vmatpush1.msra.mxu0 0.0
        %3410 = vmatprep.mubr.f32.mxu0 0.0
        %3411 = vmatmul.mubr.f32.gmra.mrb[0].mxu0 %v3296
        %v3412 = vpop.f32.mrb[0].mxu0
        %v3413 = vadd.f32 0.0, %v3412
        %v3414 = vpop.f32.mrb[0].mxu0
        %3415 = vmatprep.mubr.f32.mxu0 0.0
        %3416 = vmatmul.mubr.f32.gmra.mrb[0].mxu0 %v3299
        %v3417 = vpop.f32.mrb[0].mxu0
        %v3418 = vadd.f32 0.0, %v3417
        %v3419 = vpop.f32.mrb[0].mxu0
        %3420 = vmatprep.mubr.f32.mxu0 0.0
        %3421 = vmatmul.mubr.f32.gmra.mrb[0].mxu0 %v3302
        %v3422 = vpop.f32.mrb[0].mxu0
        %v3423 = vadd.f32 0.0, %v3422
        %v3424 = vpop.f32.mrb[0].mxu0
        %3425 = vmatprep.mubr.f32.mxu0 0.0
        %3426 = vmatmul.mubr.f32.gmra.mrb[0].mxu0 %v3305
        %v3427 = vpop.f32.mrb[0].mxu0
        %v3428 = vadd.f32 0.0, %v3427
        %v3429 = vpop.f32.mrb[0].mxu0
        %3430 = vmatprep.mubr.f32.mxu0 0.0
        %3431 = vmatmul.mubr.f32.gmra.mrb[0].mxu0 %v3308
        %v3432 = vpop.f32.mrb[0].mxu0
        %v3433 = vadd.f32 0.0, %v3432
        %v3434 = vpop.f32.mrb[0].mxu0
        %3435 = vmatprep.mubr.f32.mxu0 0.0
        %3436 = vmatmul.mubr.f32.gmra.mrb[0].mxu0 %v3311
        %v3437 = vpop.f32.mrb[0].mxu0
        %v3438 = vadd.f32 0.0, %v3437
        %v3439 = vpop.f32.mrb[0].mxu0
        %3440 = vmatprep.mubr.f32.mxu0 0.0
        %3441 = vmatmul.mubr.f32.gmra.mrb[0].mxu0 %v3314
        %v3442 = vpop.f32.mrb[0].mxu0
        %v3443 = vadd.f32 0.0, %v3442
        %v3444 = vpop.f32.mrb[0].mxu0
        %3445 = vmatprep.mubr.f32.mxu0 0.0
        %3446 = vmatmul.mubr.f32.gmra.mrb[0].mxu0 %v3317
        %v3447 = vpop.f32.mrb[0].mxu0
        %v3448 = vadd.f32 0.0, %v3447
        %v3449 = vpop.f32.mrb[0].mxu0
        %3450 = vmatprep.mubr.f32.mxu0 0.0
        %3451 = vmatmul.mubr.f32.gmra.mrb[0].mxu0 %v3320
        %v3452 = vpop.f32.mrb[0].mxu0
        %v3453 = vadd.f32 0.0, %v3452
        %v3454 = vpop.f32.mrb[0].mxu0
        %3455 = vmatprep.mubr.f32.mxu0 0.0
        %3456 = vmatmul.mubr.f32.gmra.mrb[0].mxu0 %v3323
        %v3457 = vpop.f32.mrb[0].mxu0
        %v3458 = vadd.f32 0.0, %v3457
        %v3459 = vpop.f32.mrb[0].mxu0
        %3460 = vmatprep.mubr.f32.mxu0 0.0
        %3461 = vmatmul.mubr.f32.gmra.mrb[0].mxu0 %v3326
        %v3462 = vpop.f32.mrb[0].mxu0
        %v3463 = vadd.f32 0.0, %v3462
        %v3464 = vpop.f32.mrb[0].mxu0
        %3465 = vmatprep.mubr.f32.mxu0 0.0
        %3466 = vmatmul.mubr.f32.gmra.mrb[0].mxu0 %v3329
        %v3467 = vpop.f32.mrb[0].mxu0
        %v3468 = vadd.f32 0.0, %v3467
        %v3469 = vpop.f32.mrb[0].mxu0
        %3470 = vmatprep.mubr.f32.mxu0 0.0
        %3471 = vmatmul.mubr.f32.gmra.mrb[0].mxu0 %v3332
        %v3472 = vpop.f32.mrb[0].mxu0
        %v3473 = vadd.f32 0.0, %v3472
        %v3474 = vpop.f32.mrb[0].mxu0
        %3475 = vmatprep.mubr.f32.mxu0 0.0
        %3476 = vmatmul.mubr.f32.gmra.mrb[0].mxu0 %v3335
        %v3477 = vpop.f32.mrb[0].mxu0
        %v3478 = vadd.f32 0.0, %v3477
        %v3479 = vpop.f32.mrb[0].mxu0
        %3480 = vmatprep.mubr.f32.mxu0 0.0
        %3481 = vmatmul.mubr.f32.gmra.mrb[0].mxu0 %v3338
        %v3482 = vpop.f32.mrb[0].mxu0
        %v3483 = vadd.f32 0.0, %v3482
        %v3484 = vpop.f32.mrb[0].mxu0
        %3485 = vmatprep.mubr.f32.mxu0 0.0
        %3486 = vmatmul.mubr.f32.gmra.mrb[0].mxu0 %v3341
        %v3487 = vpop.f32.mrb[0].mxu0
        %v3488 = vadd.f32 0.0, %v3487
        %v3489 = vpop.f32.mrb[0].mxu0
        %3490 = vdwg.mxu0
        %v3491 = vmul.f32 %v3413, %v844
        %v3492 = vmul.f32 %v3418, %v845
        %v3493 = vmul.f32 %v3423, %v846
        %v3494 = vmul.f32 %v3428, %v847
        %v3495 = vmul.f32 %v3433, %v848
        %v3496 = vmul.f32 %v3438, %v849
        %v3497 = vmul.f32 %v3443, %v850
        %v3498 = vmul.f32 %v3448, %v851
        %v3499 = vmul.f32 %v3453, %v852
        %v3500 = vmul.f32 %v3458, %v853
        %v3501 = vmul.f32 %v3463, %v854
        %v3502 = vmul.f32 %v3468, %v855
        %v3503 = vmul.f32 %v3473, %v856
        %v3504 = vmul.f32 %v3478, %v857
        %v3505 = vmul.f32 %v3483, %v858
        %v3506 = vmul.f32 %v3488, %v859
        %3507 = vmatprep.subr.mxu0 0.0
        %3508 = vmatpush1.msra.mxu0 %v3491
        %3509 = vmatprep.subr.mxu0 0.0
        %3510 = vmatpush1.msra.mxu0 %v3492
        %3511 = vmatprep.subr.mxu0 0.0
        %3512 = vmatpush1.msra.mxu0 %v3493
        %3513 = vmatprep.subr.mxu0 0.0
        %3514 = vmatpush1.msra.mxu0 %v3494
        %3515 = vmatprep.subr.mxu0 0.0
        %3516 = vmatpush1.msra.mxu0 %v3495
        %3517 = vmatprep.subr.mxu0 0.0
        %3518 = vmatpush1.msra.mxu0 %v3496
        %3519 = vmatprep.subr.mxu0 0.0
        %3520 = vmatpush1.msra.mxu0 %v3497
        %3521 = vmatprep.subr.mxu0 0.0
        %3522 = vmatpush1.msra.mxu0 %v3498
        %3523 = vmatprep.subr.mxu0 0.0
        %3524 = vmatpush1.msra.mxu0 %v3499
        %3525 = vmatprep.subr.mxu0 0.0
        %3526 = vmatpush1.msra.mxu0 %v3500
        %3527 = vmatprep.subr.mxu0 0.0
        %3528 = vmatpush1.msra.mxu0 %v3501
        %3529 = vmatprep.subr.mxu0 0.0
        %3530 = vmatpush1.msra.mxu0 %v3502
        %3531 = vmatprep.subr.mxu0 0.0
        %3532 = vmatpush1.msra.mxu0 %v3503
        %3533 = vmatprep.subr.mxu0 0.0
        %3534 = vmatpush1.msra.mxu0 %v3504
        %3535 = vmatprep.subr.mxu0 0.0
        %3536 = vmatpush1.msra.mxu0 %v3505
        %3537 = vmatprep.subr.mxu0 0.0
        %3538 = vmatpush1.msra.mxu0 %v3506
        %3539 = vmatprep.subr.mxu0 0.0
        %3540 = vmatpush1.msra.mxu0 0.0
        %3541 = vmatprep.subr.mxu0 0.0
        %3542 = vmatpush1.msra.mxu0 0.0
        %3543 = vmatprep.subr.mxu0 0.0
        %3544 = vmatpush1.msra.mxu0 0.0
        %3545 = vmatprep.subr.mxu0 0.0
        %3546 = vmatpush1.msra.mxu0 0.0
        %3547 = vmatprep.subr.mxu0 0.0
        %3548 = vmatpush1.msra.mxu0 0.0
        %3549 = vmatprep.subr.mxu0 0.0
        %3550 = vmatpush1.msra.mxu0 0.0
        %3551 = vmatprep.subr.mxu0 0.0
        %3552 = vmatpush1.msra.mxu0 0.0
        %3553 = vmatprep.subr.mxu0 0.0
        %3554 = vmatpush1.msra.mxu0 0.0
        %3555 = vmatprep.subr.mxu0 0.0
        %3556 = vmatpush1.msra.mxu0 0.0
        %3557 = vmatprep.subr.mxu0 0.0
        %3558 = vmatpush1.msra.mxu0 0.0
        %3559 = vmatprep.subr.mxu0 0.0
        %3560 = vmatpush1.msra.mxu0 0.0
        %3561 = vmatprep.subr.mxu0 0.0
        %3562 = vmatpush1.msra.mxu0 0.0
        %3563 = vmatprep.subr.mxu0 0.0
        %3564 = vmatpush1.msra.mxu0 0.0
        %3565 = vmatprep.subr.mxu0 0.0
        %3566 = vmatpush1.msra.mxu0 0.0
        %3567 = vmatprep.subr.mxu0 0.0
        %3568 = vmatpush1.msra.mxu0 0.0
        %3569 = vmatprep.subr.mxu0 0.0
        %3570 = vmatpush1.msra.mxu0 0.0
        %3571 = vmatprep.mubr.f32.mxu0 0.0
        %3572 = vmatmul.mubr.f32.gmra.mrb[0].mxu0 %v842
        %v3573 = vpop.f32.mrb[0].mxu0
        %v3574 = vadd.f32 0.0, %v3573
        %v3575 = vpop.f32.mrb[0].mxu0
        %3576 = vmatprep.mubr.f32.mxu0 0.0
        %3577 = vmatmul.mubr.f32.gmra.mrb[0].mxu0 %v843
        %v3578 = vpop.f32.mrb[0].mxu0
        %v3579 = vadd.f32 0.0, %v3578
        %v3580 = vpop.f32.mrb[0].mxu0
        %3581 = vdwg.mxu0
        %3582 = vmatprep.subr.mxu0 0.0
        %3583 = vmatpush1.msra.mxu0 %v826
        %3584 = vmatprep.subr.mxu0 0.0
        %3585 = vmatpush1.msra.mxu0 %v827
        %3586 = vmatprep.subr.mxu0 0.0
        %3587 = vmatpush1.msra.mxu0 %v828
        %3588 = vmatprep.subr.mxu0 0.0
        %3589 = vmatpush1.msra.mxu0 %v829
        %3590 = vmatprep.subr.mxu0 0.0
        %3591 = vmatpush1.msra.mxu0 %v830
        %3592 = vmatprep.subr.mxu0 0.0
        %3593 = vmatpush1.msra.mxu0 %v831
        %3594 = vmatprep.subr.mxu0 0.0
        %3595 = vmatpush1.msra.mxu0 %v832
        %3596 = vmatprep.subr.mxu0 0.0
        %3597 = vmatpush1.msra.mxu0 %v833
        %3598 = vmatprep.subr.mxu0 0.0
        %3599 = vmatpush1.msra.mxu0 %v834
        %3600 = vmatprep.subr.mxu0 0.0
        %3601 = vmatpush1.msra.mxu0 %v835
        %3602 = vmatprep.subr.mxu0 0.0
        %3603 = vmatpush1.msra.mxu0 %v836
        %3604 = vmatprep.subr.mxu0 0.0
        %3605 = vmatpush1.msra.mxu0 %v837
        %3606 = vmatprep.subr.mxu0 0.0
        %3607 = vmatpush1.msra.mxu0 %v838
        %3608 = vmatprep.subr.mxu0 0.0
        %3609 = vmatpush1.msra.mxu0 %v839
        %3610 = vmatprep.subr.mxu0 0.0
        %3611 = vmatpush1.msra.mxu0 %v840
        %3612 = vmatprep.subr.mxu0 0.0
        %3613 = vmatpush1.msra.mxu0 %v841
        %3614 = vmatprep.subr.mxu0 0.0
        %3615 = vmatpush1.msra.mxu0 0.0
        %3616 = vmatprep.subr.mxu0 0.0
        %3617 = vmatpush1.msra.mxu0 0.0
        %3618 = vmatprep.subr.mxu0 0.0
        %3619 = vmatpush1.msra.mxu0 0.0
        %3620 = vmatprep.subr.mxu0 0.0
        %3621 = vmatpush1.msra.mxu0 0.0
        %3622 = vmatprep.subr.mxu0 0.0
        %3623 = vmatpush1.msra.mxu0 0.0
        %3624 = vmatprep.subr.mxu0 0.0
        %3625 = vmatpush1.msra.mxu0 0.0
        %3626 = vmatprep.subr.mxu0 0.0
        %3627 = vmatpush1.msra.mxu0 0.0
        %3628 = vmatprep.subr.mxu0 0.0
        %3629 = vmatpush1.msra.mxu0 0.0
        %3630 = vmatprep.subr.mxu0 0.0
        %3631 = vmatpush1.msra.mxu0 0.0
        %3632 = vmatprep.subr.mxu0 0.0
        %3633 = vmatpush1.msra.mxu0 0.0
        %3634 = vmatprep.subr.mxu0 0.0
        %3635 = vmatpush1.msra.mxu0 0.0
        %3636 = vmatprep.subr.mxu0 0.0
        %3637 = vmatpush1.msra.mxu0 0.0
        %3638 = vmatprep.subr.mxu0 0.0
        %3639 = vmatpush1.msra.mxu0 0.0
        %3640 = vmatprep.subr.mxu0 0.0
        %3641 = vmatpush1.msra.mxu0 0.0
        %3642 = vmatprep.subr.mxu0 0.0
        %3643 = vmatpush1.msra.mxu0 0.0
        %3644 = vmatprep.subr.mxu0 0.0
        %3645 = vmatpush1.msra.mxu0 0.0
        %3646 = vmatprep.mubr.f32.mxu0 0.0
        %3647 = vmatmul.mubr.f32.gmra.mrb[0].mxu0 %v3574
        %v3648 = vpop.f32.mrb[0].mxu0
        %v3649 = vadd.f32 0.0, %v3648
        %v3650 = vpop.f32.mrb[0].mxu0
        %3651 = vmatprep.mubr.f32.mxu0 0.0
        %3652 = vmatmul.mubr.f32.gmra.mrb[0].mxu0 %v3579
        %v3653 = vpop.f32.mrb[0].mxu0
        %v3654 = vadd.f32 0.0, %v3653
        %v3655 = vpop.f32.mrb[0].mxu0
        %3656 = vdwg.mxu0
        %s3657 = scalar_lea.vmem %s7, 32
        %v3658 = vld [vmem:[%s3657] sm:$0xff]
        %v3659 = vld [vmem:[%s3657 + $0x8] sm:$0xff]
        %v3660 = vmul.f32 %v3649, 0.03125
        %v3661 = vmul.f32 %v3654, 0.03125
        %v3662 = vtanh.pop %v3660
        %v3663 = vtanh.pop %v3661
        %v3664 = vmul.f32 %v1423, %v3662
        %v3665 = vmul.f32 %v1423, %v3663
        %v3666 = vadd.f32 %v3658, %v3664
        %v3667 = vadd.f32 %v3659, %v3665
        %3668 = vmatprep.subr.mxu0 0.0
        %3669 = vmatpush1.msra.mxu0 %v3666
        %3670 = vmatprep.subr.mxu0 0.0
        %3671 = vmatpush1.msra.mxu0 %v3667
        %3672 = vmatprep.subr.mxu0 0.0
        %3673 = vmatpush1.msra.mxu0 0.0
        %3674 = vmatprep.subr.mxu0 0.0
        %3675 = vmatpush1.msra.mxu0 0.0
        %3676 = vmatprep.subr.mxu0 0.0
        %3677 = vmatpush1.msra.mxu0 0.0
        %3678 = vmatprep.subr.mxu0 0.0
        %3679 = vmatpush1.msra.mxu0 0.0
        %3680 = vmatprep.subr.mxu0 0.0
        %3681 = vmatpush1.msra.mxu0 0.0
        %3682 = vmatprep.subr.mxu0 0.0
        %3683 = vmatpush1.msra.mxu0 0.0
        %3684 = vmatprep.subr.mxu0 0.0
        %3685 = vmatpush1.msra.mxu0 0.0
        %3686 = vmatprep.subr.mxu0 0.0
        %3687 = vmatpush1.msra.mxu0 0.0
        %3688 = vmatprep.subr.mxu0 0.0
        %3689 = vmatpush1.msra.mxu0 0.0
        %3690 = vmatprep.subr.mxu0 0.0
        %3691 = vmatpush1.msra.mxu0 0.0
        %3692 = vmatprep.subr.mxu0 0.0
        %3693 = vmatpush1.msra.mxu0 0.0
        %3694 = vmatprep.subr.mxu0 0.0
        %3695 = vmatpush1.msra.mxu0 0.0
        %3696 = vmatprep.subr.mxu0 0.0
        %3697 = vmatpush1.msra.mxu0 0.0
        %3698 = vmatprep.subr.mxu0 0.0
        %3699 = vmatpush1.msra.mxu0 0.0
        %3700 = vmatprep.subr.mxu0 0.0
        %3701 = vmatpush1.msra.mxu0 0.0
        %3702 = vmatprep.subr.mxu0 0.0
        %3703 = vmatpush1.msra.mxu0 0.0
        %3704 = vmatprep.subr.mxu0 0.0
        %3705 = vmatpush1.msra.mxu0 0.0
        %3706 = vmatprep.subr.mxu0 0.0
        %3707 = vmatpush1.msra.mxu0 0.0
        %3708 = vmatprep.subr.mxu0 0.0
        %3709 = vmatpush1.msra.mxu0 0.0
        %3710 = vmatprep.subr.mxu0 0.0
        %3711 = vmatpush1.msra.mxu0 0.0
        %3712 = vmatprep.subr.mxu0 0.0
        %3713 = vmatpush1.msra.mxu0 0.0
        %3714 = vmatprep.subr.mxu0 0.0
        %3715 = vmatpush1.msra.mxu0 0.0
        %3716 = vmatprep.subr.mxu0 0.0
        %3717 = vmatpush1.msra.mxu0 0.0
        %3718 = vmatprep.subr.mxu0 0.0
        %3719 = vmatpush1.msra.mxu0 0.0
        %3720 = vmatprep.subr.mxu0 0.0
        %3721 = vmatpush1.msra.mxu0 0.0
        %3722 = vmatprep.subr.mxu0 0.0
        %3723 = vmatpush1.msra.mxu0 0.0
        %3724 = vmatprep.subr.mxu0 0.0
        %3725 = vmatpush1.msra.mxu0 0.0
        %3726 = vmatprep.subr.mxu0 0.0
        %3727 = vmatpush1.msra.mxu0 0.0
        %3728 = vmatprep.subr.mxu0 0.0
        %3729 = vmatpush1.msra.mxu0 0.0
        %3730 = vmatprep.subr.mxu0 0.0
        %3731 = vmatpush1.msra.mxu0 0.0
        %3732 = vmatprep.mubr.f32.mxu0 0.0
        %3733 = vmatmul.mubr.f32.gmra.mrb[0].mxu0 %v1429
        %v3734 = vpop.f32.mrb[0].mxu0
        %v3735 = vadd.f32 0.0, %v3734
        %v3736 = vpop.f32.mrb[0].mxu0
        %3737 = vmatprep.mubr.f32.mxu0 0.0
        %3738 = vmatmul.mubr.f32.gmra.mrb[0].mxu0 %v1432
        %v3739 = vpop.f32.mrb[0].mxu0
        %v3740 = vadd.f32 0.0, %v3739
        %v3741 = vpop.f32.mrb[0].mxu0
        %3742 = vmatprep.mubr.f32.mxu0 0.0
        %3743 = vmatmul.mubr.f32.gmra.mrb[0].mxu0 %v1435
        %v3744 = vpop.f32.mrb[0].mxu0
        %v3745 = vadd.f32 0.0, %v3744
        %v3746 = vpop.f32.mrb[0].mxu0
        %3747 = vmatprep.mubr.f32.mxu0 0.0
        %3748 = vmatmul.mubr.f32.gmra.mrb[0].mxu0 %v1438
        %v3749 = vpop.f32.mrb[0].mxu0
        %v3750 = vadd.f32 0.0, %v3749
        %v3751 = vpop.f32.mrb[0].mxu0
        %3752 = vmatprep.mubr.f32.mxu0 0.0
        %3753 = vmatmul.mubr.f32.gmra.mrb[0].mxu0 %v1441
        %v3754 = vpop.f32.mrb[0].mxu0
        %v3755 = vadd.f32 0.0, %v3754
        %v3756 = vpop.f32.mrb[0].mxu0
        %3757 = vmatprep.mubr.f32.mxu0 0.0
        %3758 = vmatmul.mubr.f32.gmra.mrb[0].mxu0 %v1444
        %v3759 = vpop.f32.mrb[0].mxu0
        %v3760 = vadd.f32 0.0, %v3759
        %v3761 = vpop.f32.mrb[0].mxu0
        %3762 = vmatprep.mubr.f32.mxu0 0.0
        %3763 = vmatmul.mubr.f32.gmra.mrb[0].mxu0 %v1447
        %v3764 = vpop.f32.mrb[0].mxu0
        %v3765 = vadd.f32 0.0, %v3764
        %v3766 = vpop.f32.mrb[0].mxu0
        %3767 = vmatprep.mubr.f32.mxu0 0.0
        %3768 = vmatmul.mubr.f32.gmra.mrb[0].mxu0 %v1450
        %v3769 = vpop.f32.mrb[0].mxu0
        %v3770 = vadd.f32 0.0, %v3769
        %v3771 = vpop.f32.mrb[0].mxu0
        %3772 = vmatprep.mubr.f32.mxu0 0.0
        %3773 = vmatmul.mubr.f32.gmra.mrb[0].mxu0 %v1453
        %v3774 = vpop.f32.mrb[0].mxu0
        %v3775 = vadd.f32 0.0, %v3774
        %v3776 = vpop.f32.mrb[0].mxu0
        %3777 = vmatprep.mubr.f32.mxu0 0.0
        %3778 = vmatmul.mubr.f32.gmra.mrb[0].mxu0 %v1456
        %v3779 = vpop.f32.mrb[0].mxu0
        %v3780 = vadd.f32 0.0, %v3779
        %v3781 = vpop.f32.mrb[0].mxu0
        %3782 = vmatprep.mubr.f32.mxu0 0.0
        %3783 = vmatmul.mubr.f32.gmra.mrb[0].mxu0 %v1459
        %v3784 = vpop.f32.mrb[0].mxu0
        %v3785 = vadd.f32 0.0, %v3784
        %v3786 = vpop.f32.mrb[0].mxu0
        %3787 = vmatprep.mubr.f32.mxu0 0.0
        %3788 = vmatmul.mubr.f32.gmra.mrb[0].mxu0 %v1462
        %v3789 = vpop.f32.mrb[0].mxu0
        %v3790 = vadd.f32 0.0, %v3789
        %v3791 = vpop.f32.mrb[0].mxu0
        %3792 = vmatprep.mubr.f32.mxu0 0.0
        %3793 = vmatmul.mubr.f32.gmra.mrb[0].mxu0 %v1465
        %v3794 = vpop.f32.mrb[0].mxu0
        %v3795 = vadd.f32 0.0, %v3794
        %v3796 = vpop.f32.mrb[0].mxu0
        %3797 = vmatprep.mubr.f32.mxu0 0.0
        %3798 = vmatmul.mubr.f32.gmra.mrb[0].mxu0 %v1468
        %v3799 = vpop.f32.mrb[0].mxu0
        %v3800 = vadd.f32 0.0, %v3799
        %v3801 = vpop.f32.mrb[0].mxu0
        %3802 = vmatprep.mubr.f32.mxu0 0.0
        %3803 = vmatmul.mubr.f32.gmra.mrb[0].mxu0 %v1471
        %v3804 = vpop.f32.mrb[0].mxu0
        %v3805 = vadd.f32 0.0, %v3804
        %v3806 = vpop.f32.mrb[0].mxu0
        %3807 = vmatprep.mubr.f32.mxu0 0.0
        %3808 = vmatmul.mubr.f32.gmra.mrb[0].mxu0 %v1474
        %v3809 = vpop.f32.mrb[0].mxu0
        %v3810 = vadd.f32 0.0, %v3809
        %v3811 = vpop.f32.mrb[0].mxu0
        %3812 = vdwg.mxu0
        %v3814 = vsel %vm867, %v3735, 0
        %v3817 = vsel %vm867, %v3740, 0
        %v3820 = vsel %vm867, %v3745, 0
        %v3823 = vsel %vm867, %v3750, 0
        %v3826 = vsel %vm867, %v3755, 0
        %v3829 = vsel %vm867, %v3760, 0
        %v3832 = vsel %vm867, %v3765, 0
        %v3835 = vsel %vm867, %v3770, 0
        %v3838 = vsel %vm867, %v3775, 0
        %v3841 = vsel %vm867, %v3780, 0
        %v3844 = vsel %vm867, %v3785, 0
        %v3847 = vsel %vm867, %v3790, 0
        %v3850 = vsel %vm867, %v3795, 0
        %v3853 = vsel %vm867, %v3800, 0
        %v3856 = vsel %vm867, %v3805, 0
        %v3859 = vsel %vm867, %v3810, 0
        %3861 = vmatprep.subr.mxu0 0.0
        %3862 = vmatpush1.msra.mxu0 %v842
        %3863 = vmatprep.subr.mxu0 0.0
        %3864 = vmatpush1.msra.mxu0 %v843
        %3865 = vmatprep.subr.mxu0 0.0
        %3866 = vmatpush1.msra.mxu0 0.0
        %3867 = vmatprep.subr.mxu0 0.0
        %3868 = vmatpush1.msra.mxu0 0.0
        %3869 = vmatprep.subr.mxu0 0.0
        %3870 = vmatpush1.msra.mxu0 0.0
        %3871 = vmatprep.subr.mxu0 0.0
        %3872 = vmatpush1.msra.mxu0 0.0
        %3873 = vmatprep.subr.mxu0 0.0
        %3874 = vmatpush1.msra.mxu0 0.0
        %3875 = vmatprep.subr.mxu0 0.0
        %3876 = vmatpush1.msra.mxu0 0.0
        %3877 = vmatprep.subr.mxu0 0.0
        %3878 = vmatpush1.msra.mxu0 0.0
        %3879 = vmatprep.subr.mxu0 0.0
        %3880 = vmatpush1.msra.mxu0 0.0
        %3881 = vmatprep.subr.mxu0 0.0
        %3882 = vmatpush1.msra.mxu0 0.0
        %3883 = vmatprep.subr.mxu0 0.0
        %3884 = vmatpush1.msra.mxu0 0.0
        %3885 = vmatprep.subr.mxu0 0.0
        %3886 = vmatpush1.msra.mxu0 0.0
        %3887 = vmatprep.subr.mxu0 0.0
        %3888 = vmatpush1.msra.mxu0 0.0
        %3889 = vmatprep.subr.mxu0 0.0
        %3890 = vmatpush1.msra.mxu0 0.0
        %3891 = vmatprep.subr.mxu0 0.0
        %3892 = vmatpush1.msra.mxu0 0.0
        %3893 = vmatprep.subr.mxu0 0.0
        %3894 = vmatpush1.msra.mxu0 0.0
        %3895 = vmatprep.subr.mxu0 0.0
        %3896 = vmatpush1.msra.mxu0 0.0
        %3897 = vmatprep.subr.mxu0 0.0
        %3898 = vmatpush1.msra.mxu0 0.0
        %3899 = vmatprep.subr.mxu0 0.0
        %3900 = vmatpush1.msra.mxu0 0.0
        %3901 = vmatprep.subr.mxu0 0.0
        %3902 = vmatpush1.msra.mxu0 0.0
        %3903 = vmatprep.subr.mxu0 0.0
        %3904 = vmatpush1.msra.mxu0 0.0
        %3905 = vmatprep.subr.mxu0 0.0
        %3906 = vmatpush1.msra.mxu0 0.0
        %3907 = vmatprep.subr.mxu0 0.0
        %3908 = vmatpush1.msra.mxu0 0.0
        %3909 = vmatprep.subr.mxu0 0.0
        %3910 = vmatpush1.msra.mxu0 0.0
        %3911 = vmatprep.subr.mxu0 0.0
        %3912 = vmatpush1.msra.mxu0 0.0
        %3913 = vmatprep.subr.mxu0 0.0
        %3914 = vmatpush1.msra.mxu0 0.0
        %3915 = vmatprep.subr.mxu0 0.0
        %3916 = vmatpush1.msra.mxu0 0.0
        %3917 = vmatprep.subr.mxu0 0.0
        %3918 = vmatpush1.msra.mxu0 0.0
        %3919 = vmatprep.subr.mxu0 0.0
        %3920 = vmatpush1.msra.mxu0 0.0
        %3921 = vmatprep.subr.mxu0 0.0
        %3922 = vmatpush1.msra.mxu0 0.0
        %3923 = vmatprep.subr.mxu0 0.0
        %3924 = vmatpush1.msra.mxu0 0.0
        %3925 = vmatprep.mubr.f32.mxu0 0.0
        %3926 = vmatmul.mubr.f32.gmra.mrb[0].mxu0 %v3814
        %v3927 = vpop.f32.mrb[0].mxu0
        %v3928 = vadd.f32 0.0, %v3927
        %v3929 = vpop.f32.mrb[0].mxu0
        %3930 = vmatprep.mubr.f32.mxu0 0.0
        %3931 = vmatmul.mubr.f32.gmra.mrb[0].mxu0 %v3817
        %v3932 = vpop.f32.mrb[0].mxu0
        %v3933 = vadd.f32 0.0, %v3932
        %v3934 = vpop.f32.mrb[0].mxu0
        %3935 = vmatprep.mubr.f32.mxu0 0.0
        %3936 = vmatmul.mubr.f32.gmra.mrb[0].mxu0 %v3820
        %v3937 = vpop.f32.mrb[0].mxu0
        %v3938 = vadd.f32 0.0, %v3937
        %v3939 = vpop.f32.mrb[0].mxu0
        %3940 = vmatprep.mubr.f32.mxu0 0.0
        %3941 = vmatmul.mubr.f32.gmra.mrb[0].mxu0 %v3823
        %v3942 = vpop.f32.mrb[0].mxu0
        %v3943 = vadd.f32 0.0, %v3942
        %v3944 = vpop.f32.mrb[0].mxu0
        %3945 = vmatprep.mubr.f32.mxu0 0.0
        %3946 = vmatmul.mubr.f32.gmra.mrb[0].mxu0 %v3826
        %v3947 = vpop.f32.mrb[0].mxu0
        %v3948 = vadd.f32 0.0, %v3947
        %v3949 = vpop.f32.mrb[0].mxu0
        %3950 = vmatprep.mubr.f32.mxu0 0.0
        %3951 = vmatmul.mubr.f32.gmra.mrb[0].mxu0 %v3829
        %v3952 = vpop.f32.mrb[0].mxu0
        %v3953 = vadd.f32 0.0, %v3952
        %v3954 = vpop.f32.mrb[0].mxu0
        %3955 = vmatprep.mubr.f32.mxu0 0.0
        %3956 = vmatmul.mubr.f32.gmra.mrb[0].mxu0 %v3832
        %v3957 = vpop.f32.mrb[0].mxu0
        %v3958 = vadd.f32 0.0, %v3957
        %v3959 = vpop.f32.mrb[0].mxu0
        %3960 = vmatprep.mubr.f32.mxu0 0.0
        %3961 = vmatmul.mubr.f32.gmra.mrb[0].mxu0 %v3835
        %v3962 = vpop.f32.mrb[0].mxu0
        %v3963 = vadd.f32 0.0, %v3962
        %v3964 = vpop.f32.mrb[0].mxu0
        %3965 = vmatprep.mubr.f32.mxu0 0.0
        %3966 = vmatmul.mubr.f32.gmra.mrb[0].mxu0 %v3838
        %v3967 = vpop.f32.mrb[0].mxu0
        %v3968 = vadd.f32 0.0, %v3967
        %v3969 = vpop.f32.mrb[0].mxu0
        %3970 = vmatprep.mubr.f32.mxu0 0.0
        %3971 = vmatmul.mubr.f32.gmra.mrb[0].mxu0 %v3841
        %v3972 = vpop.f32.mrb[0].mxu0
        %v3973 = vadd.f32 0.0, %v3972
        %v3974 = vpop.f32.mrb[0].mxu0
        %3975 = vmatprep.mubr.f32.mxu0 0.0
        %3976 = vmatmul.mubr.f32.gmra.mrb[0].mxu0 %v3844
        %v3977 = vpop.f32.mrb[0].mxu0
        %v3978 = vadd.f32 0.0, %v3977
        %v3979 = vpop.f32.mrb[0].mxu0
        %3980 = vmatprep.mubr.f32.mxu0 0.0
        %3981 = vmatmul.mubr.f32.gmra.mrb[0].mxu0 %v3847
        %v3982 = vpop.f32.mrb[0].mxu0
        %v3983 = vadd.f32 0.0, %v3982
        %v3984 = vpop.f32.mrb[0].mxu0
        %3985 = vmatprep.mubr.f32.mxu0 0.0
        %3986 = vmatmul.mubr.f32.gmra.mrb[0].mxu0 %v3850
        %v3987 = vpop.f32.mrb[0].mxu0
        %v3988 = vadd.f32 0.0, %v3987
        %v3989 = vpop.f32.mrb[0].mxu0
        %3990 = vmatprep.mubr.f32.mxu0 0.0
        %3991 = vmatmul.mubr.f32.gmra.mrb[0].mxu0 %v3853
        %v3992 = vpop.f32.mrb[0].mxu0
        %v3993 = vadd.f32 0.0, %v3992
        %v3994 = vpop.f32.mrb[0].mxu0
        %3995 = vmatprep.mubr.f32.mxu0 0.0
        %3996 = vmatmul.mubr.f32.gmra.mrb[0].mxu0 %v3856
        %v3997 = vpop.f32.mrb[0].mxu0
        %v3998 = vadd.f32 0.0, %v3997
        %v3999 = vpop.f32.mrb[0].mxu0
        %4000 = vmatprep.mubr.f32.mxu0 0.0
        %4001 = vmatmul.mubr.f32.gmra.mrb[0].mxu0 %v3859
        %v4002 = vpop.f32.mrb[0].mxu0
        %v4003 = vadd.f32 0.0, %v4002
        %v4004 = vpop.f32.mrb[0].mxu0
        %4005 = vdwg.mxu0
        %v4006 = vmul.f32 %v3928, %v844
        %v4007 = vmul.f32 %v3933, %v845
        %v4008 = vmul.f32 %v3938, %v846
        %v4009 = vmul.f32 %v3943, %v847
        %v4010 = vmul.f32 %v3948, %v848
        %v4011 = vmul.f32 %v3953, %v849
        %v4012 = vmul.f32 %v3958, %v850
        %v4013 = vmul.f32 %v3963, %v851
        %v4014 = vmul.f32 %v3968, %v852
        %v4015 = vmul.f32 %v3973, %v853
        %v4016 = vmul.f32 %v3978, %v854
        %v4017 = vmul.f32 %v3983, %v855
        %v4018 = vmul.f32 %v3988, %v856
        %v4019 = vmul.f32 %v3993, %v857
        %v4020 = vmul.f32 %v3998, %v858
        %v4021 = vmul.f32 %v4003, %v859
        %4022 = vmatprep.subr.mxu0 0.0
        %4023 = vmatpush1.msra.mxu0 %v4006
        %4024 = vmatprep.subr.mxu0 0.0
        %4025 = vmatpush1.msra.mxu0 %v4007
        %4026 = vmatprep.subr.mxu0 0.0
        %4027 = vmatpush1.msra.mxu0 %v4008
        %4028 = vmatprep.subr.mxu0 0.0
        %4029 = vmatpush1.msra.mxu0 %v4009
        %4030 = vmatprep.subr.mxu0 0.0
        %4031 = vmatpush1.msra.mxu0 %v4010
        %4032 = vmatprep.subr.mxu0 0.0
        %4033 = vmatpush1.msra.mxu0 %v4011
        %4034 = vmatprep.subr.mxu0 0.0
        %4035 = vmatpush1.msra.mxu0 %v4012
        %4036 = vmatprep.subr.mxu0 0.0
        %4037 = vmatpush1.msra.mxu0 %v4013
        %4038 = vmatprep.subr.mxu0 0.0
        %4039 = vmatpush1.msra.mxu0 %v4014
        %4040 = vmatprep.subr.mxu0 0.0
        %4041 = vmatpush1.msra.mxu0 %v4015
        %4042 = vmatprep.subr.mxu0 0.0
        %4043 = vmatpush1.msra.mxu0 %v4016
        %4044 = vmatprep.subr.mxu0 0.0
        %4045 = vmatpush1.msra.mxu0 %v4017
        %4046 = vmatprep.subr.mxu0 0.0
        %4047 = vmatpush1.msra.mxu0 %v4018
        %4048 = vmatprep.subr.mxu0 0.0
        %4049 = vmatpush1.msra.mxu0 %v4019
        %4050 = vmatprep.subr.mxu0 0.0
        %4051 = vmatpush1.msra.mxu0 %v4020
        %4052 = vmatprep.subr.mxu0 0.0
        %4053 = vmatpush1.msra.mxu0 %v4021
        %4054 = vmatprep.subr.mxu0 0.0
        %4055 = vmatpush1.msra.mxu0 0.0
        %4056 = vmatprep.subr.mxu0 0.0
        %4057 = vmatpush1.msra.mxu0 0.0
        %4058 = vmatprep.subr.mxu0 0.0
        %4059 = vmatpush1.msra.mxu0 0.0
        %4060 = vmatprep.subr.mxu0 0.0
        %4061 = vmatpush1.msra.mxu0 0.0
        %4062 = vmatprep.subr.mxu0 0.0
        %4063 = vmatpush1.msra.mxu0 0.0
        %4064 = vmatprep.subr.mxu0 0.0
        %4065 = vmatpush1.msra.mxu0 0.0
        %4066 = vmatprep.subr.mxu0 0.0
        %4067 = vmatpush1.msra.mxu0 0.0
        %4068 = vmatprep.subr.mxu0 0.0
        %4069 = vmatpush1.msra.mxu0 0.0
        %4070 = vmatprep.subr.mxu0 0.0
        %4071 = vmatpush1.msra.mxu0 0.0
        %4072 = vmatprep.subr.mxu0 0.0
        %4073 = vmatpush1.msra.mxu0 0.0
        %4074 = vmatprep.subr.mxu0 0.0
        %4075 = vmatpush1.msra.mxu0 0.0
        %4076 = vmatprep.subr.mxu0 0.0
        %4077 = vmatpush1.msra.mxu0 0.0
        %4078 = vmatprep.subr.mxu0 0.0
        %4079 = vmatpush1.msra.mxu0 0.0
        %4080 = vmatprep.subr.mxu0 0.0
        %4081 = vmatpush1.msra.mxu0 0.0
        %4082 = vmatprep.subr.mxu0 0.0
        %4083 = vmatpush1.msra.mxu0 0.0
        %4084 = vmatprep.subr.mxu0 0.0
        %4085 = vmatpush1.msra.mxu0 0.0
        %4086 = vmatprep.mubr.f32.mxu0 0.0
        %4087 = vmatmul.mubr.f32.gmra.mrb[0].mxu0 %v823
        %v4088 = vpop.f32.mrb[0].mxu0
        %v4089 = vadd.f32 0.0, %v4088
        %v4090 = vpop.f32.mrb[0].mxu0
        %4091 = vmatprep.mubr.f32.mxu0 0.0
        %4092 = vmatmul.mubr.f32.gmra.mrb[0].mxu0 %v824
        %v4093 = vpop.f32.mrb[0].mxu0
        %v4094 = vadd.f32 0.0, %v4093
        %v4095 = vpop.f32.mrb[0].mxu0
        %4096 = vdwg.mxu0
        %s4097 = scalar_lea.vmem %s5, 32
        %v4098 = vld [vmem:[%s4097] sm:$0xff]
        %v4099 = vld [vmem:[%s4097 + $0x8] sm:$0xff]
        %v4101 = vsel %vm867, %v4098, 0
        %v4104 = vsel %vm867, %v4099, 0
        %4106 = vmatprep.subr.mxu0 0.0
        %4107 = vmatpush1.msra.mxu0 %v4089
        %4108 = vmatprep.subr.mxu0 0.0
        %4109 = vmatpush1.msra.mxu0 %v4094
        %4110 = vmatprep.subr.mxu0 0.0
        %4111 = vmatpush1.msra.mxu0 0.0
        %4112 = vmatprep.subr.mxu0 0.0
        %4113 = vmatpush1.msra.mxu0 0.0
        %4114 = vmatprep.subr.mxu0 0.0
        %4115 = vmatpush1.msra.mxu0 0.0
        %4116 = vmatprep.subr.mxu0 0.0
        %4117 = vmatpush1.msra.mxu0 0.0
        %4118 = vmatprep.subr.mxu0 0.0
        %4119 = vmatpush1.msra.mxu0 0.0
        %4120 = vmatprep.subr.mxu0 0.0
        %4121 = vmatpush1.msra.mxu0 0.0
        %4122 = vmatprep.subr.mxu0 0.0
        %4123 = vmatpush1.msra.mxu0 0.0
        %4124 = vmatprep.subr.mxu0 0.0
        %4125 = vmatpush1.msra.mxu0 0.0
        %4126 = vmatprep.subr.mxu0 0.0
        %4127 = vmatpush1.msra.mxu0 0.0
        %4128 = vmatprep.subr.mxu0 0.0
        %4129 = vmatpush1.msra.mxu0 0.0
        %4130 = vmatprep.subr.mxu0 0.0
        %4131 = vmatpush1.msra.mxu0 0.0
        %4132 = vmatprep.subr.mxu0 0.0
        %4133 = vmatpush1.msra.mxu0 0.0
        %4134 = vmatprep.subr.mxu0 0.0
        %4135 = vmatpush1.msra.mxu0 0.0
        %4136 = vmatprep.subr.mxu0 0.0
        %4137 = vmatpush1.msra.mxu0 0.0
        %4138 = vmatprep.subr.mxu0 0.0
        %4139 = vmatpush1.msra.mxu0 0.0
        %4140 = vmatprep.subr.mxu0 0.0
        %4141 = vmatpush1.msra.mxu0 0.0
        %4142 = vmatprep.subr.mxu0 0.0
        %4143 = vmatpush1.msra.mxu0 0.0
        %4144 = vmatprep.subr.mxu0 0.0
        %4145 = vmatpush1.msra.mxu0 0.0
        %4146 = vmatprep.subr.mxu0 0.0
        %4147 = vmatpush1.msra.mxu0 0.0
        %4148 = vmatprep.subr.mxu0 0.0
        %4149 = vmatpush1.msra.mxu0 0.0
        %4150 = vmatprep.subr.mxu0 0.0
        %4151 = vmatpush1.msra.mxu0 0.0
        %4152 = vmatprep.subr.mxu0 0.0
        %4153 = vmatpush1.msra.mxu0 0.0
        %4154 = vmatprep.subr.mxu0 0.0
        %4155 = vmatpush1.msra.mxu0 0.0
        %4156 = vmatprep.subr.mxu0 0.0
        %4157 = vmatpush1.msra.mxu0 0.0
        %4158 = vmatprep.subr.mxu0 0.0
        %4159 = vmatpush1.msra.mxu0 0.0
        %4160 = vmatprep.subr.mxu0 0.0
        %4161 = vmatpush1.msra.mxu0 0.0
        %4162 = vmatprep.subr.mxu0 0.0
        %4163 = vmatpush1.msra.mxu0 0.0
        %4164 = vmatprep.subr.mxu0 0.0
        %4165 = vmatpush1.msra.mxu0 0.0
        %4166 = vmatprep.subr.mxu0 0.0
        %4167 = vmatpush1.msra.mxu0 0.0
        %4168 = vmatprep.subr.mxu0 0.0
        %4169 = vmatpush1.msra.mxu0 0.0
        %4170 = vmatprep.mubr.f32.mxu0 0.0
        %4171 = vmatmul.mubr.f32.gmra.mrb[0].mxu0 %v4101
        %v4172 = vpop.f32.mrb[0].mxu0
        %v4173 = vadd.f32 0.0, %v4172
        %v4174 = vpop.f32.mrb[0].mxu0
        %4175 = vmatprep.mubr.f32.mxu0 0.0
        %4176 = vmatmul.mubr.f32.gmra.mrb[0].mxu0 %v4104
        %v4177 = vpop.f32.mrb[0].mxu0
        %v4178 = vadd.f32 0.0, %v4177
        %v4179 = vpop.f32.mrb[0].mxu0
        %4180 = vdwg.mxu0
        %v4181 = vadd.f32 %v3097, %v4173
        %v4182 = vadd.f32 %v3098, %v4178
        %s4183 = scalar_lea.vmem %s6, 32
        %v4184 = vld [vmem:[%s4183] sm:$0xff]
        %v4185 = vld [vmem:[%s4183 + $0x8] sm:$0xff]
        %4187 = vset.pattern.permute.xlu0 0
        %4188 = vperm.xlu0 %4187, %v4184
        %v4189 = vpop.permute.xlu0 %4188
        %4192 = vset.pattern.permute.xlu0 0
        %4193 = vperm.xlu0 %4192, %v4185
        %v4194 = vpop.permute.xlu0 %4193
        %v4196 = vadd.f32 %v4181, %v4189
        %v4197 = vadd.f32 %v4182, %v4194
        %v4198 = vld [vmem:[%s8] sm:$0xff]
        %v4199 = vld [vmem:[%s8 + $0x8] sm:$0xff]
        %4201 = vset.pattern.permute.xlu0 0
        %4202 = vperm.xlu0 %4201, %v4198
        %v4203 = vpop.permute.xlu0 %4202
        %4206 = vset.pattern.permute.xlu0 0
        %4207 = vperm.xlu0 %4206, %v4199
        %v4208 = vpop.permute.xlu0 %4207
        %v4210 = vmul.f32 %v4196, %v4203
        %v4211 = vmul.f32 %v4197, %v4208
        %v4212 = vld [vmem:[%s9] sm:$0xff]
        %v4213 = vld [vmem:[%s9 + $0x8] sm:$0xff]
        %4215 = vset.pattern.permute.xlu0 0
        %4216 = vperm.xlu0 %4215, %v4212
        %v4217 = vpop.permute.xlu0 %4216
        %4220 = vset.pattern.permute.xlu0 0
        %4221 = vperm.xlu0 %4220, %v4213
        %v4222 = vpop.permute.xlu0 %4221
        %v4224 = vadd.f32 %v4210, %v4217
        %v4225 = vadd.f32 %v4211, %v4222
        %v4226 = vadd.f32 %v4224, %v823
        %v4227 = vadd.f32 %v4225, %v824
        %v4228 = vmax.f32 %v4226, 0.0
        %v4229 = vmax.f32 %v4227, 0.0
        %4230 = vmatprep.subr.mxu0 0.0
        %4231 = vmatpush1.msra.mxu0 %v826
        %4232 = vmatprep.subr.mxu0 0.0
        %4233 = vmatpush1.msra.mxu0 %v827
        %4234 = vmatprep.subr.mxu0 0.0
        %4235 = vmatpush1.msra.mxu0 %v828
        %4236 = vmatprep.subr.mxu0 0.0
        %4237 = vmatpush1.msra.mxu0 %v829
        %4238 = vmatprep.subr.mxu0 0.0
        %4239 = vmatpush1.msra.mxu0 %v830
        %4240 = vmatprep.subr.mxu0 0.0
        %4241 = vmatpush1.msra.mxu0 %v831
        %4242 = vmatprep.subr.mxu0 0.0
        %4243 = vmatpush1.msra.mxu0 %v832
        %4244 = vmatprep.subr.mxu0 0.0
        %4245 = vmatpush1.msra.mxu0 %v833
        %4246 = vmatprep.subr.mxu0 0.0
        %4247 = vmatpush1.msra.mxu0 %v834
        %4248 = vmatprep.subr.mxu0 0.0
        %4249 = vmatpush1.msra.mxu0 %v835
        %4250 = vmatprep.subr.mxu0 0.0
        %4251 = vmatpush1.msra.mxu0 %v836
        %4252 = vmatprep.subr.mxu0 0.0
        %4253 = vmatpush1.msra.mxu0 %v837
        %4254 = vmatprep.subr.mxu0 0.0
        %4255 = vmatpush1.msra.mxu0 %v838
        %4256 = vmatprep.subr.mxu0 0.0
        %4257 = vmatpush1.msra.mxu0 %v839
        %4258 = vmatprep.subr.mxu0 0.0
        %4259 = vmatpush1.msra.mxu0 %v840
        %4260 = vmatprep.subr.mxu0 0.0
        %4261 = vmatpush1.msra.mxu0 %v841
        %4262 = vmatprep.subr.mxu0 0.0
        %4263 = vmatpush1.msra.mxu0 0.0
        %4264 = vmatprep.subr.mxu0 0.0
        %4265 = vmatpush1.msra.mxu0 0.0
        %4266 = vmatprep.subr.mxu0 0.0
        %4267 = vmatpush1.msra.mxu0 0.0
        %4268 = vmatprep.subr.mxu0 0.0
        %4269 = vmatpush1.msra.mxu0 0.0
        %4270 = vmatprep.subr.mxu0 0.0
        %4271 = vmatpush1.msra.mxu0 0.0
        %4272 = vmatprep.subr.mxu0 0.0
        %4273 = vmatpush1.msra.mxu0 0.0
        %4274 = vmatprep.subr.mxu0 0.0
        %4275 = vmatpush1.msra.mxu0 0.0
        %4276 = vmatprep.subr.mxu0 0.0
        %4277 = vmatpush1.msra.mxu0 0.0
        %4278 = vmatprep.subr.mxu0 0.0
        %4279 = vmatpush1.msra.mxu0 0.0
        %4280 = vmatprep.subr.mxu0 0.0
        %4281 = vmatpush1.msra.mxu0 0.0
        %4282 = vmatprep.subr.mxu0 0.0
        %4283 = vmatpush1.msra.mxu0 0.0
        %4284 = vmatprep.subr.mxu0 0.0
        %4285 = vmatpush1.msra.mxu0 0.0
        %4286 = vmatprep.subr.mxu0 0.0
        %4287 = vmatpush1.msra.mxu0 0.0
        %4288 = vmatprep.subr.mxu0 0.0
        %4289 = vmatpush1.msra.mxu0 0.0
        %4290 = vmatprep.subr.mxu0 0.0
        %4291 = vmatpush1.msra.mxu0 0.0
        %4292 = vmatprep.subr.mxu0 0.0
        %4293 = vmatpush1.msra.mxu0 0.0
        %4294 = vmatprep.mubr.f32.mxu0 0.0
        %4295 = vmatmul.mubr.f32.gmra.mrb[0].mxu0 %v4228
        %v4296 = vpop.f32.mrb[0].mxu0
        %v4297 = vadd.f32 0.0, %v4296
        %v4298 = vpop.f32.mrb[0].mxu0
        %4299 = vmatprep.mubr.f32.mxu0 0.0
        %4300 = vmatmul.mubr.f32.gmra.mrb[0].mxu0 %v4229
        %v4301 = vpop.f32.mrb[0].mxu0
        %v4302 = vadd.f32 0.0, %v4301
        %v4303 = vpop.f32.mrb[0].mxu0
        %4304 = vdwg.mxu0
        %v4305 = vmul.f32 %v4297, 0.125
        %v4306 = vmul.f32 %v4302, 0.125
        %v4307 = vld [vmem:[%s15] sm:$0xff]
        %v4308 = vld [vmem:[%s15 + $0x8] sm:$0xff]
        %4309 = vxpose.xlu0.b32.start [1/16] %v4307, 128
        %4310 = vxpose.xlu0.b32.cont [2/16] %v4308, 128
        %4311 = vxpose.xlu0.b32.cont [3/16] 0.0, 128
        %4312 = vxpose.xlu0.b32.cont [4/16] 0.0, 128
        %4313 = vxpose.xlu0.b32.cont [5/16] 0.0, 128
        %4314 = vxpose.xlu0.b32.cont [6/16] 0.0, 128
        %4315 = vxpose.xlu0.b32.cont [7/16] 0.0, 128
        %4316 = vxpose.xlu0.b32.cont [8/16] 0.0, 128
        %4317 = vxpose.xlu0.b32.cont [9/16] 0.0, 128
        %4318 = vxpose.xlu0.b32.cont [10/16] 0.0, 128
        %4319 = vxpose.xlu0.b32.cont [11/16] 0.0, 128
        %4320 = vxpose.xlu0.b32.cont [12/16] 0.0, 128
        %4321 = vxpose.xlu0.b32.cont [13/16] 0.0, 128
        %4322 = vxpose.xlu0.b32.cont [14/16] 0.0, 128
        %4323 = vxpose.xlu0.b32.cont [15/16] 0.0, 128
        %4324 = vxpose.xlu0.b32.end [16/16] 0.0, 128
        %v4325 = vpop.trf.xlu0
        %v4326 = vpop.trf.xlu0
        %v4327 = vpop.trf.xlu0
        %v4328 = vpop.trf.xlu0
        %v4329 = vpop.trf.xlu0
        %v4330 = vpop.trf.xlu0
        %v4331 = vpop.trf.xlu0
        %v4332 = vpop.trf.xlu0
        %v4333 = vpop.trf.xlu0
        %v4334 = vpop.trf.xlu0
        %v4335 = vpop.trf.xlu0
        %v4336 = vpop.trf.xlu0
        %v4337 = vpop.trf.xlu0
        %v4338 = vpop.trf.xlu0
        %v4339 = vpop.trf.xlu0
        %v4340 = vpop.trf.xlu0
        %v4342 = vsel %vm867, %v4325, 0
        %v4345 = vsel %vm867, %v4326, 0
        %4347 = vmatprep.subr.mxu0 0.0
        %4348 = vmatpush1.msra.mxu0 %v4305
        %4349 = vmatprep.subr.mxu0 0.0
        %4350 = vmatpush1.msra.mxu0 %v4306
        %4351 = vmatprep.subr.mxu0 0.0
        %4352 = vmatpush1.msra.mxu0 0.0
        %4353 = vmatprep.subr.mxu0 0.0
        %4354 = vmatpush1.msra.mxu0 0.0
        %4355 = vmatprep.subr.mxu0 0.0
        %4356 = vmatpush1.msra.mxu0 0.0
        %4357 = vmatprep.subr.mxu0 0.0
        %4358 = vmatpush1.msra.mxu0 0.0
        %4359 = vmatprep.subr.mxu0 0.0
        %4360 = vmatpush1.msra.mxu0 0.0
        %4361 = vmatprep.subr.mxu0 0.0
        %4362 = vmatpush1.msra.mxu0 0.0
        %4363 = vmatprep.subr.mxu0 0.0
        %4364 = vmatpush1.msra.mxu0 0.0
        %4365 = vmatprep.subr.mxu0 0.0
        %4366 = vmatpush1.msra.mxu0 0.0
        %4367 = vmatprep.subr.mxu0 0.0
        %4368 = vmatpush1.msra.mxu0 0.0
        %4369 = vmatprep.subr.mxu0 0.0
        %4370 = vmatpush1.msra.mxu0 0.0
        %4371 = vmatprep.subr.mxu0 0.0
        %4372 = vmatpush1.msra.mxu0 0.0
        %4373 = vmatprep.subr.mxu0 0.0
        %4374 = vmatpush1.msra.mxu0 0.0
        %4375 = vmatprep.subr.mxu0 0.0
        %4376 = vmatpush1.msra.mxu0 0.0
        %4377 = vmatprep.subr.mxu0 0.0
        %4378 = vmatpush1.msra.mxu0 0.0
        %4379 = vmatprep.subr.mxu0 0.0
        %4380 = vmatpush1.msra.mxu0 0.0
        %4381 = vmatprep.subr.mxu0 0.0
        %4382 = vmatpush1.msra.mxu0 0.0
        %4383 = vmatprep.subr.mxu0 0.0
        %4384 = vmatpush1.msra.mxu0 0.0
        %4385 = vmatprep.subr.mxu0 0.0
        %4386 = vmatpush1.msra.mxu0 0.0
        %4387 = vmatprep.subr.mxu0 0.0
        %4388 = vmatpush1.msra.mxu0 0.0
        %4389 = vmatprep.subr.mxu0 0.0
        %4390 = vmatpush1.msra.mxu0 0.0
        %4391 = vmatprep.subr.mxu0 0.0
        %4392 = vmatpush1.msra.mxu0 0.0
        %4393 = vmatprep.subr.mxu0 0.0
        %4394 = vmatpush1.msra.mxu0 0.0
        %4395 = vmatprep.subr.mxu0 0.0
        %4396 = vmatpush1.msra.mxu0 0.0
        %4397 = vmatprep.subr.mxu0 0.0
        %4398 = vmatpush1.msra.mxu0 0.0
        %4399 = vmatprep.subr.mxu0 0.0
        %4400 = vmatpush1.msra.mxu0 0.0
        %4401 = vmatprep.subr.mxu0 0.0
        %4402 = vmatpush1.msra.mxu0 0.0
        %4403 = vmatprep.subr.mxu0 0.0
        %4404 = vmatpush1.msra.mxu0 0.0
        %4405 = vmatprep.subr.mxu0 0.0
        %4406 = vmatpush1.msra.mxu0 0.0
        %4407 = vmatprep.subr.mxu0 0.0
        %4408 = vmatpush1.msra.mxu0 0.0
        %4409 = vmatprep.subr.mxu0 0.0
        %4410 = vmatpush1.msra.mxu0 0.0
        %4411 = vmatprep.mubr.f32.mxu0 0.0
        %4412 = vmatmul.mubr.f32.gmra.mrb[0].mxu0 %v4342
        %v4413 = vpop.f32.mrb[0].mxu0
        %v4414 = vadd.f32 0.0, %v4413
        %v4415 = vpop.f32.mrb[0].mxu0
        %4416 = vmatprep.mubr.f32.mxu0 0.0
        %4417 = vmatmul.mubr.f32.gmra.mrb[0].mxu0 %v4345
        %v4418 = vpop.f32.mrb[0].mxu0
        %v4419 = vadd.f32 0.0, %v4418
        %v4420 = vpop.f32.mrb[0].mxu0
        %4421 = vdwg.mxu0
        %v4422 = vld [vmem:[%s16] sm:$0xff]
        %v4423 = vld [vmem:[%s16 + $0x8] sm:$0xff]
        %s4424 = scalar_lea.vmem %s16, 16
        %v4425 = vld [vmem:[%s4424] sm:$0xff]
        %v4426 = vld [vmem:[%s4424 + $0x8] sm:$0xff]
        %v4428 = vrot.slane %v4414, 1
        %v4429 = vsel %vm867, %v4428, 0
        %4431 = vmatprep.subr.mxu0 0.0
        %4432 = vmatpush1.msra.mxu0 %v4425
        %4433 = vmatprep.subr.mxu0 0.0
        %4434 = vmatpush1.msra.mxu0 %v4426
        %4435 = vmatprep.subr.mxu0 0.0
        %4436 = vmatpush1.msra.mxu0 0.0
        %4437 = vmatprep.subr.mxu0 0.0
        %4438 = vmatpush1.msra.mxu0 0.0
        %4439 = vmatprep.subr.mxu0 0.0
        %4440 = vmatpush1.msra.mxu0 0.0
        %4441 = vmatprep.subr.mxu0 0.0
        %4442 = vmatpush1.msra.mxu0 0.0
        %4443 = vmatprep.subr.mxu0 0.0
        %4444 = vmatpush1.msra.mxu0 0.0
        %4445 = vmatprep.subr.mxu0 0.0
        %4446 = vmatpush1.msra.mxu0 0.0
        %4447 = vmatprep.subr.mxu0 0.0
        %4448 = vmatpush1.msra.mxu0 0.0
        %4449 = vmatprep.subr.mxu0 0.0
        %4450 = vmatpush1.msra.mxu0 0.0
        %4451 = vmatprep.subr.mxu0 0.0
        %4452 = vmatpush1.msra.mxu0 0.0
        %4453 = vmatprep.subr.mxu0 0.0
        %4454 = vmatpush1.msra.mxu0 0.0
        %4455 = vmatprep.subr.mxu0 0.0
        %4456 = vmatpush1.msra.mxu0 0.0
        %4457 = vmatprep.subr.mxu0 0.0
        %4458 = vmatpush1.msra.mxu0 0.0
        %4459 = vmatprep.subr.mxu0 0.0
        %4460 = vmatpush1.msra.mxu0 0.0
        %4461 = vmatprep.subr.mxu0 0.0
        %4462 = vmatpush1.msra.mxu0 0.0
        %4463 = vmatprep.subr.mxu0 0.0
        %4464 = vmatpush1.msra.mxu0 0.0
        %4465 = vmatprep.subr.mxu0 0.0
        %4466 = vmatpush1.msra.mxu0 0.0
        %4467 = vmatprep.subr.mxu0 0.0
        %4468 = vmatpush1.msra.mxu0 0.0
        %4469 = vmatprep.subr.mxu0 0.0
        %4470 = vmatpush1.msra.mxu0 0.0
        %4471 = vmatprep.subr.mxu0 0.0
        %4472 = vmatpush1.msra.mxu0 0.0
        %4473 = vmatprep.subr.mxu0 0.0
        %4474 = vmatpush1.msra.mxu0 0.0
        %4475 = vmatprep.subr.mxu0 0.0
        %4476 = vmatpush1.msra.mxu0 0.0
        %4477 = vmatprep.subr.mxu0 0.0
        %4478 = vmatpush1.msra.mxu0 0.0
        %4479 = vmatprep.subr.mxu0 0.0
        %4480 = vmatpush1.msra.mxu0 0.0
        %4481 = vmatprep.subr.mxu0 0.0
        %4482 = vmatpush1.msra.mxu0 0.0
        %4483 = vmatprep.subr.mxu0 0.0
        %4484 = vmatpush1.msra.mxu0 0.0
        %4485 = vmatprep.subr.mxu0 0.0
        %4486 = vmatpush1.msra.mxu0 0.0
        %4487 = vmatprep.subr.mxu0 0.0
        %4488 = vmatpush1.msra.mxu0 0.0
        %4489 = vmatprep.subr.mxu0 0.0
        %4490 = vmatpush1.msra.mxu0 0.0
        %4491 = vmatprep.subr.mxu0 0.0
        %4492 = vmatpush1.msra.mxu0 0.0
        %4493 = vmatprep.subr.mxu0 0.0
        %4494 = vmatpush1.msra.mxu0 0.0
        %4495 = vmatprep.mubr.f32.mxu0 0.0
        %4496 = vmatmul.mubr.f32.gmra.mrb[0].mxu0 %v4429
        %v4497 = vpop.f32.mrb[0].mxu0
        %v4498 = vadd.f32 0.0, %v4497
        %v4499 = vpop.f32.mrb[0].mxu0
        %4500 = vdwg.mxu0
        %v4501 = vsel %vm867, %v4414, 0
        %4503 = vmatprep.subr.mxu0 0.0
        %4504 = vmatpush1.msra.mxu0 %v4422
        %4505 = vmatprep.subr.mxu0 0.0
        %4506 = vmatpush1.msra.mxu0 %v4423
        %4507 = vmatprep.subr.mxu0 0.0
        %4508 = vmatpush1.msra.mxu0 0.0
        %4509 = vmatprep.subr.mxu0 0.0
        %4510 = vmatpush1.msra.mxu0 0.0
        %4511 = vmatprep.subr.mxu0 0.0
        %4512 = vmatpush1.msra.mxu0 0.0
        %4513 = vmatprep.subr.mxu0 0.0
        %4514 = vmatpush1.msra.mxu0 0.0
        %4515 = vmatprep.subr.mxu0 0.0
        %4516 = vmatpush1.msra.mxu0 0.0
        %4517 = vmatprep.subr.mxu0 0.0
        %4518 = vmatpush1.msra.mxu0 0.0
        %4519 = vmatprep.subr.mxu0 0.0
        %4520 = vmatpush1.msra.mxu0 0.0
        %4521 = vmatprep.subr.mxu0 0.0
        %4522 = vmatpush1.msra.mxu0 0.0
        %4523 = vmatprep.subr.mxu0 0.0
        %4524 = vmatpush1.msra.mxu0 0.0
        %4525 = vmatprep.subr.mxu0 0.0
        %4526 = vmatpush1.msra.mxu0 0.0
        %4527 = vmatprep.subr.mxu0 0.0
        %4528 = vmatpush1.msra.mxu0 0.0
        %4529 = vmatprep.subr.mxu0 0.0
        %4530 = vmatpush1.msra.mxu0 0.0
        %4531 = vmatprep.subr.mxu0 0.0
        %4532 = vmatpush1.msra.mxu0 0.0
        %4533 = vmatprep.subr.mxu0 0.0
        %4534 = vmatpush1.msra.mxu0 0.0
        %4535 = vmatprep.subr.mxu0 0.0
        %4536 = vmatpush1.msra.mxu0 0.0
        %4537 = vmatprep.subr.mxu0 0.0
        %4538 = vmatpush1.msra.mxu0 0.0
        %4539 = vmatprep.subr.mxu0 0.0
        %4540 = vmatpush1.msra.mxu0 0.0
        %4541 = vmatprep.subr.mxu0 0.0
        %4542 = vmatpush1.msra.mxu0 0.0
        %4543 = vmatprep.subr.mxu0 0.0
        %4544 = vmatpush1.msra.mxu0 0.0
        %4545 = vmatprep.subr.mxu0 0.0
        %4546 = vmatpush1.msra.mxu0 0.0
        %4547 = vmatprep.subr.mxu0 0.0
        %4548 = vmatpush1.msra.mxu0 0.0
        %4549 = vmatprep.subr.mxu0 0.0
        %4550 = vmatpush1.msra.mxu0 0.0
        %4551 = vmatprep.subr.mxu0 0.0
        %4552 = vmatpush1.msra.mxu0 0.0
        %4553 = vmatprep.subr.mxu0 0.0
        %4554 = vmatpush1.msra.mxu0 0.0
        %4555 = vmatprep.subr.mxu0 0.0
        %4556 = vmatpush1.msra.mxu0 0.0
        %4557 = vmatprep.subr.mxu0 0.0
        %4558 = vmatpush1.msra.mxu0 0.0
        %4559 = vmatprep.subr.mxu0 0.0
        %4560 = vmatpush1.msra.mxu0 0.0
        %4561 = vmatprep.subr.mxu0 0.0
        %4562 = vmatpush1.msra.mxu0 0.0
        %4563 = vmatprep.subr.mxu0 0.0
        %4564 = vmatpush1.msra.mxu0 0.0
        %4565 = vmatprep.subr.mxu0 0.0
        %4566 = vmatpush1.msra.mxu0 0.0
        %4567 = vmatprep.mubr.f32.mxu0 0.0
        %4568 = vmatmul.mubr.f32.gmra.mrb[0].mxu0 %v4501
        %v4569 = vpop.f32.mrb[0].mxu0
        %v4570 = vadd.f32 %v4498, %v4569
        %v4571 = vpop.f32.mrb[0].mxu0
        %4572 = vdwg.mxu0
        %s4573 = scalar_lea.vmem %s16, 32
        %v4574 = vld [vmem:[%s4573] sm:$0xff]
        %v4575 = vld [vmem:[%s4573 + $0x8] sm:$0xff]
        %v4576 = vrot.slane %v4414, 2
        %v4577 = vsel %vm867, %v4576, 0
        %4579 = vmatprep.subr.mxu0 0.0
        %4580 = vmatpush1.msra.mxu0 %v4574
        %4581 = vmatprep.subr.mxu0 0.0
        %4582 = vmatpush1.msra.mxu0 %v4575
        %4583 = vmatprep.subr.mxu0 0.0
        %4584 = vmatpush1.msra.mxu0 0.0
        %4585 = vmatprep.subr.mxu0 0.0
        %4586 = vmatpush1.msra.mxu0 0.0
        %4587 = vmatprep.subr.mxu0 0.0
        %4588 = vmatpush1.msra.mxu0 0.0
        %4589 = vmatprep.subr.mxu0 0.0
        %4590 = vmatpush1.msra.mxu0 0.0
        %4591 = vmatprep.subr.mxu0 0.0
        %4592 = vmatpush1.msra.mxu0 0.0
        %4593 = vmatprep.subr.mxu0 0.0
        %4594 = vmatpush1.msra.mxu0 0.0
        %4595 = vmatprep.subr.mxu0 0.0
        %4596 = vmatpush1.msra.mxu0 0.0
        %4597 = vmatprep.subr.mxu0 0.0
        %4598 = vmatpush1.msra.mxu0 0.0
        %4599 = vmatprep.subr.mxu0 0.0
        %4600 = vmatpush1.msra.mxu0 0.0
        %4601 = vmatprep.subr.mxu0 0.0
        %4602 = vmatpush1.msra.mxu0 0.0
        %4603 = vmatprep.subr.mxu0 0.0
        %4604 = vmatpush1.msra.mxu0 0.0
        %4605 = vmatprep.subr.mxu0 0.0
        %4606 = vmatpush1.msra.mxu0 0.0
        %4607 = vmatprep.subr.mxu0 0.0
        %4608 = vmatpush1.msra.mxu0 0.0
        %4609 = vmatprep.subr.mxu0 0.0
        %4610 = vmatpush1.msra.mxu0 0.0
        %4611 = vmatprep.subr.mxu0 0.0
        %4612 = vmatpush1.msra.mxu0 0.0
        %4613 = vmatprep.subr.mxu0 0.0
        %4614 = vmatpush1.msra.mxu0 0.0
        %4615 = vmatprep.subr.mxu0 0.0
        %4616 = vmatpush1.msra.mxu0 0.0
        %4617 = vmatprep.subr.mxu0 0.0
        %4618 = vmatpush1.msra.mxu0 0.0
        %4619 = vmatprep.subr.mxu0 0.0
        %4620 = vmatpush1.msra.mxu0 0.0
        %4621 = vmatprep.subr.mxu0 0.0
        %4622 = vmatpush1.msra.mxu0 0.0
        %4623 = vmatprep.subr.mxu0 0.0
        %4624 = vmatpush1.msra.mxu0 0.0
        %4625 = vmatprep.subr.mxu0 0.0
        %4626 = vmatpush1.msra.mxu0 0.0
        %4627 = vmatprep.subr.mxu0 0.0
        %4628 = vmatpush1.msra.mxu0 0.0
        %4629 = vmatprep.subr.mxu0 0.0
        %4630 = vmatpush1.msra.mxu0 0.0
        %4631 = vmatprep.subr.mxu0 0.0
        %4632 = vmatpush1.msra.mxu0 0.0
        %4633 = vmatprep.subr.mxu0 0.0
        %4634 = vmatpush1.msra.mxu0 0.0
        %4635 = vmatprep.subr.mxu0 0.0
        %4636 = vmatpush1.msra.mxu0 0.0
        %4637 = vmatprep.subr.mxu0 0.0
        %4638 = vmatpush1.msra.mxu0 0.0
        %4639 = vmatprep.subr.mxu0 0.0
        %4640 = vmatpush1.msra.mxu0 0.0
        %4641 = vmatprep.subr.mxu0 0.0
        %4642 = vmatpush1.msra.mxu0 0.0
        %4643 = vmatprep.mubr.f32.mxu0 0.0
        %4644 = vmatmul.mubr.f32.gmra.mrb[0].mxu0 %v4577
        %v4645 = vpop.f32.mrb[0].mxu0
        %v4646 = vadd.f32 0.0, %v4645
        %v4647 = vpop.f32.mrb[0].mxu0
        %4648 = vdwg.mxu0
        %v4649 = vadd.f32 %v4570, %v4646
        %s4650 = scalar_lea.vmem %s16, 48
        %v4651 = vld [vmem:[%s4650] sm:$0xff]
        %v4652 = vld [vmem:[%s4650 + $0x8] sm:$0xff]
        %v4653 = vrot.slane %v4414, 3
        %v4654 = vsel %vm867, %v4653, 0
        %4656 = vmatprep.subr.mxu0 0.0
        %4657 = vmatpush1.msra.mxu0 %v4651
        %4658 = vmatprep.subr.mxu0 0.0
        %4659 = vmatpush1.msra.mxu0 %v4652
        %4660 = vmatprep.subr.mxu0 0.0
        %4661 = vmatpush1.msra.mxu0 0.0
        %4662 = vmatprep.subr.mxu0 0.0
        %4663 = vmatpush1.msra.mxu0 0.0
        %4664 = vmatprep.subr.mxu0 0.0
        %4665 = vmatpush1.msra.mxu0 0.0
        %4666 = vmatprep.subr.mxu0 0.0
        %4667 = vmatpush1.msra.mxu0 0.0
        %4668 = vmatprep.subr.mxu0 0.0
        %4669 = vmatpush1.msra.mxu0 0.0
        %4670 = vmatprep.subr.mxu0 0.0
        %4671 = vmatpush1.msra.mxu0 0.0
        %4672 = vmatprep.subr.mxu0 0.0
        %4673 = vmatpush1.msra.mxu0 0.0
        %4674 = vmatprep.subr.mxu0 0.0
        %4675 = vmatpush1.msra.mxu0 0.0
        %4676 = vmatprep.subr.mxu0 0.0
        %4677 = vmatpush1.msra.mxu0 0.0
        %4678 = vmatprep.subr.mxu0 0.0
        %4679 = vmatpush1.msra.mxu0 0.0
        %4680 = vmatprep.subr.mxu0 0.0
        %4681 = vmatpush1.msra.mxu0 0.0
        %4682 = vmatprep.subr.mxu0 0.0
        %4683 = vmatpush1.msra.mxu0 0.0
        %4684 = vmatprep.subr.mxu0 0.0
        %4685 = vmatpush1.msra.mxu0 0.0
        %4686 = vmatprep.subr.mxu0 0.0
        %4687 = vmatpush1.msra.mxu0 0.0
        %4688 = vmatprep.subr.mxu0 0.0
        %4689 = vmatpush1.msra.mxu0 0.0
        %4690 = vmatprep.subr.mxu0 0.0
        %4691 = vmatpush1.msra.mxu0 0.0
        %4692 = vmatprep.subr.mxu0 0.0
        %4693 = vmatpush1.msra.mxu0 0.0
        %4694 = vmatprep.subr.mxu0 0.0
        %4695 = vmatpush1.msra.mxu0 0.0
        %4696 = vmatprep.subr.mxu0 0.0
        %4697 = vmatpush1.msra.mxu0 0.0
        %4698 = vmatprep.subr.mxu0 0.0
        %4699 = vmatpush1.msra.mxu0 0.0
        %4700 = vmatprep.subr.mxu0 0.0
        %4701 = vmatpush1.msra.mxu0 0.0
        %4702 = vmatprep.subr.mxu0 0.0
        %4703 = vmatpush1.msra.mxu0 0.0
        %4704 = vmatprep.subr.mxu0 0.0
        %4705 = vmatpush1.msra.mxu0 0.0
        %4706 = vmatprep.subr.mxu0 0.0
        %4707 = vmatpush1.msra.mxu0 0.0
        %4708 = vmatprep.subr.mxu0 0.0
        %4709 = vmatpush1.msra.mxu0 0.0
        %4710 = vmatprep.subr.mxu0 0.0
        %4711 = vmatpush1.msra.mxu0 0.0
        %4712 = vmatprep.subr.mxu0 0.0
        %4713 = vmatpush1.msra.mxu0 0.0
        %4714 = vmatprep.subr.mxu0 0.0
        %4715 = vmatpush1.msra.mxu0 0.0
        %4716 = vmatprep.subr.mxu0 0.0
        %4717 = vmatpush1.msra.mxu0 0.0
        %4718 = vmatprep.subr.mxu0 0.0
        %4719 = vmatpush1.msra.mxu0 0.0
        %4720 = vmatprep.mubr.f32.mxu0 0.0
        %4721 = vmatmul.mubr.f32.gmra.mrb[0].mxu0 %v4654
        %v4722 = vpop.f32.mrb[0].mxu0
        %v4723 = vadd.f32 0.0, %v4722
        %v4724 = vpop.f32.mrb[0].mxu0
        %4725 = vdwg.mxu0
        %v4726 = vadd.f32 %v4649, %v4723
        %s4727 = scalar_lea.vmem %s16, 64
        %v4728 = vld [vmem:[%s4727] sm:$0xff]
        %v4729 = vld [vmem:[%s4727 + $0x8] sm:$0xff]
        %v4730 = vrot.slane %v4414, 4
        %v4731 = vsel %vm867, %v4730, 0
        %4733 = vmatprep.subr.mxu0 0.0
        %4734 = vmatpush1.msra.mxu0 %v4728
        %4735 = vmatprep.subr.mxu0 0.0
        %4736 = vmatpush1.msra.mxu0 %v4729
        %4737 = vmatprep.subr.mxu0 0.0
        %4738 = vmatpush1.msra.mxu0 0.0
        %4739 = vmatprep.subr.mxu0 0.0
        %4740 = vmatpush1.msra.mxu0 0.0
        %4741 = vmatprep.subr.mxu0 0.0
        %4742 = vmatpush1.msra.mxu0 0.0
        %4743 = vmatprep.subr.mxu0 0.0
        %4744 = vmatpush1.msra.mxu0 0.0
        %4745 = vmatprep.subr.mxu0 0.0
        %4746 = vmatpush1.msra.mxu0 0.0
        %4747 = vmatprep.subr.mxu0 0.0
        %4748 = vmatpush1.msra.mxu0 0.0
        %4749 = vmatprep.subr.mxu0 0.0
        %4750 = vmatpush1.msra.mxu0 0.0
        %4751 = vmatprep.subr.mxu0 0.0
        %4752 = vmatpush1.msra.mxu0 0.0
        %4753 = vmatprep.subr.mxu0 0.0
        %4754 = vmatpush1.msra.mxu0 0.0
        %4755 = vmatprep.subr.mxu0 0.0
        %4756 = vmatpush1.msra.mxu0 0.0
        %4757 = vmatprep.subr.mxu0 0.0
        %4758 = vmatpush1.msra.mxu0 0.0
        %4759 = vmatprep.subr.mxu0 0.0
        %4760 = vmatpush1.msra.mxu0 0.0
        %4761 = vmatprep.subr.mxu0 0.0
        %4762 = vmatpush1.msra.mxu0 0.0
        %4763 = vmatprep.subr.mxu0 0.0
        %4764 = vmatpush1.msra.mxu0 0.0
        %4765 = vmatprep.subr.mxu0 0.0
        %4766 = vmatpush1.msra.mxu0 0.0
        %4767 = vmatprep.subr.mxu0 0.0
        %4768 = vmatpush1.msra.mxu0 0.0
        %4769 = vmatprep.subr.mxu0 0.0
        %4770 = vmatpush1.msra.mxu0 0.0
        %4771 = vmatprep.subr.mxu0 0.0
        %4772 = vmatpush1.msra.mxu0 0.0
        %4773 = vmatprep.subr.mxu0 0.0
        %4774 = vmatpush1.msra.mxu0 0.0
        %4775 = vmatprep.subr.mxu0 0.0
        %4776 = vmatpush1.msra.mxu0 0.0
        %4777 = vmatprep.subr.mxu0 0.0
        %4778 = vmatpush1.msra.mxu0 0.0
        %4779 = vmatprep.subr.mxu0 0.0
        %4780 = vmatpush1.msra.mxu0 0.0
        %4781 = vmatprep.subr.mxu0 0.0
        %4782 = vmatpush1.msra.mxu0 0.0
        %4783 = vmatprep.subr.mxu0 0.0
        %4784 = vmatpush1.msra.mxu0 0.0
        %4785 = vmatprep.subr.mxu0 0.0
        %4786 = vmatpush1.msra.mxu0 0.0
        %4787 = vmatprep.subr.mxu0 0.0
        %4788 = vmatpush1.msra.mxu0 0.0
        %4789 = vmatprep.subr.mxu0 0.0
        %4790 = vmatpush1.msra.mxu0 0.0
        %4791 = vmatprep.subr.mxu0 0.0
        %4792 = vmatpush1.msra.mxu0 0.0
        %4793 = vmatprep.subr.mxu0 0.0
        %4794 = vmatpush1.msra.mxu0 0.0
        %4795 = vmatprep.subr.mxu0 0.0
        %4796 = vmatpush1.msra.mxu0 0.0
        %4797 = vmatprep.mubr.f32.mxu0 0.0
        %4798 = vmatmul.mubr.f32.gmra.mrb[0].mxu0 %v4731
        %v4799 = vpop.f32.mrb[0].mxu0
        %v4800 = vadd.f32 0.0, %v4799
        %v4801 = vpop.f32.mrb[0].mxu0
        %4802 = vdwg.mxu0
        %v4803 = vadd.f32 %v4726, %v4800
        %s4804 = scalar_lea.vmem %s16, 80
        %v4805 = vld [vmem:[%s4804] sm:$0xff]
        %v4806 = vld [vmem:[%s4804 + $0x8] sm:$0xff]
        %v4807 = vrot.slane %v4414, 5
        %v4808 = vsel %vm867, %v4807, 0
        %4810 = vmatprep.subr.mxu0 0.0
        %4811 = vmatpush1.msra.mxu0 %v4805
        %4812 = vmatprep.subr.mxu0 0.0
        %4813 = vmatpush1.msra.mxu0 %v4806
        %4814 = vmatprep.subr.mxu0 0.0
        %4815 = vmatpush1.msra.mxu0 0.0
        %4816 = vmatprep.subr.mxu0 0.0
        %4817 = vmatpush1.msra.mxu0 0.0
        %4818 = vmatprep.subr.mxu0 0.0
        %4819 = vmatpush1.msra.mxu0 0.0
        %4820 = vmatprep.subr.mxu0 0.0
        %4821 = vmatpush1.msra.mxu0 0.0
        %4822 = vmatprep.subr.mxu0 0.0
        %4823 = vmatpush1.msra.mxu0 0.0
        %4824 = vmatprep.subr.mxu0 0.0
        %4825 = vmatpush1.msra.mxu0 0.0
        %4826 = vmatprep.subr.mxu0 0.0
        %4827 = vmatpush1.msra.mxu0 0.0
        %4828 = vmatprep.subr.mxu0 0.0
        %4829 = vmatpush1.msra.mxu0 0.0
        %4830 = vmatprep.subr.mxu0 0.0
        %4831 = vmatpush1.msra.mxu0 0.0
        %4832 = vmatprep.subr.mxu0 0.0
        %4833 = vmatpush1.msra.mxu0 0.0
        %4834 = vmatprep.subr.mxu0 0.0
        %4835 = vmatpush1.msra.mxu0 0.0
        %4836 = vmatprep.subr.mxu0 0.0
        %4837 = vmatpush1.msra.mxu0 0.0
        %4838 = vmatprep.subr.mxu0 0.0
        %4839 = vmatpush1.msra.mxu0 0.0
        %4840 = vmatprep.subr.mxu0 0.0
        %4841 = vmatpush1.msra.mxu0 0.0
        %4842 = vmatprep.subr.mxu0 0.0
        %4843 = vmatpush1.msra.mxu0 0.0
        %4844 = vmatprep.subr.mxu0 0.0
        %4845 = vmatpush1.msra.mxu0 0.0
        %4846 = vmatprep.subr.mxu0 0.0
        %4847 = vmatpush1.msra.mxu0 0.0
        %4848 = vmatprep.subr.mxu0 0.0
        %4849 = vmatpush1.msra.mxu0 0.0
        %4850 = vmatprep.subr.mxu0 0.0
        %4851 = vmatpush1.msra.mxu0 0.0
        %4852 = vmatprep.subr.mxu0 0.0
        %4853 = vmatpush1.msra.mxu0 0.0
        %4854 = vmatprep.subr.mxu0 0.0
        %4855 = vmatpush1.msra.mxu0 0.0
        %4856 = vmatprep.subr.mxu0 0.0
        %4857 = vmatpush1.msra.mxu0 0.0
        %4858 = vmatprep.subr.mxu0 0.0
        %4859 = vmatpush1.msra.mxu0 0.0
        %4860 = vmatprep.subr.mxu0 0.0
        %4861 = vmatpush1.msra.mxu0 0.0
        %4862 = vmatprep.subr.mxu0 0.0
        %4863 = vmatpush1.msra.mxu0 0.0
        %4864 = vmatprep.subr.mxu0 0.0
        %4865 = vmatpush1.msra.mxu0 0.0
        %4866 = vmatprep.subr.mxu0 0.0
        %4867 = vmatpush1.msra.mxu0 0.0
        %4868 = vmatprep.subr.mxu0 0.0
        %4869 = vmatpush1.msra.mxu0 0.0
        %4870 = vmatprep.subr.mxu0 0.0
        %4871 = vmatpush1.msra.mxu0 0.0
        %4872 = vmatprep.subr.mxu0 0.0
        %4873 = vmatpush1.msra.mxu0 0.0
        %4874 = vmatprep.mubr.f32.mxu0 0.0
        %4875 = vmatmul.mubr.f32.gmra.mrb[0].mxu0 %v4808
        %v4876 = vpop.f32.mrb[0].mxu0
        %v4877 = vadd.f32 0.0, %v4876
        %v4878 = vpop.f32.mrb[0].mxu0
        %4879 = vdwg.mxu0
        %v4880 = vadd.f32 %v4803, %v4877
        %s4881 = scalar_lea.vmem %s16, 96
        %v4882 = vld [vmem:[%s4881] sm:$0xff]
        %v4883 = vld [vmem:[%s4881 + $0x8] sm:$0xff]
        %v4884 = vrot.slane %v4414, 6
        %v4885 = vsel %vm867, %v4884, 0
        %4887 = vmatprep.subr.mxu0 0.0
        %4888 = vmatpush1.msra.mxu0 %v4882
        %4889 = vmatprep.subr.mxu0 0.0
        %4890 = vmatpush1.msra.mxu0 %v4883
        %4891 = vmatprep.subr.mxu0 0.0
        %4892 = vmatpush1.msra.mxu0 0.0
        %4893 = vmatprep.subr.mxu0 0.0
        %4894 = vmatpush1.msra.mxu0 0.0
        %4895 = vmatprep.subr.mxu0 0.0
        %4896 = vmatpush1.msra.mxu0 0.0
        %4897 = vmatprep.subr.mxu0 0.0
        %4898 = vmatpush1.msra.mxu0 0.0
        %4899 = vmatprep.subr.mxu0 0.0
        %4900 = vmatpush1.msra.mxu0 0.0
        %4901 = vmatprep.subr.mxu0 0.0
        %4902 = vmatpush1.msra.mxu0 0.0
        %4903 = vmatprep.subr.mxu0 0.0
        %4904 = vmatpush1.msra.mxu0 0.0
        %4905 = vmatprep.subr.mxu0 0.0
        %4906 = vmatpush1.msra.mxu0 0.0
        %4907 = vmatprep.subr.mxu0 0.0
        %4908 = vmatpush1.msra.mxu0 0.0
        %4909 = vmatprep.subr.mxu0 0.0
        %4910 = vmatpush1.msra.mxu0 0.0
        %4911 = vmatprep.subr.mxu0 0.0
        %4912 = vmatpush1.msra.mxu0 0.0
        %4913 = vmatprep.subr.mxu0 0.0
        %4914 = vmatpush1.msra.mxu0 0.0
        %4915 = vmatprep.subr.mxu0 0.0
        %4916 = vmatpush1.msra.mxu0 0.0
        %4917 = vmatprep.subr.mxu0 0.0
        %4918 = vmatpush1.msra.mxu0 0.0
        %4919 = vmatprep.subr.mxu0 0.0
        %4920 = vmatpush1.msra.mxu0 0.0
        %4921 = vmatprep.subr.mxu0 0.0
        %4922 = vmatpush1.msra.mxu0 0.0
        %4923 = vmatprep.subr.mxu0 0.0
        %4924 = vmatpush1.msra.mxu0 0.0
        %4925 = vmatprep.subr.mxu0 0.0
        %4926 = vmatpush1.msra.mxu0 0.0
        %4927 = vmatprep.subr.mxu0 0.0
        %4928 = vmatpush1.msra.mxu0 0.0
        %4929 = vmatprep.subr.mxu0 0.0
        %4930 = vmatpush1.msra.mxu0 0.0
        %4931 = vmatprep.subr.mxu0 0.0
        %4932 = vmatpush1.msra.mxu0 0.0
        %4933 = vmatprep.subr.mxu0 0.0
        %4934 = vmatpush1.msra.mxu0 0.0
        %4935 = vmatprep.subr.mxu0 0.0
        %4936 = vmatpush1.msra.mxu0 0.0
        %4937 = vmatprep.subr.mxu0 0.0
        %4938 = vmatpush1.msra.mxu0 0.0
        %4939 = vmatprep.subr.mxu0 0.0
        %4940 = vmatpush1.msra.mxu0 0.0
        %4941 = vmatprep.subr.mxu0 0.0
        %4942 = vmatpush1.msra.mxu0 0.0
        %4943 = vmatprep.subr.mxu0 0.0
        %4944 = vmatpush1.msra.mxu0 0.0
        %4945 = vmatprep.subr.mxu0 0.0
        %4946 = vmatpush1.msra.mxu0 0.0
        %4947 = vmatprep.subr.mxu0 0.0
        %4948 = vmatpush1.msra.mxu0 0.0
        %4949 = vmatprep.subr.mxu0 0.0
        %4950 = vmatpush1.msra.mxu0 0.0
        %4951 = vmatprep.mubr.f32.mxu0 0.0
        %4952 = vmatmul.mubr.f32.gmra.mrb[0].mxu0 %v4885
        %v4953 = vpop.f32.mrb[0].mxu0
        %v4954 = vadd.f32 0.0, %v4953
        %v4955 = vpop.f32.mrb[0].mxu0
        %4956 = vdwg.mxu0
        %v4957 = vadd.f32 %v4880, %v4954
        %s4958 = scalar_lea.vmem %s16, 112
        %v4959 = vld [vmem:[%s4958] sm:$0xff]
        %v4960 = vld [vmem:[%s4958 + $0x8] sm:$0xff]
        %v4961 = vrot.slane %v4414, 7
        %v4962 = vsel %vm867, %v4961, 0
        %4964 = vmatprep.subr.mxu0 0.0
        %4965 = vmatpush1.msra.mxu0 %v4959
        %4966 = vmatprep.subr.mxu0 0.0
        %4967 = vmatpush1.msra.mxu0 %v4960
        %4968 = vmatprep.subr.mxu0 0.0
        %4969 = vmatpush1.msra.mxu0 0.0
        %4970 = vmatprep.subr.mxu0 0.0
        %4971 = vmatpush1.msra.mxu0 0.0
        %4972 = vmatprep.subr.mxu0 0.0
        %4973 = vmatpush1.msra.mxu0 0.0
        %4974 = vmatprep.subr.mxu0 0.0
        %4975 = vmatpush1.msra.mxu0 0.0
        %4976 = vmatprep.subr.mxu0 0.0
        %4977 = vmatpush1.msra.mxu0 0.0
        %4978 = vmatprep.subr.mxu0 0.0
        %4979 = vmatpush1.msra.mxu0 0.0
        %4980 = vmatprep.subr.mxu0 0.0
        %4981 = vmatpush1.msra.mxu0 0.0
        %4982 = vmatprep.subr.mxu0 0.0
        %4983 = vmatpush1.msra.mxu0 0.0
        %4984 = vmatprep.subr.mxu0 0.0
        %4985 = vmatpush1.msra.mxu0 0.0
        %4986 = vmatprep.subr.mxu0 0.0
        %4987 = vmatpush1.msra.mxu0 0.0
        %4988 = vmatprep.subr.mxu0 0.0
        %4989 = vmatpush1.msra.mxu0 0.0
        %4990 = vmatprep.subr.mxu0 0.0
        %4991 = vmatpush1.msra.mxu0 0.0
        %4992 = vmatprep.subr.mxu0 0.0
        %4993 = vmatpush1.msra.mxu0 0.0
        %4994 = vmatprep.subr.mxu0 0.0
        %4995 = vmatpush1.msra.mxu0 0.0
        %4996 = vmatprep.subr.mxu0 0.0
        %4997 = vmatpush1.msra.mxu0 0.0
        %4998 = vmatprep.subr.mxu0 0.0
        %4999 = vmatpush1.msra.mxu0 0.0
        %5000 = vmatprep.subr.mxu0 0.0
        %5001 = vmatpush1.msra.mxu0 0.0
        %5002 = vmatprep.subr.mxu0 0.0
        %5003 = vmatpush1.msra.mxu0 0.0
        %5004 = vmatprep.subr.mxu0 0.0
        %5005 = vmatpush1.msra.mxu0 0.0
        %5006 = vmatprep.subr.mxu0 0.0
        %5007 = vmatpush1.msra.mxu0 0.0
        %5008 = vmatprep.subr.mxu0 0.0
        %5009 = vmatpush1.msra.mxu0 0.0
        %5010 = vmatprep.subr.mxu0 0.0
        %5011 = vmatpush1.msra.mxu0 0.0
        %5012 = vmatprep.subr.mxu0 0.0
        %5013 = vmatpush1.msra.mxu0 0.0
        %5014 = vmatprep.subr.mxu0 0.0
        %5015 = vmatpush1.msra.mxu0 0.0
        %5016 = vmatprep.subr.mxu0 0.0
        %5017 = vmatpush1.msra.mxu0 0.0
        %5018 = vmatprep.subr.mxu0 0.0
        %5019 = vmatpush1.msra.mxu0 0.0
        %5020 = vmatprep.subr.mxu0 0.0
        %5021 = vmatpush1.msra.mxu0 0.0
        %5022 = vmatprep.subr.mxu0 0.0
        %5023 = vmatpush1.msra.mxu0 0.0
        %5024 = vmatprep.subr.mxu0 0.0
        %5025 = vmatpush1.msra.mxu0 0.0
        %5026 = vmatprep.subr.mxu0 0.0
        %5027 = vmatpush1.msra.mxu0 0.0
        %5028 = vmatprep.mubr.f32.mxu0 0.0
        %5029 = vmatmul.mubr.f32.gmra.mrb[0].mxu0 %v4962
        %v5030 = vpop.f32.mrb[0].mxu0
        %v5031 = vadd.f32 0.0, %v5030
        %v5032 = vpop.f32.mrb[0].mxu0
        %5033 = vdwg.mxu0
        %v5034 = vadd.f32 %v4957, %v5031
        %s5035 = scalar_lea.vmem %s16, 128
        %v5036 = vld [vmem:[%s5035] sm:$0xff]
        %v5037 = vld [vmem:[%s5035 + $0x8] sm:$0xff]
        %v5039 = vsel %vm867, %v4419, 0
        %5041 = vmatprep.subr.mxu0 0.0
        %5042 = vmatpush1.msra.mxu0 %v5036
        %5043 = vmatprep.subr.mxu0 0.0
        %5044 = vmatpush1.msra.mxu0 %v5037
        %5045 = vmatprep.subr.mxu0 0.0
        %5046 = vmatpush1.msra.mxu0 0.0
        %5047 = vmatprep.subr.mxu0 0.0
        %5048 = vmatpush1.msra.mxu0 0.0
        %5049 = vmatprep.subr.mxu0 0.0
        %5050 = vmatpush1.msra.mxu0 0.0
        %5051 = vmatprep.subr.mxu0 0.0
        %5052 = vmatpush1.msra.mxu0 0.0
        %5053 = vmatprep.subr.mxu0 0.0
        %5054 = vmatpush1.msra.mxu0 0.0
        %5055 = vmatprep.subr.mxu0 0.0
        %5056 = vmatpush1.msra.mxu0 0.0
        %5057 = vmatprep.subr.mxu0 0.0
        %5058 = vmatpush1.msra.mxu0 0.0
        %5059 = vmatprep.subr.mxu0 0.0
        %5060 = vmatpush1.msra.mxu0 0.0
        %5061 = vmatprep.subr.mxu0 0.0
        %5062 = vmatpush1.msra.mxu0 0.0
        %5063 = vmatprep.subr.mxu0 0.0
        %5064 = vmatpush1.msra.mxu0 0.0
        %5065 = vmatprep.subr.mxu0 0.0
        %5066 = vmatpush1.msra.mxu0 0.0
        %5067 = vmatprep.subr.mxu0 0.0
        %5068 = vmatpush1.msra.mxu0 0.0
        %5069 = vmatprep.subr.mxu0 0.0
        %5070 = vmatpush1.msra.mxu0 0.0
        %5071 = vmatprep.subr.mxu0 0.0
        %5072 = vmatpush1.msra.mxu0 0.0
        %5073 = vmatprep.subr.mxu0 0.0
        %5074 = vmatpush1.msra.mxu0 0.0
        %5075 = vmatprep.subr.mxu0 0.0
        %5076 = vmatpush1.msra.mxu0 0.0
        %5077 = vmatprep.subr.mxu0 0.0
        %5078 = vmatpush1.msra.mxu0 0.0
        %5079 = vmatprep.subr.mxu0 0.0
        %5080 = vmatpush1.msra.mxu0 0.0
        %5081 = vmatprep.subr.mxu0 0.0
        %5082 = vmatpush1.msra.mxu0 0.0
        %5083 = vmatprep.subr.mxu0 0.0
        %5084 = vmatpush1.msra.mxu0 0.0
        %5085 = vmatprep.subr.mxu0 0.0
        %5086 = vmatpush1.msra.mxu0 0.0
        %5087 = vmatprep.subr.mxu0 0.0
        %5088 = vmatpush1.msra.mxu0 0.0
        %5089 = vmatprep.subr.mxu0 0.0
        %5090 = vmatpush1.msra.mxu0 0.0
        %5091 = vmatprep.subr.mxu0 0.0
        %5092 = vmatpush1.msra.mxu0 0.0
        %5093 = vmatprep.subr.mxu0 0.0
        %5094 = vmatpush1.msra.mxu0 0.0
        %5095 = vmatprep.subr.mxu0 0.0
        %5096 = vmatpush1.msra.mxu0 0.0
        %5097 = vmatprep.subr.mxu0 0.0
        %5098 = vmatpush1.msra.mxu0 0.0
        %5099 = vmatprep.subr.mxu0 0.0
        %5100 = vmatpush1.msra.mxu0 0.0
        %5101 = vmatprep.subr.mxu0 0.0
        %5102 = vmatpush1.msra.mxu0 0.0
        %5103 = vmatprep.subr.mxu0 0.0
        %5104 = vmatpush1.msra.mxu0 0.0
        %5105 = vmatprep.mubr.f32.mxu0 0.0
        %5106 = vmatmul.mubr.f32.gmra.mrb[0].mxu0 %v5039
        %v5107 = vpop.f32.mrb[0].mxu0
        %v5108 = vadd.f32 0.0, %v5107
        %v5109 = vpop.f32.mrb[0].mxu0
        %5110 = vdwg.mxu0
        %v5111 = vadd.f32 %v5034, %v5108
        %s5112 = scalar_lea.vmem %s16, 144
        %v5113 = vld [vmem:[%s5112] sm:$0xff]
        %v5114 = vld [vmem:[%s5112 + $0x8] sm:$0xff]
        %v5115 = vrot.slane %v4419, 1
        %v5116 = vsel %vm867, %v5115, 0
        %5118 = vmatprep.subr.mxu0 0.0
        %5119 = vmatpush1.msra.mxu0 %v5113
        %5120 = vmatprep.subr.mxu0 0.0
        %5121 = vmatpush1.msra.mxu0 %v5114
        %5122 = vmatprep.subr.mxu0 0.0
        %5123 = vmatpush1.msra.mxu0 0.0
        %5124 = vmatprep.subr.mxu0 0.0
        %5125 = vmatpush1.msra.mxu0 0.0
        %5126 = vmatprep.subr.mxu0 0.0
        %5127 = vmatpush1.msra.mxu0 0.0
        %5128 = vmatprep.subr.mxu0 0.0
        %5129 = vmatpush1.msra.mxu0 0.0
        %5130 = vmatprep.subr.mxu0 0.0
        %5131 = vmatpush1.msra.mxu0 0.0
        %5132 = vmatprep.subr.mxu0 0.0
        %5133 = vmatpush1.msra.mxu0 0.0
        %5134 = vmatprep.subr.mxu0 0.0
        %5135 = vmatpush1.msra.mxu0 0.0
        %5136 = vmatprep.subr.mxu0 0.0
        %5137 = vmatpush1.msra.mxu0 0.0
        %5138 = vmatprep.subr.mxu0 0.0
        %5139 = vmatpush1.msra.mxu0 0.0
        %5140 = vmatprep.subr.mxu0 0.0
        %5141 = vmatpush1.msra.mxu0 0.0
        %5142 = vmatprep.subr.mxu0 0.0
        %5143 = vmatpush1.msra.mxu0 0.0
        %5144 = vmatprep.subr.mxu0 0.0
        %5145 = vmatpush1.msra.mxu0 0.0
        %5146 = vmatprep.subr.mxu0 0.0
        %5147 = vmatpush1.msra.mxu0 0.0
        %5148 = vmatprep.subr.mxu0 0.0
        %5149 = vmatpush1.msra.mxu0 0.0
        %5150 = vmatprep.subr.mxu0 0.0
        %5151 = vmatpush1.msra.mxu0 0.0
        %5152 = vmatprep.subr.mxu0 0.0
        %5153 = vmatpush1.msra.mxu0 0.0
        %5154 = vmatprep.subr.mxu0 0.0
        %5155 = vmatpush1.msra.mxu0 0.0
        %5156 = vmatprep.subr.mxu0 0.0
        %5157 = vmatpush1.msra.mxu0 0.0
        %5158 = vmatprep.subr.mxu0 0.0
        %5159 = vmatpush1.msra.mxu0 0.0
        %5160 = vmatprep.subr.mxu0 0.0
        %5161 = vmatpush1.msra.mxu0 0.0
        %5162 = vmatprep.subr.mxu0 0.0
        %5163 = vmatpush1.msra.mxu0 0.0
        %5164 = vmatprep.subr.mxu0 0.0
        %5165 = vmatpush1.msra.mxu0 0.0
        %5166 = vmatprep.subr.mxu0 0.0
        %5167 = vmatpush1.msra.mxu0 0.0
        %5168 = vmatprep.subr.mxu0 0.0
        %5169 = vmatpush1.msra.mxu0 0.0
        %5170 = vmatprep.subr.mxu0 0.0
        %5171 = vmatpush1.msra.mxu0 0.0
        %5172 = vmatprep.subr.mxu0 0.0
        %5173 = vmatpush1.msra.mxu0 0.0
        %5174 = vmatprep.subr.mxu0 0.0
        %5175 = vmatpush1.msra.mxu0 0.0
        %5176 = vmatprep.subr.mxu0 0.0
        %5177 = vmatpush1.msra.mxu0 0.0
        %5178 = vmatprep.subr.mxu0 0.0
        %5179 = vmatpush1.msra.mxu0 0.0
        %5180 = vmatprep.subr.mxu0 0.0
        %5181 = vmatpush1.msra.mxu0 0.0
        %5182 = vmatprep.mubr.f32.mxu0 0.0
        %5183 = vmatmul.mubr.f32.gmra.mrb[0].mxu0 %v5116
        %v5184 = vpop.f32.mrb[0].mxu0
        %v5185 = vadd.f32 0.0, %v5184
        %v5186 = vpop.f32.mrb[0].mxu0
        %5187 = vdwg.mxu0
        %v5188 = vadd.f32 %v5111, %v5185
        %s5189 = scalar_lea.vmem %s16, 160
        %v5190 = vld [vmem:[%s5189] sm:$0xff]
        %v5191 = vld [vmem:[%s5189 + $0x8] sm:$0xff]
        %v5192 = vrot.slane %v4419, 2
        %v5193 = vsel %vm867, %v5192, 0
        %5195 = vmatprep.subr.mxu0 0.0
        %5196 = vmatpush1.msra.mxu0 %v5190
        %5197 = vmatprep.subr.mxu0 0.0
        %5198 = vmatpush1.msra.mxu0 %v5191
        %5199 = vmatprep.subr.mxu0 0.0
        %5200 = vmatpush1.msra.mxu0 0.0
        %5201 = vmatprep.subr.mxu0 0.0
        %5202 = vmatpush1.msra.mxu0 0.0
        %5203 = vmatprep.subr.mxu0 0.0
        %5204 = vmatpush1.msra.mxu0 0.0
        %5205 = vmatprep.subr.mxu0 0.0
        %5206 = vmatpush1.msra.mxu0 0.0
        %5207 = vmatprep.subr.mxu0 0.0
        %5208 = vmatpush1.msra.mxu0 0.0
        %5209 = vmatprep.subr.mxu0 0.0
        %5210 = vmatpush1.msra.mxu0 0.0
        %5211 = vmatprep.subr.mxu0 0.0
        %5212 = vmatpush1.msra.mxu0 0.0
        %5213 = vmatprep.subr.mxu0 0.0
        %5214 = vmatpush1.msra.mxu0 0.0
        %5215 = vmatprep.subr.mxu0 0.0
        %5216 = vmatpush1.msra.mxu0 0.0
        %5217 = vmatprep.subr.mxu0 0.0
        %5218 = vmatpush1.msra.mxu0 0.0
        %5219 = vmatprep.subr.mxu0 0.0
        %5220 = vmatpush1.msra.mxu0 0.0
        %5221 = vmatprep.subr.mxu0 0.0
        %5222 = vmatpush1.msra.mxu0 0.0
        %5223 = vmatprep.subr.mxu0 0.0
        %5224 = vmatpush1.msra.mxu0 0.0
        %5225 = vmatprep.subr.mxu0 0.0
        %5226 = vmatpush1.msra.mxu0 0.0
        %5227 = vmatprep.subr.mxu0 0.0
        %5228 = vmatpush1.msra.mxu0 0.0
        %5229 = vmatprep.subr.mxu0 0.0
        %5230 = vmatpush1.msra.mxu0 0.0
        %5231 = vmatprep.subr.mxu0 0.0
        %5232 = vmatpush1.msra.mxu0 0.0
        %5233 = vmatprep.subr.mxu0 0.0
        %5234 = vmatpush1.msra.mxu0 0.0
        %5235 = vmatprep.subr.mxu0 0.0
        %5236 = vmatpush1.msra.mxu0 0.0
        %5237 = vmatprep.subr.mxu0 0.0
        %5238 = vmatpush1.msra.mxu0 0.0
        %5239 = vmatprep.subr.mxu0 0.0
        %5240 = vmatpush1.msra.mxu0 0.0
        %5241 = vmatprep.subr.mxu0 0.0
        %5242 = vmatpush1.msra.mxu0 0.0
        %5243 = vmatprep.subr.mxu0 0.0
        %5244 = vmatpush1.msra.mxu0 0.0
        %5245 = vmatprep.subr.mxu0 0.0
        %5246 = vmatpush1.msra.mxu0 0.0
        %5247 = vmatprep.subr.mxu0 0.0
        %5248 = vmatpush1.msra.mxu0 0.0
        %5249 = vmatprep.subr.mxu0 0.0
        %5250 = vmatpush1.msra.mxu0 0.0
        %5251 = vmatprep.subr.mxu0 0.0
        %5252 = vmatpush1.msra.mxu0 0.0
        %5253 = vmatprep.subr.mxu0 0.0
        %5254 = vmatpush1.msra.mxu0 0.0
        %5255 = vmatprep.subr.mxu0 0.0
        %5256 = vmatpush1.msra.mxu0 0.0
        %5257 = vmatprep.subr.mxu0 0.0
        %5258 = vmatpush1.msra.mxu0 0.0
        %5259 = vmatprep.mubr.f32.mxu0 0.0
        %5260 = vmatmul.mubr.f32.gmra.mrb[0].mxu0 %v5193
        %v5261 = vpop.f32.mrb[0].mxu0
        %v5262 = vadd.f32 0.0, %v5261
        %v5263 = vpop.f32.mrb[0].mxu0
        %5264 = vdwg.mxu0
        %v5265 = vadd.f32 %v5188, %v5262
        %s5266 = scalar_lea.vmem %s16, 176
        %v5267 = vld [vmem:[%s5266] sm:$0xff]
        %v5268 = vld [vmem:[%s5266 + $0x8] sm:$0xff]
        %v5269 = vrot.slane %v4419, 3
        %v5270 = vsel %vm867, %v5269, 0
        %5272 = vmatprep.subr.mxu0 0.0
        %5273 = vmatpush1.msra.mxu0 %v5267
        %5274 = vmatprep.subr.mxu0 0.0
        %5275 = vmatpush1.msra.mxu0 %v5268
        %5276 = vmatprep.subr.mxu0 0.0
        %5277 = vmatpush1.msra.mxu0 0.0
        %5278 = vmatprep.subr.mxu0 0.0
        %5279 = vmatpush1.msra.mxu0 0.0
        %5280 = vmatprep.subr.mxu0 0.0
        %5281 = vmatpush1.msra.mxu0 0.0
        %5282 = vmatprep.subr.mxu0 0.0
        %5283 = vmatpush1.msra.mxu0 0.0
        %5284 = vmatprep.subr.mxu0 0.0
        %5285 = vmatpush1.msra.mxu0 0.0
        %5286 = vmatprep.subr.mxu0 0.0
        %5287 = vmatpush1.msra.mxu0 0.0
        %5288 = vmatprep.subr.mxu0 0.0
        %5289 = vmatpush1.msra.mxu0 0.0
        %5290 = vmatprep.subr.mxu0 0.0
        %5291 = vmatpush1.msra.mxu0 0.0
        %5292 = vmatprep.subr.mxu0 0.0
        %5293 = vmatpush1.msra.mxu0 0.0
        %5294 = vmatprep.subr.mxu0 0.0
        %5295 = vmatpush1.msra.mxu0 0.0
        %5296 = vmatprep.subr.mxu0 0.0
        %5297 = vmatpush1.msra.mxu0 0.0
        %5298 = vmatprep.subr.mxu0 0.0
        %5299 = vmatpush1.msra.mxu0 0.0
        %5300 = vmatprep.subr.mxu0 0.0
        %5301 = vmatpush1.msra.mxu0 0.0
        %5302 = vmatprep.subr.mxu0 0.0
        %5303 = vmatpush1.msra.mxu0 0.0
        %5304 = vmatprep.subr.mxu0 0.0
        %5305 = vmatpush1.msra.mxu0 0.0
        %5306 = vmatprep.subr.mxu0 0.0
        %5307 = vmatpush1.msra.mxu0 0.0
        %5308 = vmatprep.subr.mxu0 0.0
        %5309 = vmatpush1.msra.mxu0 0.0
        %5310 = vmatprep.subr.mxu0 0.0
        %5311 = vmatpush1.msra.mxu0 0.0
        %5312 = vmatprep.subr.mxu0 0.0
        %5313 = vmatpush1.msra.mxu0 0.0
        %5314 = vmatprep.subr.mxu0 0.0
        %5315 = vmatpush1.msra.mxu0 0.0
        %5316 = vmatprep.subr.mxu0 0.0
        %5317 = vmatpush1.msra.mxu0 0.0
        %5318 = vmatprep.subr.mxu0 0.0
        %5319 = vmatpush1.msra.mxu0 0.0
        %5320 = vmatprep.subr.mxu0 0.0
        %5321 = vmatpush1.msra.mxu0 0.0
        %5322 = vmatprep.subr.mxu0 0.0
        %5323 = vmatpush1.msra.mxu0 0.0
        %5324 = vmatprep.subr.mxu0 0.0
        %5325 = vmatpush1.msra.mxu0 0.0
        %5326 = vmatprep.subr.mxu0 0.0
        %5327 = vmatpush1.msra.mxu0 0.0
        %5328 = vmatprep.subr.mxu0 0.0
        %5329 = vmatpush1.msra.mxu0 0.0
        %5330 = vmatprep.subr.mxu0 0.0
        %5331 = vmatpush1.msra.mxu0 0.0
        %5332 = vmatprep.subr.mxu0 0.0
        %5333 = vmatpush1.msra.mxu0 0.0
        %5334 = vmatprep.subr.mxu0 0.0
        %5335 = vmatpush1.msra.mxu0 0.0
        %5336 = vmatprep.mubr.f32.mxu0 0.0
        %5337 = vmatmul.mubr.f32.gmra.mrb[0].mxu0 %v5270
        %v5338 = vpop.f32.mrb[0].mxu0
        %v5339 = vadd.f32 0.0, %v5338
        %v5340 = vpop.f32.mrb[0].mxu0
        %5341 = vdwg.mxu0
        %v5342 = vadd.f32 %v5265, %v5339
        %s5343 = scalar_lea.vmem %s16, 192
        %v5344 = vld [vmem:[%s5343] sm:$0xff]
        %v5345 = vld [vmem:[%s5343 + $0x8] sm:$0xff]
        %v5346 = vrot.slane %v4419, 4
        %v5347 = vsel %vm867, %v5346, 0
        %5349 = vmatprep.subr.mxu0 0.0
        %5350 = vmatpush1.msra.mxu0 %v5344
        %5351 = vmatprep.subr.mxu0 0.0
        %5352 = vmatpush1.msra.mxu0 %v5345
        %5353 = vmatprep.subr.mxu0 0.0
        %5354 = vmatpush1.msra.mxu0 0.0
        %5355 = vmatprep.subr.mxu0 0.0
        %5356 = vmatpush1.msra.mxu0 0.0
        %5357 = vmatprep.subr.mxu0 0.0
        %5358 = vmatpush1.msra.mxu0 0.0
        %5359 = vmatprep.subr.mxu0 0.0
        %5360 = vmatpush1.msra.mxu0 0.0
        %5361 = vmatprep.subr.mxu0 0.0
        %5362 = vmatpush1.msra.mxu0 0.0
        %5363 = vmatprep.subr.mxu0 0.0
        %5364 = vmatpush1.msra.mxu0 0.0
        %5365 = vmatprep.subr.mxu0 0.0
        %5366 = vmatpush1.msra.mxu0 0.0
        %5367 = vmatprep.subr.mxu0 0.0
        %5368 = vmatpush1.msra.mxu0 0.0
        %5369 = vmatprep.subr.mxu0 0.0
        %5370 = vmatpush1.msra.mxu0 0.0
        %5371 = vmatprep.subr.mxu0 0.0
        %5372 = vmatpush1.msra.mxu0 0.0
        %5373 = vmatprep.subr.mxu0 0.0
        %5374 = vmatpush1.msra.mxu0 0.0
        %5375 = vmatprep.subr.mxu0 0.0
        %5376 = vmatpush1.msra.mxu0 0.0
        %5377 = vmatprep.subr.mxu0 0.0
        %5378 = vmatpush1.msra.mxu0 0.0
        %5379 = vmatprep.subr.mxu0 0.0
        %5380 = vmatpush1.msra.mxu0 0.0
        %5381 = vmatprep.subr.mxu0 0.0
        %5382 = vmatpush1.msra.mxu0 0.0
        %5383 = vmatprep.subr.mxu0 0.0
        %5384 = vmatpush1.msra.mxu0 0.0
        %5385 = vmatprep.subr.mxu0 0.0
        %5386 = vmatpush1.msra.mxu0 0.0
        %5387 = vmatprep.subr.mxu0 0.0
        %5388 = vmatpush1.msra.mxu0 0.0
        %5389 = vmatprep.subr.mxu0 0.0
        %5390 = vmatpush1.msra.mxu0 0.0
        %5391 = vmatprep.subr.mxu0 0.0
        %5392 = vmatpush1.msra.mxu0 0.0
        %5393 = vmatprep.subr.mxu0 0.0
        %5394 = vmatpush1.msra.mxu0 0.0
        %5395 = vmatprep.subr.mxu0 0.0
        %5396 = vmatpush1.msra.mxu0 0.0
        %5397 = vmatprep.subr.mxu0 0.0
        %5398 = vmatpush1.msra.mxu0 0.0
        %5399 = vmatprep.subr.mxu0 0.0
        %5400 = vmatpush1.msra.mxu0 0.0
        %5401 = vmatprep.subr.mxu0 0.0
        %5402 = vmatpush1.msra.mxu0 0.0
        %5403 = vmatprep.subr.mxu0 0.0
        %5404 = vmatpush1.msra.mxu0 0.0
        %5405 = vmatprep.subr.mxu0 0.0
        %5406 = vmatpush1.msra.mxu0 0.0
        %5407 = vmatprep.subr.mxu0 0.0
        %5408 = vmatpush1.msra.mxu0 0.0
        %5409 = vmatprep.subr.mxu0 0.0
        %5410 = vmatpush1.msra.mxu0 0.0
        %5411 = vmatprep.subr.mxu0 0.0
        %5412 = vmatpush1.msra.mxu0 0.0
        %5413 = vmatprep.mubr.f32.mxu0 0.0
        %5414 = vmatmul.mubr.f32.gmra.mrb[0].mxu0 %v5347
        %v5415 = vpop.f32.mrb[0].mxu0
        %v5416 = vadd.f32 0.0, %v5415
        %v5417 = vpop.f32.mrb[0].mxu0
        %5418 = vdwg.mxu0
        %v5419 = vadd.f32 %v5342, %v5416
        %s5420 = scalar_lea.vmem %s16, 208
        %v5421 = vld [vmem:[%s5420] sm:$0xff]
        %v5422 = vld [vmem:[%s5420 + $0x8] sm:$0xff]
        %v5423 = vrot.slane %v4419, 5
        %v5424 = vsel %vm867, %v5423, 0
        %5426 = vmatprep.subr.mxu0 0.0
        %5427 = vmatpush1.msra.mxu0 %v5421
        %5428 = vmatprep.subr.mxu0 0.0
        %5429 = vmatpush1.msra.mxu0 %v5422
        %5430 = vmatprep.subr.mxu0 0.0
        %5431 = vmatpush1.msra.mxu0 0.0
        %5432 = vmatprep.subr.mxu0 0.0
        %5433 = vmatpush1.msra.mxu0 0.0
        %5434 = vmatprep.subr.mxu0 0.0
        %5435 = vmatpush1.msra.mxu0 0.0
        %5436 = vmatprep.subr.mxu0 0.0
        %5437 = vmatpush1.msra.mxu0 0.0
        %5438 = vmatprep.subr.mxu0 0.0
        %5439 = vmatpush1.msra.mxu0 0.0
        %5440 = vmatprep.subr.mxu0 0.0
        %5441 = vmatpush1.msra.mxu0 0.0
        %5442 = vmatprep.subr.mxu0 0.0
        %5443 = vmatpush1.msra.mxu0 0.0
        %5444 = vmatprep.subr.mxu0 0.0
        %5445 = vmatpush1.msra.mxu0 0.0
        %5446 = vmatprep.subr.mxu0 0.0
        %5447 = vmatpush1.msra.mxu0 0.0
        %5448 = vmatprep.subr.mxu0 0.0
        %5449 = vmatpush1.msra.mxu0 0.0
        %5450 = vmatprep.subr.mxu0 0.0
        %5451 = vmatpush1.msra.mxu0 0.0
        %5452 = vmatprep.subr.mxu0 0.0
        %5453 = vmatpush1.msra.mxu0 0.0
        %5454 = vmatprep.subr.mxu0 0.0
        %5455 = vmatpush1.msra.mxu0 0.0
        %5456 = vmatprep.subr.mxu0 0.0
        %5457 = vmatpush1.msra.mxu0 0.0
        %5458 = vmatprep.subr.mxu0 0.0
        %5459 = vmatpush1.msra.mxu0 0.0
        %5460 = vmatprep.subr.mxu0 0.0
        %5461 = vmatpush1.msra.mxu0 0.0
        %5462 = vmatprep.subr.mxu0 0.0
        %5463 = vmatpush1.msra.mxu0 0.0
        %5464 = vmatprep.subr.mxu0 0.0
        %5465 = vmatpush1.msra.mxu0 0.0
        %5466 = vmatprep.subr.mxu0 0.0
        %5467 = vmatpush1.msra.mxu0 0.0
        %5468 = vmatprep.subr.mxu0 0.0
        %5469 = vmatpush1.msra.mxu0 0.0
        %5470 = vmatprep.subr.mxu0 0.0
        %5471 = vmatpush1.msra.mxu0 0.0
        %5472 = vmatprep.subr.mxu0 0.0
        %5473 = vmatpush1.msra.mxu0 0.0
        %5474 = vmatprep.subr.mxu0 0.0
        %5475 = vmatpush1.msra.mxu0 0.0
        %5476 = vmatprep.subr.mxu0 0.0
        %5477 = vmatpush1.msra.mxu0 0.0
        %5478 = vmatprep.subr.mxu0 0.0
        %5479 = vmatpush1.msra.mxu0 0.0
        %5480 = vmatprep.subr.mxu0 0.0
        %5481 = vmatpush1.msra.mxu0 0.0
        %5482 = vmatprep.subr.mxu0 0.0
        %5483 = vmatpush1.msra.mxu0 0.0
        %5484 = vmatprep.subr.mxu0 0.0
        %5485 = vmatpush1.msra.mxu0 0.0
        %5486 = vmatprep.subr.mxu0 0.0
        %5487 = vmatpush1.msra.mxu0 0.0
        %5488 = vmatprep.subr.mxu0 0.0
        %5489 = vmatpush1.msra.mxu0 0.0
        %5490 = vmatprep.mubr.f32.mxu0 0.0
        %5491 = vmatmul.mubr.f32.gmra.mrb[0].mxu0 %v5424
        %v5492 = vpop.f32.mrb[0].mxu0
        %v5493 = vadd.f32 0.0, %v5492
        %v5494 = vpop.f32.mrb[0].mxu0
        %5495 = vdwg.mxu0
        %v5496 = vadd.f32 %v5419, %v5493
        %s5497 = scalar_lea.vmem %s16, 224
        %v5498 = vld [vmem:[%s5497] sm:$0xff]
        %v5499 = vld [vmem:[%s5497 + $0x8] sm:$0xff]
        %v5500 = vrot.slane %v4419, 6
        %v5501 = vsel %vm867, %v5500, 0
        %5503 = vmatprep.subr.mxu0 0.0
        %5504 = vmatpush1.msra.mxu0 %v5498
        %5505 = vmatprep.subr.mxu0 0.0
        %5506 = vmatpush1.msra.mxu0 %v5499
        %5507 = vmatprep.subr.mxu0 0.0
        %5508 = vmatpush1.msra.mxu0 0.0
        %5509 = vmatprep.subr.mxu0 0.0
        %5510 = vmatpush1.msra.mxu0 0.0
        %5511 = vmatprep.subr.mxu0 0.0
        %5512 = vmatpush1.msra.mxu0 0.0
        %5513 = vmatprep.subr.mxu0 0.0
        %5514 = vmatpush1.msra.mxu0 0.0
        %5515 = vmatprep.subr.mxu0 0.0
        %5516 = vmatpush1.msra.mxu0 0.0
        %5517 = vmatprep.subr.mxu0 0.0
        %5518 = vmatpush1.msra.mxu0 0.0
        %5519 = vmatprep.subr.mxu0 0.0
        %5520 = vmatpush1.msra.mxu0 0.0
        %5521 = vmatprep.subr.mxu0 0.0
        %5522 = vmatpush1.msra.mxu0 0.0
        %5523 = vmatprep.subr.mxu0 0.0
        %5524 = vmatpush1.msra.mxu0 0.0
        %5525 = vmatprep.subr.mxu0 0.0
        %5526 = vmatpush1.msra.mxu0 0.0
        %5527 = vmatprep.subr.mxu0 0.0
        %5528 = vmatpush1.msra.mxu0 0.0
        %5529 = vmatprep.subr.mxu0 0.0
        %5530 = vmatpush1.msra.mxu0 0.0
        %5531 = vmatprep.subr.mxu0 0.0
        %5532 = vmatpush1.msra.mxu0 0.0
        %5533 = vmatprep.subr.mxu0 0.0
        %5534 = vmatpush1.msra.mxu0 0.0
        %5535 = vmatprep.subr.mxu0 0.0
        %5536 = vmatpush1.msra.mxu0 0.0
        %5537 = vmatprep.subr.mxu0 0.0
        %5538 = vmatpush1.msra.mxu0 0.0
        %5539 = vmatprep.subr.mxu0 0.0
        %5540 = vmatpush1.msra.mxu0 0.0
        %5541 = vmatprep.subr.mxu0 0.0
        %5542 = vmatpush1.msra.mxu0 0.0
        %5543 = vmatprep.subr.mxu0 0.0
        %5544 = vmatpush1.msra.mxu0 0.0
        %5545 = vmatprep.subr.mxu0 0.0
        %5546 = vmatpush1.msra.mxu0 0.0
        %5547 = vmatprep.subr.mxu0 0.0
        %5548 = vmatpush1.msra.mxu0 0.0
        %5549 = vmatprep.subr.mxu0 0.0
        %5550 = vmatpush1.msra.mxu0 0.0
        %5551 = vmatprep.subr.mxu0 0.0
        %5552 = vmatpush1.msra.mxu0 0.0
        %5553 = vmatprep.subr.mxu0 0.0
        %5554 = vmatpush1.msra.mxu0 0.0
        %5555 = vmatprep.subr.mxu0 0.0
        %5556 = vmatpush1.msra.mxu0 0.0
        %5557 = vmatprep.subr.mxu0 0.0
        %5558 = vmatpush1.msra.mxu0 0.0
        %5559 = vmatprep.subr.mxu0 0.0
        %5560 = vmatpush1.msra.mxu0 0.0
        %5561 = vmatprep.subr.mxu0 0.0
        %5562 = vmatpush1.msra.mxu0 0.0
        %5563 = vmatprep.subr.mxu0 0.0
        %5564 = vmatpush1.msra.mxu0 0.0
        %5565 = vmatprep.subr.mxu0 0.0
        %5566 = vmatpush1.msra.mxu0 0.0
        %5567 = vmatprep.mubr.f32.mxu0 0.0
        %5568 = vmatmul.mubr.f32.gmra.mrb[0].mxu0 %v5501
        %v5569 = vpop.f32.mrb[0].mxu0
        %v5570 = vadd.f32 0.0, %v5569
        %v5571 = vpop.f32.mrb[0].mxu0
        %5572 = vdwg.mxu0
        %v5573 = vadd.f32 %v5496, %v5570
        %s5574 = sld [smem:[#allocation3]]
        %v5575 = vstv %s5574
        %v5576 = vadd.f32 %v5573, %v5575
        %v5577 = vxor.u32 %v5576, 2147483648
        %v5578 = vmul.f32 %v5577, 1.442695
        %v5579 = vpow.pop %v5578
        %v5580 = vadd.f32 %v5579, 1.0
        %v5581 = vrcp.pop %v5580
        %v5582 = vmul.f32 1.0, %v5581
        %v5584 = vsel %vm867, %v5582, 0
        %5586 = vmatprep.subr.mxu0 0.0
        %5587 = vmatpush1.msra.mxu0 %v842
        %5588 = vmatprep.subr.mxu0 0.0
        %5589 = vmatpush1.msra.mxu0 %v843
        %5590 = vmatprep.subr.mxu0 0.0
        %5591 = vmatpush1.msra.mxu0 0.0
        %5592 = vmatprep.subr.mxu0 0.0
        %5593 = vmatpush1.msra.mxu0 0.0
        %5594 = vmatprep.subr.mxu0 0.0
        %5595 = vmatpush1.msra.mxu0 0.0
        %5596 = vmatprep.subr.mxu0 0.0
        %5597 = vmatpush1.msra.mxu0 0.0
        %5598 = vmatprep.subr.mxu0 0.0
        %5599 = vmatpush1.msra.mxu0 0.0
        %5600 = vmatprep.subr.mxu0 0.0
        %5601 = vmatpush1.msra.mxu0 0.0
        %5602 = vmatprep.subr.mxu0 0.0
        %5603 = vmatpush1.msra.mxu0 0.0
        %5604 = vmatprep.subr.mxu0 0.0
        %5605 = vmatpush1.msra.mxu0 0.0
        %5606 = vmatprep.subr.mxu0 0.0
        %5607 = vmatpush1.msra.mxu0 0.0
        %5608 = vmatprep.subr.mxu0 0.0
        %5609 = vmatpush1.msra.mxu0 0.0
        %5610 = vmatprep.subr.mxu0 0.0
        %5611 = vmatpush1.msra.mxu0 0.0
        %5612 = vmatprep.subr.mxu0 0.0
        %5613 = vmatpush1.msra.mxu0 0.0
        %5614 = vmatprep.subr.mxu0 0.0
        %5615 = vmatpush1.msra.mxu0 0.0
        %5616 = vmatprep.subr.mxu0 0.0
        %5617 = vmatpush1.msra.mxu0 0.0
        %5618 = vmatprep.subr.mxu0 0.0
        %5619 = vmatpush1.msra.mxu0 0.0
        %5620 = vmatprep.subr.mxu0 0.0
        %5621 = vmatpush1.msra.mxu0 0.0
        %5622 = vmatprep.subr.mxu0 0.0
        %5623 = vmatpush1.msra.mxu0 0.0
        %5624 = vmatprep.subr.mxu0 0.0
        %5625 = vmatpush1.msra.mxu0 0.0
        %5626 = vmatprep.subr.mxu0 0.0
        %5627 = vmatpush1.msra.mxu0 0.0
        %5628 = vmatprep.subr.mxu0 0.0
        %5629 = vmatpush1.msra.mxu0 0.0
        %5630 = vmatprep.subr.mxu0 0.0
        %5631 = vmatpush1.msra.mxu0 0.0
        %5632 = vmatprep.subr.mxu0 0.0
        %5633 = vmatpush1.msra.mxu0 0.0
        %5634 = vmatprep.subr.mxu0 0.0
        %5635 = vmatpush1.msra.mxu0 0.0
        %5636 = vmatprep.subr.mxu0 0.0
        %5637 = vmatpush1.msra.mxu0 0.0
        %5638 = vmatprep.subr.mxu0 0.0
        %5639 = vmatpush1.msra.mxu0 0.0
        %5640 = vmatprep.subr.mxu0 0.0
        %5641 = vmatpush1.msra.mxu0 0.0
        %5642 = vmatprep.subr.mxu0 0.0
        %5643 = vmatpush1.msra.mxu0 0.0
        %5644 = vmatprep.subr.mxu0 0.0
        %5645 = vmatpush1.msra.mxu0 0.0
        %5646 = vmatprep.subr.mxu0 0.0
        %5647 = vmatpush1.msra.mxu0 0.0
        %5648 = vmatprep.subr.mxu0 0.0
        %5649 = vmatpush1.msra.mxu0 0.0
        %5650 = vmatprep.mubr.f32.mxu0 0.0
        %5651 = vmatmul.mubr.f32.gmra.mrb[0].mxu0 %v5584
        %v5652 = vpop.f32.mrb[0].mxu0
        %v5653 = vadd.f32 0.0, %v5652
        %v5654 = vpop.f32.mrb[0].mxu0
        %5655 = vdwg.mxu0
        %v5656 = vlaneseq
        %v5657 = vshrl.u32 %v5656, 7
        %v5658 = vsub.s32 0, %v5657
        %v5659 = vrot.slane %v5653, %v5658
        %v5660 = vmul.f32 %v4228, %v5659
        %v5661 = vmul.f32 %v4229, %v5659
        %v5662 = vadd.f32 %v5660, %v4228
        %v5663 = vadd.f32 %v5661, %v4229
        %v5664 = vld [vmem:[%s12] sm:$0xff]
        %v5665 = vld [vmem:[%s12 + $0x8] sm:$0xff]
        %v5666 = vld [vmem:[%s12 + $0x10] sm:$0xff]
        %v5667 = vld [vmem:[%s12 + $0x18] sm:$0xff]
        %v5668 = vld [vmem:[%s12 + $0x20] sm:$0xff]
        %v5669 = vld [vmem:[%s12 + $0x28] sm:$0xff]
        %v5670 = vld [vmem:[%s12 + $0x30] sm:$0xff]
        %v5671 = vld [vmem:[%s12 + $0x38] sm:$0xff]
        %v5672 = vld [vmem:[%s12 + $0x40] sm:$0xff]
        %v5673 = vld [vmem:[%s12 + $0x48] sm:$0xff]
        %v5674 = vld [vmem:[%s12 + $0x50] sm:$0xff]
        %v5675 = vld [vmem:[%s12 + $0x58] sm:$0xff]
        %v5676 = vld [vmem:[%s12 + $0x60] sm:$0xff]
        %v5677 = vld [vmem:[%s12 + $0x68] sm:$0xff]
        %v5678 = vld [vmem:[%s12 + $0x70] sm:$0xff]
        %v5679 = vld [vmem:[%s12 + $0x78] sm:$0xff]
        %5680 = vmatprep.subr.mxu0 0.0
        %5681 = vmatpush1.msra.mxu0 %v5664
        %5682 = vmatprep.subr.mxu0 0.0
        %5683 = vmatpush1.msra.mxu0 %v5665
        %5684 = vmatprep.subr.mxu0 0.0
        %5685 = vmatpush1.msra.mxu0 %v5666
        %5686 = vmatprep.subr.mxu0 0.0
        %5687 = vmatpush1.msra.mxu0 %v5667
        %5688 = vmatprep.subr.mxu0 0.0
        %5689 = vmatpush1.msra.mxu0 %v5668
        %5690 = vmatprep.subr.mxu0 0.0
        %5691 = vmatpush1.msra.mxu0 %v5669
        %5692 = vmatprep.subr.mxu0 0.0
        %5693 = vmatpush1.msra.mxu0 %v5670
        %5694 = vmatprep.subr.mxu0 0.0
        %5695 = vmatpush1.msra.mxu0 %v5671
        %5696 = vmatprep.subr.mxu0 0.0
        %5697 = vmatpush1.msra.mxu0 %v5672
        %5698 = vmatprep.subr.mxu0 0.0
        %5699 = vmatpush1.msra.mxu0 %v5673
        %5700 = vmatprep.subr.mxu0 0.0
        %5701 = vmatpush1.msra.mxu0 %v5674
        %5702 = vmatprep.subr.mxu0 0.0
        %5703 = vmatpush1.msra.mxu0 %v5675
        %5704 = vmatprep.subr.mxu0 0.0
        %5705 = vmatpush1.msra.mxu0 %v5676
        %5706 = vmatprep.subr.mxu0 0.0
        %5707 = vmatpush1.msra.mxu0 %v5677
        %5708 = vmatprep.subr.mxu0 0.0
        %5709 = vmatpush1.msra.mxu0 %v5678
        %5710 = vmatprep.subr.mxu0 0.0
        %5711 = vmatpush1.msra.mxu0 %v5679
        %5712 = vmatprep.subr.mxu0 0.0
        %5713 = vmatpush1.msra.mxu0 0.0
        %5714 = vmatprep.subr.mxu0 0.0
        %5715 = vmatpush1.msra.mxu0 0.0
        %5716 = vmatprep.subr.mxu0 0.0
        %5717 = vmatpush1.msra.mxu0 0.0
        %5718 = vmatprep.subr.mxu0 0.0
        %5719 = vmatpush1.msra.mxu0 0.0
        %5720 = vmatprep.subr.mxu0 0.0
        %5721 = vmatpush1.msra.mxu0 0.0
        %5722 = vmatprep.subr.mxu0 0.0
        %5723 = vmatpush1.msra.mxu0 0.0
        %5724 = vmatprep.subr.mxu0 0.0
        %5725 = vmatpush1.msra.mxu0 0.0
        %5726 = vmatprep.subr.mxu0 0.0
        %5727 = vmatpush1.msra.mxu0 0.0
        %5728 = vmatprep.subr.mxu0 0.0
        %5729 = vmatpush1.msra.mxu0 0.0
        %5730 = vmatprep.subr.mxu0 0.0
        %5731 = vmatpush1.msra.mxu0 0.0
        %5732 = vmatprep.subr.mxu0 0.0
        %5733 = vmatpush1.msra.mxu0 0.0
        %5734 = vmatprep.subr.mxu0 0.0
        %5735 = vmatpush1.msra.mxu0 0.0
        %5736 = vmatprep.subr.mxu0 0.0
        %5737 = vmatpush1.msra.mxu0 0.0
        %5738 = vmatprep.subr.mxu0 0.0
        %5739 = vmatpush1.msra.mxu0 0.0
        %5740 = vmatprep.subr.mxu0 0.0
        %5741 = vmatpush1.msra.mxu0 0.0
        %5742 = vmatprep.subr.mxu0 0.0
        %5743 = vmatpush1.msra.mxu0 0.0
        %5744 = vmatprep.mubr.f32.mxu0 0.0
        %5745 = vmatmul.mubr.f32.gmra.mrb[0].mxu0 %v5662
        %v5746 = vpop.f32.mrb[0].mxu0
        %v5747 = vadd.f32 0.0, %v5746
        %v5748 = vpop.f32.mrb[0].mxu0
        %5749 = vmatprep.mubr.f32.mxu0 0.0
        %5750 = vmatmul.mubr.f32.gmra.mrb[0].mxu0 %v5663
        %v5751 = vpop.f32.mrb[0].mxu0
        %v5752 = vadd.f32 0.0, %v5751
        %v5753 = vpop.f32.mrb[0].mxu0
        %5754 = vdwg.mxu0
        %v5755 = vmul.f32 %v5747, 0.0625
        %v5756 = vmul.f32 %v5752, 0.0625
        %v5757 = vld [vmem:[%s17] sm:$0xff]
        %v5758 = vld [vmem:[%s17 + $0x8] sm:$0xff]
        %5759 = vxpose.xlu0.b32.start [1/16] %v5757, 128
        %5760 = vxpose.xlu0.b32.cont [2/16] %v5758, 128
        %5761 = vxpose.xlu0.b32.cont [3/16] 0.0, 128
        %5762 = vxpose.xlu0.b32.cont [4/16] 0.0, 128
        %5763 = vxpose.xlu0.b32.cont [5/16] 0.0, 128
        %5764 = vxpose.xlu0.b32.cont [6/16] 0.0, 128
        %5765 = vxpose.xlu0.b32.cont [7/16] 0.0, 128
        %5766 = vxpose.xlu0.b32.cont [8/16] 0.0, 128
        %5767 = vxpose.xlu0.b32.cont [9/16] 0.0, 128
        %5768 = vxpose.xlu0.b32.cont [10/16] 0.0, 128
        %5769 = vxpose.xlu0.b32.cont [11/16] 0.0, 128
        %5770 = vxpose.xlu0.b32.cont [12/16] 0.0, 128
        %5771 = vxpose.xlu0.b32.cont [13/16] 0.0, 128
        %5772 = vxpose.xlu0.b32.cont [14/16] 0.0, 128
        %5773 = vxpose.xlu0.b32.cont [15/16] 0.0, 128
        %5774 = vxpose.xlu0.b32.end [16/16] 0.0, 128
        %v5775 = vpop.trf.xlu0
        %v5776 = vpop.trf.xlu0
        %v5777 = vpop.trf.xlu0
        %v5778 = vpop.trf.xlu0
        %v5779 = vpop.trf.xlu0
        %v5780 = vpop.trf.xlu0
        %v5781 = vpop.trf.xlu0
        %v5782 = vpop.trf.xlu0
        %v5783 = vpop.trf.xlu0
        %v5784 = vpop.trf.xlu0
        %v5785 = vpop.trf.xlu0
        %v5786 = vpop.trf.xlu0
        %v5787 = vpop.trf.xlu0
        %v5788 = vpop.trf.xlu0
        %v5789 = vpop.trf.xlu0
        %v5790 = vpop.trf.xlu0
        %v5792 = vsel %vm867, %v5775, 0
        %v5795 = vsel %vm867, %v5776, 0
        %5797 = vmatprep.subr.mxu0 0.0
        %5798 = vmatpush1.msra.mxu0 %v5755
        %5799 = vmatprep.subr.mxu0 0.0
        %5800 = vmatpush1.msra.mxu0 %v5756
        %5801 = vmatprep.subr.mxu0 0.0
        %5802 = vmatpush1.msra.mxu0 0.0
        %5803 = vmatprep.subr.mxu0 0.0
        %5804 = vmatpush1.msra.mxu0 0.0
        %5805 = vmatprep.subr.mxu0 0.0
        %5806 = vmatpush1.msra.mxu0 0.0
        %5807 = vmatprep.subr.mxu0 0.0
        %5808 = vmatpush1.msra.mxu0 0.0
        %5809 = vmatprep.subr.mxu0 0.0
        %5810 = vmatpush1.msra.mxu0 0.0
        %5811 = vmatprep.subr.mxu0 0.0
        %5812 = vmatpush1.msra.mxu0 0.0
        %5813 = vmatprep.subr.mxu0 0.0
        %5814 = vmatpush1.msra.mxu0 0.0
        %5815 = vmatprep.subr.mxu0 0.0
        %5816 = vmatpush1.msra.mxu0 0.0
        %5817 = vmatprep.subr.mxu0 0.0
        %5818 = vmatpush1.msra.mxu0 0.0
        %5819 = vmatprep.subr.mxu0 0.0
        %5820 = vmatpush1.msra.mxu0 0.0
        %5821 = vmatprep.subr.mxu0 0.0
        %5822 = vmatpush1.msra.mxu0 0.0
        %5823 = vmatprep.subr.mxu0 0.0
        %5824 = vmatpush1.msra.mxu0 0.0
        %5825 = vmatprep.subr.mxu0 0.0
        %5826 = vmatpush1.msra.mxu0 0.0
        %5827 = vmatprep.subr.mxu0 0.0
        %5828 = vmatpush1.msra.mxu0 0.0
        %5829 = vmatprep.subr.mxu0 0.0
        %5830 = vmatpush1.msra.mxu0 0.0
        %5831 = vmatprep.subr.mxu0 0.0
        %5832 = vmatpush1.msra.mxu0 0.0
        %5833 = vmatprep.subr.mxu0 0.0
        %5834 = vmatpush1.msra.mxu0 0.0
        %5835 = vmatprep.subr.mxu0 0.0
        %5836 = vmatpush1.msra.mxu0 0.0
        %5837 = vmatprep.subr.mxu0 0.0
        %5838 = vmatpush1.msra.mxu0 0.0
        %5839 = vmatprep.subr.mxu0 0.0
        %5840 = vmatpush1.msra.mxu0 0.0
        %5841 = vmatprep.subr.mxu0 0.0
        %5842 = vmatpush1.msra.mxu0 0.0
        %5843 = vmatprep.subr.mxu0 0.0
        %5844 = vmatpush1.msra.mxu0 0.0
        %5845 = vmatprep.subr.mxu0 0.0
        %5846 = vmatpush1.msra.mxu0 0.0
        %5847 = vmatprep.subr.mxu0 0.0
        %5848 = vmatpush1.msra.mxu0 0.0
        %5849 = vmatprep.subr.mxu0 0.0
        %5850 = vmatpush1.msra.mxu0 0.0
        %5851 = vmatprep.subr.mxu0 0.0
        %5852 = vmatpush1.msra.mxu0 0.0
        %5853 = vmatprep.subr.mxu0 0.0
        %5854 = vmatpush1.msra.mxu0 0.0
        %5855 = vmatprep.subr.mxu0 0.0
        %5856 = vmatpush1.msra.mxu0 0.0
        %5857 = vmatprep.subr.mxu0 0.0
        %5858 = vmatpush1.msra.mxu0 0.0
        %5859 = vmatprep.subr.mxu0 0.0
        %5860 = vmatpush1.msra.mxu0 0.0
        %5861 = vmatprep.mubr.f32.mxu0 0.0
        %5862 = vmatmul.mubr.f32.gmra.mrb[0].mxu0 %v5792
        %v5863 = vpop.f32.mrb[0].mxu0
        %v5864 = vadd.f32 0.0, %v5863
        %v5865 = vpop.f32.mrb[0].mxu0
        %5866 = vmatprep.mubr.f32.mxu0 0.0
        %5867 = vmatmul.mubr.f32.gmra.mrb[0].mxu0 %v5795
        %v5868 = vpop.f32.mrb[0].mxu0
        %v5869 = vadd.f32 0.0, %v5868
        %v5870 = vpop.f32.mrb[0].mxu0
        %5871 = vdwg.mxu0
        %v5872 = vld [vmem:[%s18] sm:$0xff]
        %s5873 = scalar_lea.vmem %s18, 8
        %v5874 = vld [vmem:[%s5873] sm:$0xff]
        %v5876 = vrot.slane %v5864, 1
        %vm5877 = vcmask 64512
        %v5878 = vsel %vm5877, %v5876, 0
        %5880 = vmatprep.subr.mxu0 0.0
        %5881 = vmatpush1.msra.mxu0 %v5874
        %5882 = vmatprep.subr.mxu0 0.0
        %5883 = vmatpush1.msra.mxu0 0.0
        %5884 = vmatprep.subr.mxu0 0.0
        %5885 = vmatpush1.msra.mxu0 0.0
        %5886 = vmatprep.subr.mxu0 0.0
        %5887 = vmatpush1.msra.mxu0 0.0
        %5888 = vmatprep.subr.mxu0 0.0
        %5889 = vmatpush1.msra.mxu0 0.0
        %5890 = vmatprep.subr.mxu0 0.0
        %5891 = vmatpush1.msra.mxu0 0.0
        %5892 = vmatprep.subr.mxu0 0.0
        %5893 = vmatpush1.msra.mxu0 0.0
        %5894 = vmatprep.subr.mxu0 0.0
        %5895 = vmatpush1.msra.mxu0 0.0
        %5896 = vmatprep.subr.mxu0 0.0
        %5897 = vmatpush1.msra.mxu0 0.0
        %5898 = vmatprep.subr.mxu0 0.0
        %5899 = vmatpush1.msra.mxu0 0.0
        %5900 = vmatprep.subr.mxu0 0.0
        %5901 = vmatpush1.msra.mxu0 0.0
        %5902 = vmatprep.subr.mxu0 0.0
        %5903 = vmatpush1.msra.mxu0 0.0
        %5904 = vmatprep.subr.mxu0 0.0
        %5905 = vmatpush1.msra.mxu0 0.0
        %5906 = vmatprep.subr.mxu0 0.0
        %5907 = vmatpush1.msra.mxu0 0.0
        %5908 = vmatprep.subr.mxu0 0.0
        %5909 = vmatpush1.msra.mxu0 0.0
        %5910 = vmatprep.subr.mxu0 0.0
        %5911 = vmatpush1.msra.mxu0 0.0
        %5912 = vmatprep.subr.mxu0 0.0
        %5913 = vmatpush1.msra.mxu0 0.0
        %5914 = vmatprep.subr.mxu0 0.0
        %5915 = vmatpush1.msra.mxu0 0.0
        %5916 = vmatprep.subr.mxu0 0.0
        %5917 = vmatpush1.msra.mxu0 0.0
        %5918 = vmatprep.subr.mxu0 0.0
        %5919 = vmatpush1.msra.mxu0 0.0
        %5920 = vmatprep.subr.mxu0 0.0
        %5921 = vmatpush1.msra.mxu0 0.0
        %5922 = vmatprep.subr.mxu0 0.0
        %5923 = vmatpush1.msra.mxu0 0.0
        %5924 = vmatprep.subr.mxu0 0.0
        %5925 = vmatpush1.msra.mxu0 0.0
        %5926 = vmatprep.subr.mxu0 0.0
        %5927 = vmatpush1.msra.mxu0 0.0
        %5928 = vmatprep.subr.mxu0 0.0
        %5929 = vmatpush1.msra.mxu0 0.0
        %5930 = vmatprep.subr.mxu0 0.0
        %5931 = vmatpush1.msra.mxu0 0.0
        %5932 = vmatprep.subr.mxu0 0.0
        %5933 = vmatpush1.msra.mxu0 0.0
        %5934 = vmatprep.subr.mxu0 0.0
        %5935 = vmatpush1.msra.mxu0 0.0
        %5936 = vmatprep.subr.mxu0 0.0
        %5937 = vmatpush1.msra.mxu0 0.0
        %5938 = vmatprep.subr.mxu0 0.0
        %5939 = vmatpush1.msra.mxu0 0.0
        %5940 = vmatprep.subr.mxu0 0.0
        %5941 = vmatpush1.msra.mxu0 0.0
        %5942 = vmatprep.subr.mxu0 0.0
        %5943 = vmatpush1.msra.mxu0 0.0
        %5944 = vmatprep.mubr.f32.mxu0 0.0
        %5945 = vmatmul.mubr.f32.gmra.mrb[0].mxu0 %v5878
        %v5946 = vpop.f32.mrb[0].mxu0
        %v5947 = vadd.f32 0.0, %v5946
        %v5948 = vpop.f32.mrb[0].mxu0
        %5949 = vdwg.mxu0
        %v5950 = vsel %vm5877, %v5864, 0
        %5952 = vmatprep.subr.mxu0 0.0
        %5953 = vmatpush1.msra.mxu0 %v5872
        %5954 = vmatprep.subr.mxu0 0.0
        %5955 = vmatpush1.msra.mxu0 0.0
        %5956 = vmatprep.subr.mxu0 0.0
        %5957 = vmatpush1.msra.mxu0 0.0
        %5958 = vmatprep.subr.mxu0 0.0
        %5959 = vmatpush1.msra.mxu0 0.0
        %5960 = vmatprep.subr.mxu0 0.0
        %5961 = vmatpush1.msra.mxu0 0.0
        %5962 = vmatprep.subr.mxu0 0.0
        %5963 = vmatpush1.msra.mxu0 0.0
        %5964 = vmatprep.subr.mxu0 0.0
        %5965 = vmatpush1.msra.mxu0 0.0
        %5966 = vmatprep.subr.mxu0 0.0
        %5967 = vmatpush1.msra.mxu0 0.0
        %5968 = vmatprep.subr.mxu0 0.0
        %5969 = vmatpush1.msra.mxu0 0.0
        %5970 = vmatprep.subr.mxu0 0.0
        %5971 = vmatpush1.msra.mxu0 0.0
        %5972 = vmatprep.subr.mxu0 0.0
        %5973 = vmatpush1.msra.mxu0 0.0
        %5974 = vmatprep.subr.mxu0 0.0
        %5975 = vmatpush1.msra.mxu0 0.0
        %5976 = vmatprep.subr.mxu0 0.0
        %5977 = vmatpush1.msra.mxu0 0.0
        %5978 = vmatprep.subr.mxu0 0.0
        %5979 = vmatpush1.msra.mxu0 0.0
        %5980 = vmatprep.subr.mxu0 0.0
        %5981 = vmatpush1.msra.mxu0 0.0
        %5982 = vmatprep.subr.mxu0 0.0
        %5983 = vmatpush1.msra.mxu0 0.0
        %5984 = vmatprep.subr.mxu0 0.0
        %5985 = vmatpush1.msra.mxu0 0.0
        %5986 = vmatprep.subr.mxu0 0.0
        %5987 = vmatpush1.msra.mxu0 0.0
        %5988 = vmatprep.subr.mxu0 0.0
        %5989 = vmatpush1.msra.mxu0 0.0
        %5990 = vmatprep.subr.mxu0 0.0
        %5991 = vmatpush1.msra.mxu0 0.0
        %5992 = vmatprep.subr.mxu0 0.0
        %5993 = vmatpush1.msra.mxu0 0.0
        %5994 = vmatprep.subr.mxu0 0.0
        %5995 = vmatpush1.msra.mxu0 0.0
        %5996 = vmatprep.subr.mxu0 0.0
        %5997 = vmatpush1.msra.mxu0 0.0
        %5998 = vmatprep.subr.mxu0 0.0
        %5999 = vmatpush1.msra.mxu0 0.0
        %6000 = vmatprep.subr.mxu0 0.0
        %6001 = vmatpush1.msra.mxu0 0.0
        %6002 = vmatprep.subr.mxu0 0.0
        %6003 = vmatpush1.msra.mxu0 0.0
        %6004 = vmatprep.subr.mxu0 0.0
        %6005 = vmatpush1.msra.mxu0 0.0
        %6006 = vmatprep.subr.mxu0 0.0
        %6007 = vmatpush1.msra.mxu0 0.0
        %6008 = vmatprep.subr.mxu0 0.0
        %6009 = vmatpush1.msra.mxu0 0.0
        %6010 = vmatprep.subr.mxu0 0.0
        %6011 = vmatpush1.msra.mxu0 0.0
        %6012 = vmatprep.subr.mxu0 0.0
        %6013 = vmatpush1.msra.mxu0 0.0
        %6014 = vmatprep.subr.mxu0 0.0
        %6015 = vmatpush1.msra.mxu0 0.0
        %6016 = vmatprep.mubr.f32.mxu0 0.0
        %6017 = vmatmul.mubr.f32.gmra.mrb[0].mxu0 %v5950
        %v6018 = vpop.f32.mrb[0].mxu0
        %v6019 = vadd.f32 %v5947, %v6018
        %v6020 = vpop.f32.mrb[0].mxu0
        %6021 = vdwg.mxu0
        %s6022 = scalar_lea.vmem %s18, 16
        %v6023 = vld [vmem:[%s6022] sm:$0xff]
        %v6024 = vrot.slane %v5864, 2
        %v6025 = vsel %vm5877, %v6024, 0
        %6027 = vmatprep.subr.mxu0 0.0
        %6028 = vmatpush1.msra.mxu0 %v6023
        %6029 = vmatprep.subr.mxu0 0.0
        %6030 = vmatpush1.msra.mxu0 0.0
        %6031 = vmatprep.subr.mxu0 0.0
        %6032 = vmatpush1.msra.mxu0 0.0
        %6033 = vmatprep.subr.mxu0 0.0
        %6034 = vmatpush1.msra.mxu0 0.0
        %6035 = vmatprep.subr.mxu0 0.0
        %6036 = vmatpush1.msra.mxu0 0.0
        %6037 = vmatprep.subr.mxu0 0.0
        %6038 = vmatpush1.msra.mxu0 0.0
        %6039 = vmatprep.subr.mxu0 0.0
        %6040 = vmatpush1.msra.mxu0 0.0
        %6041 = vmatprep.subr.mxu0 0.0
        %6042 = vmatpush1.msra.mxu0 0.0
        %6043 = vmatprep.subr.mxu0 0.0
        %6044 = vmatpush1.msra.mxu0 0.0
        %6045 = vmatprep.subr.mxu0 0.0
        %6046 = vmatpush1.msra.mxu0 0.0
        %6047 = vmatprep.subr.mxu0 0.0
        %6048 = vmatpush1.msra.mxu0 0.0
        %6049 = vmatprep.subr.mxu0 0.0
        %6050 = vmatpush1.msra.mxu0 0.0
        %6051 = vmatprep.subr.mxu0 0.0
        %6052 = vmatpush1.msra.mxu0 0.0
        %6053 = vmatprep.subr.mxu0 0.0
        %6054 = vmatpush1.msra.mxu0 0.0
        %6055 = vmatprep.subr.mxu0 0.0
        %6056 = vmatpush1.msra.mxu0 0.0
        %6057 = vmatprep.subr.mxu0 0.0
        %6058 = vmatpush1.msra.mxu0 0.0
        %6059 = vmatprep.subr.mxu0 0.0
        %6060 = vmatpush1.msra.mxu0 0.0
        %6061 = vmatprep.subr.mxu0 0.0
        %6062 = vmatpush1.msra.mxu0 0.0
        %6063 = vmatprep.subr.mxu0 0.0
        %6064 = vmatpush1.msra.mxu0 0.0
        %6065 = vmatprep.subr.mxu0 0.0
        %6066 = vmatpush1.msra.mxu0 0.0
        %6067 = vmatprep.subr.mxu0 0.0
        %6068 = vmatpush1.msra.mxu0 0.0
        %6069 = vmatprep.subr.mxu0 0.0
        %6070 = vmatpush1.msra.mxu0 0.0
        %6071 = vmatprep.subr.mxu0 0.0
        %6072 = vmatpush1.msra.mxu0 0.0
        %6073 = vmatprep.subr.mxu0 0.0
        %6074 = vmatpush1.msra.mxu0 0.0
        %6075 = vmatprep.subr.mxu0 0.0
        %6076 = vmatpush1.msra.mxu0 0.0
        %6077 = vmatprep.subr.mxu0 0.0
        %6078 = vmatpush1.msra.mxu0 0.0
        %6079 = vmatprep.subr.mxu0 0.0
        %6080 = vmatpush1.msra.mxu0 0.0
        %6081 = vmatprep.subr.mxu0 0.0
        %6082 = vmatpush1.msra.mxu0 0.0
        %6083 = vmatprep.subr.mxu0 0.0
        %6084 = vmatpush1.msra.mxu0 0.0
        %6085 = vmatprep.subr.mxu0 0.0
        %6086 = vmatpush1.msra.mxu0 0.0
        %6087 = vmatprep.subr.mxu0 0.0
        %6088 = vmatpush1.msra.mxu0 0.0
        %6089 = vmatprep.subr.mxu0 0.0
        %6090 = vmatpush1.msra.mxu0 0.0
        %6091 = vmatprep.mubr.f32.mxu0 0.0
        %6092 = vmatmul.mubr.f32.gmra.mrb[0].mxu0 %v6025
        %v6093 = vpop.f32.mrb[0].mxu0
        %v6094 = vadd.f32 0.0, %v6093
        %v6095 = vpop.f32.mrb[0].mxu0
        %6096 = vdwg.mxu0
        %v6097 = vadd.f32 %v6019, %v6094
        %s6098 = scalar_lea.vmem %s18, 24
        %v6099 = vld [vmem:[%s6098] sm:$0xff]
        %v6100 = vrot.slane %v5864, 3
        %v6101 = vsel %vm5877, %v6100, 0
        %6103 = vmatprep.subr.mxu0 0.0
        %6104 = vmatpush1.msra.mxu0 %v6099
        %6105 = vmatprep.subr.mxu0 0.0
        %6106 = vmatpush1.msra.mxu0 0.0
        %6107 = vmatprep.subr.mxu0 0.0
        %6108 = vmatpush1.msra.mxu0 0.0
        %6109 = vmatprep.subr.mxu0 0.0
        %6110 = vmatpush1.msra.mxu0 0.0
        %6111 = vmatprep.subr.mxu0 0.0
        %6112 = vmatpush1.msra.mxu0 0.0
        %6113 = vmatprep.subr.mxu0 0.0
        %6114 = vmatpush1.msra.mxu0 0.0
        %6115 = vmatprep.subr.mxu0 0.0
        %6116 = vmatpush1.msra.mxu0 0.0
        %6117 = vmatprep.subr.mxu0 0.0
        %6118 = vmatpush1.msra.mxu0 0.0
        %6119 = vmatprep.subr.mxu0 0.0
        %6120 = vmatpush1.msra.mxu0 0.0
        %6121 = vmatprep.subr.mxu0 0.0
        %6122 = vmatpush1.msra.mxu0 0.0
        %6123 = vmatprep.subr.mxu0 0.0
        %6124 = vmatpush1.msra.mxu0 0.0
        %6125 = vmatprep.subr.mxu0 0.0
        %6126 = vmatpush1.msra.mxu0 0.0
        %6127 = vmatprep.subr.mxu0 0.0
        %6128 = vmatpush1.msra.mxu0 0.0
        %6129 = vmatprep.subr.mxu0 0.0
        %6130 = vmatpush1.msra.mxu0 0.0
        %6131 = vmatprep.subr.mxu0 0.0
        %6132 = vmatpush1.msra.mxu0 0.0
        %6133 = vmatprep.subr.mxu0 0.0
        %6134 = vmatpush1.msra.mxu0 0.0
        %6135 = vmatprep.subr.mxu0 0.0
        %6136 = vmatpush1.msra.mxu0 0.0
        %6137 = vmatprep.subr.mxu0 0.0
        %6138 = vmatpush1.msra.mxu0 0.0
        %6139 = vmatprep.subr.mxu0 0.0
        %6140 = vmatpush1.msra.mxu0 0.0
        %6141 = vmatprep.subr.mxu0 0.0
        %6142 = vmatpush1.msra.mxu0 0.0
        %6143 = vmatprep.subr.mxu0 0.0
        %6144 = vmatpush1.msra.mxu0 0.0
        %6145 = vmatprep.subr.mxu0 0.0
        %6146 = vmatpush1.msra.mxu0 0.0
        %6147 = vmatprep.subr.mxu0 0.0
        %6148 = vmatpush1.msra.mxu0 0.0
        %6149 = vmatprep.subr.mxu0 0.0
        %6150 = vmatpush1.msra.mxu0 0.0
        %6151 = vmatprep.subr.mxu0 0.0
        %6152 = vmatpush1.msra.mxu0 0.0
        %6153 = vmatprep.subr.mxu0 0.0
        %6154 = vmatpush1.msra.mxu0 0.0
        %6155 = vmatprep.subr.mxu0 0.0
        %6156 = vmatpush1.msra.mxu0 0.0
        %6157 = vmatprep.subr.mxu0 0.0
        %6158 = vmatpush1.msra.mxu0 0.0
        %6159 = vmatprep.subr.mxu0 0.0
        %6160 = vmatpush1.msra.mxu0 0.0
        %6161 = vmatprep.subr.mxu0 0.0
        %6162 = vmatpush1.msra.mxu0 0.0
        %6163 = vmatprep.subr.mxu0 0.0
        %6164 = vmatpush1.msra.mxu0 0.0
        %6165 = vmatprep.subr.mxu0 0.0
        %6166 = vmatpush1.msra.mxu0 0.0
        %6167 = vmatprep.mubr.f32.mxu0 0.0
        %6168 = vmatmul.mubr.f32.gmra.mrb[0].mxu0 %v6101
        %v6169 = vpop.f32.mrb[0].mxu0
        %v6170 = vadd.f32 0.0, %v6169
        %v6171 = vpop.f32.mrb[0].mxu0
        %6172 = vdwg.mxu0
        %v6173 = vadd.f32 %v6097, %v6170
        %s6174 = scalar_lea.vmem %s18, 32
        %v6175 = vld [vmem:[%s6174] sm:$0xff]
        %v6176 = vrot.slane %v5864, 4
        %v6177 = vsel %vm5877, %v6176, 0
        %6179 = vmatprep.subr.mxu0 0.0
        %6180 = vmatpush1.msra.mxu0 %v6175
        %6181 = vmatprep.subr.mxu0 0.0
        %6182 = vmatpush1.msra.mxu0 0.0
        %6183 = vmatprep.subr.mxu0 0.0
        %6184 = vmatpush1.msra.mxu0 0.0
        %6185 = vmatprep.subr.mxu0 0.0
        %6186 = vmatpush1.msra.mxu0 0.0
        %6187 = vmatprep.subr.mxu0 0.0
        %6188 = vmatpush1.msra.mxu0 0.0
        %6189 = vmatprep.subr.mxu0 0.0
        %6190 = vmatpush1.msra.mxu0 0.0
        %6191 = vmatprep.subr.mxu0 0.0
        %6192 = vmatpush1.msra.mxu0 0.0
        %6193 = vmatprep.subr.mxu0 0.0
        %6194 = vmatpush1.msra.mxu0 0.0
        %6195 = vmatprep.subr.mxu0 0.0
        %6196 = vmatpush1.msra.mxu0 0.0
        %6197 = vmatprep.subr.mxu0 0.0
        %6198 = vmatpush1.msra.mxu0 0.0
        %6199 = vmatprep.subr.mxu0 0.0
        %6200 = vmatpush1.msra.mxu0 0.0
        %6201 = vmatprep.subr.mxu0 0.0
        %6202 = vmatpush1.msra.mxu0 0.0
        %6203 = vmatprep.subr.mxu0 0.0
        %6204 = vmatpush1.msra.mxu0 0.0
        %6205 = vmatprep.subr.mxu0 0.0
        %6206 = vmatpush1.msra.mxu0 0.0
        %6207 = vmatprep.subr.mxu0 0.0
        %6208 = vmatpush1.msra.mxu0 0.0
        %6209 = vmatprep.subr.mxu0 0.0
        %6210 = vmatpush1.msra.mxu0 0.0
        %6211 = vmatprep.subr.mxu0 0.0
        %6212 = vmatpush1.msra.mxu0 0.0
        %6213 = vmatprep.subr.mxu0 0.0
        %6214 = vmatpush1.msra.mxu0 0.0
        %6215 = vmatprep.subr.mxu0 0.0
        %6216 = vmatpush1.msra.mxu0 0.0
        %6217 = vmatprep.subr.mxu0 0.0
        %6218 = vmatpush1.msra.mxu0 0.0
        %6219 = vmatprep.subr.mxu0 0.0
        %6220 = vmatpush1.msra.mxu0 0.0
        %6221 = vmatprep.subr.mxu0 0.0
        %6222 = vmatpush1.msra.mxu0 0.0
        %6223 = vmatprep.subr.mxu0 0.0
        %6224 = vmatpush1.msra.mxu0 0.0
        %6225 = vmatprep.subr.mxu0 0.0
        %6226 = vmatpush1.msra.mxu0 0.0
        %6227 = vmatprep.subr.mxu0 0.0
        %6228 = vmatpush1.msra.mxu0 0.0
        %6229 = vmatprep.subr.mxu0 0.0
        %6230 = vmatpush1.msra.mxu0 0.0
        %6231 = vmatprep.subr.mxu0 0.0
        %6232 = vmatpush1.msra.mxu0 0.0
        %6233 = vmatprep.subr.mxu0 0.0
        %6234 = vmatpush1.msra.mxu0 0.0
        %6235 = vmatprep.subr.mxu0 0.0
        %6236 = vmatpush1.msra.mxu0 0.0
        %6237 = vmatprep.subr.mxu0 0.0
        %6238 = vmatpush1.msra.mxu0 0.0
        %6239 = vmatprep.subr.mxu0 0.0
        %6240 = vmatpush1.msra.mxu0 0.0
        %6241 = vmatprep.subr.mxu0 0.0
        %6242 = vmatpush1.msra.mxu0 0.0
        %6243 = vmatprep.mubr.f32.mxu0 0.0
        %6244 = vmatmul.mubr.f32.gmra.mrb[0].mxu0 %v6177
        %v6245 = vpop.f32.mrb[0].mxu0
        %v6246 = vadd.f32 0.0, %v6245
        %v6247 = vpop.f32.mrb[0].mxu0
        %6248 = vdwg.mxu0
        %v6249 = vadd.f32 %v6173, %v6246
        %s6250 = scalar_lea.vmem %s18, 40
        %v6251 = vld [vmem:[%s6250] sm:$0xff]
        %v6252 = vrot.slane %v5864, 5
        %v6253 = vsel %vm5877, %v6252, 0
        %6255 = vmatprep.subr.mxu0 0.0
        %6256 = vmatpush1.msra.mxu0 %v6251
        %6257 = vmatprep.subr.mxu0 0.0
        %6258 = vmatpush1.msra.mxu0 0.0
        %6259 = vmatprep.subr.mxu0 0.0
        %6260 = vmatpush1.msra.mxu0 0.0
        %6261 = vmatprep.subr.mxu0 0.0
        %6262 = vmatpush1.msra.mxu0 0.0
        %6263 = vmatprep.subr.mxu0 0.0
        %6264 = vmatpush1.msra.mxu0 0.0
        %6265 = vmatprep.subr.mxu0 0.0
        %6266 = vmatpush1.msra.mxu0 0.0
        %6267 = vmatprep.subr.mxu0 0.0
        %6268 = vmatpush1.msra.mxu0 0.0
        %6269 = vmatprep.subr.mxu0 0.0
        %6270 = vmatpush1.msra.mxu0 0.0
        %6271 = vmatprep.subr.mxu0 0.0
        %6272 = vmatpush1.msra.mxu0 0.0
        %6273 = vmatprep.subr.mxu0 0.0
        %6274 = vmatpush1.msra.mxu0 0.0
        %6275 = vmatprep.subr.mxu0 0.0
        %6276 = vmatpush1.msra.mxu0 0.0
        %6277 = vmatprep.subr.mxu0 0.0
        %6278 = vmatpush1.msra.mxu0 0.0
        %6279 = vmatprep.subr.mxu0 0.0
        %6280 = vmatpush1.msra.mxu0 0.0
        %6281 = vmatprep.subr.mxu0 0.0
        %6282 = vmatpush1.msra.mxu0 0.0
        %6283 = vmatprep.subr.mxu0 0.0
        %6284 = vmatpush1.msra.mxu0 0.0
        %6285 = vmatprep.subr.mxu0 0.0
        %6286 = vmatpush1.msra.mxu0 0.0
        %6287 = vmatprep.subr.mxu0 0.0
        %6288 = vmatpush1.msra.mxu0 0.0
        %6289 = vmatprep.subr.mxu0 0.0
        %6290 = vmatpush1.msra.mxu0 0.0
        %6291 = vmatprep.subr.mxu0 0.0
        %6292 = vmatpush1.msra.mxu0 0.0
        %6293 = vmatprep.subr.mxu0 0.0
        %6294 = vmatpush1.msra.mxu0 0.0
        %6295 = vmatprep.subr.mxu0 0.0
        %6296 = vmatpush1.msra.mxu0 0.0
        %6297 = vmatprep.subr.mxu0 0.0
        %6298 = vmatpush1.msra.mxu0 0.0
        %6299 = vmatprep.subr.mxu0 0.0
        %6300 = vmatpush1.msra.mxu0 0.0
        %6301 = vmatprep.subr.mxu0 0.0
        %6302 = vmatpush1.msra.mxu0 0.0
        %6303 = vmatprep.subr.mxu0 0.0
        %6304 = vmatpush1.msra.mxu0 0.0
        %6305 = vmatprep.subr.mxu0 0.0
        %6306 = vmatpush1.msra.mxu0 0.0
        %6307 = vmatprep.subr.mxu0 0.0
        %6308 = vmatpush1.msra.mxu0 0.0
        %6309 = vmatprep.subr.mxu0 0.0
        %6310 = vmatpush1.msra.mxu0 0.0
        %6311 = vmatprep.subr.mxu0 0.0
        %6312 = vmatpush1.msra.mxu0 0.0
        %6313 = vmatprep.subr.mxu0 0.0
        %6314 = vmatpush1.msra.mxu0 0.0
        %6315 = vmatprep.subr.mxu0 0.0
        %6316 = vmatpush1.msra.mxu0 0.0
        %6317 = vmatprep.subr.mxu0 0.0
        %6318 = vmatpush1.msra.mxu0 0.0
        %6319 = vmatprep.mubr.f32.mxu0 0.0
        %6320 = vmatmul.mubr.f32.gmra.mrb[0].mxu0 %v6253
        %v6321 = vpop.f32.mrb[0].mxu0
        %v6322 = vadd.f32 0.0, %v6321
        %v6323 = vpop.f32.mrb[0].mxu0
        %6324 = vdwg.mxu0
        %v6325 = vadd.f32 %v6249, %v6322
        %s6326 = scalar_lea.vmem %s18, 48
        %v6327 = vld [vmem:[%s6326] sm:$0xff]
        %v6328 = vrot.slane %v5864, 6
        %v6329 = vsel %vm5877, %v6328, 0
        %6331 = vmatprep.subr.mxu0 0.0
        %6332 = vmatpush1.msra.mxu0 %v6327
        %6333 = vmatprep.subr.mxu0 0.0
        %6334 = vmatpush1.msra.mxu0 0.0
        %6335 = vmatprep.subr.mxu0 0.0
        %6336 = vmatpush1.msra.mxu0 0.0
        %6337 = vmatprep.subr.mxu0 0.0
        %6338 = vmatpush1.msra.mxu0 0.0
        %6339 = vmatprep.subr.mxu0 0.0
        %6340 = vmatpush1.msra.mxu0 0.0
        %6341 = vmatprep.subr.mxu0 0.0
        %6342 = vmatpush1.msra.mxu0 0.0
        %6343 = vmatprep.subr.mxu0 0.0
        %6344 = vmatpush1.msra.mxu0 0.0
        %6345 = vmatprep.subr.mxu0 0.0
        %6346 = vmatpush1.msra.mxu0 0.0
        %6347 = vmatprep.subr.mxu0 0.0
        %6348 = vmatpush1.msra.mxu0 0.0
        %6349 = vmatprep.subr.mxu0 0.0
        %6350 = vmatpush1.msra.mxu0 0.0
        %6351 = vmatprep.subr.mxu0 0.0
        %6352 = vmatpush1.msra.mxu0 0.0
        %6353 = vmatprep.subr.mxu0 0.0
        %6354 = vmatpush1.msra.mxu0 0.0
        %6355 = vmatprep.subr.mxu0 0.0
        %6356 = vmatpush1.msra.mxu0 0.0
        %6357 = vmatprep.subr.mxu0 0.0
        %6358 = vmatpush1.msra.mxu0 0.0
        %6359 = vmatprep.subr.mxu0 0.0
        %6360 = vmatpush1.msra.mxu0 0.0
        %6361 = vmatprep.subr.mxu0 0.0
        %6362 = vmatpush1.msra.mxu0 0.0
        %6363 = vmatprep.subr.mxu0 0.0
        %6364 = vmatpush1.msra.mxu0 0.0
        %6365 = vmatprep.subr.mxu0 0.0
        %6366 = vmatpush1.msra.mxu0 0.0
        %6367 = vmatprep.subr.mxu0 0.0
        %6368 = vmatpush1.msra.mxu0 0.0
        %6369 = vmatprep.subr.mxu0 0.0
        %6370 = vmatpush1.msra.mxu0 0.0
        %6371 = vmatprep.subr.mxu0 0.0
        %6372 = vmatpush1.msra.mxu0 0.0
        %6373 = vmatprep.subr.mxu0 0.0
        %6374 = vmatpush1.msra.mxu0 0.0
        %6375 = vmatprep.subr.mxu0 0.0
        %6376 = vmatpush1.msra.mxu0 0.0
        %6377 = vmatprep.subr.mxu0 0.0
        %6378 = vmatpush1.msra.mxu0 0.0
        %6379 = vmatprep.subr.mxu0 0.0
        %6380 = vmatpush1.msra.mxu0 0.0
        %6381 = vmatprep.subr.mxu0 0.0
        %6382 = vmatpush1.msra.mxu0 0.0
        %6383 = vmatprep.subr.mxu0 0.0
        %6384 = vmatpush1.msra.mxu0 0.0
        %6385 = vmatprep.subr.mxu0 0.0
        %6386 = vmatpush1.msra.mxu0 0.0
        %6387 = vmatprep.subr.mxu0 0.0
        %6388 = vmatpush1.msra.mxu0 0.0
        %6389 = vmatprep.subr.mxu0 0.0
        %6390 = vmatpush1.msra.mxu0 0.0
        %6391 = vmatprep.subr.mxu0 0.0
        %6392 = vmatpush1.msra.mxu0 0.0
        %6393 = vmatprep.subr.mxu0 0.0
        %6394 = vmatpush1.msra.mxu0 0.0
        %6395 = vmatprep.mubr.f32.mxu0 0.0
        %6396 = vmatmul.mubr.f32.gmra.mrb[0].mxu0 %v6329
        %v6397 = vpop.f32.mrb[0].mxu0
        %v6398 = vadd.f32 0.0, %v6397
        %v6399 = vpop.f32.mrb[0].mxu0
        %6400 = vdwg.mxu0
        %v6401 = vadd.f32 %v6325, %v6398
        %s6402 = scalar_lea.vmem %s18, 56
        %v6403 = vld [vmem:[%s6402] sm:$0xff]
        %v6404 = vrot.slane %v5864, 7
        %v6405 = vsel %vm5877, %v6404, 0
        %6407 = vmatprep.subr.mxu0 0.0
        %6408 = vmatpush1.msra.mxu0 %v6403
        %6409 = vmatprep.subr.mxu0 0.0
        %6410 = vmatpush1.msra.mxu0 0.0
        %6411 = vmatprep.subr.mxu0 0.0
        %6412 = vmatpush1.msra.mxu0 0.0
        %6413 = vmatprep.subr.mxu0 0.0
        %6414 = vmatpush1.msra.mxu0 0.0
        %6415 = vmatprep.subr.mxu0 0.0
        %6416 = vmatpush1.msra.mxu0 0.0
        %6417 = vmatprep.subr.mxu0 0.0
        %6418 = vmatpush1.msra.mxu0 0.0
        %6419 = vmatprep.subr.mxu0 0.0
        %6420 = vmatpush1.msra.mxu0 0.0
        %6421 = vmatprep.subr.mxu0 0.0
        %6422 = vmatpush1.msra.mxu0 0.0
        %6423 = vmatprep.subr.mxu0 0.0
        %6424 = vmatpush1.msra.mxu0 0.0
        %6425 = vmatprep.subr.mxu0 0.0
        %6426 = vmatpush1.msra.mxu0 0.0
        %6427 = vmatprep.subr.mxu0 0.0
        %6428 = vmatpush1.msra.mxu0 0.0
        %6429 = vmatprep.subr.mxu0 0.0
        %6430 = vmatpush1.msra.mxu0 0.0
        %6431 = vmatprep.subr.mxu0 0.0
        %6432 = vmatpush1.msra.mxu0 0.0
        %6433 = vmatprep.subr.mxu0 0.0
        %6434 = vmatpush1.msra.mxu0 0.0
        %6435 = vmatprep.subr.mxu0 0.0
        %6436 = vmatpush1.msra.mxu0 0.0
        %6437 = vmatprep.subr.mxu0 0.0
        %6438 = vmatpush1.msra.mxu0 0.0
        %6439 = vmatprep.subr.mxu0 0.0
        %6440 = vmatpush1.msra.mxu0 0.0
        %6441 = vmatprep.subr.mxu0 0.0
        %6442 = vmatpush1.msra.mxu0 0.0
        %6443 = vmatprep.subr.mxu0 0.0
        %6444 = vmatpush1.msra.mxu0 0.0
        %6445 = vmatprep.subr.mxu0 0.0
        %6446 = vmatpush1.msra.mxu0 0.0
        %6447 = vmatprep.subr.mxu0 0.0
        %6448 = vmatpush1.msra.mxu0 0.0
        %6449 = vmatprep.subr.mxu0 0.0
        %6450 = vmatpush1.msra.mxu0 0.0
        %6451 = vmatprep.subr.mxu0 0.0
        %6452 = vmatpush1.msra.mxu0 0.0
        %6453 = vmatprep.subr.mxu0 0.0
        %6454 = vmatpush1.msra.mxu0 0.0
        %6455 = vmatprep.subr.mxu0 0.0
        %6456 = vmatpush1.msra.mxu0 0.0
        %6457 = vmatprep.subr.mxu0 0.0
        %6458 = vmatpush1.msra.mxu0 0.0
        %6459 = vmatprep.subr.mxu0 0.0
        %6460 = vmatpush1.msra.mxu0 0.0
        %6461 = vmatprep.subr.mxu0 0.0
        %6462 = vmatpush1.msra.mxu0 0.0
        %6463 = vmatprep.subr.mxu0 0.0
        %6464 = vmatpush1.msra.mxu0 0.0
        %6465 = vmatprep.subr.mxu0 0.0
        %6466 = vmatpush1.msra.mxu0 0.0
        %6467 = vmatprep.subr.mxu0 0.0
        %6468 = vmatpush1.msra.mxu0 0.0
        %6469 = vmatprep.subr.mxu0 0.0
        %6470 = vmatpush1.msra.mxu0 0.0
        %6471 = vmatprep.mubr.f32.mxu0 0.0
        %6472 = vmatmul.mubr.f32.gmra.mrb[0].mxu0 %v6405
        %v6473 = vpop.f32.mrb[0].mxu0
        %v6474 = vadd.f32 0.0, %v6473
        %v6475 = vpop.f32.mrb[0].mxu0
        %6476 = vdwg.mxu0
        %v6477 = vadd.f32 %v6401, %v6474
        %s6478 = scalar_lea.vmem %s18, 64
        %v6479 = vld [vmem:[%s6478] sm:$0xff]
        %v6481 = vsel %vm5877, %v5869, 0
        %6483 = vmatprep.subr.mxu0 0.0
        %6484 = vmatpush1.msra.mxu0 %v6479
        %6485 = vmatprep.subr.mxu0 0.0
        %6486 = vmatpush1.msra.mxu0 0.0
        %6487 = vmatprep.subr.mxu0 0.0
        %6488 = vmatpush1.msra.mxu0 0.0
        %6489 = vmatprep.subr.mxu0 0.0
        %6490 = vmatpush1.msra.mxu0 0.0
        %6491 = vmatprep.subr.mxu0 0.0
        %6492 = vmatpush1.msra.mxu0 0.0
        %6493 = vmatprep.subr.mxu0 0.0
        %6494 = vmatpush1.msra.mxu0 0.0
        %6495 = vmatprep.subr.mxu0 0.0
        %6496 = vmatpush1.msra.mxu0 0.0
        %6497 = vmatprep.subr.mxu0 0.0
        %6498 = vmatpush1.msra.mxu0 0.0
        %6499 = vmatprep.subr.mxu0 0.0
        %6500 = vmatpush1.msra.mxu0 0.0
        %6501 = vmatprep.subr.mxu0 0.0
        %6502 = vmatpush1.msra.mxu0 0.0
        %6503 = vmatprep.subr.mxu0 0.0
        %6504 = vmatpush1.msra.mxu0 0.0
        %6505 = vmatprep.subr.mxu0 0.0
        %6506 = vmatpush1.msra.mxu0 0.0
        %6507 = vmatprep.subr.mxu0 0.0
        %6508 = vmatpush1.msra.mxu0 0.0
        %6509 = vmatprep.subr.mxu0 0.0
        %6510 = vmatpush1.msra.mxu0 0.0
        %6511 = vmatprep.subr.mxu0 0.0
        %6512 = vmatpush1.msra.mxu0 0.0
        %6513 = vmatprep.subr.mxu0 0.0
        %6514 = vmatpush1.msra.mxu0 0.0
        %6515 = vmatprep.subr.mxu0 0.0
        %6516 = vmatpush1.msra.mxu0 0.0
        %6517 = vmatprep.subr.mxu0 0.0
        %6518 = vmatpush1.msra.mxu0 0.0
        %6519 = vmatprep.subr.mxu0 0.0
        %6520 = vmatpush1.msra.mxu0 0.0
        %6521 = vmatprep.subr.mxu0 0.0
        %6522 = vmatpush1.msra.mxu0 0.0
        %6523 = vmatprep.subr.mxu0 0.0
        %6524 = vmatpush1.msra.mxu0 0.0
        %6525 = vmatprep.subr.mxu0 0.0
        %6526 = vmatpush1.msra.mxu0 0.0
        %6527 = vmatprep.subr.mxu0 0.0
        %6528 = vmatpush1.msra.mxu0 0.0
        %6529 = vmatprep.subr.mxu0 0.0
        %6530 = vmatpush1.msra.mxu0 0.0
        %6531 = vmatprep.subr.mxu0 0.0
        %6532 = vmatpush1.msra.mxu0 0.0
        %6533 = vmatprep.subr.mxu0 0.0
        %6534 = vmatpush1.msra.mxu0 0.0
        %6535 = vmatprep.subr.mxu0 0.0
        %6536 = vmatpush1.msra.mxu0 0.0
        %6537 = vmatprep.subr.mxu0 0.0
        %6538 = vmatpush1.msra.mxu0 0.0
        %6539 = vmatprep.subr.mxu0 0.0
        %6540 = vmatpush1.msra.mxu0 0.0
        %6541 = vmatprep.subr.mxu0 0.0
        %6542 = vmatpush1.msra.mxu0 0.0
        %6543 = vmatprep.subr.mxu0 0.0
        %6544 = vmatpush1.msra.mxu0 0.0
        %6545 = vmatprep.subr.mxu0 0.0
        %6546 = vmatpush1.msra.mxu0 0.0
        %6547 = vmatprep.mubr.f32.mxu0 0.0
        %6548 = vmatmul.mubr.f32.gmra.mrb[0].mxu0 %v6481
        %v6549 = vpop.f32.mrb[0].mxu0
        %v6550 = vadd.f32 0.0, %v6549
        %v6551 = vpop.f32.mrb[0].mxu0
        %6552 = vdwg.mxu0
        %v6553 = vadd.f32 %v6477, %v6550
        %s6554 = sld [smem:[#allocation4]]
        %v6555 = vstv %s6554
        %v6556 = vadd.f32 %v6553, %v6555
        %v6557 = vxor.u32 %v6556, 2147483648
        %v6558 = vmul.f32 %v6557, 1.442695
        %v6559 = vpow.pop %v6558
        %v6560 = vadd.f32 %v6559, 1.0
        %v6561 = vrcp.pop %v6560
        %v6562 = vmul.f32 1.0, %v6561
        %v6563 = vld [vmem:[%s13] sm:$0xff]
        %v6565 = vsel %vm5877, %v6562, 0
        %6567 = vmatprep.subr.mxu0 0.0
        %6568 = vmatpush1.msra.mxu0 %v6563
        %6569 = vmatprep.subr.mxu0 0.0
        %6570 = vmatpush1.msra.mxu0 0.0
        %6571 = vmatprep.subr.mxu0 0.0
        %6572 = vmatpush1.msra.mxu0 0.0
        %6573 = vmatprep.subr.mxu0 0.0
        %6574 = vmatpush1.msra.mxu0 0.0
        %6575 = vmatprep.subr.mxu0 0.0
        %6576 = vmatpush1.msra.mxu0 0.0
        %6577 = vmatprep.subr.mxu0 0.0
        %6578 = vmatpush1.msra.mxu0 0.0
        %6579 = vmatprep.subr.mxu0 0.0
        %6580 = vmatpush1.msra.mxu0 0.0
        %6581 = vmatprep.subr.mxu0 0.0
        %6582 = vmatpush1.msra.mxu0 0.0
        %6583 = vmatprep.subr.mxu0 0.0
        %6584 = vmatpush1.msra.mxu0 0.0
        %6585 = vmatprep.subr.mxu0 0.0
        %6586 = vmatpush1.msra.mxu0 0.0
        %6587 = vmatprep.subr.mxu0 0.0
        %6588 = vmatpush1.msra.mxu0 0.0
        %6589 = vmatprep.subr.mxu0 0.0
        %6590 = vmatpush1.msra.mxu0 0.0
        %6591 = vmatprep.subr.mxu0 0.0
        %6592 = vmatpush1.msra.mxu0 0.0
        %6593 = vmatprep.subr.mxu0 0.0
        %6594 = vmatpush1.msra.mxu0 0.0
        %6595 = vmatprep.subr.mxu0 0.0
        %6596 = vmatpush1.msra.mxu0 0.0
        %6597 = vmatprep.subr.mxu0 0.0
        %6598 = vmatpush1.msra.mxu0 0.0
        %6599 = vmatprep.subr.mxu0 0.0
        %6600 = vmatpush1.msra.mxu0 0.0
        %6601 = vmatprep.subr.mxu0 0.0
        %6602 = vmatpush1.msra.mxu0 0.0
        %6603 = vmatprep.subr.mxu0 0.0
        %6604 = vmatpush1.msra.mxu0 0.0
        %6605 = vmatprep.subr.mxu0 0.0
        %6606 = vmatpush1.msra.mxu0 0.0
        %6607 = vmatprep.subr.mxu0 0.0
        %6608 = vmatpush1.msra.mxu0 0.0
        %6609 = vmatprep.subr.mxu0 0.0
        %6610 = vmatpush1.msra.mxu0 0.0
        %6611 = vmatprep.subr.mxu0 0.0
        %6612 = vmatpush1.msra.mxu0 0.0
        %6613 = vmatprep.subr.mxu0 0.0
        %6614 = vmatpush1.msra.mxu0 0.0
        %6615 = vmatprep.subr.mxu0 0.0
        %6616 = vmatpush1.msra.mxu0 0.0
        %6617 = vmatprep.subr.mxu0 0.0
        %6618 = vmatpush1.msra.mxu0 0.0
        %6619 = vmatprep.subr.mxu0 0.0
        %6620 = vmatpush1.msra.mxu0 0.0
        %6621 = vmatprep.subr.mxu0 0.0
        %6622 = vmatpush1.msra.mxu0 0.0
        %6623 = vmatprep.subr.mxu0 0.0
        %6624 = vmatpush1.msra.mxu0 0.0
        %6625 = vmatprep.subr.mxu0 0.0
        %6626 = vmatpush1.msra.mxu0 0.0
        %6627 = vmatprep.subr.mxu0 0.0
        %6628 = vmatpush1.msra.mxu0 0.0
        %6629 = vmatprep.subr.mxu0 0.0
        %6630 = vmatpush1.msra.mxu0 0.0
        %6631 = vmatprep.mubr.f32.mxu0 0.0
        %6632 = vmatmul.mubr.f32.gmra.mrb[0].mxu0 %v6565
        %v6633 = vpop.f32.mrb[0].mxu0
        %v6634 = vadd.f32 0.0, %v6633
        %v6635 = vpop.f32.mrb[0].mxu0
        %6636 = vdwg.mxu0
        %v6637 = vlaneseq
        %v6638 = vshrl.u32 %v6637, 7
        %v6639 = vsub.s32 0, %v6638
        %v6640 = vrot.slane %v6634, %v6639
        %v6641 = vmul.f32 %v5662, %v6640
        %v6642 = vmul.f32 %v5663, %v6640
        %v6643 = vadd.f32 %v6641, %v5662
        %v6644 = vadd.f32 %v6642, %v5663
        %6645 = vadd.xlane.f32.xlu0 %v6643
        %v6646 = vpop.xlane.xlu0 %6645
        %6647 = vadd.xlane.f32.xlu0 %v6644
        %v6648 = vpop.xlane.xlu0 %6647
        %v6649 = vrcp.pop 128.0
        %v6650 = vmul.f32 %v6646, %v6649
        %v6651 = vmul.f32 %v6648, %v6649
        %v6652 = vld [vmem:[%s19] sm:$0xff]
        %v6653 = vld [vmem:[%s20] sm:$0xff]
        %v6655 = vsel %vm867, %v6652, 0
        %6657 = vmatprep.subr.mxu0 0.0
        %6658 = vmatpush1.msra.mxu0 %v6650
        %6659 = vmatprep.subr.mxu0 0.0
        %6660 = vmatpush1.msra.mxu0 %v6651
        %6661 = vmatprep.subr.mxu0 0.0
        %6662 = vmatpush1.msra.mxu0 0.0
        %6663 = vmatprep.subr.mxu0 0.0
        %6664 = vmatpush1.msra.mxu0 0.0
        %6665 = vmatprep.subr.mxu0 0.0
        %6666 = vmatpush1.msra.mxu0 0.0
        %6667 = vmatprep.subr.mxu0 0.0
        %6668 = vmatpush1.msra.mxu0 0.0
        %6669 = vmatprep.subr.mxu0 0.0
        %6670 = vmatpush1.msra.mxu0 0.0
        %6671 = vmatprep.subr.mxu0 0.0
        %6672 = vmatpush1.msra.mxu0 0.0
        %6673 = vmatprep.subr.mxu0 0.0
        %6674 = vmatpush1.msra.mxu0 0.0
        %6675 = vmatprep.subr.mxu0 0.0
        %6676 = vmatpush1.msra.mxu0 0.0
        %6677 = vmatprep.subr.mxu0 0.0
        %6678 = vmatpush1.msra.mxu0 0.0
        %6679 = vmatprep.subr.mxu0 0.0
        %6680 = vmatpush1.msra.mxu0 0.0
        %6681 = vmatprep.subr.mxu0 0.0
        %6682 = vmatpush1.msra.mxu0 0.0
        %6683 = vmatprep.subr.mxu0 0.0
        %6684 = vmatpush1.msra.mxu0 0.0
        %6685 = vmatprep.subr.mxu0 0.0
        %6686 = vmatpush1.msra.mxu0 0.0
        %6687 = vmatprep.subr.mxu0 0.0
        %6688 = vmatpush1.msra.mxu0 0.0
        %6689 = vmatprep.subr.mxu0 0.0
        %6690 = vmatpush1.msra.mxu0 0.0
        %6691 = vmatprep.subr.mxu0 0.0
        %6692 = vmatpush1.msra.mxu0 0.0
        %6693 = vmatprep.subr.mxu0 0.0
        %6694 = vmatpush1.msra.mxu0 0.0
        %6695 = vmatprep.subr.mxu0 0.0
        %6696 = vmatpush1.msra.mxu0 0.0
        %6697 = vmatprep.subr.mxu0 0.0
        %6698 = vmatpush1.msra.mxu0 0.0
        %6699 = vmatprep.subr.mxu0 0.0
        %6700 = vmatpush1.msra.mxu0 0.0
        %6701 = vmatprep.subr.mxu0 0.0
        %6702 = vmatpush1.msra.mxu0 0.0
        %6703 = vmatprep.subr.mxu0 0.0
        %6704 = vmatpush1.msra.mxu0 0.0
        %6705 = vmatprep.subr.mxu0 0.0
        %6706 = vmatpush1.msra.mxu0 0.0
        %6707 = vmatprep.subr.mxu0 0.0
        %6708 = vmatpush1.msra.mxu0 0.0
        %6709 = vmatprep.subr.mxu0 0.0
        %6710 = vmatpush1.msra.mxu0 0.0
        %6711 = vmatprep.subr.mxu0 0.0
        %6712 = vmatpush1.msra.mxu0 0.0
        %6713 = vmatprep.subr.mxu0 0.0
        %6714 = vmatpush1.msra.mxu0 0.0
        %6715 = vmatprep.subr.mxu0 0.0
        %6716 = vmatpush1.msra.mxu0 0.0
        %6717 = vmatprep.subr.mxu0 0.0
        %6718 = vmatpush1.msra.mxu0 0.0
        %6719 = vmatprep.subr.mxu0 0.0
        %6720 = vmatpush1.msra.mxu0 0.0
        %6721 = vmatprep.mubr.f32.mxu0 0.0
        %6722 = vmatmul.mubr.f32.gmra.mrb[0].mxu0 %v6655
        %v6723 = vpop.f32.mrb[0].mxu0
        %v6724 = vadd.f32 %v6653, %v6723
        %v6725 = vpop.f32.mrb[0].mxu0
        %6726 = vdwg.mxu0
        %v6727 = vmax.f32 %v6724, 0.0
        %v6728 = vld [vmem:[%s21] sm:$0xff]
        %v6729 = vld [vmem:[%s21 + $0x8] sm:$0xff]
        %v6730 = vld [vmem:[%s22] sm:$0xff]
        %v6731 = vld [vmem:[%s22 + $0x8] sm:$0xff]
        %v6733 = vsel %vm5877, %v6728, 0
        %v6736 = vsel %vm5877, %v6729, 0
        %6738 = vmatprep.subr.mxu0 0.0
        %6739 = vmatpush1.msra.mxu0 %v6727
        %6740 = vmatprep.subr.mxu0 0.0
        %6741 = vmatpush1.msra.mxu0 0.0
        %6742 = vmatprep.subr.mxu0 0.0
        %6743 = vmatpush1.msra.mxu0 0.0
        %6744 = vmatprep.subr.mxu0 0.0
        %6745 = vmatpush1.msra.mxu0 0.0
        %6746 = vmatprep.subr.mxu0 0.0
        %6747 = vmatpush1.msra.mxu0 0.0
        %6748 = vmatprep.subr.mxu0 0.0
        %6749 = vmatpush1.msra.mxu0 0.0
        %6750 = vmatprep.subr.mxu0 0.0
        %6751 = vmatpush1.msra.mxu0 0.0
        %6752 = vmatprep.subr.mxu0 0.0
        %6753 = vmatpush1.msra.mxu0 0.0
        %6754 = vmatprep.subr.mxu0 0.0
        %6755 = vmatpush1.msra.mxu0 0.0
        %6756 = vmatprep.subr.mxu0 0.0
        %6757 = vmatpush1.msra.mxu0 0.0
        %6758 = vmatprep.subr.mxu0 0.0
        %6759 = vmatpush1.msra.mxu0 0.0
        %6760 = vmatprep.subr.mxu0 0.0
        %6761 = vmatpush1.msra.mxu0 0.0
        %6762 = vmatprep.subr.mxu0 0.0
        %6763 = vmatpush1.msra.mxu0 0.0
        %6764 = vmatprep.subr.mxu0 0.0
        %6765 = vmatpush1.msra.mxu0 0.0
        %6766 = vmatprep.subr.mxu0 0.0
        %6767 = vmatpush1.msra.mxu0 0.0
        %6768 = vmatprep.subr.mxu0 0.0
        %6769 = vmatpush1.msra.mxu0 0.0
        %6770 = vmatprep.subr.mxu0 0.0
        %6771 = vmatpush1.msra.mxu0 0.0
        %6772 = vmatprep.subr.mxu0 0.0
        %6773 = vmatpush1.msra.mxu0 0.0
        %6774 = vmatprep.subr.mxu0 0.0
        %6775 = vmatpush1.msra.mxu0 0.0
        %6776 = vmatprep.subr.mxu0 0.0
        %6777 = vmatpush1.msra.mxu0 0.0
        %6778 = vmatprep.subr.mxu0 0.0
        %6779 = vmatpush1.msra.mxu0 0.0
        %6780 = vmatprep.subr.mxu0 0.0
        %6781 = vmatpush1.msra.mxu0 0.0
        %6782 = vmatprep.subr.mxu0 0.0
        %6783 = vmatpush1.msra.mxu0 0.0
        %6784 = vmatprep.subr.mxu0 0.0
        %6785 = vmatpush1.msra.mxu0 0.0
        %6786 = vmatprep.subr.mxu0 0.0
        %6787 = vmatpush1.msra.mxu0 0.0
        %6788 = vmatprep.subr.mxu0 0.0
        %6789 = vmatpush1.msra.mxu0 0.0
        %6790 = vmatprep.subr.mxu0 0.0
        %6791 = vmatpush1.msra.mxu0 0.0
        %6792 = vmatprep.subr.mxu0 0.0
        %6793 = vmatpush1.msra.mxu0 0.0
        %6794 = vmatprep.subr.mxu0 0.0
        %6795 = vmatpush1.msra.mxu0 0.0
        %6796 = vmatprep.subr.mxu0 0.0
        %6797 = vmatpush1.msra.mxu0 0.0
        %6798 = vmatprep.subr.mxu0 0.0
        %6799 = vmatpush1.msra.mxu0 0.0
        %6800 = vmatprep.subr.mxu0 0.0
        %6801 = vmatpush1.msra.mxu0 0.0
        %6802 = vmatprep.mubr.f32.mxu0 0.0
        %6803 = vmatmul.mubr.f32.gmra.mrb[0].mxu0 %v6733
        %v6804 = vpop.f32.mrb[0].mxu0
        %v6805 = vadd.f32 %v6730, %v6804
        %v6806 = vpop.f32.mrb[0].mxu0
        %6807 = vmatprep.mubr.f32.mxu0 0.0
        %6808 = vmatmul.mubr.f32.gmra.mrb[0].mxu0 %v6736
        %v6809 = vpop.f32.mrb[0].mxu0
        %v6810 = vadd.f32 %v6731, %v6809
        %v6811 = vpop.f32.mrb[0].mxu0
        %6812 = vdwg.mxu0
        %v6813 = vxor.u32 %v6805, 2147483648
        %v6814 = vxor.u32 %v6810, 2147483648
        %v6815 = vmul.f32 %v6813, 1.442695
        %v6816 = vpow.pop %v6815
        %v6817 = vmul.f32 %v6814, 1.442695
        %v6818 = vpow.pop %v6817
        %v6819 = vadd.f32 %v6816, 1.0
        %v6820 = vadd.f32 %v6818, 1.0
        %v6821 = vrcp.pop %v6819
        %v6822 = vmul.f32 1.0, %v6821
        %v6823 = vrcp.pop %v6820
        %v6824 = vmul.f32 1.0, %v6823
        %6826 = vset.pattern.permute.xlu0 0
        %6827 = vperm.xlu0 %6826, %v6822
        %v6828 = vpop.permute.xlu0 %6827
        %6831 = vset.pattern.permute.xlu0 0
        %6832 = vperm.xlu0 %6831, %v6824
        %v6833 = vpop.permute.xlu0 %6832
        %v6835 = vmul.f32 %v6643, %v6828
        %v6836 = vmul.f32 %v6644, %v6833
        %v6837 = vadd.f32 %v6835, %v6643
        %v6838 = vadd.f32 %v6836, %v6644
        %6839 = vst [vmem:[%s817] sm:$0xff] %v6837
        %6840 = vst [vmem:[%s817 + $0x8] sm:$0xff] %v6838
        %s6841 = sand.u32 %s604, 1
        %s6842 = scalar_lea.sflag [#allocation7], %s6841
        %s6843 = sand.u32 %s604, 1
        %s6844 = smul.addr %s6843, 16
        %s6845 = scalar_lea.vmem [#allocation10], %s6844
        // Predicated region
        $region133: #{tpu_custom_call.1} parent=123 // pred_check
          %p6846 = pneg %p614
        $region134: #{tpu_custom_call.1} parent=123 // pred_check_branch
          %6848 = sbr.rel (%p6846) target = $region136
        $region135: #{tpu_custom_call.1} parent=123 // pred_region
          %s6850 = ssub.s32 256, 256
          %6851 = vsyncadd %s6842, %s6850
          %s6852 = smul.addr %s45, 2
          %s6853 = smul.addr %s6852, 128
          %s6854 = scalar_lea.hbm %s26, %s6853
          %s6855 = sshll.u32 %s6845, 4
          %s6856 = int_to_ptr.vmem [resolvable:$true] %s6855
          %6861 = dma.vmem_to_hbm [thread:$0]  %s6856, 256, %s6854, %s6842, 128, 128, 8
        $region136: #{tpu_custom_call.1} parent=123 // pred_fallthru
          _
      $region124: #{tpu_custom_call.1} parent=5 // pred_fallthru
        _
      %p6862 = scmp.le.s32.totalorder 2, %s40
      // Predicated region
      $region137: #{tpu_custom_call.1} parent=5 // pred_check
        %p6863 = pneg %p6862
      $region138: #{tpu_custom_call.1} parent=5 // pred_check_branch
        %6865 = sbr.rel (%p6863) target = $region140
      $region139: #{tpu_custom_call.1} parent=5 // pred_region
        %s6866 = ssub.s32 %s40, 2
        // Predicated region
        $region141: #{tpu_custom_call.1} parent=139 // pred_check
          %p6867 = pneg %p620
        $region142: #{tpu_custom_call.1} parent=139 // pred_check_branch
          %6869 = sbr.rel (%p6867) target = $region144
        $region143: #{tpu_custom_call.1} parent=139 // pred_region
          %s6870 = sand.u32 %s605, 1
          %s6871 = scalar_lea.sflag [#allocation7], %s6870
          %s6872 = sand.u32 %s605, 1
          %s6873 = smul.addr %s6872, 16
          %s6874 = scalar_lea.vmem [#allocation10], %s6873
          %6875 = dma.done %s6871, 256
        $region144: #{tpu_custom_call.1} parent=139 // pred_fallthru
          _
      $region140: #{tpu_custom_call.1} parent=5 // pred_fallthru
        _
    $region6: #{tpu_custom_call.1} parent=1 // loop_footer
      %s44 = sadd.s32 1, %s40
    $region7: #{tpu_custom_call.1} parent=1 // loop_footer_branch
      %39 = sbr.rel target = $region3
    $region8: #{tpu_custom_call.1} parent=1 // loop_exit
      _
    %6876 = vsyncpa [#allocation6], 1
    %s6877 = scalar_lea.sflag [#allocation6], 1
    %6878 = vsyncpa %s6877, 1
    %6879 = vsyncpa [#allocation9], 1
    %6880 = vsyncpa [#allocation7], 1
    %s6881 = scalar_lea.sflag [#allocation7], 1
    %6882 = vsyncpa %s6881, 1

</llo_original>
